<compile_context>
chip_gen: v7x
topology: tpu7x:2x2x1
jax: 0.10.0
libtpu: 0.0.40
codegen_flags: <defaults>
</compile_context>

<pallas_src>
import functools

import jax
import jax.numpy as jnp
from jax.experimental import pallas as pl
from jax.experimental.pallas import tpu as pltpu

_EPS = 1e-5
_PAD = 8   # zero guard rows above/below the in-kernel padded slab (keeps slab 8-aligned)


# --------------------------------------------------------------------------------------
# Small helpers: VMEM budget and tile choice
# --------------------------------------------------------------------------------------
def _round_up(x, m):
    return (x + m - 1) // m * m


def _vmem_limit_bytes():
    """3/4 of physical per-core VMEM (96 MiB on v5e/v6e, 48 MiB on v7x); None if unknown."""
    try:
        cap = int(pltpu.get_tpu_info().vmem_capacity_bytes)
        return max(32 << 20, min((cap * 3) // 4, cap - (8 << 20)))
    except Exception:
        return None


def _tile_vmem_bytes(tile_h, pitch, cin, mid, cout):
    slab = (tile_h + 2) * pitch
    tw = tile_h * pitch
    b = 2 * slab * cin * 2             # x slab block (bf16, double-buffered)
    b += 2 * slab * 4                  # mask block (f32, double-buffered)
    b += 2 * tw * cout * 2             # output block (bf16, double-buffered)
    b += (slab + 2 * _PAD) * mid * 4   # ypad scratch (f32)
    b += slab * (cin + 2 * mid) * 4    # stage-A temporaries (f32)
    b += tw * (mid + 2 * cout) * 4     # stage-B/C temporaries (f32)
    return b


def _pick_tile_h(N, H, pitch, cin, mid, cout, budget):
    divs = [d for d in range(1, H + 1) if H % d == 0]
    ok = [d for d in divs
          if d * pitch <= 4096 and _tile_vmem_bytes(d, pitch, cin, mid, cout) <= budget]
    if not ok:
        ok = [1]
    # prefer >= 2 total parallel grid points so v7x's two TensorCores both get work
    pref = [d for d in ok if N * (H // d) >= 2] or ok
    return max(pref)


# --------------------------------------------------------------------------------------
# Fused kernel
# --------------------------------------------------------------------------------------
def _make_residual_kernel(pitch, tile_h, mid, has_branch):
    SLAB = (tile_h + 2) * pitch     # slab rows per tile (tile + 1-row halo top/bottom)
    TW = tile_h * pitch             # output rows per tile (padded-column pixel grid)

    def kernel(x_ref, m_ref, sA_ref, tA_ref, wA_ref, tB_ref, wB_ref, tC_ref,
               wC_ref, bO_ref, *rest):
        if has_branch:
            sR_ref, tR_ref, wR_ref, o_ref, ypad_ref = rest
        else:
            o_ref, ypad_ref = rest

        # ---- stage A: BN_A -> ReLU -> conv_A(1x1) -> (BN_B scale folded into wA) -> ReLU
        x = x_ref[0, 0].astype(jnp.float32)                 # (SLAB, cin)
        m = m_ref[0]                                        # (SLAB, 1)  1=real pixel
        a = jnp.maximum(x * sA_ref[...] + tA_ref[...], 0.0)
        hA = jnp.dot(a.astype(jnp.bfloat16), wA_ref[...],
                     preferred_element_type=jnp.float32)    # bA/sB folded into tB/wA
        yb = jnp.maximum(hA + tB_ref[...], 0.0) * m         # conv_B zero padding via mask

        # Slab between zero guard rows; conv taps read shifted row windows.  Guards are
        # rewritten every step (cheap: 16 rows) because scratch is per-core under
        # megacore and a "first step only" gate would leave core 1 uninitialized.
        ypad_ref[0:_PAD, :] = jnp.zeros((_PAD, mid), jnp.float32)
        ypad_ref[_PAD + SLAB:_PAD + SLAB + _PAD, :] = jnp.zeros((_PAD, mid), jnp.float32)
        ypad_ref[_PAD:_PAD + SLAB, :] = yb

        # ---- conv_B (3x3): 9 shifted matmuls over the flat slab, bf16 MXU, f32 acc.
        acc = jnp.zeros((TW, mid), jnp.float32)
        for ky in range(3):
            for kx in range(3):
                off = _PAD + ky * pitch + kx - 1            # static offset
                win = ypad_ref[off:off + TW, :]             # (TW, mid) f32
                acc = acc + jnp.dot(win.astype(jnp.bfloat16), wB_ref[ky, kx],
                                    preferred_element_type=jnp.float32)

        # ---- (BN_C scale folded into wB) -> shift -> ReLU -> conv_C(1x1)
        c = jnp.maximum(acc + tC_ref[...], 0.0)
        out = jnp.dot(c.astype(jnp.bfloat16), wC_ref[...],
                      preferred_element_type=jnp.float32) + bO_ref[...]

        # ---- shortcut (identity, or BN_R -> ReLU -> 1x1 conv; its bias folded into bO)
        xs = x[pitch:pitch + TW, :]                         # x at this tile's output pixels
        if has_branch:
            r = jnp.maximum(xs * sR_ref[...] + tR_ref[...], 0.0)
            out = out + jnp.dot(r.astype(jnp.bfloat16), wR_ref[...],
                                preferred_element_type=jnp.float32)
        else:
            out = out + xs                                  # identity (cin == cout)

        o_ref[0, 0] = out.astype(o_ref.dtype)               # (TW, num_out) bf16

    return kernel


# --------------------------------------------------------------------------------------
# Parameters (deterministic synthetic init, matching PyTorch module shapes)
# --------------------------------------------------------------------------------------
def init_params(key, num_in, num_out):
    mid = num_out // 2
    keys = jax.random.split(key, 12)

    def bn_params(k, c):
        k1, k2, k3, k4 = jax.random.split(k, 4)
        gamma = 1.0 + 0.1 * jax.random.normal(k1, (c,), jnp.float32)
        beta = 0.1 * jax.random.normal(k2, (c,), jnp.float32)
        mean = 0.1 * jax.random.normal(k3, (c,), jnp.float32)
        var = 0.5 + jax.random.uniform(k4, (c,), jnp.float32)
        return gamma, beta, mean, var

    p = {
        'bnA': bn_params(keys[0], num_in),
        'wA': 0.3 * jax.random.normal(keys[1], (mid, num_in), jnp.float32),     # Conv2d(numIn, mid, 1)
        'bA': 0.1 * jax.random.normal(keys[2], (mid,), jnp.float32),
        'bnB': bn_params(keys[3], mid),
        'wB': 0.3 * jax.random.normal(keys[4], (mid, mid, 3, 3), jnp.float32),  # Conv2d(mid, mid, 3, pad=1)
        'bB': 0.1 * jax.random.normal(keys[5], (mid,), jnp.float32),
        'bnC': bn_params(keys[6], mid),
        'wC': 0.3 * jax.random.normal(keys[7], (num_out, mid), jnp.float32),    # Conv2d(mid, numOut, 1)
        'bC': 0.1 * jax.random.normal(keys[8], (num_out,), jnp.float32),
    }
    if num_in != num_out:
        p['bnR'] = bn_params(keys[9], num_in)
        p['wR'] = 0.3 * jax.random.normal(keys[10], (num_out, num_in), jnp.float32)  # branch 1x1
        p['bR'] = 0.1 * jax.random.normal(keys[11], (num_out,), jnp.float32)
    return p


def _fold_bn(bn):
    gamma, beta, mean, var = bn
    scale = gamma / jnp.sqrt(var + _EPS)
    shift = beta - mean * scale
    return scale.astype(jnp.float32), shift.astype(jnp.float32)


# --------------------------------------------------------------------------------------
# Wrapper
# --------------------------------------------------------------------------------------
@functools.partial(jax.jit, static_argnums=(2, 3))
def residual_forward(x_nchw, params, num_in, num_out):
    N, Cin, H, W = x_nchw.shape
    assert Cin == num_in
    mid = num_out // 2
    has_branch = (num_in != num_out)

    pitch = _round_up(W + 2, 8)                     # 8-aligned flat row pitch

    limit = _vmem_limit_bytes()
    w_bytes = 4 * (Cin * mid + 9 * mid * mid + mid * num_out
                   + (Cin * num_out if has_branch else 0))
    budget = int(0.8 * (limit if limit is not None else (32 << 20))) - w_bytes
    tile_h = _pick_tile_h(N, H, pitch, Cin, mid, num_out, budget)
    n_h = H // tile_h
    SLAB = (tile_h + 2) * pitch
    TW = tile_h * pitch

    # ---- fold BN stats, conv biases and BN_B/BN_C scales into weights/shifts (trace time)
    sA, tA = _fold_bn(params['bnA'])
    sB, tB = _fold_bn(params['bnB'])
    sC, tC = _fold_bn(params['bnC'])
    wA2 = (params['wA'].T * sB[None, :]).astype(jnp.bfloat16)                 # (cin, mid)
    tB2 = (tB + sB * params['bA']).reshape(1, -1).astype(jnp.float32)
    wB2 = (jnp.transpose(params['wB'], (2, 3, 1, 0))
           * sC[None, None, None, :]).astype(jnp.bfloat16)                    # (3,3,in,out)
    tC2 = (tC + sC * params['bB']).reshape(1, -1).astype(jnp.float32)
    wC2 = params['wC'].T.astype(jnp.bfloat16)                                 # (mid, cout)
    sAr = sA.reshape(1, -1)
    tAr = tA.reshape(1, -1)
    if has_branch:
        sR, tR = _fold_bn(params['bnR'])
        wR2 = params['wR'].T.astype(jnp.bfloat16)                             # (cin, cout)
        bO = (params['bC'] + params['bR']).reshape(1, -1).astype(jnp.float32)
    else:
        bO = params['bC'].reshape(1, -1).astype(jnp.float32)

    # ---- NCHW -> zero-padded NHWC (bf16) at the aligned pitch, gathered into per-tile
    #      halo slabs (no duplication when n_h == 1).
    # TODO(synk): for very large images a manual make_async_copy of the slab from a
    #             memory_space=pl.ANY x would avoid the extra wrapper-side halo copy.
    x_nhwc = jnp.transpose(x_nchw, (0, 2, 3, 1)).astype(jnp.bfloat16)
    xp = jnp.pad(x_nhwc, ((0, 0), (1, 1), (1, pitch - 1 - W), (0, 0)))   # (N, H+2, pitch, cin)
    xslab = jnp.stack([xp[:, h * tile_h: h * tile_h + tile_h + 2]
                       for h in range(n_h)], axis=1).reshape(N, n_h, SLAB, Cin)

    # 1.0 at real pixels, 0.0 on the zero-padding ring / extra pitch columns.
    rr = jnp.arange(H + 2)
    cc = jnp.arange(pitch)
    interior = (((rr >= 1) & (rr <= H))[:, None]
                & ((cc >= 1) & (cc <= W))[None, :]).astype(jnp.float32)  # (H+2, pitch)
    mslab = jnp.stack([interior[h * tile_h: h * tile_h + tile_h + 2]
                       for h in range(n_h)], axis=0).reshape(n_h, SLAB, 1)

    def const_spec(shape):
        nd = len(shape)
        return pl.BlockSpec(shape, lambda n, h, _nd=nd: (0,) * _nd)

    in_specs = [
        pl.BlockSpec((1, 1, SLAB, Cin), lambda n, h: (n, h, 0, 0)),   # per-tile x slab
        pl.BlockSpec((1, SLAB, 1), lambda n, h: (h, 0, 0)),           # per-tile pad mask
        const_spec((1, Cin)), const_spec((1, Cin)),
        const_spec((Cin, mid)), const_spec((1, mid)),
        const_spec((3, 3, mid, mid)), const_spec((1, mid)),
        const_spec((mid, num_out)), const_spec((1, num_out)),
    ]
    args = [xslab, mslab, sAr, tAr, wA2, tB2, wB2, tC2, wC2, bO]
    if has_branch:
        in_specs += [const_spec((1, Cin)), const_spec((1, Cin)),
                     const_spec((Cin, num_out))]
        args += [sR.reshape(1, -1), tR.reshape(1, -1), wR2]

    rows = N * H * W
    flops = 2 * rows * (Cin * mid + 9 * mid * mid + mid * num_out
                        + (Cin * num_out if has_branch else 0))
    bytes_accessed = (2 * (xslab.size + N * n_h * TW * num_out
                           + Cin * mid + 9 * mid * mid + mid * num_out
                           + (Cin * num_out if has_branch else 0))
                      + 4 * mslab.size)

    cp_kwargs = dict(dimension_semantics=("parallel", "parallel"))
    if limit is not None:
        cp_kwargs["vmem_limit_bytes"] = int(limit)

    out_pad = pl.pallas_call(
        _make_residual_kernel(pitch, tile_h, mid, has_branch),
        out_shape=jax.ShapeDtypeStruct((N, n_h, TW, num_out), jnp.bfloat16),
        grid=(N, n_h),
        in_specs=in_specs,
        out_specs=pl.BlockSpec((1, 1, TW, num_out), lambda n, h: (n, h, 0, 0)),
        scratch_shapes=[pltpu.VMEM((SLAB + 2 * _PAD, mid), jnp.float32)],
        compiler_params=pltpu.CompilerParams(**cp_kwargs),
        cost_estimate=pl.CostEstimate(flops=flops, transcendentals=0,
                                      bytes_accessed=bytes_accessed),
    )(*args)

    # Crop the padded/extra columns and return to NCHW (consumers that accept NHWC
    # should take out_pad directly to skip this relayout).
    out_nhwc = out_pad.reshape(N, H, pitch, num_out)[:, :, 1:W + 1, :]
    return jnp.transpose(out_nhwc, (0, 3, 1, 2)).astype(jnp.float32)


# --------------------------------------------------------------------------------------
# Pure-JAX f32 reference (NCHW, mirrors the PyTorch forward in eval mode)
# --------------------------------------------------------------------------------------
def residual_reference(x, params, num_in, num_out):
    def bn_relu(h, bn):
        g, b, m, v = bn
        h = (h - m[None, :, None, None]) / jnp.sqrt(v[None, :, None, None] + _EPS)
        h = h * g[None, :, None, None] + b[None, :, None, None]
        return jnp.maximum(h, 0.0)

    def conv1x1(h, w, b):
        return jnp.einsum('nchw,oc->nohw', h, w) + b[None, :, None, None]

    def conv3x3(h, w, b):
        return jax.lax.conv_general_dilated(
            h, w, window_strides=(1, 1), padding=((1, 1), (1, 1)),
            dimension_numbers=('NCHW', 'OIHW', 'NCHW')) + b[None, :, None, None]

    main = conv1x1(bn_relu(x, params['bnA']), params['wA'], params['bA'])
    main = conv3x3(bn_relu(main, params['bnB']), params['wB'], params['bB'])
    main = conv1x1(bn_relu(main, params['bnC']), params['wC'], params['bC'])
    if num_in != num_out:
        res = conv1x1(bn_relu(x, params['bnR']), params['wR'], params['bR'])
    else:
        res = x
    return main + res


if __name__ == "__main__":
    N, H, W = 2, 16, 16
    key = jax.random.PRNGKey(0)
    for num_in, num_out in [(4, 8),    # numIn != numOut -> projection shortcut
                            (8, 8)]:   # numIn == numOut -> identity shortcut
        key, kx, kp = jax.random.split(key, 3)
        x = jax.random.normal(kx, (N, num_in, H, W), jnp.float32)
        params = init_params(kp, num_in, num_out)

        out = jax.block_until_ready(residual_forward(x, params, num_in, num_out))
        ref = residual_reference(x, params, num_in, num_out)

        assert out.shape == (N, num_out, H, W), out.shape
        # Looser tolerance than the f32 version: activations/weights are stored in bf16
        # (f32 MXU accumulation), per the performance review.
        if not bool(jnp.allclose(out, ref, rtol=5e-2, atol=1e-1)):
            err = float(jnp.max(jnp.abs(out - ref)))
            raise AssertionError(
                f"Pallas output mismatch for (numIn={num_in}, numOut={num_out}): "
                f"max abs err {err}")

    print("KERNEL_OK")
</pallas_src>

<mosaic_0001>
module attributes {stable_mosaic.version = 11 : i64} {
  func.func @kernel(%arg0: i32, %arg1: i32, %arg2: memref<1x1x432x4xbf16, #tpu.memory_space<vmem>>, %arg3: memref<1x432x1xf32, #tpu.memory_space<vmem>>, %arg4: memref<1x4xf32, #tpu.memory_space<vmem>>, %arg5: memref<1x4xf32, #tpu.memory_space<vmem>>, %arg6: memref<4x4xbf16, #tpu.memory_space<vmem>>, %arg7: memref<1x4xf32, #tpu.memory_space<vmem>>, %arg8: memref<3x3x4x4xbf16, #tpu.memory_space<vmem>>, %arg9: memref<1x4xf32, #tpu.memory_space<vmem>>, %arg10: memref<4x8xbf16, #tpu.memory_space<vmem>>, %arg11: memref<1x8xf32, #tpu.memory_space<vmem>>, %arg12: memref<1x4xf32, #tpu.memory_space<vmem>>, %arg13: memref<1x4xf32, #tpu.memory_space<vmem>>, %arg14: memref<4x8xbf16, #tpu.memory_space<vmem>>, %arg15: memref<1x1x384x8xbf16, #tpu.memory_space<vmem>>, %arg16: memref<448x4xf32, #tpu.memory_space<vmem>>) attributes {dimension_semantics = [#tpu.dimension_semantics<parallel>, #tpu.dimension_semantics<parallel>], iteration_bounds = array<i64: 2, 1>, scalar_prefetch = 0 : i64, scratch_operands = 1 : i64, tpu.core_type = #tpu.core_type<tc>, window_params = [{transform_indices = @transform_0, window_bounds = array<i64: 1, 1, 432, 4>}, {transform_indices = @transform_1, window_bounds = array<i64: 1, 432, 1>}, {pipeline_mode = #tpu.pipeline_mode<synchronous>, transform_indices = @transform_2, window_bounds = array<i64: 1, 4>}, {pipeline_mode = #tpu.pipeline_mode<synchronous>, transform_indices = @transform_3, window_bounds = array<i64: 1, 4>}, {pipeline_mode = #tpu.pipeline_mode<synchronous>, transform_indices = @transform_4, window_bounds = array<i64: 4, 4>}, {pipeline_mode = #tpu.pipeline_mode<synchronous>, transform_indices = @transform_5, window_bounds = array<i64: 1, 4>}, {pipeline_mode = #tpu.pipeline_mode<synchronous>, transform_indices = @transform_6, window_bounds = array<i64: 3, 3, 4, 4>}, {pipeline_mode = #tpu.pipeline_mode<synchronous>, transform_indices = @transform_7, window_bounds = array<i64: 1, 4>}, {pipeline_mode = #tpu.pipeline_mode<synchronous>, transform_indices = @transform_8, window_bounds = array<i64: 4, 8>}, {pipeline_mode = #tpu.pipeline_mode<synchronous>, transform_indices = @transform_9, window_bounds = array<i64: 1, 8>}, {pipeline_mode = #tpu.pipeline_mode<synchronous>, transform_indices = @transform_10, window_bounds = array<i64: 1, 4>}, {pipeline_mode = #tpu.pipeline_mode<synchronous>, transform_indices = @transform_11, window_bounds = array<i64: 1, 4>}, {pipeline_mode = #tpu.pipeline_mode<synchronous>, transform_indices = @transform_12, window_bounds = array<i64: 4, 8>}, {transform_indices = @transform_13, window_bounds = array<i64: 1, 1, 384, 8>}]} {
    %c0 = arith.constant 0 : index
    %c0_0 = arith.constant 0 : index
    %c0_1 = arith.constant 0 : index
    %c0_2 = arith.constant 0 : index
    %0 = vector.load %arg2[%c0, %c0_0, %c0_1, %c0_2] : memref<1x1x432x4xbf16, #tpu.memory_space<vmem>>, vector<1x1x432x4xbf16>
    %1 = vector.shape_cast %0 : vector<1x1x432x4xbf16> to vector<432x4xbf16>
    %2 = arith.extf %1 : vector<432x4xbf16> to vector<432x4xf32>
    %c0_3 = arith.constant 0 : index
    %c0_4 = arith.constant 0 : index
    %c0_5 = arith.constant 0 : index
    %3 = vector.load %arg3[%c0_3, %c0_4, %c0_5] : memref<1x432x1xf32, #tpu.memory_space<vmem>>, vector<1x432x1xf32>
    %4 = vector.shape_cast %3 : vector<1x432x1xf32> to vector<432x1xf32>
    %c0_6 = arith.constant 0 : index
    %c0_7 = arith.constant 0 : index
    %5 = vector.load %arg4[%c0_6, %c0_7] : memref<1x4xf32, #tpu.memory_space<vmem>>, vector<1x4xf32>
    %6 = vector.broadcast %5 : vector<1x4xf32> to vector<432x4xf32>
    %7 = arith.mulf %2, %6 : vector<432x4xf32>
    %c0_8 = arith.constant 0 : index
    %c0_9 = arith.constant 0 : index
    %8 = vector.load %arg5[%c0_8, %c0_9] : memref<1x4xf32, #tpu.memory_space<vmem>>, vector<1x4xf32>
    %9 = vector.broadcast %8 : vector<1x4xf32> to vector<432x4xf32>
    %10 = arith.addf %7, %9 : vector<432x4xf32>
    %cst = arith.constant 0.000000e+00 : f32
    %11 = vector.broadcast %cst : f32 to vector<432x4xf32>
    %12 = arith.maximumf %10, %11 : vector<432x4xf32>
    %13 = arith.truncf %12 : vector<432x4xf32> to vector<432x4xbf16>
    %c0_10 = arith.constant 0 : index
    %c0_11 = arith.constant 0 : index
    %14 = vector.load %arg6[%c0_10, %c0_11] : memref<4x4xbf16, #tpu.memory_space<vmem>>, vector<4x4xbf16>
    %cst_12 = arith.constant dense<0.000000e+00> : vector<432x4xf32>
    %15 = tpu.matmul %13, %14, %cst_12 {dimension_numbers = #tpu.dot_dimension_numbers<[1], [0], [0], [1], [0, 0, 1, 1], [], []>} : vector<432x4xbf16>, vector<4x4xbf16>, vector<432x4xf32> -> vector<432x4xf32>
    %c0_13 = arith.constant 0 : index
    %c0_14 = arith.constant 0 : index
    %16 = vector.load %arg7[%c0_13, %c0_14] : memref<1x4xf32, #tpu.memory_space<vmem>>, vector<1x4xf32>
    %17 = vector.broadcast %16 : vector<1x4xf32> to vector<432x4xf32>
    %18 = arith.addf %15, %17 : vector<432x4xf32>
    %cst_15 = arith.constant 0.000000e+00 : f32
    %19 = vector.broadcast %cst_15 : f32 to vector<432x4xf32>
    %20 = arith.maximumf %18, %19 : vector<432x4xf32>
    %21 = vector.broadcast %4 : vector<432x1xf32> to vector<432x4xf32>
    %22 = arith.mulf %20, %21 : vector<432x4xf32>
    %cst_16 = arith.constant 0.000000e+00 : f32
    %23 = vector.broadcast %cst_16 : f32 to vector<8x4xf32>
    %c0_17 = arith.constant 0 : index
    %c0_18 = arith.constant 0 : index
    %24 = vector.load %arg16[%c0_17, %c0_18] : memref<448x4xf32, #tpu.memory_space<vmem>>, vector<8x4xf32>
    tpu.vector_store %arg16[%c0_17, %c0_18], %23 {strides = array<i32>} : memref<448x4xf32, #tpu.memory_space<vmem>>, vector<8x4xf32>,
    %cst_19 = arith.constant 0.000000e+00 : f32
    %25 = vector.broadcast %cst_19 : f32 to vector<8x4xf32>
    %c440 = arith.constant 440 : index
    %c0_20 = arith.constant 0 : index
    %26 = vector.load %arg16[%c440, %c0_20] : memref<448x4xf32, #tpu.memory_space<vmem>>, vector<8x4xf32>
    tpu.vector_store %arg16[%c440, %c0_20], %25 {strides = array<i32>} : memref<448x4xf32, #tpu.memory_space<vmem>>, vector<8x4xf32>,
    %c8 = arith.constant 8 : index
    %c0_21 = arith.constant 0 : index
    %27 = vector.load %arg16[%c8, %c0_21] : memref<448x4xf32, #tpu.memory_space<vmem>>, vector<432x4xf32>
    tpu.vector_store %arg16[%c8, %c0_21], %22 {strides = array<i32>} : memref<448x4xf32, #tpu.memory_space<vmem>>, vector<432x4xf32>,
    %cst_22 = arith.constant 0.000000e+00 : f32
    %28 = vector.broadcast %cst_22 : f32 to vector<384x4xf32>
    %c7 = arith.constant 7 : index
    %c0_23 = arith.constant 0 : index
    %29 = vector.load %arg16[%c7, %c0_23] : memref<448x4xf32, #tpu.memory_space<vmem>>, vector<384x4xf32>
    %30 = arith.truncf %29 : vector<384x4xf32> to vector<384x4xbf16>
    %c0_24 = arith.constant 0 : index
    %c0_25 = arith.constant 0 : index
    %c0_26 = arith.constant 0 : index
    %c0_27 = arith.constant 0 : index
    %31 = vector.load %arg8[%c0_24, %c0_25, %c0_26, %c0_27] : memref<3x3x4x4xbf16, #tpu.memory_space<vmem>>, vector<1x1x4x4xbf16>
    %32 = vector.shape_cast %31 : vector<1x1x4x4xbf16> to vector<4x4xbf16>
    %cst_28 = arith.constant dense<0.000000e+00> : vector<384x4xf32>
    %33 = tpu.matmul %30, %32, %cst_28 {dimension_numbers = #tpu.dot_dimension_numbers<[1], [0], [0], [1], [0, 0, 1, 1], [], []>} : vector<384x4xbf16>, vector<4x4xbf16>, vector<384x4xf32> -> vector<384x4xf32>
    %34 = arith.addf %28, %33 : vector<384x4xf32>
    %c8_29 = arith.constant 8 : index
    %c0_30 = arith.constant 0 : index
    %35 = vector.load %arg16[%c8_29, %c0_30] : memref<448x4xf32, #tpu.memory_space<vmem>>, vector<384x4xf32>
    %36 = arith.truncf %35 : vector<384x4xf32> to vector<384x4xbf16>
    %c0_31 = arith.constant 0 : index
    %c1 = arith.constant 1 : index
    %c0_32 = arith.constant 0 : index
    %c0_33 = arith.constant 0 : index
    %37 = vector.load %arg8[%c0_31, %c1, %c0_32, %c0_33] : memref<3x3x4x4xbf16, #tpu.memory_space<vmem>>, vector<1x1x4x4xbf16>
    %38 = vector.shape_cast %37 : vector<1x1x4x4xbf16> to vector<4x4xbf16>
    %cst_34 = arith.constant dense<0.000000e+00> : vector<384x4xf32>
    %39 = tpu.matmul %36, %38, %cst_34 {dimension_numbers = #tpu.dot_dimension_numbers<[1], [0], [0], [1], [0, 0, 1, 1], [], []>} : vector<384x4xbf16>, vector<4x4xbf16>, vector<384x4xf32> -> vector<384x4xf32>
    %40 = arith.addf %34, %39 : vector<384x4xf32>
    %c9 = arith.constant 9 : index
    %c0_35 = arith.constant 0 : index
    %41 = vector.load %arg16[%c9, %c0_35] : memref<448x4xf32, #tpu.memory_space<vmem>>, vector<384x4xf32>
    %42 = arith.truncf %41 : vector<384x4xf32> to vector<384x4xbf16>
    %c0_36 = arith.constant 0 : index
    %c2 = arith.constant 2 : index
    %c0_37 = arith.constant 0 : index
    %c0_38 = arith.constant 0 : index
    %43 = vector.load %arg8[%c0_36, %c2, %c0_37, %c0_38] : memref<3x3x4x4xbf16, #tpu.memory_space<vmem>>, vector<1x1x4x4xbf16>
    %44 = vector.shape_cast %43 : vector<1x1x4x4xbf16> to vector<4x4xbf16>
    %cst_39 = arith.constant dense<0.000000e+00> : vector<384x4xf32>
    %45 = tpu.matmul %42, %44, %cst_39 {dimension_numbers = #tpu.dot_dimension_numbers<[1], [0], [0], [1], [0, 0, 1, 1], [], []>} : vector<384x4xbf16>, vector<4x4xbf16>, vector<384x4xf32> -> vector<384x4xf32>
    %46 = arith.addf %40, %45 : vector<384x4xf32>
    %c31 = arith.constant 31 : index
    %c0_40 = arith.constant 0 : index
    %47 = vector.load %arg16[%c31, %c0_40] : memref<448x4xf32, #tpu.memory_space<vmem>>, vector<384x4xf32>
    %48 = arith.truncf %47 : vector<384x4xf32> to vector<384x4xbf16>
    %c1_41 = arith.constant 1 : index
    %c0_42 = arith.constant 0 : index
    %c0_43 = arith.constant 0 : index
    %c0_44 = arith.constant 0 : index
    %49 = vector.load %arg8[%c1_41, %c0_42, %c0_43, %c0_44] : memref<3x3x4x4xbf16, #tpu.memory_space<vmem>>, vector<1x1x4x4xbf16>
    %50 = vector.shape_cast %49 : vector<1x1x4x4xbf16> to vector<4x4xbf16>
    %cst_45 = arith.constant dense<0.000000e+00> : vector<384x4xf32>
    %51 = tpu.matmul %48, %50, %cst_45 {dimension_numbers = #tpu.dot_dimension_numbers<[1], [0], [0], [1], [0, 0, 1, 1], [], []>} : vector<384x4xbf16>, vector<4x4xbf16>, vector<384x4xf32> -> vector<384x4xf32>
    %52 = arith.addf %46, %51 : vector<384x4xf32>
    %c32 = arith.constant 32 : index
    %c0_46 = arith.constant 0 : index
    %53 = vector.load %arg16[%c32, %c0_46] : memref<448x4xf32, #tpu.memory_space<vmem>>, vector<384x4xf32>
    %54 = arith.truncf %53 : vector<384x4xf32> to vector<384x4xbf16>
    %c1_47 = arith.constant 1 : index
    %c1_48 = arith.constant 1 : index
    %c0_49 = arith.constant 0 : index
    %c0_50 = arith.constant 0 : index
    %55 = vector.load %arg8[%c1_47, %c1_48, %c0_49, %c0_50] : memref<3x3x4x4xbf16, #tpu.memory_space<vmem>>, vector<1x1x4x4xbf16>
    %56 = vector.shape_cast %55 : vector<1x1x4x4xbf16> to vector<4x4xbf16>
    %cst_51 = arith.constant dense<0.000000e+00> : vector<384x4xf32>
    %57 = tpu.matmul %54, %56, %cst_51 {dimension_numbers = #tpu.dot_dimension_numbers<[1], [0], [0], [1], [0, 0, 1, 1], [], []>} : vector<384x4xbf16>, vector<4x4xbf16>, vector<384x4xf32> -> vector<384x4xf32>
    %58 = arith.addf %52, %57 : vector<384x4xf32>
    %c33 = arith.constant 33 : index
    %c0_52 = arith.constant 0 : index
    %59 = vector.load %arg16[%c33, %c0_52] : memref<448x4xf32, #tpu.memory_space<vmem>>, vector<384x4xf32>
    %60 = arith.truncf %59 : vector<384x4xf32> to vector<384x4xbf16>
    %c1_53 = arith.constant 1 : index
    %c2_54 = arith.constant 2 : index
    %c0_55 = arith.constant 0 : index
    %c0_56 = arith.constant 0 : index
    %61 = vector.load %arg8[%c1_53, %c2_54, %c0_55, %c0_56] : memref<3x3x4x4xbf16, #tpu.memory_space<vmem>>, vector<1x1x4x4xbf16>
    %62 = vector.shape_cast %61 : vector<1x1x4x4xbf16> to vector<4x4xbf16>
    %cst_57 = arith.constant dense<0.000000e+00> : vector<384x4xf32>
    %63 = tpu.matmul %60, %62, %cst_57 {dimension_numbers = #tpu.dot_dimension_numbers<[1], [0], [0], [1], [0, 0, 1, 1], [], []>} : vector<384x4xbf16>, vector<4x4xbf16>, vector<384x4xf32> -> vector<384x4xf32>
    %64 = arith.addf %58, %63 : vector<384x4xf32>
    %c55 = arith.constant 55 : index
    %c0_58 = arith.constant 0 : index
    %65 = vector.load %arg16[%c55, %c0_58] : memref<448x4xf32, #tpu.memory_space<vmem>>, vector<384x4xf32>
    %66 = arith.truncf %65 : vector<384x4xf32> to vector<384x4xbf16>
    %c2_59 = arith.constant 2 : index
    %c0_60 = arith.constant 0 : index
    %c0_61 = arith.constant 0 : index
    %c0_62 = arith.constant 0 : index
    %67 = vector.load %arg8[%c2_59, %c0_60, %c0_61, %c0_62] : memref<3x3x4x4xbf16, #tpu.memory_space<vmem>>, vector<1x1x4x4xbf16>
    %68 = vector.shape_cast %67 : vector<1x1x4x4xbf16> to vector<4x4xbf16>
    %cst_63 = arith.constant dense<0.000000e+00> : vector<384x4xf32>
    %69 = tpu.matmul %66, %68, %cst_63 {dimension_numbers = #tpu.dot_dimension_numbers<[1], [0], [0], [1], [0, 0, 1, 1], [], []>} : vector<384x4xbf16>, vector<4x4xbf16>, vector<384x4xf32> -> vector<384x4xf32>
    %70 = arith.addf %64, %69 : vector<384x4xf32>
    %c56 = arith.constant 56 : index
    %c0_64 = arith.constant 0 : index
    %71 = vector.load %arg16[%c56, %c0_64] : memref<448x4xf32, #tpu.memory_space<vmem>>, vector<384x4xf32>
    %72 = arith.truncf %71 : vector<384x4xf32> to vector<384x4xbf16>
    %c2_65 = arith.constant 2 : index
    %c1_66 = arith.constant 1 : index
    %c0_67 = arith.constant 0 : index
    %c0_68 = arith.constant 0 : index
    %73 = vector.load %arg8[%c2_65, %c1_66, %c0_67, %c0_68] : memref<3x3x4x4xbf16, #tpu.memory_space<vmem>>, vector<1x1x4x4xbf16>
    %74 = vector.shape_cast %73 : vector<1x1x4x4xbf16> to vector<4x4xbf16>
    %cst_69 = arith.constant dense<0.000000e+00> : vector<384x4xf32>
    %75 = tpu.matmul %72, %74, %cst_69 {dimension_numbers = #tpu.dot_dimension_numbers<[1], [0], [0], [1], [0, 0, 1, 1], [], []>} : vector<384x4xbf16>, vector<4x4xbf16>, vector<384x4xf32> -> vector<384x4xf32>
    %76 = arith.addf %70, %75 : vector<384x4xf32>
    %c57 = arith.constant 57 : index
    %c0_70 = arith.constant 0 : index
    %77 = vector.load %arg16[%c57, %c0_70] : memref<448x4xf32, #tpu.memory_space<vmem>>, vector<384x4xf32>
    %78 = arith.truncf %77 : vector<384x4xf32> to vector<384x4xbf16>
    %c2_71 = arith.constant 2 : index
    %c2_72 = arith.constant 2 : index
    %c0_73 = arith.constant 0 : index
    %c0_74 = arith.constant 0 : index
    %79 = vector.load %arg8[%c2_71, %c2_72, %c0_73, %c0_74] : memref<3x3x4x4xbf16, #tpu.memory_space<vmem>>, vector<1x1x4x4xbf16>
    %80 = vector.shape_cast %79 : vector<1x1x4x4xbf16> to vector<4x4xbf16>
    %cst_75 = arith.constant dense<0.000000e+00> : vector<384x4xf32>
    %81 = tpu.matmul %78, %80, %cst_75 {dimension_numbers = #tpu.dot_dimension_numbers<[1], [0], [0], [1], [0, 0, 1, 1], [], []>} : vector<384x4xbf16>, vector<4x4xbf16>, vector<384x4xf32> -> vector<384x4xf32>
    %82 = arith.addf %76, %81 : vector<384x4xf32>
    %c0_76 = arith.constant 0 : index
    %c0_77 = arith.constant 0 : index
    %83 = vector.load %arg9[%c0_76, %c0_77] : memref<1x4xf32, #tpu.memory_space<vmem>>, vector<1x4xf32>
    %84 = vector.broadcast %83 : vector<1x4xf32> to vector<384x4xf32>
    %85 = arith.addf %82, %84 : vector<384x4xf32>
    %cst_78 = arith.constant 0.000000e+00 : f32
    %86 = vector.broadcast %cst_78 : f32 to vector<384x4xf32>
    %87 = arith.maximumf %85, %86 : vector<384x4xf32>
    %88 = arith.truncf %87 : vector<384x4xf32> to vector<384x4xbf16>
    %c0_79 = arith.constant 0 : index
    %c0_80 = arith.constant 0 : index
    %89 = vector.load %arg10[%c0_79, %c0_80] : memref<4x8xbf16, #tpu.memory_space<vmem>>, vector<4x8xbf16>
    %cst_81 = arith.constant dense<0.000000e+00> : vector<384x8xf32>
    %90 = tpu.matmul %88, %89, %cst_81 {dimension_numbers = #tpu.dot_dimension_numbers<[1], [0], [0], [1], [0, 0, 1, 1], [], []>} : vector<384x4xbf16>, vector<4x8xbf16>, vector<384x8xf32> -> vector<384x8xf32>
    %c0_82 = arith.constant 0 : index
    %c0_83 = arith.constant 0 : index
    %91 = vector.load %arg11[%c0_82, %c0_83] : memref<1x8xf32, #tpu.memory_space<vmem>>, vector<1x8xf32>
    %92 = vector.broadcast %91 : vector<1x8xf32> to vector<384x8xf32>
    %93 = arith.addf %90, %92 : vector<384x8xf32>
    %94 = vector.extract_strided_slice %2 {offsets = [24, 0], sizes = [384, 4], strides = [1, 1]} : vector<432x4xf32> to vector<384x4xf32>
    %c0_84 = arith.constant 0 : index
    %c0_85 = arith.constant 0 : index
    %95 = vector.load %arg12[%c0_84, %c0_85] : memref<1x4xf32, #tpu.memory_space<vmem>>, vector<1x4xf32>
    %96 = vector.broadcast %95 : vector<1x4xf32> to vector<384x4xf32>
    %97 = arith.mulf %94, %96 : vector<384x4xf32>
    %c0_86 = arith.constant 0 : index
    %c0_87 = arith.constant 0 : index
    %98 = vector.load %arg13[%c0_86, %c0_87] : memref<1x4xf32, #tpu.memory_space<vmem>>, vector<1x4xf32>
    %99 = vector.broadcast %98 : vector<1x4xf32> to vector<384x4xf32>
    %100 = arith.addf %97, %99 : vector<384x4xf32>
    %cst_88 = arith.constant 0.000000e+00 : f32
    %101 = vector.broadcast %cst_88 : f32 to vector<384x4xf32>
    %102 = arith.maximumf %100, %101 : vector<384x4xf32>
    %103 = arith.truncf %102 : vector<384x4xf32> to vector<384x4xbf16>
    %c0_89 = arith.constant 0 : index
    %c0_90 = arith.constant 0 : index
    %104 = vector.load %arg14[%c0_89, %c0_90] : memref<4x8xbf16, #tpu.memory_space<vmem>>, vector<4x8xbf16>
    %cst_91 = arith.constant dense<0.000000e+00> : vector<384x8xf32>
    %105 = tpu.matmul %103, %104, %cst_91 {dimension_numbers = #tpu.dot_dimension_numbers<[1], [0], [0], [1], [0, 0, 1, 1], [], []>} : vector<384x4xbf16>, vector<4x8xbf16>, vector<384x8xf32> -> vector<384x8xf32>
    %106 = arith.addf %93, %105 : vector<384x8xf32>
    %107 = arith.truncf %106 : vector<384x8xf32> to vector<384x8xbf16>
    %c0_92 = arith.constant 0 : index
    %c0_93 = arith.constant 0 : index
    %c0_94 = arith.constant 0 : index
    %c0_95 = arith.constant 0 : index
    %108 = vector.load %arg15[%c0_92, %c0_93, %c0_94, %c0_95] : memref<1x1x384x8xbf16, #tpu.memory_space<vmem>>, vector<1x1x384x8xbf16>
    %109 = vector.shape_cast %108 : vector<1x1x384x8xbf16> to vector<384x8xbf16>
    %110 = vector.shape_cast %107 : vector<384x8xbf16> to vector<1x1x384x8xbf16>
    tpu.vector_store %arg15[%c0_92, %c0_93, %c0_94, %c0_95], %110 {strides = array<i32>} : memref<1x1x384x8xbf16, #tpu.memory_space<vmem>>, vector<1x1x384x8xbf16>,
    return
  }
  func.func @transform_0(%arg0: i32, %arg1: i32) -> (i32, i32, i32, i32) {
    %c0_i32 = arith.constant 0 : i32
    %c0_i32_0 = arith.constant 0 : i32
    %c0_i32_1 = arith.constant 0 : i32
    return %arg0, %arg1, %c0_i32, %c0_i32_0 : i32, i32, i32, i32
  }
  func.func @transform_1(%arg0: i32, %arg1: i32) -> (i32, i32, i32) {
    %c0_i32 = arith.constant 0 : i32
    %c0_i32_0 = arith.constant 0 : i32
    %c0_i32_1 = arith.constant 0 : i32
    return %arg1, %c0_i32, %c0_i32_0 : i32, i32, i32
  }
  func.func @transform_2(%arg0: i32, %arg1: i32) -> (i32, i32) {
    %c0_i32 = arith.constant 0 : i32
    %c0_i32_0 = arith.constant 0 : i32
    %c0_i32_1 = arith.constant 0 : i32
    return %c0_i32, %c0_i32_0 : i32, i32
  }
  func.func @transform_3(%arg0: i32, %arg1: i32) -> (i32, i32) {
    %c0_i32 = arith.constant 0 : i32
    %c0_i32_0 = arith.constant 0 : i32
    %c0_i32_1 = arith.constant 0 : i32
    return %c0_i32, %c0_i32_0 : i32, i32
  }
  func.func @transform_4(%arg0: i32, %arg1: i32) -> (i32, i32) {
    %c0_i32 = arith.constant 0 : i32
    %c0_i32_0 = arith.constant 0 : i32
    %c0_i32_1 = arith.constant 0 : i32
    return %c0_i32, %c0_i32_0 : i32, i32
  }
  func.func @transform_5(%arg0: i32, %arg1: i32) -> (i32, i32) {
    %c0_i32 = arith.constant 0 : i32
    %c0_i32_0 = arith.constant 0 : i32
    %c0_i32_1 = arith.constant 0 : i32
    return %c0_i32, %c0_i32_0 : i32, i32
  }
  func.func @transform_6(%arg0: i32, %arg1: i32) -> (i32, i32, i32, i32) {
    %c0_i32 = arith.constant 0 : i32
    %c0_i32_0 = arith.constant 0 : i32
    %c0_i32_1 = arith.constant 0 : i32
    %c0_i32_2 = arith.constant 0 : i32
    %c0_i32_3 = arith.constant 0 : i32
    return %c0_i32, %c0_i32_0, %c0_i32_1, %c0_i32_2 : i32, i32, i32, i32
  }
  func.func @transform_7(%arg0: i32, %arg1: i32) -> (i32, i32) {
    %c0_i32 = arith.constant 0 : i32
    %c0_i32_0 = arith.constant 0 : i32
    %c0_i32_1 = arith.constant 0 : i32
    return %c0_i32, %c0_i32_0 : i32, i32
  }
  func.func @transform_8(%arg0: i32, %arg1: i32) -> (i32, i32) {
    %c0_i32 = arith.constant 0 : i32
    %c0_i32_0 = arith.constant 0 : i32
    %c0_i32_1 = arith.constant 0 : i32
    return %c0_i32, %c0_i32_0 : i32, i32
  }
  func.func @transform_9(%arg0: i32, %arg1: i32) -> (i32, i32) {
    %c0_i32 = arith.constant 0 : i32
    %c0_i32_0 = arith.constant 0 : i32
    %c0_i32_1 = arith.constant 0 : i32
    return %c0_i32, %c0_i32_0 : i32, i32
  }
  func.func @transform_10(%arg0: i32, %arg1: i32) -> (i32, i32) {
    %c0_i32 = arith.constant 0 : i32
    %c0_i32_0 = arith.constant 0 : i32
    %c0_i32_1 = arith.constant 0 : i32
    return %c0_i32, %c0_i32_0 : i32, i32
  }
  func.func @transform_11(%arg0: i32, %arg1: i32) -> (i32, i32) {
    %c0_i32 = arith.constant 0 : i32
    %c0_i32_0 = arith.constant 0 : i32
    %c0_i32_1 = arith.constant 0 : i32
    return %c0_i32, %c0_i32_0 : i32, i32
  }
  func.func @transform_12(%arg0: i32, %arg1: i32) -> (i32, i32) {
    %c0_i32 = arith.constant 0 : i32
    %c0_i32_0 = arith.constant 0 : i32
    %c0_i32_1 = arith.constant 0 : i32
    return %c0_i32, %c0_i32_0 : i32, i32
  }
  func.func @transform_13(%arg0: i32, %arg1: i32) -> (i32, i32, i32, i32) {
    %c0_i32 = arith.constant 0 : i32
    %c0_i32_0 = arith.constant 0 : i32
    %c0_i32_1 = arith.constant 0 : i32
    return %arg0, %arg1, %c0_i32, %c0_i32_0 : i32, i32, i32, i32
  }
}

</mosaic_0001>

<llo_original>
// kernel: residual_forward.1
$region0: #{residual_forward.1}
  #allocation0 [shape = 'u32[]', space=smem, size = 0x4, offset = 0x4, fixed_abs, tag = 'smem constant byte address 0x4 - core index']
  #allocation1 [shape = 'u32[144,128]{1,0:T(1,128)}', space=vmem, size = 0x12000, scoped, tag = 'internal scratch']
  #allocation2 [shape = 'f32[448,4]{1,0:T(8,128)}', space=vmem, size = 0x38000, scoped, tag = 'scratch operand']
  %s0 = inlined_call_operand.vmem [shape: bf16[2,1,432,4], index: 0, kind: input, shape index: {}]
  %s1 = inlined_call_operand.vmem [shape: f32[1,432,1], index: 1, kind: input, shape index: {}]
  %s2 = inlined_call_operand.vmem [shape: f32[1,4], index: 2, kind: input, shape index: {}]
  %s3 = inlined_call_operand.vmem [shape: f32[1,4], index: 3, kind: input, shape index: {}]
  %s4 = inlined_call_operand.vmem [shape: bf16[4,4], index: 4, kind: input, shape index: {}]
  %s5 = inlined_call_operand.vmem [shape: f32[1,4], index: 5, kind: input, shape index: {}]
  %s6 = inlined_call_operand.vmem [shape: bf16[3,3,4,4], index: 6, kind: input, shape index: {}]
  %s7 = inlined_call_operand.vmem [shape: f32[1,4], index: 7, kind: input, shape index: {}]
  %s8 = inlined_call_operand.vmem [shape: bf16[4,8], index: 8, kind: input, shape index: {}]
  %s9 = inlined_call_operand.vmem [shape: f32[1,8], index: 9, kind: input, shape index: {}]
  %s10 = inlined_call_operand.vmem [shape: f32[1,4], index: 10, kind: input, shape index: {}]
  %s11 = inlined_call_operand.vmem [shape: f32[1,4], index: 11, kind: input, shape index: {}]
  %s12 = inlined_call_operand.vmem [shape: bf16[4,8], index: 12, kind: input, shape index: {}]
  %s13 = inlined_call_operand.vmem [shape: bf16[2,1,384,8], index: 13, kind: output, shape index: {}]
  %s14 = sld [smem:[#allocation0]]
  $region85: #{residual_forward.1} parent=0
    _
  %s16 = ssub.s32 1, %s14
  %s17 = scalar_select 0, %s16, %s14
  loop: start=0, step=1, limit=4
  $region2: #{residual_forward.1} parent=0 // loop_pre_header
    _
  $region3: #{residual_forward.1} parent=0 // loop_header
    %s19 = sphi 0, %s23
    %p20 = scmp.ge.s32.totalorder %s19, 4
    %s26 = sphi 0, %s38
    %s27 = sphi 0, %s34
    %s28 = sphi 0, %s26
    %s29 = sphi 0, %s27
    %s30 = sphi 0, %s28
    %s31 = sphi 0, %s29
    %s43 = sphi 0, %s45
    %s46 = sphi 0, %s43
    %s47 = sphi 0, %s46
    %s63 = sphi 0, %s47
    %s69 = sphi 0, %s71
    %s72 = sphi 0, %s69
    %s73 = sphi 0, %s72
    %s89 = sphi 0, %s73
    %s93 = sphi 0, %s93
    %s95 = sphi 0, %s93
    %s96 = sphi 0, %s95
    %s110 = sphi 0, %s96
    %s114 = sphi 0, %s114
    %s116 = sphi 0, %s114
    %s117 = sphi 0, %s116
    %s131 = sphi 0, %s117
    %s135 = sphi 0, %s135
    %s137 = sphi 0, %s135
    %s138 = sphi 0, %s137
    %s152 = sphi 0, %s138
    %s156 = sphi 0, %s156
    %s158 = sphi 0, %s156
    %s159 = sphi 0, %s158
    %s173 = sphi 0, %s159
    %s177 = sphi 0, %s177
    %s179 = sphi 0, %s177
    %s180 = sphi 0, %s179
    %s194 = sphi 0, %s180
    %s198 = sphi 0, %s198
    %s200 = sphi 0, %s198
    %s201 = sphi 0, %s200
    %s215 = sphi 0, %s201
    %s219 = sphi 0, %s219
    %s221 = sphi 0, %s219
    %s222 = sphi 0, %s221
    %s236 = sphi 0, %s222
    %s240 = sphi 0, %s240
    %s242 = sphi 0, %s240
    %s243 = sphi 0, %s242
    %s257 = sphi 0, %s243
    %s261 = sphi 0, %s261
    %s263 = sphi 0, %s261
    %s264 = sphi 0, %s263
    %s278 = sphi 0, %s264
    %s282 = sphi 0, %s282
    %s284 = sphi 0, %s282
    %s285 = sphi 0, %s284
    %s299 = sphi 0, %s285
    %s303 = sphi 0, %s303
    %s305 = sphi 0, %s303
    %s306 = sphi 0, %s305
    %s320 = sphi 0, %s306
    %s328 = sphi 0, %s330
    %s331 = sphi 0, %s328
    %s332 = sphi 0, %s331
    %s348 = sphi 0, %s332
  $region4: #{residual_forward.1} parent=0 // loop_header_branch
    %22 = sbr.rel (%p20) target = $region8
  $region5: #{residual_forward.1} parent=0 // loop_body
    %s24 = ssub.s32 %s19, 1
    %s25 = ssub.s32 %s19, 2
    %s32 = sadd.s32 1, %s27
    %p33 = scmp.ge.s32.totalorder %s32, 1
    %s34 = scalar_select %p33, 0, %s32
    %s35 = sadd.s32 1, %s26
    %s36 = scalar_select %p33, %s35, %s26
    %p37 = scmp.ge.s32.totalorder %s36, 2
    %s38 = scalar_select %p37, 0, %s36
    %s39 = ssub.s32 %s26, %s38
    %s40 = ssub.s32 %s27, %s34
    %s41 = sor.u32 %s39, %s40
    %p42 = scmp.eq.s32.totalorder %s41, 0
    %s44 = sadd.s32 %s43, 1
    %s45 = scalar_select %p42, %s43, %s44
    %p48 = pneg %p42
    %p49 = scmp.eq.s32.totalorder %s19, 1
    %p50 = por %p48, %p49
    %p51 = scmp.ne.s32.totalorder %s43, %s46
    %p52 = scmp.eq.s32.totalorder %s19, 0
    %p53 = por %p51, %p52
    %p54 = scmp.ne.s32.totalorder %s43, %s46
    %p55 = scmp.eq.s32.totalorder %s24, 1
    %p56 = por %p54, %p55
    %p57 = scmp.ne.s32.totalorder %s46, %s47
    %p58 = scmp.eq.s32.totalorder %s24, 0
    %p59 = por %p57, %p58
    %p60 = scmp.ne.s32.totalorder %s46, %s47
    %p61 = scmp.eq.s32.totalorder %s25, 1
    %p62 = por %p60, %p61
    %p64 = scmp.ne.s32.totalorder %s47, %s63
    %p65 = scmp.eq.s32.totalorder %s25, 0
    %p66 = por %p64, %p65
    %s67 = ssub.s32 %s27, %s34
    %p68 = scmp.eq.s32.totalorder %s67, 0
    %s70 = sadd.s32 %s69, 1
    %s71 = scalar_select %p68, %s69, %s70
    %p74 = pneg %p68
    %p75 = scmp.eq.s32.totalorder %s19, 1
    %p76 = por %p74, %p75
    %p77 = scmp.ne.s32.totalorder %s69, %s72
    %p78 = scmp.eq.s32.totalorder %s19, 0
    %p79 = por %p77, %p78
    %p80 = scmp.ne.s32.totalorder %s69, %s72
    %p81 = scmp.eq.s32.totalorder %s24, 1
    %p82 = por %p80, %p81
    %p83 = scmp.ne.s32.totalorder %s72, %s73
    %p84 = scmp.eq.s32.totalorder %s24, 0
    %p85 = por %p83, %p84
    %p86 = scmp.ne.s32.totalorder %s72, %s73
    %p87 = scmp.eq.s32.totalorder %s25, 1
    %p88 = por %p86, %p87
    %p90 = scmp.ne.s32.totalorder %s73, %s89
    %p91 = scmp.eq.s32.totalorder %s25, 0
    %p92 = por %p90, %p91
    %s94 = sadd.s32 %s93, 1
    %p97 = scmp.eq.s32.totalorder %s19, 1
    %p98 = scmp.ne.s32.totalorder %s93, %s95
    %p99 = scmp.eq.s32.totalorder %s19, 0
    %p100 = por %p98, %p99
    %p101 = scmp.ne.s32.totalorder %s93, %s95
    %p102 = scmp.eq.s32.totalorder %s24, 1
    %p103 = por %p101, %p102
    %p104 = scmp.ne.s32.totalorder %s95, %s96
    %p105 = scmp.eq.s32.totalorder %s24, 0
    %p106 = por %p104, %p105
    %p107 = scmp.ne.s32.totalorder %s95, %s96
    %p108 = scmp.eq.s32.totalorder %s25, 1
    %p109 = por %p107, %p108
    %p111 = scmp.ne.s32.totalorder %s96, %s110
    %p112 = scmp.eq.s32.totalorder %s25, 0
    %p113 = por %p111, %p112
    %s115 = sadd.s32 %s114, 1
    %p118 = scmp.eq.s32.totalorder %s19, 1
    %p119 = scmp.ne.s32.totalorder %s114, %s116
    %p120 = scmp.eq.s32.totalorder %s19, 0
    %p121 = por %p119, %p120
    %p122 = scmp.ne.s32.totalorder %s114, %s116
    %p123 = scmp.eq.s32.totalorder %s24, 1
    %p124 = por %p122, %p123
    %p125 = scmp.ne.s32.totalorder %s116, %s117
    %p126 = scmp.eq.s32.totalorder %s24, 0
    %p127 = por %p125, %p126
    %p128 = scmp.ne.s32.totalorder %s116, %s117
    %p129 = scmp.eq.s32.totalorder %s25, 1
    %p130 = por %p128, %p129
    %p132 = scmp.ne.s32.totalorder %s117, %s131
    %p133 = scmp.eq.s32.totalorder %s25, 0
    %p134 = por %p132, %p133
    %s136 = sadd.s32 %s135, 1
    %p139 = scmp.eq.s32.totalorder %s19, 1
    %p140 = scmp.ne.s32.totalorder %s135, %s137
    %p141 = scmp.eq.s32.totalorder %s19, 0
    %p142 = por %p140, %p141
    %p143 = scmp.ne.s32.totalorder %s135, %s137
    %p144 = scmp.eq.s32.totalorder %s24, 1
    %p145 = por %p143, %p144
    %p146 = scmp.ne.s32.totalorder %s137, %s138
    %p147 = scmp.eq.s32.totalorder %s24, 0
    %p148 = por %p146, %p147
    %p149 = scmp.ne.s32.totalorder %s137, %s138
    %p150 = scmp.eq.s32.totalorder %s25, 1
    %p151 = por %p149, %p150
    %p153 = scmp.ne.s32.totalorder %s138, %s152
    %p154 = scmp.eq.s32.totalorder %s25, 0
    %p155 = por %p153, %p154
    %s157 = sadd.s32 %s156, 1
    %p160 = scmp.eq.s32.totalorder %s19, 1
    %p161 = scmp.ne.s32.totalorder %s156, %s158
    %p162 = scmp.eq.s32.totalorder %s19, 0
    %p163 = por %p161, %p162
    %p164 = scmp.ne.s32.totalorder %s156, %s158
    %p165 = scmp.eq.s32.totalorder %s24, 1
    %p166 = por %p164, %p165
    %p167 = scmp.ne.s32.totalorder %s158, %s159
    %p168 = scmp.eq.s32.totalorder %s24, 0
    %p169 = por %p167, %p168
    %p170 = scmp.ne.s32.totalorder %s158, %s159
    %p171 = scmp.eq.s32.totalorder %s25, 1
    %p172 = por %p170, %p171
    %p174 = scmp.ne.s32.totalorder %s159, %s173
    %p175 = scmp.eq.s32.totalorder %s25, 0
    %p176 = por %p174, %p175
    %s178 = sadd.s32 %s177, 1
    %p181 = scmp.eq.s32.totalorder %s19, 1
    %p182 = scmp.ne.s32.totalorder %s177, %s179
    %p183 = scmp.eq.s32.totalorder %s19, 0
    %p184 = por %p182, %p183
    %p185 = scmp.ne.s32.totalorder %s177, %s179
    %p186 = scmp.eq.s32.totalorder %s24, 1
    %p187 = por %p185, %p186
    %p188 = scmp.ne.s32.totalorder %s179, %s180
    %p189 = scmp.eq.s32.totalorder %s24, 0
    %p190 = por %p188, %p189
    %p191 = scmp.ne.s32.totalorder %s179, %s180
    %p192 = scmp.eq.s32.totalorder %s25, 1
    %p193 = por %p191, %p192
    %p195 = scmp.ne.s32.totalorder %s180, %s194
    %p196 = scmp.eq.s32.totalorder %s25, 0
    %p197 = por %p195, %p196
    %s199 = sadd.s32 %s198, 1
    %p202 = scmp.eq.s32.totalorder %s19, 1
    %p203 = scmp.ne.s32.totalorder %s198, %s200
    %p204 = scmp.eq.s32.totalorder %s19, 0
    %p205 = por %p203, %p204
    %p206 = scmp.ne.s32.totalorder %s198, %s200
    %p207 = scmp.eq.s32.totalorder %s24, 1
    %p208 = por %p206, %p207
    %p209 = scmp.ne.s32.totalorder %s200, %s201
    %p210 = scmp.eq.s32.totalorder %s24, 0
    %p211 = por %p209, %p210
    %p212 = scmp.ne.s32.totalorder %s200, %s201
    %p213 = scmp.eq.s32.totalorder %s25, 1
    %p214 = por %p212, %p213
    %p216 = scmp.ne.s32.totalorder %s201, %s215
    %p217 = scmp.eq.s32.totalorder %s25, 0
    %p218 = por %p216, %p217
    %s220 = sadd.s32 %s219, 1
    %p223 = scmp.eq.s32.totalorder %s19, 1
    %p224 = scmp.ne.s32.totalorder %s219, %s221
    %p225 = scmp.eq.s32.totalorder %s19, 0
    %p226 = por %p224, %p225
    %p227 = scmp.ne.s32.totalorder %s219, %s221
    %p228 = scmp.eq.s32.totalorder %s24, 1
    %p229 = por %p227, %p228
    %p230 = scmp.ne.s32.totalorder %s221, %s222
    %p231 = scmp.eq.s32.totalorder %s24, 0
    %p232 = por %p230, %p231
    %p233 = scmp.ne.s32.totalorder %s221, %s222
    %p234 = scmp.eq.s32.totalorder %s25, 1
    %p235 = por %p233, %p234
    %p237 = scmp.ne.s32.totalorder %s222, %s236
    %p238 = scmp.eq.s32.totalorder %s25, 0
    %p239 = por %p237, %p238
    %s241 = sadd.s32 %s240, 1
    %p244 = scmp.eq.s32.totalorder %s19, 1
    %p245 = scmp.ne.s32.totalorder %s240, %s242
    %p246 = scmp.eq.s32.totalorder %s19, 0
    %p247 = por %p245, %p246
    %p248 = scmp.ne.s32.totalorder %s240, %s242
    %p249 = scmp.eq.s32.totalorder %s24, 1
    %p250 = por %p248, %p249
    %p251 = scmp.ne.s32.totalorder %s242, %s243
    %p252 = scmp.eq.s32.totalorder %s24, 0
    %p253 = por %p251, %p252
    %p254 = scmp.ne.s32.totalorder %s242, %s243
    %p255 = scmp.eq.s32.totalorder %s25, 1
    %p256 = por %p254, %p255
    %p258 = scmp.ne.s32.totalorder %s243, %s257
    %p259 = scmp.eq.s32.totalorder %s25, 0
    %p260 = por %p258, %p259
    %s262 = sadd.s32 %s261, 1
    %p265 = scmp.eq.s32.totalorder %s19, 1
    %p266 = scmp.ne.s32.totalorder %s261, %s263
    %p267 = scmp.eq.s32.totalorder %s19, 0
    %p268 = por %p266, %p267
    %p269 = scmp.ne.s32.totalorder %s261, %s263
    %p270 = scmp.eq.s32.totalorder %s24, 1
    %p271 = por %p269, %p270
    %p272 = scmp.ne.s32.totalorder %s263, %s264
    %p273 = scmp.eq.s32.totalorder %s24, 0
    %p274 = por %p272, %p273
    %p275 = scmp.ne.s32.totalorder %s263, %s264
    %p276 = scmp.eq.s32.totalorder %s25, 1
    %p277 = por %p275, %p276
    %p279 = scmp.ne.s32.totalorder %s264, %s278
    %p280 = scmp.eq.s32.totalorder %s25, 0
    %p281 = por %p279, %p280
    %s283 = sadd.s32 %s282, 1
    %p286 = scmp.eq.s32.totalorder %s19, 1
    %p287 = scmp.ne.s32.totalorder %s282, %s284
    %p288 = scmp.eq.s32.totalorder %s19, 0
    %p289 = por %p287, %p288
    %p290 = scmp.ne.s32.totalorder %s282, %s284
    %p291 = scmp.eq.s32.totalorder %s24, 1
    %p292 = por %p290, %p291
    %p293 = scmp.ne.s32.totalorder %s284, %s285
    %p294 = scmp.eq.s32.totalorder %s24, 0
    %p295 = por %p293, %p294
    %p296 = scmp.ne.s32.totalorder %s284, %s285
    %p297 = scmp.eq.s32.totalorder %s25, 1
    %p298 = por %p296, %p297
    %p300 = scmp.ne.s32.totalorder %s285, %s299
    %p301 = scmp.eq.s32.totalorder %s25, 0
    %p302 = por %p300, %p301
    %s304 = sadd.s32 %s303, 1
    %p307 = scmp.eq.s32.totalorder %s19, 1
    %p308 = scmp.ne.s32.totalorder %s303, %s305
    %p309 = scmp.eq.s32.totalorder %s19, 0
    %p310 = por %p308, %p309
    %p311 = scmp.ne.s32.totalorder %s303, %s305
    %p312 = scmp.eq.s32.totalorder %s24, 1
    %p313 = por %p311, %p312
    %p314 = scmp.ne.s32.totalorder %s305, %s306
    %p315 = scmp.eq.s32.totalorder %s24, 0
    %p316 = por %p314, %p315
    %p317 = scmp.ne.s32.totalorder %s305, %s306
    %p318 = scmp.eq.s32.totalorder %s25, 1
    %p319 = por %p317, %p318
    %p321 = scmp.ne.s32.totalorder %s306, %s320
    %p322 = scmp.eq.s32.totalorder %s25, 0
    %p323 = por %p321, %p322
    %s324 = ssub.s32 %s26, %s38
    %s325 = ssub.s32 %s27, %s34
    %s326 = sor.u32 %s324, %s325
    %p327 = scmp.eq.s32.totalorder %s326, 0
    %s329 = sadd.s32 %s328, 1
    %s330 = scalar_select %p327, %s328, %s329
    %p333 = pneg %p327
    %p334 = scmp.eq.s32.totalorder %s19, 1
    %p335 = por %p333, %p334
    %p336 = scmp.ne.s32.totalorder %s328, %s331
    %p337 = scmp.eq.s32.totalorder %s19, 0
    %p338 = por %p336, %p337
    %p339 = scmp.ne.s32.totalorder %s328, %s331
    %p340 = scmp.eq.s32.totalorder %s24, 1
    %p341 = por %p339, %p340
    %p342 = scmp.ne.s32.totalorder %s331, %s332
    %p343 = scmp.eq.s32.totalorder %s24, 0
    %p344 = por %p342, %p343
    %p345 = scmp.ne.s32.totalorder %s331, %s332
    %p346 = scmp.eq.s32.totalorder %s25, 1
    %p347 = por %p345, %p346
    %p349 = scmp.ne.s32.totalorder %s332, %s348
    %p350 = scmp.eq.s32.totalorder %s25, 0
    %p351 = por %p349, %p350
    %p352 = scmp.le.s32.totalorder 1, %s19
    %p353 = scmp.lt.s32.totalorder %s19, 3
    %p354 = pnand %p352, %p353
    %p355 = pneg %p354
    // Predicated region
    $region9: #{residual_forward.1} parent=5 // pred_check
      _
    $region10: #{residual_forward.1} parent=5 // pred_check_branch
      %357 = sbr.rel (%p354) target = $region12
    $region11: #{residual_forward.1} parent=5 // pred_region
      %s358 = ssub.s32 %s19, 1
      // Predicated region
      $region13: #{residual_forward.1} parent=11 // pred_check
        %p359 = pneg %p85
      $region14: #{residual_forward.1} parent=11 // pred_check_branch
        %361 = sbr.rel (%p359) target = $region16
      $region15: #{residual_forward.1} parent=11 // pred_region
        %p362 = scmp.lt.s32.totalorder %s29, 0
        %s363 = scalar_select %p362, %s29, 0
        %s364 = smul.addr %s363, 54
        %s365 = smul.addr %s364, 8
        %s366 = scalar_lea.vmem %s1, %s365
      $region16: #{residual_forward.1} parent=11 // pred_fallthru
        _
      // Predicated region
      $region17: #{residual_forward.1} parent=11 // pred_check
        %p367 = pneg %p106
      $region18: #{residual_forward.1} parent=11 // pred_check_branch
        %369 = sbr.rel (%p367) target = $region20
      $region19: #{residual_forward.1} parent=11 // pred_region
        _
      $region20: #{residual_forward.1} parent=11 // pred_fallthru
        _
      // Predicated region
      $region21: #{residual_forward.1} parent=11 // pred_check
        %p370 = pneg %p127
      $region22: #{residual_forward.1} parent=11 // pred_check_branch
        %372 = sbr.rel (%p370) target = $region24
      $region23: #{residual_forward.1} parent=11 // pred_region
        _
      $region24: #{residual_forward.1} parent=11 // pred_fallthru
        _
      // Predicated region
      $region25: #{residual_forward.1} parent=11 // pred_check
        %p373 = pneg %p148
      $region26: #{residual_forward.1} parent=11 // pred_check_branch
        %375 = sbr.rel (%p373) target = $region28
      $region27: #{residual_forward.1} parent=11 // pred_region
        _
      $region28: #{residual_forward.1} parent=11 // pred_fallthru
        _
      // Predicated region
      $region29: #{residual_forward.1} parent=11 // pred_check
        %p376 = pneg %p169
      $region30: #{residual_forward.1} parent=11 // pred_check_branch
        %378 = sbr.rel (%p376) target = $region32
      $region31: #{residual_forward.1} parent=11 // pred_region
        _
      $region32: #{residual_forward.1} parent=11 // pred_fallthru
        _
      // Predicated region
      $region33: #{residual_forward.1} parent=11 // pred_check
        %p379 = pneg %p190
      $region34: #{residual_forward.1} parent=11 // pred_check_branch
        %381 = sbr.rel (%p379) target = $region36
      $region35: #{residual_forward.1} parent=11 // pred_region
        _
      $region36: #{residual_forward.1} parent=11 // pred_fallthru
        _
      // Predicated region
      $region37: #{residual_forward.1} parent=11 // pred_check
        %p382 = pneg %p211
      $region38: #{residual_forward.1} parent=11 // pred_check_branch
        %384 = sbr.rel (%p382) target = $region40
      $region39: #{residual_forward.1} parent=11 // pred_region
        _
      $region40: #{residual_forward.1} parent=11 // pred_fallthru
        _
      // Predicated region
      $region41: #{residual_forward.1} parent=11 // pred_check
        %p385 = pneg %p232
      $region42: #{residual_forward.1} parent=11 // pred_check_branch
        %387 = sbr.rel (%p385) target = $region44
      $region43: #{residual_forward.1} parent=11 // pred_region
        _
      $region44: #{residual_forward.1} parent=11 // pred_fallthru
        _
      // Predicated region
      $region45: #{residual_forward.1} parent=11 // pred_check
        %p388 = pneg %p253
      $region46: #{residual_forward.1} parent=11 // pred_check_branch
        %390 = sbr.rel (%p388) target = $region48
      $region47: #{residual_forward.1} parent=11 // pred_region
        _
      $region48: #{residual_forward.1} parent=11 // pred_fallthru
        _
      // Predicated region
      $region49: #{residual_forward.1} parent=11 // pred_check
        %p391 = pneg %p274
      $region50: #{residual_forward.1} parent=11 // pred_check_branch
        %393 = sbr.rel (%p391) target = $region52
      $region51: #{residual_forward.1} parent=11 // pred_region
        _
      $region52: #{residual_forward.1} parent=11 // pred_fallthru
        _
      // Predicated region
      $region53: #{residual_forward.1} parent=11 // pred_check
        %p394 = pneg %p295
      $region54: #{residual_forward.1} parent=11 // pred_check_branch
        %396 = sbr.rel (%p394) target = $region56
      $region55: #{residual_forward.1} parent=11 // pred_region
        _
      $region56: #{residual_forward.1} parent=11 // pred_fallthru
        _
      // Predicated region
      $region57: #{residual_forward.1} parent=11 // pred_check
        %p397 = pneg %p316
      $region58: #{residual_forward.1} parent=11 // pred_check_branch
        %399 = sbr.rel (%p397) target = $region60
      $region59: #{residual_forward.1} parent=11 // pred_region
        _
      $region60: #{residual_forward.1} parent=11 // pred_fallthru
        _
    $region12: #{residual_forward.1} parent=5 // pred_fallthru
      _
    %p400 = scmp.lt.s32.totalorder %s19, 2
    // Predicated region
    $region61: #{residual_forward.1} parent=5 // pred_check
      %p401 = pneg %p400
    $region62: #{residual_forward.1} parent=5 // pred_check_branch
      %403 = sbr.rel (%p401) target = $region64
    $region63: #{residual_forward.1} parent=5 // pred_region
      // Predicated region
      $region65: #{residual_forward.1} parent=63 // pred_check
        %p404 = pneg %p53
      $region66: #{residual_forward.1} parent=63 // pred_check_branch
        %406 = sbr.rel (%p404) target = $region68
      $region67: #{residual_forward.1} parent=63 // pred_region
        %p407 = scmp.lt.s32.totalorder %s26, 1
        %s408 = scalar_select %p407, %s26, 1
        %p409 = scmp.lt.s32.totalorder %s27, 0
        %s410 = scalar_select %p409, %s27, 0
        %s411 = smul.addr %s410, 54
        %s412 = smul.addr %s408, 54
        %s413 = sadd.s32 %s411, %s412
        %s414 = smul.addr %s413, 4
        %s415 = scalar_lea.vmem %s0, %s414
      $region68: #{residual_forward.1} parent=63 // pred_fallthru
        _
    $region64: #{residual_forward.1} parent=5 // pred_fallthru
      _
    %p416 = scmp.le.s32.totalorder 1, %s19
    %p417 = scmp.lt.s32.totalorder %s19, 3
    %p418 = pnand %p416, %p417
    %p419 = pneg %p418
    // Predicated region
    $region69: #{residual_forward.1} parent=5 // pred_check
      _
    $region70: #{residual_forward.1} parent=5 // pred_check_branch
      %421 = sbr.rel (%p418) target = $region72
    $region71: #{residual_forward.1} parent=5 // pred_region
      %s422 = ssub.s32 %s19, 1
      %p423 = scmp.lt.s32.totalorder %s28, 1
      %s424 = scalar_select %p423, %s28, 1
      %p425 = scmp.lt.s32.totalorder %s29, 0
      %s426 = scalar_select %p425, %s29, 0
      %s427 = smul.addr %s426, 54
      %s428 = smul.addr %s424, 54
      %s429 = sadd.s32 %s427, %s428
      %s430 = smul.addr %s429, 4
      %s431 = scalar_lea.vmem %s0, %s430
      %p432 = pneg %p59
      %p433 = pneg %p56
      %p434 = scmp.lt.s32.totalorder %s29, 0
      %s435 = scalar_select %p434, %s29, 0
      %s436 = smul.addr %s435, 54
      %s437 = smul.addr %s436, 8
      %s438 = scalar_lea.vmem %s1, %s437
      %p439 = pneg %p85
      %p440 = pneg %p82
      %p441 = pneg %p106
      %p442 = pneg %p103
      %p443 = pneg %p127
      %p444 = pneg %p124
      %p445 = pneg %p148
      %p446 = pneg %p145
      %p447 = pneg %p169
      %p448 = pneg %p166
      %p449 = pneg %p190
      %p450 = pneg %p187
      %p451 = pneg %p211
      %p452 = pneg %p208
      %p453 = pneg %p232
      %p454 = pneg %p229
      %p455 = pneg %p253
      %p456 = pneg %p250
      %p457 = pneg %p274
      %p458 = pneg %p271
      %p459 = pneg %p295
      %p460 = pneg %p292
      %p461 = pneg %p316
      %p462 = pneg %p313
      %p463 = pneg %p344
      %p464 = pneg %p341
      %p465 = scmp.lt.s32.totalorder %s28, 1
      %s466 = scalar_select %p465, %s28, 1
      %p467 = scmp.lt.s32.totalorder %s29, 0
      %s468 = scalar_select %p467, %s29, 0
      %s469 = smul.addr %s468, 48
      %s470 = smul.addr %s466, 48
      %s471 = sadd.s32 %s469, %s470
      %s472 = smul.addr %s471, 4
      %s473 = scalar_lea.vmem %s13, %s472
      %p474 = scmp.lt.s32.totalorder %s28, 1
      %s475 = scalar_select %p474, %s28, 1
      %p476 = scmp.lt.s32.totalorder %s29, 0
      %s477 = scalar_select %p476, %s29, 0
      %s478 = smul.addr %s477, 54
      %s479 = smul.addr %s475, 54
      %s480 = sadd.s32 %s478, %s479
      %s481 = smul.addr %s480, 4
      %s482 = scalar_lea.vmem %s0, %s481
      %p483 = scmp.lt.s32.totalorder %s29, 0
      %s484 = scalar_select %p483, %s29, 0
      %s485 = smul.addr %s484, 54
      %s486 = smul.addr %s485, 8
      %s487 = scalar_lea.vmem %s1, %s486
      %p488 = scmp.lt.s32.totalorder %s28, 1
      %s489 = scalar_select %p488, %s28, 1
      %p490 = scmp.lt.s32.totalorder %s29, 0
      %s491 = scalar_select %p490, %s29, 0
      %s492 = smul.addr %s491, 48
      %s493 = smul.addr %s489, 48
      %s494 = sadd.s32 %s492, %s493
      %s495 = smul.addr %s494, 4
      %s496 = scalar_lea.vmem %s13, %s495
      %v498 = vld [vmem:[%s482] sm:$0xf]
      %v499 = vld [vmem:[%s482 + $0x4] sm:$0xf]
      %v500 = vld [vmem:[%s482 + $0x8] sm:$0xf]
      %v501 = vld [vmem:[%s482 + $0xc] sm:$0xf]
      %v502 = vld [vmem:[%s482 + $0x10] sm:$0xf]
      %v503 = vld [vmem:[%s482 + $0x14] sm:$0xf]
      %v504 = vld [vmem:[%s482 + $0x18] sm:$0xf]
      %v505 = vld [vmem:[%s482 + $0x1c] sm:$0xf]
      %v506 = vld [vmem:[%s482 + $0x20] sm:$0xf]
      %v507 = vld [vmem:[%s482 + $0x24] sm:$0xf]
      %v508 = vld [vmem:[%s482 + $0x28] sm:$0xf]
      %v509 = vld [vmem:[%s482 + $0x2c] sm:$0xf]
      %v510 = vld [vmem:[%s482 + $0x30] sm:$0xf]
      %v511 = vld [vmem:[%s482 + $0x34] sm:$0xf]
      %v512 = vld [vmem:[%s482 + $0x38] sm:$0xf]
      %v513 = vld [vmem:[%s482 + $0x3c] sm:$0xf]
      %v514 = vld [vmem:[%s482 + $0x40] sm:$0xf]
      %v515 = vld [vmem:[%s482 + $0x44] sm:$0xf]
      %v516 = vld [vmem:[%s482 + $0x48] sm:$0xf]
      %v517 = vld [vmem:[%s482 + $0x4c] sm:$0xf]
      %v518 = vld [vmem:[%s482 + $0x50] sm:$0xf]
      %v519 = vld [vmem:[%s482 + $0x54] sm:$0xf]
      %v520 = vld [vmem:[%s482 + $0x58] sm:$0xf]
      %v521 = vld [vmem:[%s482 + $0x5c] sm:$0xf]
      %v522 = vld [vmem:[%s482 + $0x60] sm:$0xf]
      %v523 = vld [vmem:[%s482 + $0x64] sm:$0xf]
      %v524 = vld [vmem:[%s482 + $0x68] sm:$0xf]
      %v525 = vld [vmem:[%s482 + $0x6c] sm:$0xf]
      %v526 = vld [vmem:[%s482 + $0x70] sm:$0xf]
      %v527 = vld [vmem:[%s482 + $0x74] sm:$0xf]
      %v528 = vld [vmem:[%s482 + $0x78] sm:$0xf]
      %v529 = vld [vmem:[%s482 + $0x7c] sm:$0xf]
      %v530 = vld [vmem:[%s482 + $0x80] sm:$0xf]
      %v531 = vld [vmem:[%s482 + $0x84] sm:$0xf]
      %v532 = vld [vmem:[%s482 + $0x88] sm:$0xf]
      %v533 = vld [vmem:[%s482 + $0x8c] sm:$0xf]
      %v534 = vld [vmem:[%s482 + $0x90] sm:$0xf]
      %v535 = vld [vmem:[%s482 + $0x94] sm:$0xf]
      %v536 = vld [vmem:[%s482 + $0x98] sm:$0xf]
      %v537 = vld [vmem:[%s482 + $0x9c] sm:$0xf]
      %v538 = vld [vmem:[%s482 + $0xa0] sm:$0xf]
      %v539 = vld [vmem:[%s482 + $0xa4] sm:$0xf]
      %v540 = vld [vmem:[%s482 + $0xa8] sm:$0xf]
      %v541 = vld [vmem:[%s482 + $0xac] sm:$0xf]
      %v542 = vld [vmem:[%s482 + $0xb0] sm:$0xf]
      %v543 = vld [vmem:[%s482 + $0xb4] sm:$0xf]
      %v544 = vld [vmem:[%s482 + $0xb8] sm:$0xf]
      %v545 = vld [vmem:[%s482 + $0xbc] sm:$0xf]
      %v546 = vld [vmem:[%s482 + $0xc0] sm:$0xf]
      %v547 = vld [vmem:[%s482 + $0xc4] sm:$0xf]
      %v548 = vld [vmem:[%s482 + $0xc8] sm:$0xf]
      %v549 = vld [vmem:[%s482 + $0xcc] sm:$0xf]
      %v550 = vld [vmem:[%s482 + $0xd0] sm:$0xf]
      %v551 = vld [vmem:[%s482 + $0xd4] sm:$0xf]
      %v552 = vunpack.c.l.bf16 %v498
      %v553 = vunpack.c.l.bf16 %v499
      %v554 = vunpack.c.l.bf16 %v500
      %v555 = vunpack.c.l.bf16 %v501
      %v556 = vunpack.c.l.bf16 %v502
      %v557 = vunpack.c.l.bf16 %v503
      %v558 = vunpack.c.l.bf16 %v504
      %v559 = vunpack.c.l.bf16 %v505
      %v560 = vunpack.c.l.bf16 %v506
      %v561 = vunpack.c.l.bf16 %v507
      %v562 = vunpack.c.l.bf16 %v508
      %v563 = vunpack.c.l.bf16 %v509
      %v564 = vunpack.c.l.bf16 %v510
      %v565 = vunpack.c.l.bf16 %v511
      %v566 = vunpack.c.l.bf16 %v512
      %v567 = vunpack.c.l.bf16 %v513
      %v568 = vunpack.c.l.bf16 %v514
      %v569 = vunpack.c.l.bf16 %v515
      %v570 = vunpack.c.l.bf16 %v516
      %v571 = vunpack.c.l.bf16 %v517
      %v572 = vunpack.c.l.bf16 %v518
      %v573 = vunpack.c.l.bf16 %v519
      %v574 = vunpack.c.l.bf16 %v520
      %v575 = vunpack.c.l.bf16 %v521
      %v576 = vunpack.c.l.bf16 %v522
      %v577 = vunpack.c.l.bf16 %v523
      %v578 = vunpack.c.l.bf16 %v524
      %v579 = vunpack.c.l.bf16 %v525
      %v580 = vunpack.c.l.bf16 %v526
      %v581 = vunpack.c.l.bf16 %v527
      %v582 = vunpack.c.l.bf16 %v528
      %v583 = vunpack.c.l.bf16 %v529
      %v584 = vunpack.c.l.bf16 %v530
      %v585 = vunpack.c.l.bf16 %v531
      %v586 = vunpack.c.l.bf16 %v532
      %v587 = vunpack.c.l.bf16 %v533
      %v588 = vunpack.c.l.bf16 %v534
      %v589 = vunpack.c.l.bf16 %v535
      %v590 = vunpack.c.l.bf16 %v536
      %v591 = vunpack.c.l.bf16 %v537
      %v592 = vunpack.c.l.bf16 %v538
      %v593 = vunpack.c.l.bf16 %v539
      %v594 = vunpack.c.l.bf16 %v540
      %v595 = vunpack.c.l.bf16 %v541
      %v596 = vunpack.c.l.bf16 %v542
      %v597 = vunpack.c.l.bf16 %v543
      %v598 = vunpack.c.l.bf16 %v544
      %v599 = vunpack.c.l.bf16 %v545
      %v600 = vunpack.c.l.bf16 %v546
      %v601 = vunpack.c.l.bf16 %v547
      %v602 = vunpack.c.l.bf16 %v548
      %v603 = vunpack.c.l.bf16 %v549
      %v604 = vunpack.c.l.bf16 %v550
      %v605 = vunpack.c.l.bf16 %v551
      %v606 = vld [vmem:[%s487] sm:$0xff]
      %v607 = vld [vmem:[%s487 + $0x8] sm:$0xff]
      %v608 = vld [vmem:[%s487 + $0x10] sm:$0xff]
      %v609 = vld [vmem:[%s487 + $0x18] sm:$0xff]
      %v610 = vld [vmem:[%s487 + $0x20] sm:$0xff]
      %v611 = vld [vmem:[%s487 + $0x28] sm:$0xff]
      %v612 = vld [vmem:[%s487 + $0x30] sm:$0xff]
      %v613 = vld [vmem:[%s487 + $0x38] sm:$0xff]
      %v614 = vld [vmem:[%s487 + $0x40] sm:$0xff]
      %v615 = vld [vmem:[%s487 + $0x48] sm:$0xff]
      %v616 = vld [vmem:[%s487 + $0x50] sm:$0xff]
      %v617 = vld [vmem:[%s487 + $0x58] sm:$0xff]
      %v618 = vld [vmem:[%s487 + $0x60] sm:$0xff]
      %v619 = vld [vmem:[%s487 + $0x68] sm:$0xff]
      %v620 = vld [vmem:[%s487 + $0x70] sm:$0xff]
      %v621 = vld [vmem:[%s487 + $0x78] sm:$0xff]
      %v622 = vld [vmem:[%s487 + $0x80] sm:$0xff]
      %v623 = vld [vmem:[%s487 + $0x88] sm:$0xff]
      %v624 = vld [vmem:[%s487 + $0x90] sm:$0xff]
      %v625 = vld [vmem:[%s487 + $0x98] sm:$0xff]
      %v626 = vld [vmem:[%s487 + $0xa0] sm:$0xff]
      %v627 = vld [vmem:[%s487 + $0xa8] sm:$0xff]
      %v628 = vld [vmem:[%s487 + $0xb0] sm:$0xff]
      %v629 = vld [vmem:[%s487 + $0xb8] sm:$0xff]
      %v630 = vld [vmem:[%s487 + $0xc0] sm:$0xff]
      %v631 = vld [vmem:[%s487 + $0xc8] sm:$0xff]
      %v632 = vld [vmem:[%s487 + $0xd0] sm:$0xff]
      %v633 = vld [vmem:[%s487 + $0xd8] sm:$0xff]
      %v634 = vld [vmem:[%s487 + $0xe0] sm:$0xff]
      %v635 = vld [vmem:[%s487 + $0xe8] sm:$0xff]
      %v636 = vld [vmem:[%s487 + $0xf0] sm:$0xff]
      %v637 = vld [vmem:[%s487 + $0xf8] sm:$0xff]
      %v638 = vld [vmem:[%s487 + $0x100] sm:$0xff]
      %v639 = vld [vmem:[%s487 + $0x108] sm:$0xff]
      %v640 = vld [vmem:[%s487 + $0x110] sm:$0xff]
      %v641 = vld [vmem:[%s487 + $0x118] sm:$0xff]
      %v642 = vld [vmem:[%s487 + $0x120] sm:$0xff]
      %v643 = vld [vmem:[%s487 + $0x128] sm:$0xff]
      %v644 = vld [vmem:[%s487 + $0x130] sm:$0xff]
      %v645 = vld [vmem:[%s487 + $0x138] sm:$0xff]
      %v646 = vld [vmem:[%s487 + $0x140] sm:$0xff]
      %v647 = vld [vmem:[%s487 + $0x148] sm:$0xff]
      %v648 = vld [vmem:[%s487 + $0x150] sm:$0xff]
      %v649 = vld [vmem:[%s487 + $0x158] sm:$0xff]
      %v650 = vld [vmem:[%s487 + $0x160] sm:$0xff]
      %v651 = vld [vmem:[%s487 + $0x168] sm:$0xff]
      %v652 = vld [vmem:[%s487 + $0x170] sm:$0xff]
      %v653 = vld [vmem:[%s487 + $0x178] sm:$0xff]
      %v654 = vld [vmem:[%s487 + $0x180] sm:$0xff]
      %v655 = vld [vmem:[%s487 + $0x188] sm:$0xff]
      %v656 = vld [vmem:[%s487 + $0x190] sm:$0xff]
      %v657 = vld [vmem:[%s487 + $0x198] sm:$0xff]
      %v658 = vld [vmem:[%s487 + $0x1a0] sm:$0xff]
      %v659 = vld [vmem:[%s487 + $0x1a8] sm:$0xff]
      %v660 = vld [vmem:[%s2] sm:$0x1]
      %v662 = vlaneseq
      %v663 = vshrl.u32 %v662, 7
      %v664 = vsub.s32 0, %v663
      %v665 = vrot.slane %v660, %v664
      %v667 = vmul.f32 %v552, %v665
      %v668 = vmul.f32 %v553, %v665
      %v669 = vmul.f32 %v554, %v665
      %v670 = vmul.f32 %v555, %v665
      %v671 = vmul.f32 %v556, %v665
      %v672 = vmul.f32 %v557, %v665
      %v673 = vmul.f32 %v558, %v665
      %v674 = vmul.f32 %v559, %v665
      %v675 = vmul.f32 %v560, %v665
      %v676 = vmul.f32 %v561, %v665
      %v677 = vmul.f32 %v562, %v665
      %v678 = vmul.f32 %v563, %v665
      %v679 = vmul.f32 %v564, %v665
      %v680 = vmul.f32 %v565, %v665
      %v681 = vmul.f32 %v566, %v665
      %v682 = vmul.f32 %v567, %v665
      %v683 = vmul.f32 %v568, %v665
      %v684 = vmul.f32 %v569, %v665
      %v685 = vmul.f32 %v570, %v665
      %v686 = vmul.f32 %v571, %v665
      %v687 = vmul.f32 %v572, %v665
      %v688 = vmul.f32 %v573, %v665
      %v689 = vmul.f32 %v574, %v665
      %v690 = vmul.f32 %v575, %v665
      %v691 = vmul.f32 %v576, %v665
      %v692 = vmul.f32 %v577, %v665
      %v693 = vmul.f32 %v578, %v665
      %v694 = vmul.f32 %v579, %v665
      %v695 = vmul.f32 %v580, %v665
      %v696 = vmul.f32 %v581, %v665
      %v697 = vmul.f32 %v582, %v665
      %v698 = vmul.f32 %v583, %v665
      %v699 = vmul.f32 %v584, %v665
      %v700 = vmul.f32 %v585, %v665
      %v701 = vmul.f32 %v586, %v665
      %v702 = vmul.f32 %v587, %v665
      %v703 = vmul.f32 %v588, %v665
      %v704 = vmul.f32 %v589, %v665
      %v705 = vmul.f32 %v590, %v665
      %v706 = vmul.f32 %v591, %v665
      %v707 = vmul.f32 %v592, %v665
      %v708 = vmul.f32 %v593, %v665
      %v709 = vmul.f32 %v594, %v665
      %v710 = vmul.f32 %v595, %v665
      %v711 = vmul.f32 %v596, %v665
      %v712 = vmul.f32 %v597, %v665
      %v713 = vmul.f32 %v598, %v665
      %v714 = vmul.f32 %v599, %v665
      %v715 = vmul.f32 %v600, %v665
      %v716 = vmul.f32 %v601, %v665
      %v717 = vmul.f32 %v602, %v665
      %v718 = vmul.f32 %v603, %v665
      %v719 = vmul.f32 %v604, %v665
      %v720 = vmul.f32 %v605, %v665
      %v721 = vld [vmem:[%s3] sm:$0x1]
      %v723 = vlaneseq
      %v724 = vshrl.u32 %v723, 7
      %v725 = vsub.s32 0, %v724
      %v726 = vrot.slane %v721, %v725
      %v728 = vadd.f32 %v667, %v726
      %v729 = vadd.f32 %v668, %v726
      %v730 = vadd.f32 %v669, %v726
      %v731 = vadd.f32 %v670, %v726
      %v732 = vadd.f32 %v671, %v726
      %v733 = vadd.f32 %v672, %v726
      %v734 = vadd.f32 %v673, %v726
      %v735 = vadd.f32 %v674, %v726
      %v736 = vadd.f32 %v675, %v726
      %v737 = vadd.f32 %v676, %v726
      %v738 = vadd.f32 %v677, %v726
      %v739 = vadd.f32 %v678, %v726
      %v740 = vadd.f32 %v679, %v726
      %v741 = vadd.f32 %v680, %v726
      %v742 = vadd.f32 %v681, %v726
      %v743 = vadd.f32 %v682, %v726
      %v744 = vadd.f32 %v683, %v726
      %v745 = vadd.f32 %v684, %v726
      %v746 = vadd.f32 %v685, %v726
      %v747 = vadd.f32 %v686, %v726
      %v748 = vadd.f32 %v687, %v726
      %v749 = vadd.f32 %v688, %v726
      %v750 = vadd.f32 %v689, %v726
      %v751 = vadd.f32 %v690, %v726
      %v752 = vadd.f32 %v691, %v726
      %v753 = vadd.f32 %v692, %v726
      %v754 = vadd.f32 %v693, %v726
      %v755 = vadd.f32 %v694, %v726
      %v756 = vadd.f32 %v695, %v726
      %v757 = vadd.f32 %v696, %v726
      %v758 = vadd.f32 %v697, %v726
      %v759 = vadd.f32 %v698, %v726
      %v760 = vadd.f32 %v699, %v726
      %v761 = vadd.f32 %v700, %v726
      %v762 = vadd.f32 %v701, %v726
      %v763 = vadd.f32 %v702, %v726
      %v764 = vadd.f32 %v703, %v726
      %v765 = vadd.f32 %v704, %v726
      %v766 = vadd.f32 %v705, %v726
      %v767 = vadd.f32 %v706, %v726
      %v768 = vadd.f32 %v707, %v726
      %v769 = vadd.f32 %v708, %v726
      %v770 = vadd.f32 %v709, %v726
      %v771 = vadd.f32 %v710, %v726
      %v772 = vadd.f32 %v711, %v726
      %v773 = vadd.f32 %v712, %v726
      %v774 = vadd.f32 %v713, %v726
      %v775 = vadd.f32 %v714, %v726
      %v776 = vadd.f32 %v715, %v726
      %v777 = vadd.f32 %v716, %v726
      %v778 = vadd.f32 %v717, %v726
      %v779 = vadd.f32 %v718, %v726
      %v780 = vadd.f32 %v719, %v726
      %v781 = vadd.f32 %v720, %v726
      %v782 = vmax.f32 %v728, 0.0
      %v783 = vmax.f32 %v729, 0.0
      %v784 = vmax.f32 %v730, 0.0
      %v785 = vmax.f32 %v731, 0.0
      %v786 = vmax.f32 %v732, 0.0
      %v787 = vmax.f32 %v733, 0.0
      %v788 = vmax.f32 %v734, 0.0
      %v789 = vmax.f32 %v735, 0.0
      %v790 = vmax.f32 %v736, 0.0
      %v791 = vmax.f32 %v737, 0.0
      %v792 = vmax.f32 %v738, 0.0
      %v793 = vmax.f32 %v739, 0.0
      %v794 = vmax.f32 %v740, 0.0
      %v795 = vmax.f32 %v741, 0.0
      %v796 = vmax.f32 %v742, 0.0
      %v797 = vmax.f32 %v743, 0.0
      %v798 = vmax.f32 %v744, 0.0
      %v799 = vmax.f32 %v745, 0.0
      %v800 = vmax.f32 %v746, 0.0
      %v801 = vmax.f32 %v747, 0.0
      %v802 = vmax.f32 %v748, 0.0
      %v803 = vmax.f32 %v749, 0.0
      %v804 = vmax.f32 %v750, 0.0
      %v805 = vmax.f32 %v751, 0.0
      %v806 = vmax.f32 %v752, 0.0
      %v807 = vmax.f32 %v753, 0.0
      %v808 = vmax.f32 %v754, 0.0
      %v809 = vmax.f32 %v755, 0.0
      %v810 = vmax.f32 %v756, 0.0
      %v811 = vmax.f32 %v757, 0.0
      %v812 = vmax.f32 %v758, 0.0
      %v813 = vmax.f32 %v759, 0.0
      %v814 = vmax.f32 %v760, 0.0
      %v815 = vmax.f32 %v761, 0.0
      %v816 = vmax.f32 %v762, 0.0
      %v817 = vmax.f32 %v763, 0.0
      %v818 = vmax.f32 %v764, 0.0
      %v819 = vmax.f32 %v765, 0.0
      %v820 = vmax.f32 %v766, 0.0
      %v821 = vmax.f32 %v767, 0.0
      %v822 = vmax.f32 %v768, 0.0
      %v823 = vmax.f32 %v769, 0.0
      %v824 = vmax.f32 %v770, 0.0
      %v825 = vmax.f32 %v771, 0.0
      %v826 = vmax.f32 %v772, 0.0
      %v827 = vmax.f32 %v773, 0.0
      %v828 = vmax.f32 %v774, 0.0
      %v829 = vmax.f32 %v775, 0.0
      %v830 = vmax.f32 %v776, 0.0
      %v831 = vmax.f32 %v777, 0.0
      %v832 = vmax.f32 %v778, 0.0
      %v833 = vmax.f32 %v779, 0.0
      %v834 = vmax.f32 %v780, 0.0
      %v835 = vmax.f32 %v781, 0.0
      %v836 = vpack.c.bf16 %v783, %v782
      %v837 = vpack.c.bf16 %v785, %v784
      %v838 = vpack.c.bf16 %v787, %v786
      %v839 = vpack.c.bf16 %v789, %v788
      %v840 = vpack.c.bf16 %v791, %v790
      %v841 = vpack.c.bf16 %v793, %v792
      %v842 = vpack.c.bf16 %v795, %v794
      %v843 = vpack.c.bf16 %v797, %v796
      %v844 = vpack.c.bf16 %v799, %v798
      %v845 = vpack.c.bf16 %v801, %v800
      %v846 = vpack.c.bf16 %v803, %v802
      %v847 = vpack.c.bf16 %v805, %v804
      %v848 = vpack.c.bf16 %v807, %v806
      %v849 = vpack.c.bf16 %v809, %v808
      %v850 = vpack.c.bf16 %v811, %v810
      %v851 = vpack.c.bf16 %v813, %v812
      %v852 = vpack.c.bf16 %v815, %v814
      %v853 = vpack.c.bf16 %v817, %v816
      %v854 = vpack.c.bf16 %v819, %v818
      %v855 = vpack.c.bf16 %v821, %v820
      %v856 = vpack.c.bf16 %v823, %v822
      %v857 = vpack.c.bf16 %v825, %v824
      %v858 = vpack.c.bf16 %v827, %v826
      %v859 = vpack.c.bf16 %v829, %v828
      %v860 = vpack.c.bf16 %v831, %v830
      %v861 = vpack.c.bf16 %v833, %v832
      %v862 = vpack.c.bf16 %v835, %v834
      %v863 = vld [vmem:[%s4] sm:$0x3]
      %v864 = vld [vmem:[%s5] sm:$0x1]
      %v866 = vlaneseq
      %v867 = vshrl.u32 %v866, 7
      %v868 = vsub.s32 0, %v867
      %v869 = vrot.slane %v864, %v868
      %vm871 = vcmask 31744
      %v873 = vsel %vm871, %v836, 0
      %v876 = vsel %vm871, %v837, 0
      %v879 = vsel %vm871, %v838, 0
      %v882 = vsel %vm871, %v839, 0
      %v885 = vsel %vm871, %v840, 0
      %v888 = vsel %vm871, %v841, 0
      %v891 = vsel %vm871, %v842, 0
      %v894 = vsel %vm871, %v843, 0
      %v897 = vsel %vm871, %v844, 0
      %v900 = vsel %vm871, %v845, 0
      %v903 = vsel %vm871, %v846, 0
      %v906 = vsel %vm871, %v847, 0
      %v909 = vsel %vm871, %v848, 0
      %v912 = vsel %vm871, %v849, 0
      %v915 = vsel %vm871, %v850, 0
      %v918 = vsel %vm871, %v851, 0
      %v921 = vsel %vm871, %v852, 0
      %v924 = vsel %vm871, %v853, 0
      %v927 = vsel %vm871, %v854, 0
      %v930 = vsel %vm871, %v855, 0
      %v933 = vsel %vm871, %v856, 0
      %v936 = vsel %vm871, %v857, 0
      %v939 = vsel %vm871, %v858, 0
      %v942 = vsel %vm871, %v859, 0
      %v945 = vsel %vm871, %v860, 0
      %v948 = vsel %vm871, %v861, 0
      %v951 = vsel %vm871, %v862, 0
      %vm953 = vcmask 1041408
      %v955 = vsel %vm953, %v863, 0
      %957 = vmatprep.subr.bf16.mxu0 0
      %958 = vmatpush1.bf16.msra.mxu0 %v955
      %959 = vmatprep.subr.bf16.mxu0 0
      %960 = vmatpush1.bf16.msra.mxu0 0
      %961 = vmatprep.subr.bf16.mxu0 0
      %962 = vmatpush1.bf16.msra.mxu0 0
      %963 = vmatprep.subr.bf16.mxu0 0
      %964 = vmatpush1.bf16.msra.mxu0 0
      %965 = vmatprep.subr.bf16.mxu0 0
      %966 = vmatpush1.bf16.msra.mxu0 0
      %967 = vmatprep.subr.bf16.mxu0 0
      %968 = vmatpush1.bf16.msra.mxu0 0
      %969 = vmatprep.subr.bf16.mxu0 0
      %970 = vmatpush1.bf16.msra.mxu0 0
      %971 = vmatprep.subr.bf16.mxu0 0
      %972 = vmatpush1.bf16.msra.mxu0 0
      %973 = vmatprep.subr.bf16.mxu0 0
      %974 = vmatpush1.bf16.msra.mxu0 0
      %975 = vmatprep.subr.bf16.mxu0 0
      %976 = vmatpush1.bf16.msra.mxu0 0
      %977 = vmatprep.subr.bf16.mxu0 0
      %978 = vmatpush1.bf16.msra.mxu0 0
      %979 = vmatprep.subr.bf16.mxu0 0
      %980 = vmatpush1.bf16.msra.mxu0 0
      %981 = vmatprep.subr.bf16.mxu0 0
      %982 = vmatpush1.bf16.msra.mxu0 0
      %983 = vmatprep.subr.bf16.mxu0 0
      %984 = vmatpush1.bf16.msra.mxu0 0
      %985 = vmatprep.subr.bf16.mxu0 0
      %986 = vmatpush1.bf16.msra.mxu0 0
      %987 = vmatprep.subr.bf16.mxu0 0
      %988 = vmatpush1.bf16.msra.mxu0 0
      %989 = vmatprep.mubr.bf16.mxu0 0
      %990 = vmatmul.mubr.bf16.gmra.mrb[0].mxu0 %v873
      %v991 = vpop.f32.mrb[0].mxu0
      %v992 = vadd.f32 %v869, %v991
      %v993 = vpop.f32.mrb[0].mxu0
      %v994 = vpop.f32.mrb[0].mxu0
      %v995 = vadd.f32 %v869, %v994
      %v996 = vpop.f32.mrb[0].mxu0
      %997 = vmatprep.mubr.bf16.mxu0 0
      %998 = vmatmul.mubr.bf16.gmra.mrb[0].mxu0 %v876
      %v999 = vpop.f32.mrb[0].mxu0
      %v1000 = vadd.f32 %v869, %v999
      %v1001 = vpop.f32.mrb[0].mxu0
      %v1002 = vpop.f32.mrb[0].mxu0
      %v1003 = vadd.f32 %v869, %v1002
      %v1004 = vpop.f32.mrb[0].mxu0
      %1005 = vmatprep.mubr.bf16.mxu0 0
      %1006 = vmatmul.mubr.bf16.gmra.mrb[0].mxu0 %v879
      %v1007 = vpop.f32.mrb[0].mxu0
      %v1008 = vadd.f32 %v869, %v1007
      %v1009 = vpop.f32.mrb[0].mxu0
      %v1010 = vpop.f32.mrb[0].mxu0
      %v1011 = vadd.f32 %v869, %v1010
      %v1012 = vpop.f32.mrb[0].mxu0
      %1013 = vmatprep.mubr.bf16.mxu0 0
      %1014 = vmatmul.mubr.bf16.gmra.mrb[0].mxu0 %v882
      %v1015 = vpop.f32.mrb[0].mxu0
      %v1016 = vadd.f32 %v869, %v1015
      %v1017 = vpop.f32.mrb[0].mxu0
      %v1018 = vpop.f32.mrb[0].mxu0
      %v1019 = vadd.f32 %v869, %v1018
      %v1020 = vpop.f32.mrb[0].mxu0
      %1021 = vmatprep.mubr.bf16.mxu0 0
      %1022 = vmatmul.mubr.bf16.gmra.mrb[0].mxu0 %v885
      %v1023 = vpop.f32.mrb[0].mxu0
      %v1024 = vadd.f32 %v869, %v1023
      %v1025 = vpop.f32.mrb[0].mxu0
      %v1026 = vpop.f32.mrb[0].mxu0
      %v1027 = vadd.f32 %v869, %v1026
      %v1028 = vpop.f32.mrb[0].mxu0
      %1029 = vmatprep.mubr.bf16.mxu0 0
      %1030 = vmatmul.mubr.bf16.gmra.mrb[0].mxu0 %v888
      %v1031 = vpop.f32.mrb[0].mxu0
      %v1032 = vadd.f32 %v869, %v1031
      %v1033 = vpop.f32.mrb[0].mxu0
      %v1034 = vpop.f32.mrb[0].mxu0
      %v1035 = vadd.f32 %v869, %v1034
      %v1036 = vpop.f32.mrb[0].mxu0
      %1037 = vmatprep.mubr.bf16.mxu0 0
      %1038 = vmatmul.mubr.bf16.gmra.mrb[0].mxu0 %v891
      %v1039 = vpop.f32.mrb[0].mxu0
      %v1040 = vadd.f32 %v869, %v1039
      %v1041 = vpop.f32.mrb[0].mxu0
      %v1042 = vpop.f32.mrb[0].mxu0
      %v1043 = vadd.f32 %v869, %v1042
      %v1044 = vpop.f32.mrb[0].mxu0
      %1045 = vmatprep.mubr.bf16.mxu0 0
      %1046 = vmatmul.mubr.bf16.gmra.mrb[0].mxu0 %v894
      %v1047 = vpop.f32.mrb[0].mxu0
      %v1048 = vadd.f32 %v869, %v1047
      %v1049 = vpop.f32.mrb[0].mxu0
      %v1050 = vpop.f32.mrb[0].mxu0
      %v1051 = vadd.f32 %v869, %v1050
      %v1052 = vpop.f32.mrb[0].mxu0
      %1053 = vmatprep.mubr.bf16.mxu0 0
      %1054 = vmatmul.mubr.bf16.gmra.mrb[0].mxu0 %v897
      %v1055 = vpop.f32.mrb[0].mxu0
      %v1056 = vadd.f32 %v869, %v1055
      %v1057 = vpop.f32.mrb[0].mxu0
      %v1058 = vpop.f32.mrb[0].mxu0
      %v1059 = vadd.f32 %v869, %v1058
      %v1060 = vpop.f32.mrb[0].mxu0
      %1061 = vmatprep.mubr.bf16.mxu0 0
      %1062 = vmatmul.mubr.bf16.gmra.mrb[0].mxu0 %v900
      %v1063 = vpop.f32.mrb[0].mxu0
      %v1064 = vadd.f32 %v869, %v1063
      %v1065 = vpop.f32.mrb[0].mxu0
      %v1066 = vpop.f32.mrb[0].mxu0
      %v1067 = vadd.f32 %v869, %v1066
      %v1068 = vpop.f32.mrb[0].mxu0
      %1069 = vmatprep.mubr.bf16.mxu0 0
      %1070 = vmatmul.mubr.bf16.gmra.mrb[0].mxu0 %v903
      %v1071 = vpop.f32.mrb[0].mxu0
      %v1072 = vadd.f32 %v869, %v1071
      %v1073 = vpop.f32.mrb[0].mxu0
      %v1074 = vpop.f32.mrb[0].mxu0
      %v1075 = vadd.f32 %v869, %v1074
      %v1076 = vpop.f32.mrb[0].mxu0
      %1077 = vmatprep.mubr.bf16.mxu0 0
      %1078 = vmatmul.mubr.bf16.gmra.mrb[0].mxu0 %v906
      %v1079 = vpop.f32.mrb[0].mxu0
      %v1080 = vadd.f32 %v869, %v1079
      %v1081 = vpop.f32.mrb[0].mxu0
      %v1082 = vpop.f32.mrb[0].mxu0
      %v1083 = vadd.f32 %v869, %v1082
      %v1084 = vpop.f32.mrb[0].mxu0
      %1085 = vmatprep.mubr.bf16.mxu0 0
      %1086 = vmatmul.mubr.bf16.gmra.mrb[0].mxu0 %v909
      %v1087 = vpop.f32.mrb[0].mxu0
      %v1088 = vadd.f32 %v869, %v1087
      %v1089 = vpop.f32.mrb[0].mxu0
      %v1090 = vpop.f32.mrb[0].mxu0
      %v1091 = vadd.f32 %v869, %v1090
      %v1092 = vpop.f32.mrb[0].mxu0
      %1093 = vmatprep.mubr.bf16.mxu0 0
      %1094 = vmatmul.mubr.bf16.gmra.mrb[0].mxu0 %v912
      %v1095 = vpop.f32.mrb[0].mxu0
      %v1096 = vadd.f32 %v869, %v1095
      %v1097 = vpop.f32.mrb[0].mxu0
      %v1098 = vpop.f32.mrb[0].mxu0
      %v1099 = vadd.f32 %v869, %v1098
      %v1100 = vpop.f32.mrb[0].mxu0
      %1101 = vmatprep.mubr.bf16.mxu0 0
      %1102 = vmatmul.mubr.bf16.gmra.mrb[0].mxu0 %v915
      %v1103 = vpop.f32.mrb[0].mxu0
      %v1104 = vadd.f32 %v869, %v1103
      %v1105 = vpop.f32.mrb[0].mxu0
      %v1106 = vpop.f32.mrb[0].mxu0
      %v1107 = vadd.f32 %v869, %v1106
      %v1108 = vpop.f32.mrb[0].mxu0
      %1109 = vmatprep.mubr.bf16.mxu0 0
      %1110 = vmatmul.mubr.bf16.gmra.mrb[0].mxu0 %v918
      %v1111 = vpop.f32.mrb[0].mxu0
      %v1112 = vadd.f32 %v869, %v1111
      %v1113 = vpop.f32.mrb[0].mxu0
      %v1114 = vpop.f32.mrb[0].mxu0
      %v1115 = vadd.f32 %v869, %v1114
      %v1116 = vpop.f32.mrb[0].mxu0
      %1117 = vmatprep.mubr.bf16.mxu0 0
      %1118 = vmatmul.mubr.bf16.gmra.mrb[0].mxu0 %v921
      %v1119 = vpop.f32.mrb[0].mxu0
      %v1120 = vadd.f32 %v869, %v1119
      %v1121 = vpop.f32.mrb[0].mxu0
      %v1122 = vpop.f32.mrb[0].mxu0
      %v1123 = vadd.f32 %v869, %v1122
      %v1124 = vpop.f32.mrb[0].mxu0
      %1125 = vmatprep.mubr.bf16.mxu0 0
      %1126 = vmatmul.mubr.bf16.gmra.mrb[0].mxu0 %v924
      %v1127 = vpop.f32.mrb[0].mxu0
      %v1128 = vadd.f32 %v869, %v1127
      %v1129 = vpop.f32.mrb[0].mxu0
      %v1130 = vpop.f32.mrb[0].mxu0
      %v1131 = vadd.f32 %v869, %v1130
      %v1132 = vpop.f32.mrb[0].mxu0
      %1133 = vmatprep.mubr.bf16.mxu0 0
      %1134 = vmatmul.mubr.bf16.gmra.mrb[0].mxu0 %v927
      %v1135 = vpop.f32.mrb[0].mxu0
      %v1136 = vadd.f32 %v869, %v1135
      %v1137 = vpop.f32.mrb[0].mxu0
      %v1138 = vpop.f32.mrb[0].mxu0
      %v1139 = vadd.f32 %v869, %v1138
      %v1140 = vpop.f32.mrb[0].mxu0
      %1141 = vmatprep.mubr.bf16.mxu0 0
      %1142 = vmatmul.mubr.bf16.gmra.mrb[0].mxu0 %v930
      %v1143 = vpop.f32.mrb[0].mxu0
      %v1144 = vadd.f32 %v869, %v1143
      %v1145 = vpop.f32.mrb[0].mxu0
      %v1146 = vpop.f32.mrb[0].mxu0
      %v1147 = vadd.f32 %v869, %v1146
      %v1148 = vpop.f32.mrb[0].mxu0
      %1149 = vmatprep.mubr.bf16.mxu0 0
      %1150 = vmatmul.mubr.bf16.gmra.mrb[0].mxu0 %v933
      %v1151 = vpop.f32.mrb[0].mxu0
      %v1152 = vadd.f32 %v869, %v1151
      %v1153 = vpop.f32.mrb[0].mxu0
      %v1154 = vpop.f32.mrb[0].mxu0
      %v1155 = vadd.f32 %v869, %v1154
      %v1156 = vpop.f32.mrb[0].mxu0
      %1157 = vmatprep.mubr.bf16.mxu0 0
      %1158 = vmatmul.mubr.bf16.gmra.mrb[0].mxu0 %v936
      %v1159 = vpop.f32.mrb[0].mxu0
      %v1160 = vadd.f32 %v869, %v1159
      %v1161 = vpop.f32.mrb[0].mxu0
      %v1162 = vpop.f32.mrb[0].mxu0
      %v1163 = vadd.f32 %v869, %v1162
      %v1164 = vpop.f32.mrb[0].mxu0
      %1165 = vmatprep.mubr.bf16.mxu0 0
      %1166 = vmatmul.mubr.bf16.gmra.mrb[0].mxu0 %v939
      %v1167 = vpop.f32.mrb[0].mxu0
      %v1168 = vadd.f32 %v869, %v1167
      %v1169 = vpop.f32.mrb[0].mxu0
      %v1170 = vpop.f32.mrb[0].mxu0
      %v1171 = vadd.f32 %v869, %v1170
      %v1172 = vpop.f32.mrb[0].mxu0
      %1173 = vmatprep.mubr.bf16.mxu0 0
      %1174 = vmatmul.mubr.bf16.gmra.mrb[0].mxu0 %v942
      %v1175 = vpop.f32.mrb[0].mxu0
      %v1176 = vadd.f32 %v869, %v1175
      %v1177 = vpop.f32.mrb[0].mxu0
      %v1178 = vpop.f32.mrb[0].mxu0
      %v1179 = vadd.f32 %v869, %v1178
      %v1180 = vpop.f32.mrb[0].mxu0
      %1181 = vmatprep.mubr.bf16.mxu0 0
      %1182 = vmatmul.mubr.bf16.gmra.mrb[0].mxu0 %v945
      %v1183 = vpop.f32.mrb[0].mxu0
      %v1184 = vadd.f32 %v869, %v1183
      %v1185 = vpop.f32.mrb[0].mxu0
      %v1186 = vpop.f32.mrb[0].mxu0
      %v1187 = vadd.f32 %v869, %v1186
      %v1188 = vpop.f32.mrb[0].mxu0
      %1189 = vmatprep.mubr.bf16.mxu0 0
      %1190 = vmatmul.mubr.bf16.gmra.mrb[0].mxu0 %v948
      %v1191 = vpop.f32.mrb[0].mxu0
      %v1192 = vadd.f32 %v869, %v1191
      %v1193 = vpop.f32.mrb[0].mxu0
      %v1194 = vpop.f32.mrb[0].mxu0
      %v1195 = vadd.f32 %v869, %v1194
      %v1196 = vpop.f32.mrb[0].mxu0
      %1197 = vmatprep.mubr.bf16.mxu0 0
      %1198 = vmatmul.mubr.bf16.gmra.mrb[0].mxu0 %v951
      %v1199 = vpop.f32.mrb[0].mxu0
      %v1200 = vadd.f32 %v869, %v1199
      %v1201 = vpop.f32.mrb[0].mxu0
      %v1202 = vpop.f32.mrb[0].mxu0
      %v1203 = vadd.f32 %v869, %v1202
      %v1204 = vpop.f32.mrb[0].mxu0
      %1205 = vdwg.mxu0
      %v1206 = vmax.f32 %v992, 0.0
      %v1207 = vmax.f32 %v995, 0.0
      %v1208 = vmax.f32 %v1000, 0.0
      %v1209 = vmax.f32 %v1003, 0.0
      %v1210 = vmax.f32 %v1008, 0.0
      %v1211 = vmax.f32 %v1011, 0.0
      %v1212 = vmax.f32 %v1016, 0.0
      %v1213 = vmax.f32 %v1019, 0.0
      %v1214 = vmax.f32 %v1024, 0.0
      %v1215 = vmax.f32 %v1027, 0.0
      %v1216 = vmax.f32 %v1032, 0.0
      %v1217 = vmax.f32 %v1035, 0.0
      %v1218 = vmax.f32 %v1040, 0.0
      %v1219 = vmax.f32 %v1043, 0.0
      %v1220 = vmax.f32 %v1048, 0.0
      %v1221 = vmax.f32 %v1051, 0.0
      %v1222 = vmax.f32 %v1056, 0.0
      %v1223 = vmax.f32 %v1059, 0.0
      %v1224 = vmax.f32 %v1064, 0.0
      %v1225 = vmax.f32 %v1067, 0.0
      %v1226 = vmax.f32 %v1072, 0.0
      %v1227 = vmax.f32 %v1075, 0.0
      %v1228 = vmax.f32 %v1080, 0.0
      %v1229 = vmax.f32 %v1083, 0.0
      %v1230 = vmax.f32 %v1088, 0.0
      %v1231 = vmax.f32 %v1091, 0.0
      %v1232 = vmax.f32 %v1096, 0.0
      %v1233 = vmax.f32 %v1099, 0.0
      %v1234 = vmax.f32 %v1104, 0.0
      %v1235 = vmax.f32 %v1107, 0.0
      %v1236 = vmax.f32 %v1112, 0.0
      %v1237 = vmax.f32 %v1115, 0.0
      %v1238 = vmax.f32 %v1120, 0.0
      %v1239 = vmax.f32 %v1123, 0.0
      %v1240 = vmax.f32 %v1128, 0.0
      %v1241 = vmax.f32 %v1131, 0.0
      %v1242 = vmax.f32 %v1136, 0.0
      %v1243 = vmax.f32 %v1139, 0.0
      %v1244 = vmax.f32 %v1144, 0.0
      %v1245 = vmax.f32 %v1147, 0.0
      %v1246 = vmax.f32 %v1152, 0.0
      %v1247 = vmax.f32 %v1155, 0.0
      %v1248 = vmax.f32 %v1160, 0.0
      %v1249 = vmax.f32 %v1163, 0.0
      %v1250 = vmax.f32 %v1168, 0.0
      %v1251 = vmax.f32 %v1171, 0.0
      %v1252 = vmax.f32 %v1176, 0.0
      %v1253 = vmax.f32 %v1179, 0.0
      %v1254 = vmax.f32 %v1184, 0.0
      %v1255 = vmax.f32 %v1187, 0.0
      %v1256 = vmax.f32 %v1192, 0.0
      %v1257 = vmax.f32 %v1195, 0.0
      %v1258 = vmax.f32 %v1200, 0.0
      %v1259 = vmax.f32 %v1203, 0.0
      %1261 = vset.pattern.permute.xlu0 0
      %1262 = vperm.xlu0 %1261, %v606
      %v1263 = vpop.permute.xlu0 %1262
      %1266 = vset.pattern.permute.xlu0 0
      %1267 = vperm.xlu0 %1266, %v607
      %v1268 = vpop.permute.xlu0 %1267
      %1271 = vset.pattern.permute.xlu0 0
      %1272 = vperm.xlu0 %1271, %v608
      %v1273 = vpop.permute.xlu0 %1272
      %1276 = vset.pattern.permute.xlu0 0
      %1277 = vperm.xlu0 %1276, %v609
      %v1278 = vpop.permute.xlu0 %1277
      %1281 = vset.pattern.permute.xlu0 0
      %1282 = vperm.xlu0 %1281, %v610
      %v1283 = vpop.permute.xlu0 %1282
      %1286 = vset.pattern.permute.xlu0 0
      %1287 = vperm.xlu0 %1286, %v611
      %v1288 = vpop.permute.xlu0 %1287
      %1291 = vset.pattern.permute.xlu0 0
      %1292 = vperm.xlu0 %1291, %v612
      %v1293 = vpop.permute.xlu0 %1292
      %1296 = vset.pattern.permute.xlu0 0
      %1297 = vperm.xlu0 %1296, %v613
      %v1298 = vpop.permute.xlu0 %1297
      %1301 = vset.pattern.permute.xlu0 0
      %1302 = vperm.xlu0 %1301, %v614
      %v1303 = vpop.permute.xlu0 %1302
      %1306 = vset.pattern.permute.xlu0 0
      %1307 = vperm.xlu0 %1306, %v615
      %v1308 = vpop.permute.xlu0 %1307
      %1311 = vset.pattern.permute.xlu0 0
      %1312 = vperm.xlu0 %1311, %v616
      %v1313 = vpop.permute.xlu0 %1312
      %1316 = vset.pattern.permute.xlu0 0
      %1317 = vperm.xlu0 %1316, %v617
      %v1318 = vpop.permute.xlu0 %1317
      %1321 = vset.pattern.permute.xlu0 0
      %1322 = vperm.xlu0 %1321, %v618
      %v1323 = vpop.permute.xlu0 %1322
      %1326 = vset.pattern.permute.xlu0 0
      %1327 = vperm.xlu0 %1326, %v619
      %v1328 = vpop.permute.xlu0 %1327
      %1331 = vset.pattern.permute.xlu0 0
      %1332 = vperm.xlu0 %1331, %v620
      %v1333 = vpop.permute.xlu0 %1332
      %1336 = vset.pattern.permute.xlu0 0
      %1337 = vperm.xlu0 %1336, %v621
      %v1338 = vpop.permute.xlu0 %1337
      %1341 = vset.pattern.permute.xlu0 0
      %1342 = vperm.xlu0 %1341, %v622
      %v1343 = vpop.permute.xlu0 %1342
      %1346 = vset.pattern.permute.xlu0 0
      %1347 = vperm.xlu0 %1346, %v623
      %v1348 = vpop.permute.xlu0 %1347
      %1351 = vset.pattern.permute.xlu0 0
      %1352 = vperm.xlu0 %1351, %v624
      %v1353 = vpop.permute.xlu0 %1352
      %1356 = vset.pattern.permute.xlu0 0
      %1357 = vperm.xlu0 %1356, %v625
      %v1358 = vpop.permute.xlu0 %1357
      %1361 = vset.pattern.permute.xlu0 0
      %1362 = vperm.xlu0 %1361, %v626
      %v1363 = vpop.permute.xlu0 %1362
      %1366 = vset.pattern.permute.xlu0 0
      %1367 = vperm.xlu0 %1366, %v627
      %v1368 = vpop.permute.xlu0 %1367
      %1371 = vset.pattern.permute.xlu0 0
      %1372 = vperm.xlu0 %1371, %v628
      %v1373 = vpop.permute.xlu0 %1372
      %1376 = vset.pattern.permute.xlu0 0
      %1377 = vperm.xlu0 %1376, %v629
      %v1378 = vpop.permute.xlu0 %1377
      %1381 = vset.pattern.permute.xlu0 0
      %1382 = vperm.xlu0 %1381, %v630
      %v1383 = vpop.permute.xlu0 %1382
      %1386 = vset.pattern.permute.xlu0 0
      %1387 = vperm.xlu0 %1386, %v631
      %v1388 = vpop.permute.xlu0 %1387
      %1391 = vset.pattern.permute.xlu0 0
      %1392 = vperm.xlu0 %1391, %v632
      %v1393 = vpop.permute.xlu0 %1392
      %1396 = vset.pattern.permute.xlu0 0
      %1397 = vperm.xlu0 %1396, %v633
      %v1398 = vpop.permute.xlu0 %1397
      %1401 = vset.pattern.permute.xlu0 0
      %1402 = vperm.xlu0 %1401, %v634
      %v1403 = vpop.permute.xlu0 %1402
      %1406 = vset.pattern.permute.xlu0 0
      %1407 = vperm.xlu0 %1406, %v635
      %v1408 = vpop.permute.xlu0 %1407
      %1411 = vset.pattern.permute.xlu0 0
      %1412 = vperm.xlu0 %1411, %v636
      %v1413 = vpop.permute.xlu0 %1412
      %1416 = vset.pattern.permute.xlu0 0
      %1417 = vperm.xlu0 %1416, %v637
      %v1418 = vpop.permute.xlu0 %1417
      %1421 = vset.pattern.permute.xlu0 0
      %1422 = vperm.xlu0 %1421, %v638
      %v1423 = vpop.permute.xlu0 %1422
      %1426 = vset.pattern.permute.xlu0 0
      %1427 = vperm.xlu0 %1426, %v639
      %v1428 = vpop.permute.xlu0 %1427
      %1431 = vset.pattern.permute.xlu0 0
      %1432 = vperm.xlu0 %1431, %v640
      %v1433 = vpop.permute.xlu0 %1432
      %1436 = vset.pattern.permute.xlu0 0
      %1437 = vperm.xlu0 %1436, %v641
      %v1438 = vpop.permute.xlu0 %1437
      %1441 = vset.pattern.permute.xlu0 0
      %1442 = vperm.xlu0 %1441, %v642
      %v1443 = vpop.permute.xlu0 %1442
      %1446 = vset.pattern.permute.xlu0 0
      %1447 = vperm.xlu0 %1446, %v643
      %v1448 = vpop.permute.xlu0 %1447
      %1451 = vset.pattern.permute.xlu0 0
      %1452 = vperm.xlu0 %1451, %v644
      %v1453 = vpop.permute.xlu0 %1452
      %1456 = vset.pattern.permute.xlu0 0
      %1457 = vperm.xlu0 %1456, %v645
      %v1458 = vpop.permute.xlu0 %1457
      %1461 = vset.pattern.permute.xlu0 0
      %1462 = vperm.xlu0 %1461, %v646
      %v1463 = vpop.permute.xlu0 %1462
      %1466 = vset.pattern.permute.xlu0 0
      %1467 = vperm.xlu0 %1466, %v647
      %v1468 = vpop.permute.xlu0 %1467
      %1471 = vset.pattern.permute.xlu0 0
      %1472 = vperm.xlu0 %1471, %v648
      %v1473 = vpop.permute.xlu0 %1472
      %1476 = vset.pattern.permute.xlu0 0
      %1477 = vperm.xlu0 %1476, %v649
      %v1478 = vpop.permute.xlu0 %1477
      %1481 = vset.pattern.permute.xlu0 0
      %1482 = vperm.xlu0 %1481, %v650
      %v1483 = vpop.permute.xlu0 %1482
      %1486 = vset.pattern.permute.xlu0 0
      %1487 = vperm.xlu0 %1486, %v651
      %v1488 = vpop.permute.xlu0 %1487
      %1491 = vset.pattern.permute.xlu0 0
      %1492 = vperm.xlu0 %1491, %v652
      %v1493 = vpop.permute.xlu0 %1492
      %1496 = vset.pattern.permute.xlu0 0
      %1497 = vperm.xlu0 %1496, %v653
      %v1498 = vpop.permute.xlu0 %1497
      %1501 = vset.pattern.permute.xlu0 0
      %1502 = vperm.xlu0 %1501, %v654
      %v1503 = vpop.permute.xlu0 %1502
      %1506 = vset.pattern.permute.xlu0 0
      %1507 = vperm.xlu0 %1506, %v655
      %v1508 = vpop.permute.xlu0 %1507
      %1511 = vset.pattern.permute.xlu0 0
      %1512 = vperm.xlu0 %1511, %v656
      %v1513 = vpop.permute.xlu0 %1512
      %1516 = vset.pattern.permute.xlu0 0
      %1517 = vperm.xlu0 %1516, %v657
      %v1518 = vpop.permute.xlu0 %1517
      %1521 = vset.pattern.permute.xlu0 0
      %1522 = vperm.xlu0 %1521, %v658
      %v1523 = vpop.permute.xlu0 %1522
      %1526 = vset.pattern.permute.xlu0 0
      %1527 = vperm.xlu0 %1526, %v659
      %v1528 = vpop.permute.xlu0 %1527
      %v1530 = vmul.f32 %v1206, %v1263
      %v1531 = vmul.f32 %v1207, %v1268
      %v1532 = vmul.f32 %v1208, %v1273
      %v1533 = vmul.f32 %v1209, %v1278
      %v1534 = vmul.f32 %v1210, %v1283
      %v1535 = vmul.f32 %v1211, %v1288
      %v1536 = vmul.f32 %v1212, %v1293
      %v1537 = vmul.f32 %v1213, %v1298
      %v1538 = vmul.f32 %v1214, %v1303
      %v1539 = vmul.f32 %v1215, %v1308
      %v1540 = vmul.f32 %v1216, %v1313
      %v1541 = vmul.f32 %v1217, %v1318
      %v1542 = vmul.f32 %v1218, %v1323
      %v1543 = vmul.f32 %v1219, %v1328
      %v1544 = vmul.f32 %v1220, %v1333
      %v1545 = vmul.f32 %v1221, %v1338
      %v1546 = vmul.f32 %v1222, %v1343
      %v1547 = vmul.f32 %v1223, %v1348
      %v1548 = vmul.f32 %v1224, %v1353
      %v1549 = vmul.f32 %v1225, %v1358
      %v1550 = vmul.f32 %v1226, %v1363
      %v1551 = vmul.f32 %v1227, %v1368
      %v1552 = vmul.f32 %v1228, %v1373
      %v1553 = vmul.f32 %v1229, %v1378
      %v1554 = vmul.f32 %v1230, %v1383
      %v1555 = vmul.f32 %v1231, %v1388
      %v1556 = vmul.f32 %v1232, %v1393
      %v1557 = vmul.f32 %v1233, %v1398
      %v1558 = vmul.f32 %v1234, %v1403
      %v1559 = vmul.f32 %v1235, %v1408
      %v1560 = vmul.f32 %v1236, %v1413
      %v1561 = vmul.f32 %v1237, %v1418
      %v1562 = vmul.f32 %v1238, %v1423
      %v1563 = vmul.f32 %v1239, %v1428
      %v1564 = vmul.f32 %v1240, %v1433
      %v1565 = vmul.f32 %v1241, %v1438
      %v1566 = vmul.f32 %v1242, %v1443
      %v1567 = vmul.f32 %v1243, %v1448
      %v1568 = vmul.f32 %v1244, %v1453
      %v1569 = vmul.f32 %v1245, %v1458
      %v1570 = vmul.f32 %v1246, %v1463
      %v1571 = vmul.f32 %v1247, %v1468
      %v1572 = vmul.f32 %v1248, %v1473
      %v1573 = vmul.f32 %v1249, %v1478
      %v1574 = vmul.f32 %v1250, %v1483
      %v1575 = vmul.f32 %v1251, %v1488
      %v1576 = vmul.f32 %v1252, %v1493
      %v1577 = vmul.f32 %v1253, %v1498
      %v1578 = vmul.f32 %v1254, %v1503
      %v1579 = vmul.f32 %v1255, %v1508
      %v1580 = vmul.f32 %v1256, %v1513
      %v1581 = vmul.f32 %v1257, %v1518
      %v1582 = vmul.f32 %v1258, %v1523
      %v1583 = vmul.f32 %v1259, %v1528
      %1584 = vst.msk [vmem:[#allocation2] sm:$0xff] %vm871, 0.0
      %1585 = vst.msk [vmem:[#allocation2 + $0x1b8] sm:$0xff] %vm871, 0.0
      %1586 = vst.msk [vmem:[#allocation2 + $0x8] sm:$0xff] %vm871, %v1530
      %1587 = vst.msk [vmem:[#allocation2 + $0x10] sm:$0xff] %vm871, %v1531
      %1588 = vst.msk [vmem:[#allocation2 + $0x18] sm:$0xff] %vm871, %v1532
      %1589 = vst.msk [vmem:[#allocation2 + $0x20] sm:$0xff] %vm871, %v1533
      %1590 = vst.msk [vmem:[#allocation2 + $0x28] sm:$0xff] %vm871, %v1534
      %1591 = vst.msk [vmem:[#allocation2 + $0x30] sm:$0xff] %vm871, %v1535
      %1592 = vst.msk [vmem:[#allocation2 + $0x38] sm:$0xff] %vm871, %v1536
      %1593 = vst.msk [vmem:[#allocation2 + $0x40] sm:$0xff] %vm871, %v1537
      %1594 = vst.msk [vmem:[#allocation2 + $0x48] sm:$0xff] %vm871, %v1538
      %1595 = vst.msk [vmem:[#allocation2 + $0x50] sm:$0xff] %vm871, %v1539
      %1596 = vst.msk [vmem:[#allocation2 + $0x58] sm:$0xff] %vm871, %v1540
      %1597 = vst.msk [vmem:[#allocation2 + $0x60] sm:$0xff] %vm871, %v1541
      %1598 = vst.msk [vmem:[#allocation2 + $0x68] sm:$0xff] %vm871, %v1542
      %1599 = vst.msk [vmem:[#allocation2 + $0x70] sm:$0xff] %vm871, %v1543
      %1600 = vst.msk [vmem:[#allocation2 + $0x78] sm:$0xff] %vm871, %v1544
      %1601 = vst.msk [vmem:[#allocation2 + $0x80] sm:$0xff] %vm871, %v1545
      %1602 = vst.msk [vmem:[#allocation2 + $0x88] sm:$0xff] %vm871, %v1546
      %1603 = vst.msk [vmem:[#allocation2 + $0x90] sm:$0xff] %vm871, %v1547
      %1604 = vst.msk [vmem:[#allocation2 + $0x98] sm:$0xff] %vm871, %v1548
      %1605 = vst.msk [vmem:[#allocation2 + $0xa0] sm:$0xff] %vm871, %v1549
      %1606 = vst.msk [vmem:[#allocation2 + $0xa8] sm:$0xff] %vm871, %v1550
      %1607 = vst.msk [vmem:[#allocation2 + $0xb0] sm:$0xff] %vm871, %v1551
      %1608 = vst.msk [vmem:[#allocation2 + $0xb8] sm:$0xff] %vm871, %v1552
      %1609 = vst.msk [vmem:[#allocation2 + $0xc0] sm:$0xff] %vm871, %v1553
      %1610 = vst.msk [vmem:[#allocation2 + $0xc8] sm:$0xff] %vm871, %v1554
      %1611 = vst.msk [vmem:[#allocation2 + $0xd0] sm:$0xff] %vm871, %v1555
      %1612 = vst.msk [vmem:[#allocation2 + $0xd8] sm:$0xff] %vm871, %v1556
      %1613 = vst.msk [vmem:[#allocation2 + $0xe0] sm:$0xff] %vm871, %v1557
      %1614 = vst.msk [vmem:[#allocation2 + $0xe8] sm:$0xff] %vm871, %v1558
      %1615 = vst.msk [vmem:[#allocation2 + $0xf0] sm:$0xff] %vm871, %v1559
      %1616 = vst.msk [vmem:[#allocation2 + $0xf8] sm:$0xff] %vm871, %v1560
      %1617 = vst.msk [vmem:[#allocation2 + $0x100] sm:$0xff] %vm871, %v1561
      %1618 = vst.msk [vmem:[#allocation2 + $0x108] sm:$0xff] %vm871, %v1562
      %1619 = vst.msk [vmem:[#allocation2 + $0x110] sm:$0xff] %vm871, %v1563
      %1620 = vst.msk [vmem:[#allocation2 + $0x118] sm:$0xff] %vm871, %v1564
      %1621 = vst.msk [vmem:[#allocation2 + $0x120] sm:$0xff] %vm871, %v1565
      %1622 = vst.msk [vmem:[#allocation2 + $0x128] sm:$0xff] %vm871, %v1566
      %1623 = vst.msk [vmem:[#allocation2 + $0x130] sm:$0xff] %vm871, %v1567
      %1624 = vst.msk [vmem:[#allocation2 + $0x138] sm:$0xff] %vm871, %v1568
      %1625 = vst.msk [vmem:[#allocation2 + $0x140] sm:$0xff] %vm871, %v1569
      %1626 = vst.msk [vmem:[#allocation2 + $0x148] sm:$0xff] %vm871, %v1570
      %1627 = vst.msk [vmem:[#allocation2 + $0x150] sm:$0xff] %vm871, %v1571
      %1628 = vst.msk [vmem:[#allocation2 + $0x158] sm:$0xff] %vm871, %v1572
      %1629 = vst.msk [vmem:[#allocation2 + $0x160] sm:$0xff] %vm871, %v1573
      %1630 = vst.msk [vmem:[#allocation2 + $0x168] sm:$0xff] %vm871, %v1574
      %1631 = vst.msk [vmem:[#allocation2 + $0x170] sm:$0xff] %vm871, %v1575
      %1632 = vst.msk [vmem:[#allocation2 + $0x178] sm:$0xff] %vm871, %v1576
      %1633 = vst.msk [vmem:[#allocation2 + $0x180] sm:$0xff] %vm871, %v1577
      %1634 = vst.msk [vmem:[#allocation2 + $0x188] sm:$0xff] %vm871, %v1578
      %1635 = vst.msk [vmem:[#allocation2 + $0x190] sm:$0xff] %vm871, %v1579
      %1636 = vst.msk [vmem:[#allocation2 + $0x198] sm:$0xff] %vm871, %v1580
      %1637 = vst.msk [vmem:[#allocation2 + $0x1a0] sm:$0xff] %vm871, %v1581
      %1638 = vst.msk [vmem:[#allocation2 + $0x1a8] sm:$0xff] %vm871, %v1582
      %1639 = vst.msk [vmem:[#allocation2 + $0x1b0] sm:$0xff] %vm871, %v1583
      %v1640 = vld [vmem:[#allocation2 + $0x7] sm:$0xff]
      %v1641 = vld [vmem:[#allocation2 + $0xf] sm:$0xff]
      %v1642 = vld [vmem:[#allocation2 + $0x17] sm:$0xff]
      %v1643 = vld [vmem:[#allocation2 + $0x1f] sm:$0xff]
      %v1644 = vld [vmem:[#allocation2 + $0x27] sm:$0xff]
      %v1645 = vld [vmem:[#allocation2 + $0x2f] sm:$0xff]
      %v1646 = vld [vmem:[#allocation2 + $0x37] sm:$0xff]
      %v1647 = vld [vmem:[#allocation2 + $0x3f] sm:$0xff]
      %v1648 = vld [vmem:[#allocation2 + $0x47] sm:$0xff]
      %v1649 = vld [vmem:[#allocation2 + $0x4f] sm:$0xff]
      %v1650 = vld [vmem:[#allocation2 + $0x57] sm:$0xff]
      %v1651 = vld [vmem:[#allocation2 + $0x5f] sm:$0xff]
      %v1652 = vld [vmem:[#allocation2 + $0x67] sm:$0xff]
      %v1653 = vld [vmem:[#allocation2 + $0x6f] sm:$0xff]
      %v1654 = vld [vmem:[#allocation2 + $0x77] sm:$0xff]
      %v1655 = vld [vmem:[#allocation2 + $0x7f] sm:$0xff]
      %v1656 = vld [vmem:[#allocation2 + $0x87] sm:$0xff]
      %v1657 = vld [vmem:[#allocation2 + $0x8f] sm:$0xff]
      %v1658 = vld [vmem:[#allocation2 + $0x97] sm:$0xff]
      %v1659 = vld [vmem:[#allocation2 + $0x9f] sm:$0xff]
      %v1660 = vld [vmem:[#allocation2 + $0xa7] sm:$0xff]
      %v1661 = vld [vmem:[#allocation2 + $0xaf] sm:$0xff]
      %v1662 = vld [vmem:[#allocation2 + $0xb7] sm:$0xff]
      %v1663 = vld [vmem:[#allocation2 + $0xbf] sm:$0xff]
      %v1664 = vld [vmem:[#allocation2 + $0xc7] sm:$0xff]
      %v1665 = vld [vmem:[#allocation2 + $0xcf] sm:$0xff]
      %v1666 = vld [vmem:[#allocation2 + $0xd7] sm:$0xff]
      %v1667 = vld [vmem:[#allocation2 + $0xdf] sm:$0xff]
      %v1668 = vld [vmem:[#allocation2 + $0xe7] sm:$0xff]
      %v1669 = vld [vmem:[#allocation2 + $0xef] sm:$0xff]
      %v1670 = vld [vmem:[#allocation2 + $0xf7] sm:$0xff]
      %v1671 = vld [vmem:[#allocation2 + $0xff] sm:$0xff]
      %v1672 = vld [vmem:[#allocation2 + $0x107] sm:$0xff]
      %v1673 = vld [vmem:[#allocation2 + $0x10f] sm:$0xff]
      %v1674 = vld [vmem:[#allocation2 + $0x117] sm:$0xff]
      %v1675 = vld [vmem:[#allocation2 + $0x11f] sm:$0xff]
      %v1676 = vld [vmem:[#allocation2 + $0x127] sm:$0xff]
      %v1677 = vld [vmem:[#allocation2 + $0x12f] sm:$0xff]
      %v1678 = vld [vmem:[#allocation2 + $0x137] sm:$0xff]
      %v1679 = vld [vmem:[#allocation2 + $0x13f] sm:$0xff]
      %v1680 = vld [vmem:[#allocation2 + $0x147] sm:$0xff]
      %v1681 = vld [vmem:[#allocation2 + $0x14f] sm:$0xff]
      %v1682 = vld [vmem:[#allocation2 + $0x157] sm:$0xff]
      %v1683 = vld [vmem:[#allocation2 + $0x15f] sm:$0xff]
      %v1684 = vld [vmem:[#allocation2 + $0x167] sm:$0xff]
      %v1685 = vld [vmem:[#allocation2 + $0x16f] sm:$0xff]
      %v1686 = vld [vmem:[#allocation2 + $0x177] sm:$0xff]
      %v1687 = vld [vmem:[#allocation2 + $0x17f] sm:$0xff]
      %v1688 = vpack.c.bf16 %v1641, %v1640
      %v1689 = vpack.c.bf16 %v1643, %v1642
      %v1690 = vpack.c.bf16 %v1645, %v1644
      %v1691 = vpack.c.bf16 %v1647, %v1646
      %v1692 = vpack.c.bf16 %v1649, %v1648
      %v1693 = vpack.c.bf16 %v1651, %v1650
      %v1694 = vpack.c.bf16 %v1653, %v1652
      %v1695 = vpack.c.bf16 %v1655, %v1654
      %v1696 = vpack.c.bf16 %v1657, %v1656
      %v1697 = vpack.c.bf16 %v1659, %v1658
      %v1698 = vpack.c.bf16 %v1661, %v1660
      %v1699 = vpack.c.bf16 %v1663, %v1662
      %v1700 = vpack.c.bf16 %v1665, %v1664
      %v1701 = vpack.c.bf16 %v1667, %v1666
      %v1702 = vpack.c.bf16 %v1669, %v1668
      %v1703 = vpack.c.bf16 %v1671, %v1670
      %v1704 = vpack.c.bf16 %v1673, %v1672
      %v1705 = vpack.c.bf16 %v1675, %v1674
      %v1706 = vpack.c.bf16 %v1677, %v1676
      %v1707 = vpack.c.bf16 %v1679, %v1678
      %v1708 = vpack.c.bf16 %v1681, %v1680
      %v1709 = vpack.c.bf16 %v1683, %v1682
      %v1710 = vpack.c.bf16 %v1685, %v1684
      %v1711 = vpack.c.bf16 %v1687, %v1686
      %v1712 = vld [vmem:[%s6] sm:$0x3]
      %v1713 = vld [vmem:[#allocation2 + $0x8] sm:$0xff]
      %v1714 = vld [vmem:[#allocation2 + $0x10] sm:$0xff]
      %v1715 = vld [vmem:[#allocation2 + $0x18] sm:$0xff]
      %v1716 = vld [vmem:[#allocation2 + $0x20] sm:$0xff]
      %v1717 = vld [vmem:[#allocation2 + $0x28] sm:$0xff]
      %v1718 = vld [vmem:[#allocation2 + $0x30] sm:$0xff]
      %v1719 = vld [vmem:[#allocation2 + $0x38] sm:$0xff]
      %v1720 = vld [vmem:[#allocation2 + $0x40] sm:$0xff]
      %v1721 = vld [vmem:[#allocation2 + $0x48] sm:$0xff]
      %v1722 = vld [vmem:[#allocation2 + $0x50] sm:$0xff]
      %v1723 = vld [vmem:[#allocation2 + $0x58] sm:$0xff]
      %v1724 = vld [vmem:[#allocation2 + $0x60] sm:$0xff]
      %v1725 = vld [vmem:[#allocation2 + $0x68] sm:$0xff]
      %v1726 = vld [vmem:[#allocation2 + $0x70] sm:$0xff]
      %v1727 = vld [vmem:[#allocation2 + $0x78] sm:$0xff]
      %v1728 = vld [vmem:[#allocation2 + $0x80] sm:$0xff]
      %v1729 = vld [vmem:[#allocation2 + $0x88] sm:$0xff]
      %v1730 = vld [vmem:[#allocation2 + $0x90] sm:$0xff]
      %v1731 = vld [vmem:[#allocation2 + $0x98] sm:$0xff]
      %v1732 = vld [vmem:[#allocation2 + $0xa0] sm:$0xff]
      %v1733 = vld [vmem:[#allocation2 + $0xa8] sm:$0xff]
      %v1734 = vld [vmem:[#allocation2 + $0xb0] sm:$0xff]
      %v1735 = vld [vmem:[#allocation2 + $0xb8] sm:$0xff]
      %v1736 = vld [vmem:[#allocation2 + $0xc0] sm:$0xff]
      %v1737 = vld [vmem:[#allocation2 + $0xc8] sm:$0xff]
      %v1738 = vld [vmem:[#allocation2 + $0xd0] sm:$0xff]
      %v1739 = vld [vmem:[#allocation2 + $0xd8] sm:$0xff]
      %v1740 = vld [vmem:[#allocation2 + $0xe0] sm:$0xff]
      %v1741 = vld [vmem:[#allocation2 + $0xe8] sm:$0xff]
      %v1742 = vld [vmem:[#allocation2 + $0xf0] sm:$0xff]
      %v1743 = vld [vmem:[#allocation2 + $0xf8] sm:$0xff]
      %v1744 = vld [vmem:[#allocation2 + $0x100] sm:$0xff]
      %v1745 = vld [vmem:[#allocation2 + $0x108] sm:$0xff]
      %v1746 = vld [vmem:[#allocation2 + $0x110] sm:$0xff]
      %v1747 = vld [vmem:[#allocation2 + $0x118] sm:$0xff]
      %v1748 = vld [vmem:[#allocation2 + $0x120] sm:$0xff]
      %v1749 = vld [vmem:[#allocation2 + $0x128] sm:$0xff]
      %v1750 = vld [vmem:[#allocation2 + $0x130] sm:$0xff]
      %v1751 = vld [vmem:[#allocation2 + $0x138] sm:$0xff]
      %v1752 = vld [vmem:[#allocation2 + $0x140] sm:$0xff]
      %v1753 = vld [vmem:[#allocation2 + $0x148] sm:$0xff]
      %v1754 = vld [vmem:[#allocation2 + $0x150] sm:$0xff]
      %v1755 = vld [vmem:[#allocation2 + $0x158] sm:$0xff]
      %v1756 = vld [vmem:[#allocation2 + $0x160] sm:$0xff]
      %v1757 = vld [vmem:[#allocation2 + $0x168] sm:$0xff]
      %v1758 = vld [vmem:[#allocation2 + $0x170] sm:$0xff]
      %v1759 = vld [vmem:[#allocation2 + $0x178] sm:$0xff]
      %v1760 = vld [vmem:[#allocation2 + $0x180] sm:$0xff]
      %v1761 = vpack.c.bf16 %v1714, %v1713
      %v1762 = vpack.c.bf16 %v1716, %v1715
      %v1763 = vpack.c.bf16 %v1718, %v1717
      %v1764 = vpack.c.bf16 %v1720, %v1719
      %v1765 = vpack.c.bf16 %v1722, %v1721
      %v1766 = vpack.c.bf16 %v1724, %v1723
      %v1767 = vpack.c.bf16 %v1726, %v1725
      %v1768 = vpack.c.bf16 %v1728, %v1727
      %v1769 = vpack.c.bf16 %v1730, %v1729
      %v1770 = vpack.c.bf16 %v1732, %v1731
      %v1771 = vpack.c.bf16 %v1734, %v1733
      %v1772 = vpack.c.bf16 %v1736, %v1735
      %v1773 = vpack.c.bf16 %v1738, %v1737
      %v1774 = vpack.c.bf16 %v1740, %v1739
      %v1775 = vpack.c.bf16 %v1742, %v1741
      %v1776 = vpack.c.bf16 %v1744, %v1743
      %v1777 = vpack.c.bf16 %v1746, %v1745
      %v1778 = vpack.c.bf16 %v1748, %v1747
      %v1779 = vpack.c.bf16 %v1750, %v1749
      %v1780 = vpack.c.bf16 %v1752, %v1751
      %v1781 = vpack.c.bf16 %v1754, %v1753
      %v1782 = vpack.c.bf16 %v1756, %v1755
      %v1783 = vpack.c.bf16 %v1758, %v1757
      %v1784 = vpack.c.bf16 %v1760, %v1759
      %s1785 = scalar_lea.vmem %s6, 2
      %v1786 = vld [vmem:[%s1785] sm:$0x3]
      %v1788 = vsel %vm871, %v1761, 0
      %v1791 = vsel %vm871, %v1762, 0
      %v1794 = vsel %vm871, %v1763, 0
      %v1797 = vsel %vm871, %v1764, 0
      %v1800 = vsel %vm871, %v1765, 0
      %v1803 = vsel %vm871, %v1766, 0
      %v1806 = vsel %vm871, %v1767, 0
      %v1809 = vsel %vm871, %v1768, 0
      %v1812 = vsel %vm871, %v1769, 0
      %v1815 = vsel %vm871, %v1770, 0
      %v1818 = vsel %vm871, %v1771, 0
      %v1821 = vsel %vm871, %v1772, 0
      %v1824 = vsel %vm871, %v1773, 0
      %v1827 = vsel %vm871, %v1774, 0
      %v1830 = vsel %vm871, %v1775, 0
      %v1833 = vsel %vm871, %v1776, 0
      %v1836 = vsel %vm871, %v1777, 0
      %v1839 = vsel %vm871, %v1778, 0
      %v1842 = vsel %vm871, %v1779, 0
      %v1845 = vsel %vm871, %v1780, 0
      %v1848 = vsel %vm871, %v1781, 0
      %v1851 = vsel %vm871, %v1782, 0
      %v1854 = vsel %vm871, %v1783, 0
      %v1857 = vsel %vm871, %v1784, 0
      %v1860 = vsel %vm953, %v1786, 0
      %1862 = vmatprep.subr.bf16.mxu0 0
      %1863 = vmatpush1.bf16.msra.mxu0 %v1860
      %1864 = vmatprep.subr.bf16.mxu0 0
      %1865 = vmatpush1.bf16.msra.mxu0 0
      %1866 = vmatprep.subr.bf16.mxu0 0
      %1867 = vmatpush1.bf16.msra.mxu0 0
      %1868 = vmatprep.subr.bf16.mxu0 0
      %1869 = vmatpush1.bf16.msra.mxu0 0
      %1870 = vmatprep.subr.bf16.mxu0 0
      %1871 = vmatpush1.bf16.msra.mxu0 0
      %1872 = vmatprep.subr.bf16.mxu0 0
      %1873 = vmatpush1.bf16.msra.mxu0 0
      %1874 = vmatprep.subr.bf16.mxu0 0
      %1875 = vmatpush1.bf16.msra.mxu0 0
      %1876 = vmatprep.subr.bf16.mxu0 0
      %1877 = vmatpush1.bf16.msra.mxu0 0
      %1878 = vmatprep.subr.bf16.mxu0 0
      %1879 = vmatpush1.bf16.msra.mxu0 0
      %1880 = vmatprep.subr.bf16.mxu0 0
      %1881 = vmatpush1.bf16.msra.mxu0 0
      %1882 = vmatprep.subr.bf16.mxu0 0
      %1883 = vmatpush1.bf16.msra.mxu0 0
      %1884 = vmatprep.subr.bf16.mxu0 0
      %1885 = vmatpush1.bf16.msra.mxu0 0
      %1886 = vmatprep.subr.bf16.mxu0 0
      %1887 = vmatpush1.bf16.msra.mxu0 0
      %1888 = vmatprep.subr.bf16.mxu0 0
      %1889 = vmatpush1.bf16.msra.mxu0 0
      %1890 = vmatprep.subr.bf16.mxu0 0
      %1891 = vmatpush1.bf16.msra.mxu0 0
      %1892 = vmatprep.subr.bf16.mxu0 0
      %1893 = vmatpush1.bf16.msra.mxu0 0
      %1894 = vmatprep.mubr.bf16.mxu0 0
      %1895 = vmatmul.mubr.bf16.gmra.mrb[0].mxu0 %v1788
      %v1896 = vpop.f32.mrb[0].mxu0
      %v1897 = vadd.f32 0.0, %v1896
      %v1898 = vpop.f32.mrb[0].mxu0
      %v1899 = vpop.f32.mrb[0].mxu0
      %v1900 = vadd.f32 0.0, %v1899
      %v1901 = vpop.f32.mrb[0].mxu0
      %1902 = vmatprep.mubr.bf16.mxu0 0
      %1903 = vmatmul.mubr.bf16.gmra.mrb[0].mxu0 %v1791
      %v1904 = vpop.f32.mrb[0].mxu0
      %v1905 = vadd.f32 0.0, %v1904
      %v1906 = vpop.f32.mrb[0].mxu0
      %v1907 = vpop.f32.mrb[0].mxu0
      %v1908 = vadd.f32 0.0, %v1907
      %v1909 = vpop.f32.mrb[0].mxu0
      %1910 = vmatprep.mubr.bf16.mxu0 0
      %1911 = vmatmul.mubr.bf16.gmra.mrb[0].mxu0 %v1794
      %v1912 = vpop.f32.mrb[0].mxu0
      %v1913 = vadd.f32 0.0, %v1912
      %v1914 = vpop.f32.mrb[0].mxu0
      %v1915 = vpop.f32.mrb[0].mxu0
      %v1916 = vadd.f32 0.0, %v1915
      %v1917 = vpop.f32.mrb[0].mxu0
      %1918 = vmatprep.mubr.bf16.mxu0 0
      %1919 = vmatmul.mubr.bf16.gmra.mrb[0].mxu0 %v1797
      %v1920 = vpop.f32.mrb[0].mxu0
      %v1921 = vadd.f32 0.0, %v1920
      %v1922 = vpop.f32.mrb[0].mxu0
      %v1923 = vpop.f32.mrb[0].mxu0
      %v1924 = vadd.f32 0.0, %v1923
      %v1925 = vpop.f32.mrb[0].mxu0
      %1926 = vmatprep.mubr.bf16.mxu0 0
      %1927 = vmatmul.mubr.bf16.gmra.mrb[0].mxu0 %v1800
      %v1928 = vpop.f32.mrb[0].mxu0
      %v1929 = vadd.f32 0.0, %v1928
      %v1930 = vpop.f32.mrb[0].mxu0
      %v1931 = vpop.f32.mrb[0].mxu0
      %v1932 = vadd.f32 0.0, %v1931
      %v1933 = vpop.f32.mrb[0].mxu0
      %1934 = vmatprep.mubr.bf16.mxu0 0
      %1935 = vmatmul.mubr.bf16.gmra.mrb[0].mxu0 %v1803
      %v1936 = vpop.f32.mrb[0].mxu0
      %v1937 = vadd.f32 0.0, %v1936
      %v1938 = vpop.f32.mrb[0].mxu0
      %v1939 = vpop.f32.mrb[0].mxu0
      %v1940 = vadd.f32 0.0, %v1939
      %v1941 = vpop.f32.mrb[0].mxu0
      %1942 = vmatprep.mubr.bf16.mxu0 0
      %1943 = vmatmul.mubr.bf16.gmra.mrb[0].mxu0 %v1806
      %v1944 = vpop.f32.mrb[0].mxu0
      %v1945 = vadd.f32 0.0, %v1944
      %v1946 = vpop.f32.mrb[0].mxu0
      %v1947 = vpop.f32.mrb[0].mxu0
      %v1948 = vadd.f32 0.0, %v1947
      %v1949 = vpop.f32.mrb[0].mxu0
      %1950 = vmatprep.mubr.bf16.mxu0 0
      %1951 = vmatmul.mubr.bf16.gmra.mrb[0].mxu0 %v1809
      %v1952 = vpop.f32.mrb[0].mxu0
      %v1953 = vadd.f32 0.0, %v1952
      %v1954 = vpop.f32.mrb[0].mxu0
      %v1955 = vpop.f32.mrb[0].mxu0
      %v1956 = vadd.f32 0.0, %v1955
      %v1957 = vpop.f32.mrb[0].mxu0
      %1958 = vmatprep.mubr.bf16.mxu0 0
      %1959 = vmatmul.mubr.bf16.gmra.mrb[0].mxu0 %v1812
      %v1960 = vpop.f32.mrb[0].mxu0
      %v1961 = vadd.f32 0.0, %v1960
      %v1962 = vpop.f32.mrb[0].mxu0
      %v1963 = vpop.f32.mrb[0].mxu0
      %v1964 = vadd.f32 0.0, %v1963
      %v1965 = vpop.f32.mrb[0].mxu0
      %1966 = vmatprep.mubr.bf16.mxu0 0
      %1967 = vmatmul.mubr.bf16.gmra.mrb[0].mxu0 %v1815
      %v1968 = vpop.f32.mrb[0].mxu0
      %v1969 = vadd.f32 0.0, %v1968
      %v1970 = vpop.f32.mrb[0].mxu0
      %v1971 = vpop.f32.mrb[0].mxu0
      %v1972 = vadd.f32 0.0, %v1971
      %v1973 = vpop.f32.mrb[0].mxu0
      %1974 = vmatprep.mubr.bf16.mxu0 0
      %1975 = vmatmul.mubr.bf16.gmra.mrb[0].mxu0 %v1818
      %v1976 = vpop.f32.mrb[0].mxu0
      %v1977 = vadd.f32 0.0, %v1976
      %v1978 = vpop.f32.mrb[0].mxu0
      %v1979 = vpop.f32.mrb[0].mxu0
      %v1980 = vadd.f32 0.0, %v1979
      %v1981 = vpop.f32.mrb[0].mxu0
      %1982 = vmatprep.mubr.bf16.mxu0 0
      %1983 = vmatmul.mubr.bf16.gmra.mrb[0].mxu0 %v1821
      %v1984 = vpop.f32.mrb[0].mxu0
      %v1985 = vadd.f32 0.0, %v1984
      %v1986 = vpop.f32.mrb[0].mxu0
      %v1987 = vpop.f32.mrb[0].mxu0
      %v1988 = vadd.f32 0.0, %v1987
      %v1989 = vpop.f32.mrb[0].mxu0
      %1990 = vmatprep.mubr.bf16.mxu0 0
      %1991 = vmatmul.mubr.bf16.gmra.mrb[0].mxu0 %v1824
      %v1992 = vpop.f32.mrb[0].mxu0
      %v1993 = vadd.f32 0.0, %v1992
      %v1994 = vpop.f32.mrb[0].mxu0
      %v1995 = vpop.f32.mrb[0].mxu0
      %v1996 = vadd.f32 0.0, %v1995
      %v1997 = vpop.f32.mrb[0].mxu0
      %1998 = vmatprep.mubr.bf16.mxu0 0
      %1999 = vmatmul.mubr.bf16.gmra.mrb[0].mxu0 %v1827
      %v2000 = vpop.f32.mrb[0].mxu0
      %v2001 = vadd.f32 0.0, %v2000
      %v2002 = vpop.f32.mrb[0].mxu0
      %v2003 = vpop.f32.mrb[0].mxu0
      %v2004 = vadd.f32 0.0, %v2003
      %v2005 = vpop.f32.mrb[0].mxu0
      %2006 = vmatprep.mubr.bf16.mxu0 0
      %2007 = vmatmul.mubr.bf16.gmra.mrb[0].mxu0 %v1830
      %v2008 = vpop.f32.mrb[0].mxu0
      %v2009 = vadd.f32 0.0, %v2008
      %v2010 = vpop.f32.mrb[0].mxu0
      %v2011 = vpop.f32.mrb[0].mxu0
      %v2012 = vadd.f32 0.0, %v2011
      %v2013 = vpop.f32.mrb[0].mxu0
      %2014 = vmatprep.mubr.bf16.mxu0 0
      %2015 = vmatmul.mubr.bf16.gmra.mrb[0].mxu0 %v1833
      %v2016 = vpop.f32.mrb[0].mxu0
      %v2017 = vadd.f32 0.0, %v2016
      %v2018 = vpop.f32.mrb[0].mxu0
      %v2019 = vpop.f32.mrb[0].mxu0
      %v2020 = vadd.f32 0.0, %v2019
      %v2021 = vpop.f32.mrb[0].mxu0
      %2022 = vmatprep.mubr.bf16.mxu0 0
      %2023 = vmatmul.mubr.bf16.gmra.mrb[0].mxu0 %v1836
      %v2024 = vpop.f32.mrb[0].mxu0
      %v2025 = vadd.f32 0.0, %v2024
      %v2026 = vpop.f32.mrb[0].mxu0
      %v2027 = vpop.f32.mrb[0].mxu0
      %v2028 = vadd.f32 0.0, %v2027
      %v2029 = vpop.f32.mrb[0].mxu0
      %2030 = vmatprep.mubr.bf16.mxu0 0
      %2031 = vmatmul.mubr.bf16.gmra.mrb[0].mxu0 %v1839
      %v2032 = vpop.f32.mrb[0].mxu0
      %v2033 = vadd.f32 0.0, %v2032
      %v2034 = vpop.f32.mrb[0].mxu0
      %v2035 = vpop.f32.mrb[0].mxu0
      %v2036 = vadd.f32 0.0, %v2035
      %v2037 = vpop.f32.mrb[0].mxu0
      %2038 = vmatprep.mubr.bf16.mxu0 0
      %2039 = vmatmul.mubr.bf16.gmra.mrb[0].mxu0 %v1842
      %v2040 = vpop.f32.mrb[0].mxu0
      %v2041 = vadd.f32 0.0, %v2040
      %v2042 = vpop.f32.mrb[0].mxu0
      %v2043 = vpop.f32.mrb[0].mxu0
      %v2044 = vadd.f32 0.0, %v2043
      %v2045 = vpop.f32.mrb[0].mxu0
      %2046 = vmatprep.mubr.bf16.mxu0 0
      %2047 = vmatmul.mubr.bf16.gmra.mrb[0].mxu0 %v1845
      %v2048 = vpop.f32.mrb[0].mxu0
      %v2049 = vadd.f32 0.0, %v2048
      %v2050 = vpop.f32.mrb[0].mxu0
      %v2051 = vpop.f32.mrb[0].mxu0
      %v2052 = vadd.f32 0.0, %v2051
      %v2053 = vpop.f32.mrb[0].mxu0
      %2054 = vmatprep.mubr.bf16.mxu0 0
      %2055 = vmatmul.mubr.bf16.gmra.mrb[0].mxu0 %v1848
      %v2056 = vpop.f32.mrb[0].mxu0
      %v2057 = vadd.f32 0.0, %v2056
      %v2058 = vpop.f32.mrb[0].mxu0
      %v2059 = vpop.f32.mrb[0].mxu0
      %v2060 = vadd.f32 0.0, %v2059
      %v2061 = vpop.f32.mrb[0].mxu0
      %2062 = vmatprep.mubr.bf16.mxu0 0
      %2063 = vmatmul.mubr.bf16.gmra.mrb[0].mxu0 %v1851
      %v2064 = vpop.f32.mrb[0].mxu0
      %v2065 = vadd.f32 0.0, %v2064
      %v2066 = vpop.f32.mrb[0].mxu0
      %v2067 = vpop.f32.mrb[0].mxu0
      %v2068 = vadd.f32 0.0, %v2067
      %v2069 = vpop.f32.mrb[0].mxu0
      %2070 = vmatprep.mubr.bf16.mxu0 0
      %2071 = vmatmul.mubr.bf16.gmra.mrb[0].mxu0 %v1854
      %v2072 = vpop.f32.mrb[0].mxu0
      %v2073 = vadd.f32 0.0, %v2072
      %v2074 = vpop.f32.mrb[0].mxu0
      %v2075 = vpop.f32.mrb[0].mxu0
      %v2076 = vadd.f32 0.0, %v2075
      %v2077 = vpop.f32.mrb[0].mxu0
      %2078 = vmatprep.mubr.bf16.mxu0 0
      %2079 = vmatmul.mubr.bf16.gmra.mrb[0].mxu0 %v1857
      %v2080 = vpop.f32.mrb[0].mxu0
      %v2081 = vadd.f32 0.0, %v2080
      %v2082 = vpop.f32.mrb[0].mxu0
      %v2083 = vpop.f32.mrb[0].mxu0
      %v2084 = vadd.f32 0.0, %v2083
      %v2085 = vpop.f32.mrb[0].mxu0
      %2086 = vdwg.mxu0
      %v2088 = vsel %vm871, %v1688, 0
      %v2091 = vsel %vm871, %v1689, 0
      %v2094 = vsel %vm871, %v1690, 0
      %v2097 = vsel %vm871, %v1691, 0
      %v2100 = vsel %vm871, %v1692, 0
      %v2103 = vsel %vm871, %v1693, 0
      %v2106 = vsel %vm871, %v1694, 0
      %v2109 = vsel %vm871, %v1695, 0
      %v2112 = vsel %vm871, %v1696, 0
      %v2115 = vsel %vm871, %v1697, 0
      %v2118 = vsel %vm871, %v1698, 0
      %v2121 = vsel %vm871, %v1699, 0
      %v2124 = vsel %vm871, %v1700, 0
      %v2127 = vsel %vm871, %v1701, 0
      %v2130 = vsel %vm871, %v1702, 0
      %v2133 = vsel %vm871, %v1703, 0
      %v2136 = vsel %vm871, %v1704, 0
      %v2139 = vsel %vm871, %v1705, 0
      %v2142 = vsel %vm871, %v1706, 0
      %v2145 = vsel %vm871, %v1707, 0
      %v2148 = vsel %vm871, %v1708, 0
      %v2151 = vsel %vm871, %v1709, 0
      %v2154 = vsel %vm871, %v1710, 0
      %v2157 = vsel %vm871, %v1711, 0
      %v2160 = vsel %vm953, %v1712, 0
      %2162 = vmatprep.subr.bf16.mxu0 0
      %2163 = vmatpush1.bf16.msra.mxu0 %v2160
      %2164 = vmatprep.subr.bf16.mxu0 0
      %2165 = vmatpush1.bf16.msra.mxu0 0
      %2166 = vmatprep.subr.bf16.mxu0 0
      %2167 = vmatpush1.bf16.msra.mxu0 0
      %2168 = vmatprep.subr.bf16.mxu0 0
      %2169 = vmatpush1.bf16.msra.mxu0 0
      %2170 = vmatprep.subr.bf16.mxu0 0
      %2171 = vmatpush1.bf16.msra.mxu0 0
      %2172 = vmatprep.subr.bf16.mxu0 0
      %2173 = vmatpush1.bf16.msra.mxu0 0
      %2174 = vmatprep.subr.bf16.mxu0 0
      %2175 = vmatpush1.bf16.msra.mxu0 0
      %2176 = vmatprep.subr.bf16.mxu0 0
      %2177 = vmatpush1.bf16.msra.mxu0 0
      %2178 = vmatprep.subr.bf16.mxu0 0
      %2179 = vmatpush1.bf16.msra.mxu0 0
      %2180 = vmatprep.subr.bf16.mxu0 0
      %2181 = vmatpush1.bf16.msra.mxu0 0
      %2182 = vmatprep.subr.bf16.mxu0 0
      %2183 = vmatpush1.bf16.msra.mxu0 0
      %2184 = vmatprep.subr.bf16.mxu0 0
      %2185 = vmatpush1.bf16.msra.mxu0 0
      %2186 = vmatprep.subr.bf16.mxu0 0
      %2187 = vmatpush1.bf16.msra.mxu0 0
      %2188 = vmatprep.subr.bf16.mxu0 0
      %2189 = vmatpush1.bf16.msra.mxu0 0
      %2190 = vmatprep.subr.bf16.mxu0 0
      %2191 = vmatpush1.bf16.msra.mxu0 0
      %2192 = vmatprep.subr.bf16.mxu0 0
      %2193 = vmatpush1.bf16.msra.mxu0 0
      %2194 = vmatprep.mubr.bf16.mxu0 0
      %2195 = vmatmul.mubr.bf16.gmra.mrb[0].mxu0 %v2088
      %v2196 = vpop.f32.mrb[0].mxu0
      %v2197 = vadd.f32 %v1897, %v2196
      %v2198 = vpop.f32.mrb[0].mxu0
      %v2199 = vpop.f32.mrb[0].mxu0
      %v2200 = vadd.f32 %v1900, %v2199
      %v2201 = vpop.f32.mrb[0].mxu0
      %2202 = vmatprep.mubr.bf16.mxu0 0
      %2203 = vmatmul.mubr.bf16.gmra.mrb[0].mxu0 %v2091
      %v2204 = vpop.f32.mrb[0].mxu0
      %v2205 = vadd.f32 %v1905, %v2204
      %v2206 = vpop.f32.mrb[0].mxu0
      %v2207 = vpop.f32.mrb[0].mxu0
      %v2208 = vadd.f32 %v1908, %v2207
      %v2209 = vpop.f32.mrb[0].mxu0
      %2210 = vmatprep.mubr.bf16.mxu0 0
      %2211 = vmatmul.mubr.bf16.gmra.mrb[0].mxu0 %v2094
      %v2212 = vpop.f32.mrb[0].mxu0
      %v2213 = vadd.f32 %v1913, %v2212
      %v2214 = vpop.f32.mrb[0].mxu0
      %v2215 = vpop.f32.mrb[0].mxu0
      %v2216 = vadd.f32 %v1916, %v2215
      %v2217 = vpop.f32.mrb[0].mxu0
      %2218 = vmatprep.mubr.bf16.mxu0 0
      %2219 = vmatmul.mubr.bf16.gmra.mrb[0].mxu0 %v2097
      %v2220 = vpop.f32.mrb[0].mxu0
      %v2221 = vadd.f32 %v1921, %v2220
      %v2222 = vpop.f32.mrb[0].mxu0
      %v2223 = vpop.f32.mrb[0].mxu0
      %v2224 = vadd.f32 %v1924, %v2223
      %v2225 = vpop.f32.mrb[0].mxu0
      %2226 = vmatprep.mubr.bf16.mxu0 0
      %2227 = vmatmul.mubr.bf16.gmra.mrb[0].mxu0 %v2100
      %v2228 = vpop.f32.mrb[0].mxu0
      %v2229 = vadd.f32 %v1929, %v2228
      %v2230 = vpop.f32.mrb[0].mxu0
      %v2231 = vpop.f32.mrb[0].mxu0
      %v2232 = vadd.f32 %v1932, %v2231
      %v2233 = vpop.f32.mrb[0].mxu0
      %2234 = vmatprep.mubr.bf16.mxu0 0
      %2235 = vmatmul.mubr.bf16.gmra.mrb[0].mxu0 %v2103
      %v2236 = vpop.f32.mrb[0].mxu0
      %v2237 = vadd.f32 %v1937, %v2236
      %v2238 = vpop.f32.mrb[0].mxu0
      %v2239 = vpop.f32.mrb[0].mxu0
      %v2240 = vadd.f32 %v1940, %v2239
      %v2241 = vpop.f32.mrb[0].mxu0
      %2242 = vmatprep.mubr.bf16.mxu0 0
      %2243 = vmatmul.mubr.bf16.gmra.mrb[0].mxu0 %v2106
      %v2244 = vpop.f32.mrb[0].mxu0
      %v2245 = vadd.f32 %v1945, %v2244
      %v2246 = vpop.f32.mrb[0].mxu0
      %v2247 = vpop.f32.mrb[0].mxu0
      %v2248 = vadd.f32 %v1948, %v2247
      %v2249 = vpop.f32.mrb[0].mxu0
      %2250 = vmatprep.mubr.bf16.mxu0 0
      %2251 = vmatmul.mubr.bf16.gmra.mrb[0].mxu0 %v2109
      %v2252 = vpop.f32.mrb[0].mxu0
      %v2253 = vadd.f32 %v1953, %v2252
      %v2254 = vpop.f32.mrb[0].mxu0
      %v2255 = vpop.f32.mrb[0].mxu0
      %v2256 = vadd.f32 %v1956, %v2255
      %v2257 = vpop.f32.mrb[0].mxu0
      %2258 = vmatprep.mubr.bf16.mxu0 0
      %2259 = vmatmul.mubr.bf16.gmra.mrb[0].mxu0 %v2112
      %v2260 = vpop.f32.mrb[0].mxu0
      %v2261 = vadd.f32 %v1961, %v2260
      %v2262 = vpop.f32.mrb[0].mxu0
      %v2263 = vpop.f32.mrb[0].mxu0
      %v2264 = vadd.f32 %v1964, %v2263
      %v2265 = vpop.f32.mrb[0].mxu0
      %2266 = vmatprep.mubr.bf16.mxu0 0
      %2267 = vmatmul.mubr.bf16.gmra.mrb[0].mxu0 %v2115
      %v2268 = vpop.f32.mrb[0].mxu0
      %v2269 = vadd.f32 %v1969, %v2268
      %v2270 = vpop.f32.mrb[0].mxu0
      %v2271 = vpop.f32.mrb[0].mxu0
      %v2272 = vadd.f32 %v1972, %v2271
      %v2273 = vpop.f32.mrb[0].mxu0
      %2274 = vmatprep.mubr.bf16.mxu0 0
      %2275 = vmatmul.mubr.bf16.gmra.mrb[0].mxu0 %v2118
      %v2276 = vpop.f32.mrb[0].mxu0
      %v2277 = vadd.f32 %v1977, %v2276
      %v2278 = vpop.f32.mrb[0].mxu0
      %v2279 = vpop.f32.mrb[0].mxu0
      %v2280 = vadd.f32 %v1980, %v2279
      %v2281 = vpop.f32.mrb[0].mxu0
      %2282 = vmatprep.mubr.bf16.mxu0 0
      %2283 = vmatmul.mubr.bf16.gmra.mrb[0].mxu0 %v2121
      %v2284 = vpop.f32.mrb[0].mxu0
      %v2285 = vadd.f32 %v1985, %v2284
      %v2286 = vpop.f32.mrb[0].mxu0
      %v2287 = vpop.f32.mrb[0].mxu0
      %v2288 = vadd.f32 %v1988, %v2287
      %v2289 = vpop.f32.mrb[0].mxu0
      %2290 = vmatprep.mubr.bf16.mxu0 0
      %2291 = vmatmul.mubr.bf16.gmra.mrb[0].mxu0 %v2124
      %v2292 = vpop.f32.mrb[0].mxu0
      %v2293 = vadd.f32 %v1993, %v2292
      %v2294 = vpop.f32.mrb[0].mxu0
      %v2295 = vpop.f32.mrb[0].mxu0
      %v2296 = vadd.f32 %v1996, %v2295
      %v2297 = vpop.f32.mrb[0].mxu0
      %2298 = vmatprep.mubr.bf16.mxu0 0
      %2299 = vmatmul.mubr.bf16.gmra.mrb[0].mxu0 %v2127
      %v2300 = vpop.f32.mrb[0].mxu0
      %v2301 = vadd.f32 %v2001, %v2300
      %v2302 = vpop.f32.mrb[0].mxu0
      %v2303 = vpop.f32.mrb[0].mxu0
      %v2304 = vadd.f32 %v2004, %v2303
      %v2305 = vpop.f32.mrb[0].mxu0
      %2306 = vmatprep.mubr.bf16.mxu0 0
      %2307 = vmatmul.mubr.bf16.gmra.mrb[0].mxu0 %v2130
      %v2308 = vpop.f32.mrb[0].mxu0
      %v2309 = vadd.f32 %v2009, %v2308
      %v2310 = vpop.f32.mrb[0].mxu0
      %v2311 = vpop.f32.mrb[0].mxu0
      %v2312 = vadd.f32 %v2012, %v2311
      %v2313 = vpop.f32.mrb[0].mxu0
      %2314 = vmatprep.mubr.bf16.mxu0 0
      %2315 = vmatmul.mubr.bf16.gmra.mrb[0].mxu0 %v2133
      %v2316 = vpop.f32.mrb[0].mxu0
      %v2317 = vadd.f32 %v2017, %v2316
      %v2318 = vpop.f32.mrb[0].mxu0
      %v2319 = vpop.f32.mrb[0].mxu0
      %v2320 = vadd.f32 %v2020, %v2319
      %v2321 = vpop.f32.mrb[0].mxu0
      %2322 = vmatprep.mubr.bf16.mxu0 0
      %2323 = vmatmul.mubr.bf16.gmra.mrb[0].mxu0 %v2136
      %v2324 = vpop.f32.mrb[0].mxu0
      %v2325 = vadd.f32 %v2025, %v2324
      %v2326 = vpop.f32.mrb[0].mxu0
      %v2327 = vpop.f32.mrb[0].mxu0
      %v2328 = vadd.f32 %v2028, %v2327
      %v2329 = vpop.f32.mrb[0].mxu0
      %2330 = vmatprep.mubr.bf16.mxu0 0
      %2331 = vmatmul.mubr.bf16.gmra.mrb[0].mxu0 %v2139
      %v2332 = vpop.f32.mrb[0].mxu0
      %v2333 = vadd.f32 %v2033, %v2332
      %v2334 = vpop.f32.mrb[0].mxu0
      %v2335 = vpop.f32.mrb[0].mxu0
      %v2336 = vadd.f32 %v2036, %v2335
      %v2337 = vpop.f32.mrb[0].mxu0
      %2338 = vmatprep.mubr.bf16.mxu0 0
      %2339 = vmatmul.mubr.bf16.gmra.mrb[0].mxu0 %v2142
      %v2340 = vpop.f32.mrb[0].mxu0
      %v2341 = vadd.f32 %v2041, %v2340
      %v2342 = vpop.f32.mrb[0].mxu0
      %v2343 = vpop.f32.mrb[0].mxu0
      %v2344 = vadd.f32 %v2044, %v2343
      %v2345 = vpop.f32.mrb[0].mxu0
      %2346 = vmatprep.mubr.bf16.mxu0 0
      %2347 = vmatmul.mubr.bf16.gmra.mrb[0].mxu0 %v2145
      %v2348 = vpop.f32.mrb[0].mxu0
      %v2349 = vadd.f32 %v2049, %v2348
      %v2350 = vpop.f32.mrb[0].mxu0
      %v2351 = vpop.f32.mrb[0].mxu0
      %v2352 = vadd.f32 %v2052, %v2351
      %v2353 = vpop.f32.mrb[0].mxu0
      %2354 = vmatprep.mubr.bf16.mxu0 0
      %2355 = vmatmul.mubr.bf16.gmra.mrb[0].mxu0 %v2148
      %v2356 = vpop.f32.mrb[0].mxu0
      %v2357 = vadd.f32 %v2057, %v2356
      %v2358 = vpop.f32.mrb[0].mxu0
      %v2359 = vpop.f32.mrb[0].mxu0
      %v2360 = vadd.f32 %v2060, %v2359
      %v2361 = vpop.f32.mrb[0].mxu0
      %2362 = vmatprep.mubr.bf16.mxu0 0
      %2363 = vmatmul.mubr.bf16.gmra.mrb[0].mxu0 %v2151
      %v2364 = vpop.f32.mrb[0].mxu0
      %v2365 = vadd.f32 %v2065, %v2364
      %v2366 = vpop.f32.mrb[0].mxu0
      %v2367 = vpop.f32.mrb[0].mxu0
      %v2368 = vadd.f32 %v2068, %v2367
      %v2369 = vpop.f32.mrb[0].mxu0
      %2370 = vmatprep.mubr.bf16.mxu0 0
      %2371 = vmatmul.mubr.bf16.gmra.mrb[0].mxu0 %v2154
      %v2372 = vpop.f32.mrb[0].mxu0
      %v2373 = vadd.f32 %v2073, %v2372
      %v2374 = vpop.f32.mrb[0].mxu0
      %v2375 = vpop.f32.mrb[0].mxu0
      %v2376 = vadd.f32 %v2076, %v2375
      %v2377 = vpop.f32.mrb[0].mxu0
      %2378 = vmatprep.mubr.bf16.mxu0 0
      %2379 = vmatmul.mubr.bf16.gmra.mrb[0].mxu0 %v2157
      %v2380 = vpop.f32.mrb[0].mxu0
      %v2381 = vadd.f32 %v2081, %v2380
      %v2382 = vpop.f32.mrb[0].mxu0
      %v2383 = vpop.f32.mrb[0].mxu0
      %v2384 = vadd.f32 %v2084, %v2383
      %v2385 = vpop.f32.mrb[0].mxu0
      %2386 = vdwg.mxu0
      %v2387 = vld [vmem:[#allocation2 + $0x9] sm:$0xff]
      %v2388 = vld [vmem:[#allocation2 + $0x11] sm:$0xff]
      %v2389 = vld [vmem:[#allocation2 + $0x19] sm:$0xff]
      %v2390 = vld [vmem:[#allocation2 + $0x21] sm:$0xff]
      %v2391 = vld [vmem:[#allocation2 + $0x29] sm:$0xff]
      %v2392 = vld [vmem:[#allocation2 + $0x31] sm:$0xff]
      %v2393 = vld [vmem:[#allocation2 + $0x39] sm:$0xff]
      %v2394 = vld [vmem:[#allocation2 + $0x41] sm:$0xff]
      %v2395 = vld [vmem:[#allocation2 + $0x49] sm:$0xff]
      %v2396 = vld [vmem:[#allocation2 + $0x51] sm:$0xff]
      %v2397 = vld [vmem:[#allocation2 + $0x59] sm:$0xff]
      %v2398 = vld [vmem:[#allocation2 + $0x61] sm:$0xff]
      %v2399 = vld [vmem:[#allocation2 + $0x69] sm:$0xff]
      %v2400 = vld [vmem:[#allocation2 + $0x71] sm:$0xff]
      %v2401 = vld [vmem:[#allocation2 + $0x79] sm:$0xff]
      %v2402 = vld [vmem:[#allocation2 + $0x81] sm:$0xff]
      %v2403 = vld [vmem:[#allocation2 + $0x89] sm:$0xff]
      %v2404 = vld [vmem:[#allocation2 + $0x91] sm:$0xff]
      %v2405 = vld [vmem:[#allocation2 + $0x99] sm:$0xff]
      %v2406 = vld [vmem:[#allocation2 + $0xa1] sm:$0xff]
      %v2407 = vld [vmem:[#allocation2 + $0xa9] sm:$0xff]
      %v2408 = vld [vmem:[#allocation2 + $0xb1] sm:$0xff]
      %v2409 = vld [vmem:[#allocation2 + $0xb9] sm:$0xff]
      %v2410 = vld [vmem:[#allocation2 + $0xc1] sm:$0xff]
      %v2411 = vld [vmem:[#allocation2 + $0xc9] sm:$0xff]
      %v2412 = vld [vmem:[#allocation2 + $0xd1] sm:$0xff]
      %v2413 = vld [vmem:[#allocation2 + $0xd9] sm:$0xff]
      %v2414 = vld [vmem:[#allocation2 + $0xe1] sm:$0xff]
      %v2415 = vld [vmem:[#allocation2 + $0xe9] sm:$0xff]
      %v2416 = vld [vmem:[#allocation2 + $0xf1] sm:$0xff]
      %v2417 = vld [vmem:[#allocation2 + $0xf9] sm:$0xff]
      %v2418 = vld [vmem:[#allocation2 + $0x101] sm:$0xff]
      %v2419 = vld [vmem:[#allocation2 + $0x109] sm:$0xff]
      %v2420 = vld [vmem:[#allocation2 + $0x111] sm:$0xff]
      %v2421 = vld [vmem:[#allocation2 + $0x119] sm:$0xff]
      %v2422 = vld [vmem:[#allocation2 + $0x121] sm:$0xff]
      %v2423 = vld [vmem:[#allocation2 + $0x129] sm:$0xff]
      %v2424 = vld [vmem:[#allocation2 + $0x131] sm:$0xff]
      %v2425 = vld [vmem:[#allocation2 + $0x139] sm:$0xff]
      %v2426 = vld [vmem:[#allocation2 + $0x141] sm:$0xff]
      %v2427 = vld [vmem:[#allocation2 + $0x149] sm:$0xff]
      %v2428 = vld [vmem:[#allocation2 + $0x151] sm:$0xff]
      %v2429 = vld [vmem:[#allocation2 + $0x159] sm:$0xff]
      %v2430 = vld [vmem:[#allocation2 + $0x161] sm:$0xff]
      %v2431 = vld [vmem:[#allocation2 + $0x169] sm:$0xff]
      %v2432 = vld [vmem:[#allocation2 + $0x171] sm:$0xff]
      %v2433 = vld [vmem:[#allocation2 + $0x179] sm:$0xff]
      %v2434 = vld [vmem:[#allocation2 + $0x181] sm:$0xff]
      %v2435 = vpack.c.bf16 %v2388, %v2387
      %v2436 = vpack.c.bf16 %v2390, %v2389
      %v2437 = vpack.c.bf16 %v2392, %v2391
      %v2438 = vpack.c.bf16 %v2394, %v2393
      %v2439 = vpack.c.bf16 %v2396, %v2395
      %v2440 = vpack.c.bf16 %v2398, %v2397
      %v2441 = vpack.c.bf16 %v2400, %v2399
      %v2442 = vpack.c.bf16 %v2402, %v2401
      %v2443 = vpack.c.bf16 %v2404, %v2403
      %v2444 = vpack.c.bf16 %v2406, %v2405
      %v2445 = vpack.c.bf16 %v2408, %v2407
      %v2446 = vpack.c.bf16 %v2410, %v2409
      %v2447 = vpack.c.bf16 %v2412, %v2411
      %v2448 = vpack.c.bf16 %v2414, %v2413
      %v2449 = vpack.c.bf16 %v2416, %v2415
      %v2450 = vpack.c.bf16 %v2418, %v2417
      %v2451 = vpack.c.bf16 %v2420, %v2419
      %v2452 = vpack.c.bf16 %v2422, %v2421
      %v2453 = vpack.c.bf16 %v2424, %v2423
      %v2454 = vpack.c.bf16 %v2426, %v2425
      %v2455 = vpack.c.bf16 %v2428, %v2427
      %v2456 = vpack.c.bf16 %v2430, %v2429
      %v2457 = vpack.c.bf16 %v2432, %v2431
      %v2458 = vpack.c.bf16 %v2434, %v2433
      %s2459 = scalar_lea.vmem %s6, 4
      %v2460 = vld [vmem:[%s2459] sm:$0x3]
      %v2462 = vsel %vm871, %v2435, 0
      %v2465 = vsel %vm871, %v2436, 0
      %v2468 = vsel %vm871, %v2437, 0
      %v2471 = vsel %vm871, %v2438, 0
      %v2474 = vsel %vm871, %v2439, 0
      %v2477 = vsel %vm871, %v2440, 0
      %v2480 = vsel %vm871, %v2441, 0
      %v2483 = vsel %vm871, %v2442, 0
      %v2486 = vsel %vm871, %v2443, 0
      %v2489 = vsel %vm871, %v2444, 0
      %v2492 = vsel %vm871, %v2445, 0
      %v2495 = vsel %vm871, %v2446, 0
      %v2498 = vsel %vm871, %v2447, 0
      %v2501 = vsel %vm871, %v2448, 0
      %v2504 = vsel %vm871, %v2449, 0
      %v2507 = vsel %vm871, %v2450, 0
      %v2510 = vsel %vm871, %v2451, 0
      %v2513 = vsel %vm871, %v2452, 0
      %v2516 = vsel %vm871, %v2453, 0
      %v2519 = vsel %vm871, %v2454, 0
      %v2522 = vsel %vm871, %v2455, 0
      %v2525 = vsel %vm871, %v2456, 0
      %v2528 = vsel %vm871, %v2457, 0
      %v2531 = vsel %vm871, %v2458, 0
      %v2534 = vsel %vm953, %v2460, 0
      %2536 = vmatprep.subr.bf16.mxu0 0
      %2537 = vmatpush1.bf16.msra.mxu0 %v2534
      %2538 = vmatprep.subr.bf16.mxu0 0
      %2539 = vmatpush1.bf16.msra.mxu0 0
      %2540 = vmatprep.subr.bf16.mxu0 0
      %2541 = vmatpush1.bf16.msra.mxu0 0
      %2542 = vmatprep.subr.bf16.mxu0 0
      %2543 = vmatpush1.bf16.msra.mxu0 0
      %2544 = vmatprep.subr.bf16.mxu0 0
      %2545 = vmatpush1.bf16.msra.mxu0 0
      %2546 = vmatprep.subr.bf16.mxu0 0
      %2547 = vmatpush1.bf16.msra.mxu0 0
      %2548 = vmatprep.subr.bf16.mxu0 0
      %2549 = vmatpush1.bf16.msra.mxu0 0
      %2550 = vmatprep.subr.bf16.mxu0 0
      %2551 = vmatpush1.bf16.msra.mxu0 0
      %2552 = vmatprep.subr.bf16.mxu0 0
      %2553 = vmatpush1.bf16.msra.mxu0 0
      %2554 = vmatprep.subr.bf16.mxu0 0
      %2555 = vmatpush1.bf16.msra.mxu0 0
      %2556 = vmatprep.subr.bf16.mxu0 0
      %2557 = vmatpush1.bf16.msra.mxu0 0
      %2558 = vmatprep.subr.bf16.mxu0 0
      %2559 = vmatpush1.bf16.msra.mxu0 0
      %2560 = vmatprep.subr.bf16.mxu0 0
      %2561 = vmatpush1.bf16.msra.mxu0 0
      %2562 = vmatprep.subr.bf16.mxu0 0
      %2563 = vmatpush1.bf16.msra.mxu0 0
      %2564 = vmatprep.subr.bf16.mxu0 0
      %2565 = vmatpush1.bf16.msra.mxu0 0
      %2566 = vmatprep.subr.bf16.mxu0 0
      %2567 = vmatpush1.bf16.msra.mxu0 0
      %2568 = vmatprep.mubr.bf16.mxu0 0
      %2569 = vmatmul.mubr.bf16.gmra.mrb[0].mxu0 %v2462
      %v2570 = vpop.f32.mrb[0].mxu0
      %v2571 = vadd.f32 0.0, %v2570
      %v2572 = vpop.f32.mrb[0].mxu0
      %v2573 = vpop.f32.mrb[0].mxu0
      %v2574 = vadd.f32 0.0, %v2573
      %v2575 = vpop.f32.mrb[0].mxu0
      %2576 = vmatprep.mubr.bf16.mxu0 0
      %2577 = vmatmul.mubr.bf16.gmra.mrb[0].mxu0 %v2465
      %v2578 = vpop.f32.mrb[0].mxu0
      %v2579 = vadd.f32 0.0, %v2578
      %v2580 = vpop.f32.mrb[0].mxu0
      %v2581 = vpop.f32.mrb[0].mxu0
      %v2582 = vadd.f32 0.0, %v2581
      %v2583 = vpop.f32.mrb[0].mxu0
      %2584 = vmatprep.mubr.bf16.mxu0 0
      %2585 = vmatmul.mubr.bf16.gmra.mrb[0].mxu0 %v2468
      %v2586 = vpop.f32.mrb[0].mxu0
      %v2587 = vadd.f32 0.0, %v2586
      %v2588 = vpop.f32.mrb[0].mxu0
      %v2589 = vpop.f32.mrb[0].mxu0
      %v2590 = vadd.f32 0.0, %v2589
      %v2591 = vpop.f32.mrb[0].mxu0
      %2592 = vmatprep.mubr.bf16.mxu0 0
      %2593 = vmatmul.mubr.bf16.gmra.mrb[0].mxu0 %v2471
      %v2594 = vpop.f32.mrb[0].mxu0
      %v2595 = vadd.f32 0.0, %v2594
      %v2596 = vpop.f32.mrb[0].mxu0
      %v2597 = vpop.f32.mrb[0].mxu0
      %v2598 = vadd.f32 0.0, %v2597
      %v2599 = vpop.f32.mrb[0].mxu0
      %2600 = vmatprep.mubr.bf16.mxu0 0
      %2601 = vmatmul.mubr.bf16.gmra.mrb[0].mxu0 %v2474
      %v2602 = vpop.f32.mrb[0].mxu0
      %v2603 = vadd.f32 0.0, %v2602
      %v2604 = vpop.f32.mrb[0].mxu0
      %v2605 = vpop.f32.mrb[0].mxu0
      %v2606 = vadd.f32 0.0, %v2605
      %v2607 = vpop.f32.mrb[0].mxu0
      %2608 = vmatprep.mubr.bf16.mxu0 0
      %2609 = vmatmul.mubr.bf16.gmra.mrb[0].mxu0 %v2477
      %v2610 = vpop.f32.mrb[0].mxu0
      %v2611 = vadd.f32 0.0, %v2610
      %v2612 = vpop.f32.mrb[0].mxu0
      %v2613 = vpop.f32.mrb[0].mxu0
      %v2614 = vadd.f32 0.0, %v2613
      %v2615 = vpop.f32.mrb[0].mxu0
      %2616 = vmatprep.mubr.bf16.mxu0 0
      %2617 = vmatmul.mubr.bf16.gmra.mrb[0].mxu0 %v2480
      %v2618 = vpop.f32.mrb[0].mxu0
      %v2619 = vadd.f32 0.0, %v2618
      %v2620 = vpop.f32.mrb[0].mxu0
      %v2621 = vpop.f32.mrb[0].mxu0
      %v2622 = vadd.f32 0.0, %v2621
      %v2623 = vpop.f32.mrb[0].mxu0
      %2624 = vmatprep.mubr.bf16.mxu0 0
      %2625 = vmatmul.mubr.bf16.gmra.mrb[0].mxu0 %v2483
      %v2626 = vpop.f32.mrb[0].mxu0
      %v2627 = vadd.f32 0.0, %v2626
      %v2628 = vpop.f32.mrb[0].mxu0
      %v2629 = vpop.f32.mrb[0].mxu0
      %v2630 = vadd.f32 0.0, %v2629
      %v2631 = vpop.f32.mrb[0].mxu0
      %2632 = vmatprep.mubr.bf16.mxu0 0
      %2633 = vmatmul.mubr.bf16.gmra.mrb[0].mxu0 %v2486
      %v2634 = vpop.f32.mrb[0].mxu0
      %v2635 = vadd.f32 0.0, %v2634
      %v2636 = vpop.f32.mrb[0].mxu0
      %v2637 = vpop.f32.mrb[0].mxu0
      %v2638 = vadd.f32 0.0, %v2637
      %v2639 = vpop.f32.mrb[0].mxu0
      %2640 = vmatprep.mubr.bf16.mxu0 0
      %2641 = vmatmul.mubr.bf16.gmra.mrb[0].mxu0 %v2489
      %v2642 = vpop.f32.mrb[0].mxu0
      %v2643 = vadd.f32 0.0, %v2642
      %v2644 = vpop.f32.mrb[0].mxu0
      %v2645 = vpop.f32.mrb[0].mxu0
      %v2646 = vadd.f32 0.0, %v2645
      %v2647 = vpop.f32.mrb[0].mxu0
      %2648 = vmatprep.mubr.bf16.mxu0 0
      %2649 = vmatmul.mubr.bf16.gmra.mrb[0].mxu0 %v2492
      %v2650 = vpop.f32.mrb[0].mxu0
      %v2651 = vadd.f32 0.0, %v2650
      %v2652 = vpop.f32.mrb[0].mxu0
      %v2653 = vpop.f32.mrb[0].mxu0
      %v2654 = vadd.f32 0.0, %v2653
      %v2655 = vpop.f32.mrb[0].mxu0
      %2656 = vmatprep.mubr.bf16.mxu0 0
      %2657 = vmatmul.mubr.bf16.gmra.mrb[0].mxu0 %v2495
      %v2658 = vpop.f32.mrb[0].mxu0
      %v2659 = vadd.f32 0.0, %v2658
      %v2660 = vpop.f32.mrb[0].mxu0
      %v2661 = vpop.f32.mrb[0].mxu0
      %v2662 = vadd.f32 0.0, %v2661
      %v2663 = vpop.f32.mrb[0].mxu0
      %2664 = vmatprep.mubr.bf16.mxu0 0
      %2665 = vmatmul.mubr.bf16.gmra.mrb[0].mxu0 %v2498
      %v2666 = vpop.f32.mrb[0].mxu0
      %v2667 = vadd.f32 0.0, %v2666
      %v2668 = vpop.f32.mrb[0].mxu0
      %v2669 = vpop.f32.mrb[0].mxu0
      %v2670 = vadd.f32 0.0, %v2669
      %v2671 = vpop.f32.mrb[0].mxu0
      %2672 = vmatprep.mubr.bf16.mxu0 0
      %2673 = vmatmul.mubr.bf16.gmra.mrb[0].mxu0 %v2501
      %v2674 = vpop.f32.mrb[0].mxu0
      %v2675 = vadd.f32 0.0, %v2674
      %v2676 = vpop.f32.mrb[0].mxu0
      %v2677 = vpop.f32.mrb[0].mxu0
      %v2678 = vadd.f32 0.0, %v2677
      %v2679 = vpop.f32.mrb[0].mxu0
      %2680 = vmatprep.mubr.bf16.mxu0 0
      %2681 = vmatmul.mubr.bf16.gmra.mrb[0].mxu0 %v2504
      %v2682 = vpop.f32.mrb[0].mxu0
      %v2683 = vadd.f32 0.0, %v2682
      %v2684 = vpop.f32.mrb[0].mxu0
      %v2685 = vpop.f32.mrb[0].mxu0
      %v2686 = vadd.f32 0.0, %v2685
      %v2687 = vpop.f32.mrb[0].mxu0
      %2688 = vmatprep.mubr.bf16.mxu0 0
      %2689 = vmatmul.mubr.bf16.gmra.mrb[0].mxu0 %v2507
      %v2690 = vpop.f32.mrb[0].mxu0
      %v2691 = vadd.f32 0.0, %v2690
      %v2692 = vpop.f32.mrb[0].mxu0
      %v2693 = vpop.f32.mrb[0].mxu0
      %v2694 = vadd.f32 0.0, %v2693
      %v2695 = vpop.f32.mrb[0].mxu0
      %2696 = vmatprep.mubr.bf16.mxu0 0
      %2697 = vmatmul.mubr.bf16.gmra.mrb[0].mxu0 %v2510
      %v2698 = vpop.f32.mrb[0].mxu0
      %v2699 = vadd.f32 0.0, %v2698
      %v2700 = vpop.f32.mrb[0].mxu0
      %v2701 = vpop.f32.mrb[0].mxu0
      %v2702 = vadd.f32 0.0, %v2701
      %v2703 = vpop.f32.mrb[0].mxu0
      %2704 = vmatprep.mubr.bf16.mxu0 0
      %2705 = vmatmul.mubr.bf16.gmra.mrb[0].mxu0 %v2513
      %v2706 = vpop.f32.mrb[0].mxu0
      %v2707 = vadd.f32 0.0, %v2706
      %v2708 = vpop.f32.mrb[0].mxu0
      %v2709 = vpop.f32.mrb[0].mxu0
      %v2710 = vadd.f32 0.0, %v2709
      %v2711 = vpop.f32.mrb[0].mxu0
      %2712 = vmatprep.mubr.bf16.mxu0 0
      %2713 = vmatmul.mubr.bf16.gmra.mrb[0].mxu0 %v2516
      %v2714 = vpop.f32.mrb[0].mxu0
      %v2715 = vadd.f32 0.0, %v2714
      %v2716 = vpop.f32.mrb[0].mxu0
      %v2717 = vpop.f32.mrb[0].mxu0
      %v2718 = vadd.f32 0.0, %v2717
      %v2719 = vpop.f32.mrb[0].mxu0
      %2720 = vmatprep.mubr.bf16.mxu0 0
      %2721 = vmatmul.mubr.bf16.gmra.mrb[0].mxu0 %v2519
      %v2722 = vpop.f32.mrb[0].mxu0
      %v2723 = vadd.f32 0.0, %v2722
      %v2724 = vpop.f32.mrb[0].mxu0
      %v2725 = vpop.f32.mrb[0].mxu0
      %v2726 = vadd.f32 0.0, %v2725
      %v2727 = vpop.f32.mrb[0].mxu0
      %2728 = vmatprep.mubr.bf16.mxu0 0
      %2729 = vmatmul.mubr.bf16.gmra.mrb[0].mxu0 %v2522
      %v2730 = vpop.f32.mrb[0].mxu0
      %v2731 = vadd.f32 0.0, %v2730
      %v2732 = vpop.f32.mrb[0].mxu0
      %v2733 = vpop.f32.mrb[0].mxu0
      %v2734 = vadd.f32 0.0, %v2733
      %v2735 = vpop.f32.mrb[0].mxu0
      %2736 = vmatprep.mubr.bf16.mxu0 0
      %2737 = vmatmul.mubr.bf16.gmra.mrb[0].mxu0 %v2525
      %v2738 = vpop.f32.mrb[0].mxu0
      %v2739 = vadd.f32 0.0, %v2738
      %v2740 = vpop.f32.mrb[0].mxu0
      %v2741 = vpop.f32.mrb[0].mxu0
      %v2742 = vadd.f32 0.0, %v2741
      %v2743 = vpop.f32.mrb[0].mxu0
      %2744 = vmatprep.mubr.bf16.mxu0 0
      %2745 = vmatmul.mubr.bf16.gmra.mrb[0].mxu0 %v2528
      %v2746 = vpop.f32.mrb[0].mxu0
      %v2747 = vadd.f32 0.0, %v2746
      %v2748 = vpop.f32.mrb[0].mxu0
      %v2749 = vpop.f32.mrb[0].mxu0
      %v2750 = vadd.f32 0.0, %v2749
      %v2751 = vpop.f32.mrb[0].mxu0
      %2752 = vmatprep.mubr.bf16.mxu0 0
      %2753 = vmatmul.mubr.bf16.gmra.mrb[0].mxu0 %v2531
      %v2754 = vpop.f32.mrb[0].mxu0
      %v2755 = vadd.f32 0.0, %v2754
      %v2756 = vpop.f32.mrb[0].mxu0
      %v2757 = vpop.f32.mrb[0].mxu0
      %v2758 = vadd.f32 0.0, %v2757
      %v2759 = vpop.f32.mrb[0].mxu0
      %2760 = vdwg.mxu0
      %v2761 = vadd.f32 %v2197, %v2571
      %v2762 = vadd.f32 %v2200, %v2574
      %v2763 = vadd.f32 %v2205, %v2579
      %v2764 = vadd.f32 %v2208, %v2582
      %v2765 = vadd.f32 %v2213, %v2587
      %v2766 = vadd.f32 %v2216, %v2590
      %v2767 = vadd.f32 %v2221, %v2595
      %v2768 = vadd.f32 %v2224, %v2598
      %v2769 = vadd.f32 %v2229, %v2603
      %v2770 = vadd.f32 %v2232, %v2606
      %v2771 = vadd.f32 %v2237, %v2611
      %v2772 = vadd.f32 %v2240, %v2614
      %v2773 = vadd.f32 %v2245, %v2619
      %v2774 = vadd.f32 %v2248, %v2622
      %v2775 = vadd.f32 %v2253, %v2627
      %v2776 = vadd.f32 %v2256, %v2630
      %v2777 = vadd.f32 %v2261, %v2635
      %v2778 = vadd.f32 %v2264, %v2638
      %v2779 = vadd.f32 %v2269, %v2643
      %v2780 = vadd.f32 %v2272, %v2646
      %v2781 = vadd.f32 %v2277, %v2651
      %v2782 = vadd.f32 %v2280, %v2654
      %v2783 = vadd.f32 %v2285, %v2659
      %v2784 = vadd.f32 %v2288, %v2662
      %v2785 = vadd.f32 %v2293, %v2667
      %v2786 = vadd.f32 %v2296, %v2670
      %v2787 = vadd.f32 %v2301, %v2675
      %v2788 = vadd.f32 %v2304, %v2678
      %v2789 = vadd.f32 %v2309, %v2683
      %v2790 = vadd.f32 %v2312, %v2686
      %v2791 = vadd.f32 %v2317, %v2691
      %v2792 = vadd.f32 %v2320, %v2694
      %v2793 = vadd.f32 %v2325, %v2699
      %v2794 = vadd.f32 %v2328, %v2702
      %v2795 = vadd.f32 %v2333, %v2707
      %v2796 = vadd.f32 %v2336, %v2710
      %v2797 = vadd.f32 %v2341, %v2715
      %v2798 = vadd.f32 %v2344, %v2718
      %v2799 = vadd.f32 %v2349, %v2723
      %v2800 = vadd.f32 %v2352, %v2726
      %v2801 = vadd.f32 %v2357, %v2731
      %v2802 = vadd.f32 %v2360, %v2734
      %v2803 = vadd.f32 %v2365, %v2739
      %v2804 = vadd.f32 %v2368, %v2742
      %v2805 = vadd.f32 %v2373, %v2747
      %v2806 = vadd.f32 %v2376, %v2750
      %v2807 = vadd.f32 %v2381, %v2755
      %v2808 = vadd.f32 %v2384, %v2758
      %v2809 = vld [vmem:[#allocation2 + $0x1f] sm:$0xff]
      %v2810 = vld [vmem:[#allocation2 + $0x27] sm:$0xff]
      %v2811 = vld [vmem:[#allocation2 + $0x2f] sm:$0xff]
      %v2812 = vld [vmem:[#allocation2 + $0x37] sm:$0xff]
      %v2813 = vld [vmem:[#allocation2 + $0x3f] sm:$0xff]
      %v2814 = vld [vmem:[#allocation2 + $0x47] sm:$0xff]
      %v2815 = vld [vmem:[#allocation2 + $0x4f] sm:$0xff]
      %v2816 = vld [vmem:[#allocation2 + $0x57] sm:$0xff]
      %v2817 = vld [vmem:[#allocation2 + $0x5f] sm:$0xff]
      %v2818 = vld [vmem:[#allocation2 + $0x67] sm:$0xff]
      %v2819 = vld [vmem:[#allocation2 + $0x6f] sm:$0xff]
      %v2820 = vld [vmem:[#allocation2 + $0x77] sm:$0xff]
      %v2821 = vld [vmem:[#allocation2 + $0x7f] sm:$0xff]
      %v2822 = vld [vmem:[#allocation2 + $0x87] sm:$0xff]
      %v2823 = vld [vmem:[#allocation2 + $0x8f] sm:$0xff]
      %v2824 = vld [vmem:[#allocation2 + $0x97] sm:$0xff]
      %v2825 = vld [vmem:[#allocation2 + $0x9f] sm:$0xff]
      %v2826 = vld [vmem:[#allocation2 + $0xa7] sm:$0xff]
      %v2827 = vld [vmem:[#allocation2 + $0xaf] sm:$0xff]
      %v2828 = vld [vmem:[#allocation2 + $0xb7] sm:$0xff]
      %v2829 = vld [vmem:[#allocation2 + $0xbf] sm:$0xff]
      %v2830 = vld [vmem:[#allocation2 + $0xc7] sm:$0xff]
      %v2831 = vld [vmem:[#allocation2 + $0xcf] sm:$0xff]
      %v2832 = vld [vmem:[#allocation2 + $0xd7] sm:$0xff]
      %v2833 = vld [vmem:[#allocation2 + $0xdf] sm:$0xff]
      %v2834 = vld [vmem:[#allocation2 + $0xe7] sm:$0xff]
      %v2835 = vld [vmem:[#allocation2 + $0xef] sm:$0xff]
      %v2836 = vld [vmem:[#allocation2 + $0xf7] sm:$0xff]
      %v2837 = vld [vmem:[#allocation2 + $0xff] sm:$0xff]
      %v2838 = vld [vmem:[#allocation2 + $0x107] sm:$0xff]
      %v2839 = vld [vmem:[#allocation2 + $0x10f] sm:$0xff]
      %v2840 = vld [vmem:[#allocation2 + $0x117] sm:$0xff]
      %v2841 = vld [vmem:[#allocation2 + $0x11f] sm:$0xff]
      %v2842 = vld [vmem:[#allocation2 + $0x127] sm:$0xff]
      %v2843 = vld [vmem:[#allocation2 + $0x12f] sm:$0xff]
      %v2844 = vld [vmem:[#allocation2 + $0x137] sm:$0xff]
      %v2845 = vld [vmem:[#allocation2 + $0x13f] sm:$0xff]
      %v2846 = vld [vmem:[#allocation2 + $0x147] sm:$0xff]
      %v2847 = vld [vmem:[#allocation2 + $0x14f] sm:$0xff]
      %v2848 = vld [vmem:[#allocation2 + $0x157] sm:$0xff]
      %v2849 = vld [vmem:[#allocation2 + $0x15f] sm:$0xff]
      %v2850 = vld [vmem:[#allocation2 + $0x167] sm:$0xff]
      %v2851 = vld [vmem:[#allocation2 + $0x16f] sm:$0xff]
      %v2852 = vld [vmem:[#allocation2 + $0x177] sm:$0xff]
      %v2853 = vld [vmem:[#allocation2 + $0x17f] sm:$0xff]
      %v2854 = vld [vmem:[#allocation2 + $0x187] sm:$0xff]
      %v2855 = vld [vmem:[#allocation2 + $0x18f] sm:$0xff]
      %v2856 = vld [vmem:[#allocation2 + $0x197] sm:$0xff]
      %v2857 = vpack.c.bf16 %v2810, %v2809
      %v2858 = vpack.c.bf16 %v2812, %v2811
      %v2859 = vpack.c.bf16 %v2814, %v2813
      %v2860 = vpack.c.bf16 %v2816, %v2815
      %v2861 = vpack.c.bf16 %v2818, %v2817
      %v2862 = vpack.c.bf16 %v2820, %v2819
      %v2863 = vpack.c.bf16 %v2822, %v2821
      %v2864 = vpack.c.bf16 %v2824, %v2823
      %v2865 = vpack.c.bf16 %v2826, %v2825
      %v2866 = vpack.c.bf16 %v2828, %v2827
      %v2867 = vpack.c.bf16 %v2830, %v2829
      %v2868 = vpack.c.bf16 %v2832, %v2831
      %v2869 = vpack.c.bf16 %v2834, %v2833
      %v2870 = vpack.c.bf16 %v2836, %v2835
      %v2871 = vpack.c.bf16 %v2838, %v2837
      %v2872 = vpack.c.bf16 %v2840, %v2839
      %v2873 = vpack.c.bf16 %v2842, %v2841
      %v2874 = vpack.c.bf16 %v2844, %v2843
      %v2875 = vpack.c.bf16 %v2846, %v2845
      %v2876 = vpack.c.bf16 %v2848, %v2847
      %v2877 = vpack.c.bf16 %v2850, %v2849
      %v2878 = vpack.c.bf16 %v2852, %v2851
      %v2879 = vpack.c.bf16 %v2854, %v2853
      %v2880 = vpack.c.bf16 %v2856, %v2855
      %s2881 = scalar_lea.vmem %s6, 6
      %v2882 = vld [vmem:[%s2881] sm:$0x3]
      %v2884 = vsel %vm871, %v2857, 0
      %v2887 = vsel %vm871, %v2858, 0
      %v2890 = vsel %vm871, %v2859, 0
      %v2893 = vsel %vm871, %v2860, 0
      %v2896 = vsel %vm871, %v2861, 0
      %v2899 = vsel %vm871, %v2862, 0
      %v2902 = vsel %vm871, %v2863, 0
      %v2905 = vsel %vm871, %v2864, 0
      %v2908 = vsel %vm871, %v2865, 0
      %v2911 = vsel %vm871, %v2866, 0
      %v2914 = vsel %vm871, %v2867, 0
      %v2917 = vsel %vm871, %v2868, 0
      %v2920 = vsel %vm871, %v2869, 0
      %v2923 = vsel %vm871, %v2870, 0
      %v2926 = vsel %vm871, %v2871, 0
      %v2929 = vsel %vm871, %v2872, 0
      %v2932 = vsel %vm871, %v2873, 0
      %v2935 = vsel %vm871, %v2874, 0
      %v2938 = vsel %vm871, %v2875, 0
      %v2941 = vsel %vm871, %v2876, 0
      %v2944 = vsel %vm871, %v2877, 0
      %v2947 = vsel %vm871, %v2878, 0
      %v2950 = vsel %vm871, %v2879, 0
      %v2953 = vsel %vm871, %v2880, 0
      %v2956 = vsel %vm953, %v2882, 0
      %2958 = vmatprep.subr.bf16.mxu0 0
      %2959 = vmatpush1.bf16.msra.mxu0 %v2956
      %2960 = vmatprep.subr.bf16.mxu0 0
      %2961 = vmatpush1.bf16.msra.mxu0 0
      %2962 = vmatprep.subr.bf16.mxu0 0
      %2963 = vmatpush1.bf16.msra.mxu0 0
      %2964 = vmatprep.subr.bf16.mxu0 0
      %2965 = vmatpush1.bf16.msra.mxu0 0
      %2966 = vmatprep.subr.bf16.mxu0 0
      %2967 = vmatpush1.bf16.msra.mxu0 0
      %2968 = vmatprep.subr.bf16.mxu0 0
      %2969 = vmatpush1.bf16.msra.mxu0 0
      %2970 = vmatprep.subr.bf16.mxu0 0
      %2971 = vmatpush1.bf16.msra.mxu0 0
      %2972 = vmatprep.subr.bf16.mxu0 0
      %2973 = vmatpush1.bf16.msra.mxu0 0
      %2974 = vmatprep.subr.bf16.mxu0 0
      %2975 = vmatpush1.bf16.msra.mxu0 0
      %2976 = vmatprep.subr.bf16.mxu0 0
      %2977 = vmatpush1.bf16.msra.mxu0 0
      %2978 = vmatprep.subr.bf16.mxu0 0
      %2979 = vmatpush1.bf16.msra.mxu0 0
      %2980 = vmatprep.subr.bf16.mxu0 0
      %2981 = vmatpush1.bf16.msra.mxu0 0
      %2982 = vmatprep.subr.bf16.mxu0 0
      %2983 = vmatpush1.bf16.msra.mxu0 0
      %2984 = vmatprep.subr.bf16.mxu0 0
      %2985 = vmatpush1.bf16.msra.mxu0 0
      %2986 = vmatprep.subr.bf16.mxu0 0
      %2987 = vmatpush1.bf16.msra.mxu0 0
      %2988 = vmatprep.subr.bf16.mxu0 0
      %2989 = vmatpush1.bf16.msra.mxu0 0
      %2990 = vmatprep.mubr.bf16.mxu0 0
      %2991 = vmatmul.mubr.bf16.gmra.mrb[0].mxu0 %v2884
      %v2992 = vpop.f32.mrb[0].mxu0
      %v2993 = vadd.f32 0.0, %v2992
      %v2994 = vpop.f32.mrb[0].mxu0
      %v2995 = vpop.f32.mrb[0].mxu0
      %v2996 = vadd.f32 0.0, %v2995
      %v2997 = vpop.f32.mrb[0].mxu0
      %2998 = vmatprep.mubr.bf16.mxu0 0
      %2999 = vmatmul.mubr.bf16.gmra.mrb[0].mxu0 %v2887
      %v3000 = vpop.f32.mrb[0].mxu0
      %v3001 = vadd.f32 0.0, %v3000
      %v3002 = vpop.f32.mrb[0].mxu0
      %v3003 = vpop.f32.mrb[0].mxu0
      %v3004 = vadd.f32 0.0, %v3003
      %v3005 = vpop.f32.mrb[0].mxu0
      %3006 = vmatprep.mubr.bf16.mxu0 0
      %3007 = vmatmul.mubr.bf16.gmra.mrb[0].mxu0 %v2890
      %v3008 = vpop.f32.mrb[0].mxu0
      %v3009 = vadd.f32 0.0, %v3008
      %v3010 = vpop.f32.mrb[0].mxu0
      %v3011 = vpop.f32.mrb[0].mxu0
      %v3012 = vadd.f32 0.0, %v3011
      %v3013 = vpop.f32.mrb[0].mxu0
      %3014 = vmatprep.mubr.bf16.mxu0 0
      %3015 = vmatmul.mubr.bf16.gmra.mrb[0].mxu0 %v2893
      %v3016 = vpop.f32.mrb[0].mxu0
      %v3017 = vadd.f32 0.0, %v3016
      %v3018 = vpop.f32.mrb[0].mxu0
      %v3019 = vpop.f32.mrb[0].mxu0
      %v3020 = vadd.f32 0.0, %v3019
      %v3021 = vpop.f32.mrb[0].mxu0
      %3022 = vmatprep.mubr.bf16.mxu0 0
      %3023 = vmatmul.mubr.bf16.gmra.mrb[0].mxu0 %v2896
      %v3024 = vpop.f32.mrb[0].mxu0
      %v3025 = vadd.f32 0.0, %v3024
      %v3026 = vpop.f32.mrb[0].mxu0
      %v3027 = vpop.f32.mrb[0].mxu0
      %v3028 = vadd.f32 0.0, %v3027
      %v3029 = vpop.f32.mrb[0].mxu0
      %3030 = vmatprep.mubr.bf16.mxu0 0
      %3031 = vmatmul.mubr.bf16.gmra.mrb[0].mxu0 %v2899
      %v3032 = vpop.f32.mrb[0].mxu0
      %v3033 = vadd.f32 0.0, %v3032
      %v3034 = vpop.f32.mrb[0].mxu0
      %v3035 = vpop.f32.mrb[0].mxu0
      %v3036 = vadd.f32 0.0, %v3035
      %v3037 = vpop.f32.mrb[0].mxu0
      %3038 = vmatprep.mubr.bf16.mxu0 0
      %3039 = vmatmul.mubr.bf16.gmra.mrb[0].mxu0 %v2902
      %v3040 = vpop.f32.mrb[0].mxu0
      %v3041 = vadd.f32 0.0, %v3040
      %v3042 = vpop.f32.mrb[0].mxu0
      %v3043 = vpop.f32.mrb[0].mxu0
      %v3044 = vadd.f32 0.0, %v3043
      %v3045 = vpop.f32.mrb[0].mxu0
      %3046 = vmatprep.mubr.bf16.mxu0 0
      %3047 = vmatmul.mubr.bf16.gmra.mrb[0].mxu0 %v2905
      %v3048 = vpop.f32.mrb[0].mxu0
      %v3049 = vadd.f32 0.0, %v3048
      %v3050 = vpop.f32.mrb[0].mxu0
      %v3051 = vpop.f32.mrb[0].mxu0
      %v3052 = vadd.f32 0.0, %v3051
      %v3053 = vpop.f32.mrb[0].mxu0
      %3054 = vmatprep.mubr.bf16.mxu0 0
      %3055 = vmatmul.mubr.bf16.gmra.mrb[0].mxu0 %v2908
      %v3056 = vpop.f32.mrb[0].mxu0
      %v3057 = vadd.f32 0.0, %v3056
      %v3058 = vpop.f32.mrb[0].mxu0
      %v3059 = vpop.f32.mrb[0].mxu0
      %v3060 = vadd.f32 0.0, %v3059
      %v3061 = vpop.f32.mrb[0].mxu0
      %3062 = vmatprep.mubr.bf16.mxu0 0
      %3063 = vmatmul.mubr.bf16.gmra.mrb[0].mxu0 %v2911
      %v3064 = vpop.f32.mrb[0].mxu0
      %v3065 = vadd.f32 0.0, %v3064
      %v3066 = vpop.f32.mrb[0].mxu0
      %v3067 = vpop.f32.mrb[0].mxu0
      %v3068 = vadd.f32 0.0, %v3067
      %v3069 = vpop.f32.mrb[0].mxu0
      %3070 = vmatprep.mubr.bf16.mxu0 0
      %3071 = vmatmul.mubr.bf16.gmra.mrb[0].mxu0 %v2914
      %v3072 = vpop.f32.mrb[0].mxu0
      %v3073 = vadd.f32 0.0, %v3072
      %v3074 = vpop.f32.mrb[0].mxu0
      %v3075 = vpop.f32.mrb[0].mxu0
      %v3076 = vadd.f32 0.0, %v3075
      %v3077 = vpop.f32.mrb[0].mxu0
      %3078 = vmatprep.mubr.bf16.mxu0 0
      %3079 = vmatmul.mubr.bf16.gmra.mrb[0].mxu0 %v2917
      %v3080 = vpop.f32.mrb[0].mxu0
      %v3081 = vadd.f32 0.0, %v3080
      %v3082 = vpop.f32.mrb[0].mxu0
      %v3083 = vpop.f32.mrb[0].mxu0
      %v3084 = vadd.f32 0.0, %v3083
      %v3085 = vpop.f32.mrb[0].mxu0
      %3086 = vmatprep.mubr.bf16.mxu0 0
      %3087 = vmatmul.mubr.bf16.gmra.mrb[0].mxu0 %v2920
      %v3088 = vpop.f32.mrb[0].mxu0
      %v3089 = vadd.f32 0.0, %v3088
      %v3090 = vpop.f32.mrb[0].mxu0
      %v3091 = vpop.f32.mrb[0].mxu0
      %v3092 = vadd.f32 0.0, %v3091
      %v3093 = vpop.f32.mrb[0].mxu0
      %3094 = vmatprep.mubr.bf16.mxu0 0
      %3095 = vmatmul.mubr.bf16.gmra.mrb[0].mxu0 %v2923
      %v3096 = vpop.f32.mrb[0].mxu0
      %v3097 = vadd.f32 0.0, %v3096
      %v3098 = vpop.f32.mrb[0].mxu0
      %v3099 = vpop.f32.mrb[0].mxu0
      %v3100 = vadd.f32 0.0, %v3099
      %v3101 = vpop.f32.mrb[0].mxu0
      %3102 = vmatprep.mubr.bf16.mxu0 0
      %3103 = vmatmul.mubr.bf16.gmra.mrb[0].mxu0 %v2926
      %v3104 = vpop.f32.mrb[0].mxu0
      %v3105 = vadd.f32 0.0, %v3104
      %v3106 = vpop.f32.mrb[0].mxu0
      %v3107 = vpop.f32.mrb[0].mxu0
      %v3108 = vadd.f32 0.0, %v3107
      %v3109 = vpop.f32.mrb[0].mxu0
      %3110 = vmatprep.mubr.bf16.mxu0 0
      %3111 = vmatmul.mubr.bf16.gmra.mrb[0].mxu0 %v2929
      %v3112 = vpop.f32.mrb[0].mxu0
      %v3113 = vadd.f32 0.0, %v3112
      %v3114 = vpop.f32.mrb[0].mxu0
      %v3115 = vpop.f32.mrb[0].mxu0
      %v3116 = vadd.f32 0.0, %v3115
      %v3117 = vpop.f32.mrb[0].mxu0
      %3118 = vmatprep.mubr.bf16.mxu0 0
      %3119 = vmatmul.mubr.bf16.gmra.mrb[0].mxu0 %v2932
      %v3120 = vpop.f32.mrb[0].mxu0
      %v3121 = vadd.f32 0.0, %v3120
      %v3122 = vpop.f32.mrb[0].mxu0
      %v3123 = vpop.f32.mrb[0].mxu0
      %v3124 = vadd.f32 0.0, %v3123
      %v3125 = vpop.f32.mrb[0].mxu0
      %3126 = vmatprep.mubr.bf16.mxu0 0
      %3127 = vmatmul.mubr.bf16.gmra.mrb[0].mxu0 %v2935
      %v3128 = vpop.f32.mrb[0].mxu0
      %v3129 = vadd.f32 0.0, %v3128
      %v3130 = vpop.f32.mrb[0].mxu0
      %v3131 = vpop.f32.mrb[0].mxu0
      %v3132 = vadd.f32 0.0, %v3131
      %v3133 = vpop.f32.mrb[0].mxu0
      %3134 = vmatprep.mubr.bf16.mxu0 0
      %3135 = vmatmul.mubr.bf16.gmra.mrb[0].mxu0 %v2938
      %v3136 = vpop.f32.mrb[0].mxu0
      %v3137 = vadd.f32 0.0, %v3136
      %v3138 = vpop.f32.mrb[0].mxu0
      %v3139 = vpop.f32.mrb[0].mxu0
      %v3140 = vadd.f32 0.0, %v3139
      %v3141 = vpop.f32.mrb[0].mxu0
      %3142 = vmatprep.mubr.bf16.mxu0 0
      %3143 = vmatmul.mubr.bf16.gmra.mrb[0].mxu0 %v2941
      %v3144 = vpop.f32.mrb[0].mxu0
      %v3145 = vadd.f32 0.0, %v3144
      %v3146 = vpop.f32.mrb[0].mxu0
      %v3147 = vpop.f32.mrb[0].mxu0
      %v3148 = vadd.f32 0.0, %v3147
      %v3149 = vpop.f32.mrb[0].mxu0
      %3150 = vmatprep.mubr.bf16.mxu0 0
      %3151 = vmatmul.mubr.bf16.gmra.mrb[0].mxu0 %v2944
      %v3152 = vpop.f32.mrb[0].mxu0
      %v3153 = vadd.f32 0.0, %v3152
      %v3154 = vpop.f32.mrb[0].mxu0
      %v3155 = vpop.f32.mrb[0].mxu0
      %v3156 = vadd.f32 0.0, %v3155
      %v3157 = vpop.f32.mrb[0].mxu0
      %3158 = vmatprep.mubr.bf16.mxu0 0
      %3159 = vmatmul.mubr.bf16.gmra.mrb[0].mxu0 %v2947
      %v3160 = vpop.f32.mrb[0].mxu0
      %v3161 = vadd.f32 0.0, %v3160
      %v3162 = vpop.f32.mrb[0].mxu0
      %v3163 = vpop.f32.mrb[0].mxu0
      %v3164 = vadd.f32 0.0, %v3163
      %v3165 = vpop.f32.mrb[0].mxu0
      %3166 = vmatprep.mubr.bf16.mxu0 0
      %3167 = vmatmul.mubr.bf16.gmra.mrb[0].mxu0 %v2950
      %v3168 = vpop.f32.mrb[0].mxu0
      %v3169 = vadd.f32 0.0, %v3168
      %v3170 = vpop.f32.mrb[0].mxu0
      %v3171 = vpop.f32.mrb[0].mxu0
      %v3172 = vadd.f32 0.0, %v3171
      %v3173 = vpop.f32.mrb[0].mxu0
      %3174 = vmatprep.mubr.bf16.mxu0 0
      %3175 = vmatmul.mubr.bf16.gmra.mrb[0].mxu0 %v2953
      %v3176 = vpop.f32.mrb[0].mxu0
      %v3177 = vadd.f32 0.0, %v3176
      %v3178 = vpop.f32.mrb[0].mxu0
      %v3179 = vpop.f32.mrb[0].mxu0
      %v3180 = vadd.f32 0.0, %v3179
      %v3181 = vpop.f32.mrb[0].mxu0
      %3182 = vdwg.mxu0
      %v3183 = vadd.f32 %v2761, %v2993
      %v3184 = vadd.f32 %v2762, %v2996
      %v3185 = vadd.f32 %v2763, %v3001
      %v3186 = vadd.f32 %v2764, %v3004
      %v3187 = vadd.f32 %v2765, %v3009
      %v3188 = vadd.f32 %v2766, %v3012
      %v3189 = vadd.f32 %v2767, %v3017
      %v3190 = vadd.f32 %v2768, %v3020
      %v3191 = vadd.f32 %v2769, %v3025
      %v3192 = vadd.f32 %v2770, %v3028
      %v3193 = vadd.f32 %v2771, %v3033
      %v3194 = vadd.f32 %v2772, %v3036
      %v3195 = vadd.f32 %v2773, %v3041
      %v3196 = vadd.f32 %v2774, %v3044
      %v3197 = vadd.f32 %v2775, %v3049
      %v3198 = vadd.f32 %v2776, %v3052
      %v3199 = vadd.f32 %v2777, %v3057
      %v3200 = vadd.f32 %v2778, %v3060
      %v3201 = vadd.f32 %v2779, %v3065
      %v3202 = vadd.f32 %v2780, %v3068
      %v3203 = vadd.f32 %v2781, %v3073
      %v3204 = vadd.f32 %v2782, %v3076
      %v3205 = vadd.f32 %v2783, %v3081
      %v3206 = vadd.f32 %v2784, %v3084
      %v3207 = vadd.f32 %v2785, %v3089
      %v3208 = vadd.f32 %v2786, %v3092
      %v3209 = vadd.f32 %v2787, %v3097
      %v3210 = vadd.f32 %v2788, %v3100
      %v3211 = vadd.f32 %v2789, %v3105
      %v3212 = vadd.f32 %v2790, %v3108
      %v3213 = vadd.f32 %v2791, %v3113
      %v3214 = vadd.f32 %v2792, %v3116
      %v3215 = vadd.f32 %v2793, %v3121
      %v3216 = vadd.f32 %v2794, %v3124
      %v3217 = vadd.f32 %v2795, %v3129
      %v3218 = vadd.f32 %v2796, %v3132
      %v3219 = vadd.f32 %v2797, %v3137
      %v3220 = vadd.f32 %v2798, %v3140
      %v3221 = vadd.f32 %v2799, %v3145
      %v3222 = vadd.f32 %v2800, %v3148
      %v3223 = vadd.f32 %v2801, %v3153
      %v3224 = vadd.f32 %v2802, %v3156
      %v3225 = vadd.f32 %v2803, %v3161
      %v3226 = vadd.f32 %v2804, %v3164
      %v3227 = vadd.f32 %v2805, %v3169
      %v3228 = vadd.f32 %v2806, %v3172
      %v3229 = vadd.f32 %v2807, %v3177
      %v3230 = vadd.f32 %v2808, %v3180
      %v3231 = vld [vmem:[#allocation2 + $0x20] sm:$0xff]
      %v3232 = vld [vmem:[#allocation2 + $0x28] sm:$0xff]
      %v3233 = vld [vmem:[#allocation2 + $0x30] sm:$0xff]
      %v3234 = vld [vmem:[#allocation2 + $0x38] sm:$0xff]
      %v3235 = vld [vmem:[#allocation2 + $0x40] sm:$0xff]
      %v3236 = vld [vmem:[#allocation2 + $0x48] sm:$0xff]
      %v3237 = vld [vmem:[#allocation2 + $0x50] sm:$0xff]
      %v3238 = vld [vmem:[#allocation2 + $0x58] sm:$0xff]
      %v3239 = vld [vmem:[#allocation2 + $0x60] sm:$0xff]
      %v3240 = vld [vmem:[#allocation2 + $0x68] sm:$0xff]
      %v3241 = vld [vmem:[#allocation2 + $0x70] sm:$0xff]
      %v3242 = vld [vmem:[#allocation2 + $0x78] sm:$0xff]
      %v3243 = vld [vmem:[#allocation2 + $0x80] sm:$0xff]
      %v3244 = vld [vmem:[#allocation2 + $0x88] sm:$0xff]
      %v3245 = vld [vmem:[#allocation2 + $0x90] sm:$0xff]
      %v3246 = vld [vmem:[#allocation2 + $0x98] sm:$0xff]
      %v3247 = vld [vmem:[#allocation2 + $0xa0] sm:$0xff]
      %v3248 = vld [vmem:[#allocation2 + $0xa8] sm:$0xff]
      %v3249 = vld [vmem:[#allocation2 + $0xb0] sm:$0xff]
      %v3250 = vld [vmem:[#allocation2 + $0xb8] sm:$0xff]
      %v3251 = vld [vmem:[#allocation2 + $0xc0] sm:$0xff]
      %v3252 = vld [vmem:[#allocation2 + $0xc8] sm:$0xff]
      %v3253 = vld [vmem:[#allocation2 + $0xd0] sm:$0xff]
      %v3254 = vld [vmem:[#allocation2 + $0xd8] sm:$0xff]
      %v3255 = vld [vmem:[#allocation2 + $0xe0] sm:$0xff]
      %v3256 = vld [vmem:[#allocation2 + $0xe8] sm:$0xff]
      %v3257 = vld [vmem:[#allocation2 + $0xf0] sm:$0xff]
      %v3258 = vld [vmem:[#allocation2 + $0xf8] sm:$0xff]
      %v3259 = vld [vmem:[#allocation2 + $0x100] sm:$0xff]
      %v3260 = vld [vmem:[#allocation2 + $0x108] sm:$0xff]
      %v3261 = vld [vmem:[#allocation2 + $0x110] sm:$0xff]
      %v3262 = vld [vmem:[#allocation2 + $0x118] sm:$0xff]
      %v3263 = vld [vmem:[#allocation2 + $0x120] sm:$0xff]
      %v3264 = vld [vmem:[#allocation2 + $0x128] sm:$0xff]
      %v3265 = vld [vmem:[#allocation2 + $0x130] sm:$0xff]
      %v3266 = vld [vmem:[#allocation2 + $0x138] sm:$0xff]
      %v3267 = vld [vmem:[#allocation2 + $0x140] sm:$0xff]
      %v3268 = vld [vmem:[#allocation2 + $0x148] sm:$0xff]
      %v3269 = vld [vmem:[#allocation2 + $0x150] sm:$0xff]
      %v3270 = vld [vmem:[#allocation2 + $0x158] sm:$0xff]
      %v3271 = vld [vmem:[#allocation2 + $0x160] sm:$0xff]
      %v3272 = vld [vmem:[#allocation2 + $0x168] sm:$0xff]
      %v3273 = vld [vmem:[#allocation2 + $0x170] sm:$0xff]
      %v3274 = vld [vmem:[#allocation2 + $0x178] sm:$0xff]
      %v3275 = vld [vmem:[#allocation2 + $0x180] sm:$0xff]
      %v3276 = vld [vmem:[#allocation2 + $0x188] sm:$0xff]
      %v3277 = vld [vmem:[#allocation2 + $0x190] sm:$0xff]
      %v3278 = vld [vmem:[#allocation2 + $0x198] sm:$0xff]
      %v3279 = vpack.c.bf16 %v3232, %v3231
      %v3280 = vpack.c.bf16 %v3234, %v3233
      %v3281 = vpack.c.bf16 %v3236, %v3235
      %v3282 = vpack.c.bf16 %v3238, %v3237
      %v3283 = vpack.c.bf16 %v3240, %v3239
      %v3284 = vpack.c.bf16 %v3242, %v3241
      %v3285 = vpack.c.bf16 %v3244, %v3243
      %v3286 = vpack.c.bf16 %v3246, %v3245
      %v3287 = vpack.c.bf16 %v3248, %v3247
      %v3288 = vpack.c.bf16 %v3250, %v3249
      %v3289 = vpack.c.bf16 %v3252, %v3251
      %v3290 = vpack.c.bf16 %v3254, %v3253
      %v3291 = vpack.c.bf16 %v3256, %v3255
      %v3292 = vpack.c.bf16 %v3258, %v3257
      %v3293 = vpack.c.bf16 %v3260, %v3259
      %v3294 = vpack.c.bf16 %v3262, %v3261
      %v3295 = vpack.c.bf16 %v3264, %v3263
      %v3296 = vpack.c.bf16 %v3266, %v3265
      %v3297 = vpack.c.bf16 %v3268, %v3267
      %v3298 = vpack.c.bf16 %v3270, %v3269
      %v3299 = vpack.c.bf16 %v3272, %v3271
      %v3300 = vpack.c.bf16 %v3274, %v3273
      %v3301 = vpack.c.bf16 %v3276, %v3275
      %v3302 = vpack.c.bf16 %v3278, %v3277
      %s3303 = scalar_lea.vmem %s6, 8
      %v3304 = vld [vmem:[%s3303] sm:$0x3]
      %v3306 = vsel %vm871, %v3279, 0
      %v3309 = vsel %vm871, %v3280, 0
      %v3312 = vsel %vm871, %v3281, 0
      %v3315 = vsel %vm871, %v3282, 0
      %v3318 = vsel %vm871, %v3283, 0
      %v3321 = vsel %vm871, %v3284, 0
      %v3324 = vsel %vm871, %v3285, 0
      %v3327 = vsel %vm871, %v3286, 0
      %v3330 = vsel %vm871, %v3287, 0
      %v3333 = vsel %vm871, %v3288, 0
      %v3336 = vsel %vm871, %v3289, 0
      %v3339 = vsel %vm871, %v3290, 0
      %v3342 = vsel %vm871, %v3291, 0
      %v3345 = vsel %vm871, %v3292, 0
      %v3348 = vsel %vm871, %v3293, 0
      %v3351 = vsel %vm871, %v3294, 0
      %v3354 = vsel %vm871, %v3295, 0
      %v3357 = vsel %vm871, %v3296, 0
      %v3360 = vsel %vm871, %v3297, 0
      %v3363 = vsel %vm871, %v3298, 0
      %v3366 = vsel %vm871, %v3299, 0
      %v3369 = vsel %vm871, %v3300, 0
      %v3372 = vsel %vm871, %v3301, 0
      %v3375 = vsel %vm871, %v3302, 0
      %v3378 = vsel %vm953, %v3304, 0
      %3380 = vmatprep.subr.bf16.mxu0 0
      %3381 = vmatpush1.bf16.msra.mxu0 %v3378
      %3382 = vmatprep.subr.bf16.mxu0 0
      %3383 = vmatpush1.bf16.msra.mxu0 0
      %3384 = vmatprep.subr.bf16.mxu0 0
      %3385 = vmatpush1.bf16.msra.mxu0 0
      %3386 = vmatprep.subr.bf16.mxu0 0
      %3387 = vmatpush1.bf16.msra.mxu0 0
      %3388 = vmatprep.subr.bf16.mxu0 0
      %3389 = vmatpush1.bf16.msra.mxu0 0
      %3390 = vmatprep.subr.bf16.mxu0 0
      %3391 = vmatpush1.bf16.msra.mxu0 0
      %3392 = vmatprep.subr.bf16.mxu0 0
      %3393 = vmatpush1.bf16.msra.mxu0 0
      %3394 = vmatprep.subr.bf16.mxu0 0
      %3395 = vmatpush1.bf16.msra.mxu0 0
      %3396 = vmatprep.subr.bf16.mxu0 0
      %3397 = vmatpush1.bf16.msra.mxu0 0
      %3398 = vmatprep.subr.bf16.mxu0 0
      %3399 = vmatpush1.bf16.msra.mxu0 0
      %3400 = vmatprep.subr.bf16.mxu0 0
      %3401 = vmatpush1.bf16.msra.mxu0 0
      %3402 = vmatprep.subr.bf16.mxu0 0
      %3403 = vmatpush1.bf16.msra.mxu0 0
      %3404 = vmatprep.subr.bf16.mxu0 0
      %3405 = vmatpush1.bf16.msra.mxu0 0
      %3406 = vmatprep.subr.bf16.mxu0 0
      %3407 = vmatpush1.bf16.msra.mxu0 0
      %3408 = vmatprep.subr.bf16.mxu0 0
      %3409 = vmatpush1.bf16.msra.mxu0 0
      %3410 = vmatprep.subr.bf16.mxu0 0
      %3411 = vmatpush1.bf16.msra.mxu0 0
      %3412 = vmatprep.mubr.bf16.mxu0 0
      %3413 = vmatmul.mubr.bf16.gmra.mrb[0].mxu0 %v3306
      %v3414 = vpop.f32.mrb[0].mxu0
      %v3415 = vadd.f32 0.0, %v3414
      %v3416 = vpop.f32.mrb[0].mxu0
      %v3417 = vpop.f32.mrb[0].mxu0
      %v3418 = vadd.f32 0.0, %v3417
      %v3419 = vpop.f32.mrb[0].mxu0
      %3420 = vmatprep.mubr.bf16.mxu0 0
      %3421 = vmatmul.mubr.bf16.gmra.mrb[0].mxu0 %v3309
      %v3422 = vpop.f32.mrb[0].mxu0
      %v3423 = vadd.f32 0.0, %v3422
      %v3424 = vpop.f32.mrb[0].mxu0
      %v3425 = vpop.f32.mrb[0].mxu0
      %v3426 = vadd.f32 0.0, %v3425
      %v3427 = vpop.f32.mrb[0].mxu0
      %3428 = vmatprep.mubr.bf16.mxu0 0
      %3429 = vmatmul.mubr.bf16.gmra.mrb[0].mxu0 %v3312
      %v3430 = vpop.f32.mrb[0].mxu0
      %v3431 = vadd.f32 0.0, %v3430
      %v3432 = vpop.f32.mrb[0].mxu0
      %v3433 = vpop.f32.mrb[0].mxu0
      %v3434 = vadd.f32 0.0, %v3433
      %v3435 = vpop.f32.mrb[0].mxu0
      %3436 = vmatprep.mubr.bf16.mxu0 0
      %3437 = vmatmul.mubr.bf16.gmra.mrb[0].mxu0 %v3315
      %v3438 = vpop.f32.mrb[0].mxu0
      %v3439 = vadd.f32 0.0, %v3438
      %v3440 = vpop.f32.mrb[0].mxu0
      %v3441 = vpop.f32.mrb[0].mxu0
      %v3442 = vadd.f32 0.0, %v3441
      %v3443 = vpop.f32.mrb[0].mxu0
      %3444 = vmatprep.mubr.bf16.mxu0 0
      %3445 = vmatmul.mubr.bf16.gmra.mrb[0].mxu0 %v3318
      %v3446 = vpop.f32.mrb[0].mxu0
      %v3447 = vadd.f32 0.0, %v3446
      %v3448 = vpop.f32.mrb[0].mxu0
      %v3449 = vpop.f32.mrb[0].mxu0
      %v3450 = vadd.f32 0.0, %v3449
      %v3451 = vpop.f32.mrb[0].mxu0
      %3452 = vmatprep.mubr.bf16.mxu0 0
      %3453 = vmatmul.mubr.bf16.gmra.mrb[0].mxu0 %v3321
      %v3454 = vpop.f32.mrb[0].mxu0
      %v3455 = vadd.f32 0.0, %v3454
      %v3456 = vpop.f32.mrb[0].mxu0
      %v3457 = vpop.f32.mrb[0].mxu0
      %v3458 = vadd.f32 0.0, %v3457
      %v3459 = vpop.f32.mrb[0].mxu0
      %3460 = vmatprep.mubr.bf16.mxu0 0
      %3461 = vmatmul.mubr.bf16.gmra.mrb[0].mxu0 %v3324
      %v3462 = vpop.f32.mrb[0].mxu0
      %v3463 = vadd.f32 0.0, %v3462
      %v3464 = vpop.f32.mrb[0].mxu0
      %v3465 = vpop.f32.mrb[0].mxu0
      %v3466 = vadd.f32 0.0, %v3465
      %v3467 = vpop.f32.mrb[0].mxu0
      %3468 = vmatprep.mubr.bf16.mxu0 0
      %3469 = vmatmul.mubr.bf16.gmra.mrb[0].mxu0 %v3327
      %v3470 = vpop.f32.mrb[0].mxu0
      %v3471 = vadd.f32 0.0, %v3470
      %v3472 = vpop.f32.mrb[0].mxu0
      %v3473 = vpop.f32.mrb[0].mxu0
      %v3474 = vadd.f32 0.0, %v3473
      %v3475 = vpop.f32.mrb[0].mxu0
      %3476 = vmatprep.mubr.bf16.mxu0 0
      %3477 = vmatmul.mubr.bf16.gmra.mrb[0].mxu0 %v3330
      %v3478 = vpop.f32.mrb[0].mxu0
      %v3479 = vadd.f32 0.0, %v3478
      %v3480 = vpop.f32.mrb[0].mxu0
      %v3481 = vpop.f32.mrb[0].mxu0
      %v3482 = vadd.f32 0.0, %v3481
      %v3483 = vpop.f32.mrb[0].mxu0
      %3484 = vmatprep.mubr.bf16.mxu0 0
      %3485 = vmatmul.mubr.bf16.gmra.mrb[0].mxu0 %v3333
      %v3486 = vpop.f32.mrb[0].mxu0
      %v3487 = vadd.f32 0.0, %v3486
      %v3488 = vpop.f32.mrb[0].mxu0
      %v3489 = vpop.f32.mrb[0].mxu0
      %v3490 = vadd.f32 0.0, %v3489
      %v3491 = vpop.f32.mrb[0].mxu0
      %3492 = vmatprep.mubr.bf16.mxu0 0
      %3493 = vmatmul.mubr.bf16.gmra.mrb[0].mxu0 %v3336
      %v3494 = vpop.f32.mrb[0].mxu0
      %v3495 = vadd.f32 0.0, %v3494
      %v3496 = vpop.f32.mrb[0].mxu0
      %v3497 = vpop.f32.mrb[0].mxu0
      %v3498 = vadd.f32 0.0, %v3497
      %v3499 = vpop.f32.mrb[0].mxu0
      %3500 = vmatprep.mubr.bf16.mxu0 0
      %3501 = vmatmul.mubr.bf16.gmra.mrb[0].mxu0 %v3339
      %v3502 = vpop.f32.mrb[0].mxu0
      %v3503 = vadd.f32 0.0, %v3502
      %v3504 = vpop.f32.mrb[0].mxu0
      %v3505 = vpop.f32.mrb[0].mxu0
      %v3506 = vadd.f32 0.0, %v3505
      %v3507 = vpop.f32.mrb[0].mxu0
      %3508 = vmatprep.mubr.bf16.mxu0 0
      %3509 = vmatmul.mubr.bf16.gmra.mrb[0].mxu0 %v3342
      %v3510 = vpop.f32.mrb[0].mxu0
      %v3511 = vadd.f32 0.0, %v3510
      %v3512 = vpop.f32.mrb[0].mxu0
      %v3513 = vpop.f32.mrb[0].mxu0
      %v3514 = vadd.f32 0.0, %v3513
      %v3515 = vpop.f32.mrb[0].mxu0
      %3516 = vmatprep.mubr.bf16.mxu0 0
      %3517 = vmatmul.mubr.bf16.gmra.mrb[0].mxu0 %v3345
      %v3518 = vpop.f32.mrb[0].mxu0
      %v3519 = vadd.f32 0.0, %v3518
      %v3520 = vpop.f32.mrb[0].mxu0
      %v3521 = vpop.f32.mrb[0].mxu0
      %v3522 = vadd.f32 0.0, %v3521
      %v3523 = vpop.f32.mrb[0].mxu0
      %3524 = vmatprep.mubr.bf16.mxu0 0
      %3525 = vmatmul.mubr.bf16.gmra.mrb[0].mxu0 %v3348
      %v3526 = vpop.f32.mrb[0].mxu0
      %v3527 = vadd.f32 0.0, %v3526
      %v3528 = vpop.f32.mrb[0].mxu0
      %v3529 = vpop.f32.mrb[0].mxu0
      %v3530 = vadd.f32 0.0, %v3529
      %v3531 = vpop.f32.mrb[0].mxu0
      %3532 = vmatprep.mubr.bf16.mxu0 0
      %3533 = vmatmul.mubr.bf16.gmra.mrb[0].mxu0 %v3351
      %v3534 = vpop.f32.mrb[0].mxu0
      %v3535 = vadd.f32 0.0, %v3534
      %v3536 = vpop.f32.mrb[0].mxu0
      %v3537 = vpop.f32.mrb[0].mxu0
      %v3538 = vadd.f32 0.0, %v3537
      %v3539 = vpop.f32.mrb[0].mxu0
      %3540 = vmatprep.mubr.bf16.mxu0 0
      %3541 = vmatmul.mubr.bf16.gmra.mrb[0].mxu0 %v3354
      %v3542 = vpop.f32.mrb[0].mxu0
      %v3543 = vadd.f32 0.0, %v3542
      %v3544 = vpop.f32.mrb[0].mxu0
      %v3545 = vpop.f32.mrb[0].mxu0
      %v3546 = vadd.f32 0.0, %v3545
      %v3547 = vpop.f32.mrb[0].mxu0
      %3548 = vmatprep.mubr.bf16.mxu0 0
      %3549 = vmatmul.mubr.bf16.gmra.mrb[0].mxu0 %v3357
      %v3550 = vpop.f32.mrb[0].mxu0
      %v3551 = vadd.f32 0.0, %v3550
      %v3552 = vpop.f32.mrb[0].mxu0
      %v3553 = vpop.f32.mrb[0].mxu0
      %v3554 = vadd.f32 0.0, %v3553
      %v3555 = vpop.f32.mrb[0].mxu0
      %3556 = vmatprep.mubr.bf16.mxu0 0
      %3557 = vmatmul.mubr.bf16.gmra.mrb[0].mxu0 %v3360
      %v3558 = vpop.f32.mrb[0].mxu0
      %v3559 = vadd.f32 0.0, %v3558
      %v3560 = vpop.f32.mrb[0].mxu0
      %v3561 = vpop.f32.mrb[0].mxu0
      %v3562 = vadd.f32 0.0, %v3561
      %v3563 = vpop.f32.mrb[0].mxu0
      %3564 = vmatprep.mubr.bf16.mxu0 0
      %3565 = vmatmul.mubr.bf16.gmra.mrb[0].mxu0 %v3363
      %v3566 = vpop.f32.mrb[0].mxu0
      %v3567 = vadd.f32 0.0, %v3566
      %v3568 = vpop.f32.mrb[0].mxu0
      %v3569 = vpop.f32.mrb[0].mxu0
      %v3570 = vadd.f32 0.0, %v3569
      %v3571 = vpop.f32.mrb[0].mxu0
      %3572 = vmatprep.mubr.bf16.mxu0 0
      %3573 = vmatmul.mubr.bf16.gmra.mrb[0].mxu0 %v3366
      %v3574 = vpop.f32.mrb[0].mxu0
      %v3575 = vadd.f32 0.0, %v3574
      %v3576 = vpop.f32.mrb[0].mxu0
      %v3577 = vpop.f32.mrb[0].mxu0
      %v3578 = vadd.f32 0.0, %v3577
      %v3579 = vpop.f32.mrb[0].mxu0
      %3580 = vmatprep.mubr.bf16.mxu0 0
      %3581 = vmatmul.mubr.bf16.gmra.mrb[0].mxu0 %v3369
      %v3582 = vpop.f32.mrb[0].mxu0
      %v3583 = vadd.f32 0.0, %v3582
      %v3584 = vpop.f32.mrb[0].mxu0
      %v3585 = vpop.f32.mrb[0].mxu0
      %v3586 = vadd.f32 0.0, %v3585
      %v3587 = vpop.f32.mrb[0].mxu0
      %3588 = vmatprep.mubr.bf16.mxu0 0
      %3589 = vmatmul.mubr.bf16.gmra.mrb[0].mxu0 %v3372
      %v3590 = vpop.f32.mrb[0].mxu0
      %v3591 = vadd.f32 0.0, %v3590
      %v3592 = vpop.f32.mrb[0].mxu0
      %v3593 = vpop.f32.mrb[0].mxu0
      %v3594 = vadd.f32 0.0, %v3593
      %v3595 = vpop.f32.mrb[0].mxu0
      %3596 = vmatprep.mubr.bf16.mxu0 0
      %3597 = vmatmul.mubr.bf16.gmra.mrb[0].mxu0 %v3375
      %v3598 = vpop.f32.mrb[0].mxu0
      %v3599 = vadd.f32 0.0, %v3598
      %v3600 = vpop.f32.mrb[0].mxu0
      %v3601 = vpop.f32.mrb[0].mxu0
      %v3602 = vadd.f32 0.0, %v3601
      %v3603 = vpop.f32.mrb[0].mxu0
      %3604 = vdwg.mxu0
      %v3605 = vadd.f32 %v3183, %v3415
      %v3606 = vadd.f32 %v3184, %v3418
      %v3607 = vadd.f32 %v3185, %v3423
      %v3608 = vadd.f32 %v3186, %v3426
      %v3609 = vadd.f32 %v3187, %v3431
      %v3610 = vadd.f32 %v3188, %v3434
      %v3611 = vadd.f32 %v3189, %v3439
      %v3612 = vadd.f32 %v3190, %v3442
      %v3613 = vadd.f32 %v3191, %v3447
      %v3614 = vadd.f32 %v3192, %v3450
      %v3615 = vadd.f32 %v3193, %v3455
      %v3616 = vadd.f32 %v3194, %v3458
      %v3617 = vadd.f32 %v3195, %v3463
      %v3618 = vadd.f32 %v3196, %v3466
      %v3619 = vadd.f32 %v3197, %v3471
      %v3620 = vadd.f32 %v3198, %v3474
      %v3621 = vadd.f32 %v3199, %v3479
      %v3622 = vadd.f32 %v3200, %v3482
      %v3623 = vadd.f32 %v3201, %v3487
      %v3624 = vadd.f32 %v3202, %v3490
      %v3625 = vadd.f32 %v3203, %v3495
      %v3626 = vadd.f32 %v3204, %v3498
      %v3627 = vadd.f32 %v3205, %v3503
      %v3628 = vadd.f32 %v3206, %v3506
      %v3629 = vadd.f32 %v3207, %v3511
      %v3630 = vadd.f32 %v3208, %v3514
      %v3631 = vadd.f32 %v3209, %v3519
      %v3632 = vadd.f32 %v3210, %v3522
      %v3633 = vadd.f32 %v3211, %v3527
      %v3634 = vadd.f32 %v3212, %v3530
      %v3635 = vadd.f32 %v3213, %v3535
      %v3636 = vadd.f32 %v3214, %v3538
      %v3637 = vadd.f32 %v3215, %v3543
      %v3638 = vadd.f32 %v3216, %v3546
      %v3639 = vadd.f32 %v3217, %v3551
      %v3640 = vadd.f32 %v3218, %v3554
      %v3641 = vadd.f32 %v3219, %v3559
      %v3642 = vadd.f32 %v3220, %v3562
      %v3643 = vadd.f32 %v3221, %v3567
      %v3644 = vadd.f32 %v3222, %v3570
      %v3645 = vadd.f32 %v3223, %v3575
      %v3646 = vadd.f32 %v3224, %v3578
      %v3647 = vadd.f32 %v3225, %v3583
      %v3648 = vadd.f32 %v3226, %v3586
      %v3649 = vadd.f32 %v3227, %v3591
      %v3650 = vadd.f32 %v3228, %v3594
      %v3651 = vadd.f32 %v3229, %v3599
      %v3652 = vadd.f32 %v3230, %v3602
      %v3653 = vld [vmem:[#allocation2 + $0x21] sm:$0xff]
      %v3654 = vld [vmem:[#allocation2 + $0x29] sm:$0xff]
      %v3655 = vld [vmem:[#allocation2 + $0x31] sm:$0xff]
      %v3656 = vld [vmem:[#allocation2 + $0x39] sm:$0xff]
      %v3657 = vld [vmem:[#allocation2 + $0x41] sm:$0xff]
      %v3658 = vld [vmem:[#allocation2 + $0x49] sm:$0xff]
      %v3659 = vld [vmem:[#allocation2 + $0x51] sm:$0xff]
      %v3660 = vld [vmem:[#allocation2 + $0x59] sm:$0xff]
      %v3661 = vld [vmem:[#allocation2 + $0x61] sm:$0xff]
      %v3662 = vld [vmem:[#allocation2 + $0x69] sm:$0xff]
      %v3663 = vld [vmem:[#allocation2 + $0x71] sm:$0xff]
      %v3664 = vld [vmem:[#allocation2 + $0x79] sm:$0xff]
      %v3665 = vld [vmem:[#allocation2 + $0x81] sm:$0xff]
      %v3666 = vld [vmem:[#allocation2 + $0x89] sm:$0xff]
      %v3667 = vld [vmem:[#allocation2 + $0x91] sm:$0xff]
      %v3668 = vld [vmem:[#allocation2 + $0x99] sm:$0xff]
      %v3669 = vld [vmem:[#allocation2 + $0xa1] sm:$0xff]
      %v3670 = vld [vmem:[#allocation2 + $0xa9] sm:$0xff]
      %v3671 = vld [vmem:[#allocation2 + $0xb1] sm:$0xff]
      %v3672 = vld [vmem:[#allocation2 + $0xb9] sm:$0xff]
      %v3673 = vld [vmem:[#allocation2 + $0xc1] sm:$0xff]
      %v3674 = vld [vmem:[#allocation2 + $0xc9] sm:$0xff]
      %v3675 = vld [vmem:[#allocation2 + $0xd1] sm:$0xff]
      %v3676 = vld [vmem:[#allocation2 + $0xd9] sm:$0xff]
      %v3677 = vld [vmem:[#allocation2 + $0xe1] sm:$0xff]
      %v3678 = vld [vmem:[#allocation2 + $0xe9] sm:$0xff]
      %v3679 = vld [vmem:[#allocation2 + $0xf1] sm:$0xff]
      %v3680 = vld [vmem:[#allocation2 + $0xf9] sm:$0xff]
      %v3681 = vld [vmem:[#allocation2 + $0x101] sm:$0xff]
      %v3682 = vld [vmem:[#allocation2 + $0x109] sm:$0xff]
      %v3683 = vld [vmem:[#allocation2 + $0x111] sm:$0xff]
      %v3684 = vld [vmem:[#allocation2 + $0x119] sm:$0xff]
      %v3685 = vld [vmem:[#allocation2 + $0x121] sm:$0xff]
      %v3686 = vld [vmem:[#allocation2 + $0x129] sm:$0xff]
      %v3687 = vld [vmem:[#allocation2 + $0x131] sm:$0xff]
      %v3688 = vld [vmem:[#allocation2 + $0x139] sm:$0xff]
      %v3689 = vld [vmem:[#allocation2 + $0x141] sm:$0xff]
      %v3690 = vld [vmem:[#allocation2 + $0x149] sm:$0xff]
      %v3691 = vld [vmem:[#allocation2 + $0x151] sm:$0xff]
      %v3692 = vld [vmem:[#allocation2 + $0x159] sm:$0xff]
      %v3693 = vld [vmem:[#allocation2 + $0x161] sm:$0xff]
      %v3694 = vld [vmem:[#allocation2 + $0x169] sm:$0xff]
      %v3695 = vld [vmem:[#allocation2 + $0x171] sm:$0xff]
      %v3696 = vld [vmem:[#allocation2 + $0x179] sm:$0xff]
      %v3697 = vld [vmem:[#allocation2 + $0x181] sm:$0xff]
      %v3698 = vld [vmem:[#allocation2 + $0x189] sm:$0xff]
      %v3699 = vld [vmem:[#allocation2 + $0x191] sm:$0xff]
      %v3700 = vld [vmem:[#allocation2 + $0x199] sm:$0xff]
      %v3701 = vpack.c.bf16 %v3654, %v3653
      %v3702 = vpack.c.bf16 %v3656, %v3655
      %v3703 = vpack.c.bf16 %v3658, %v3657
      %v3704 = vpack.c.bf16 %v3660, %v3659
      %v3705 = vpack.c.bf16 %v3662, %v3661
      %v3706 = vpack.c.bf16 %v3664, %v3663
      %v3707 = vpack.c.bf16 %v3666, %v3665
      %v3708 = vpack.c.bf16 %v3668, %v3667
      %v3709 = vpack.c.bf16 %v3670, %v3669
      %v3710 = vpack.c.bf16 %v3672, %v3671
      %v3711 = vpack.c.bf16 %v3674, %v3673
      %v3712 = vpack.c.bf16 %v3676, %v3675
      %v3713 = vpack.c.bf16 %v3678, %v3677
      %v3714 = vpack.c.bf16 %v3680, %v3679
      %v3715 = vpack.c.bf16 %v3682, %v3681
      %v3716 = vpack.c.bf16 %v3684, %v3683
      %v3717 = vpack.c.bf16 %v3686, %v3685
      %v3718 = vpack.c.bf16 %v3688, %v3687
      %v3719 = vpack.c.bf16 %v3690, %v3689
      %v3720 = vpack.c.bf16 %v3692, %v3691
      %v3721 = vpack.c.bf16 %v3694, %v3693
      %v3722 = vpack.c.bf16 %v3696, %v3695
      %v3723 = vpack.c.bf16 %v3698, %v3697
      %v3724 = vpack.c.bf16 %v3700, %v3699
      %s3725 = scalar_lea.vmem %s6, 10
      %v3726 = vld [vmem:[%s3725] sm:$0x3]
      %v3728 = vsel %vm871, %v3701, 0
      %v3731 = vsel %vm871, %v3702, 0
      %v3734 = vsel %vm871, %v3703, 0
      %v3737 = vsel %vm871, %v3704, 0
      %v3740 = vsel %vm871, %v3705, 0
      %v3743 = vsel %vm871, %v3706, 0
      %v3746 = vsel %vm871, %v3707, 0
      %v3749 = vsel %vm871, %v3708, 0
      %v3752 = vsel %vm871, %v3709, 0
      %v3755 = vsel %vm871, %v3710, 0
      %v3758 = vsel %vm871, %v3711, 0
      %v3761 = vsel %vm871, %v3712, 0
      %v3764 = vsel %vm871, %v3713, 0
      %v3767 = vsel %vm871, %v3714, 0
      %v3770 = vsel %vm871, %v3715, 0
      %v3773 = vsel %vm871, %v3716, 0
      %v3776 = vsel %vm871, %v3717, 0
      %v3779 = vsel %vm871, %v3718, 0
      %v3782 = vsel %vm871, %v3719, 0
      %v3785 = vsel %vm871, %v3720, 0
      %v3788 = vsel %vm871, %v3721, 0
      %v3791 = vsel %vm871, %v3722, 0
      %v3794 = vsel %vm871, %v3723, 0
      %v3797 = vsel %vm871, %v3724, 0
      %v3800 = vsel %vm953, %v3726, 0
      %3802 = vmatprep.subr.bf16.mxu0 0
      %3803 = vmatpush1.bf16.msra.mxu0 %v3800
      %3804 = vmatprep.subr.bf16.mxu0 0
      %3805 = vmatpush1.bf16.msra.mxu0 0
      %3806 = vmatprep.subr.bf16.mxu0 0
      %3807 = vmatpush1.bf16.msra.mxu0 0
      %3808 = vmatprep.subr.bf16.mxu0 0
      %3809 = vmatpush1.bf16.msra.mxu0 0
      %3810 = vmatprep.subr.bf16.mxu0 0
      %3811 = vmatpush1.bf16.msra.mxu0 0
      %3812 = vmatprep.subr.bf16.mxu0 0
      %3813 = vmatpush1.bf16.msra.mxu0 0
      %3814 = vmatprep.subr.bf16.mxu0 0
      %3815 = vmatpush1.bf16.msra.mxu0 0
      %3816 = vmatprep.subr.bf16.mxu0 0
      %3817 = vmatpush1.bf16.msra.mxu0 0
      %3818 = vmatprep.subr.bf16.mxu0 0
      %3819 = vmatpush1.bf16.msra.mxu0 0
      %3820 = vmatprep.subr.bf16.mxu0 0
      %3821 = vmatpush1.bf16.msra.mxu0 0
      %3822 = vmatprep.subr.bf16.mxu0 0
      %3823 = vmatpush1.bf16.msra.mxu0 0
      %3824 = vmatprep.subr.bf16.mxu0 0
      %3825 = vmatpush1.bf16.msra.mxu0 0
      %3826 = vmatprep.subr.bf16.mxu0 0
      %3827 = vmatpush1.bf16.msra.mxu0 0
      %3828 = vmatprep.subr.bf16.mxu0 0
      %3829 = vmatpush1.bf16.msra.mxu0 0
      %3830 = vmatprep.subr.bf16.mxu0 0
      %3831 = vmatpush1.bf16.msra.mxu0 0
      %3832 = vmatprep.subr.bf16.mxu0 0
      %3833 = vmatpush1.bf16.msra.mxu0 0
      %3834 = vmatprep.mubr.bf16.mxu0 0
      %3835 = vmatmul.mubr.bf16.gmra.mrb[0].mxu0 %v3728
      %v3836 = vpop.f32.mrb[0].mxu0
      %v3837 = vadd.f32 0.0, %v3836
      %v3838 = vpop.f32.mrb[0].mxu0
      %v3839 = vpop.f32.mrb[0].mxu0
      %v3840 = vadd.f32 0.0, %v3839
      %v3841 = vpop.f32.mrb[0].mxu0
      %3842 = vmatprep.mubr.bf16.mxu0 0
      %3843 = vmatmul.mubr.bf16.gmra.mrb[0].mxu0 %v3731
      %v3844 = vpop.f32.mrb[0].mxu0
      %v3845 = vadd.f32 0.0, %v3844
      %v3846 = vpop.f32.mrb[0].mxu0
      %v3847 = vpop.f32.mrb[0].mxu0
      %v3848 = vadd.f32 0.0, %v3847
      %v3849 = vpop.f32.mrb[0].mxu0
      %3850 = vmatprep.mubr.bf16.mxu0 0
      %3851 = vmatmul.mubr.bf16.gmra.mrb[0].mxu0 %v3734
      %v3852 = vpop.f32.mrb[0].mxu0
      %v3853 = vadd.f32 0.0, %v3852
      %v3854 = vpop.f32.mrb[0].mxu0
      %v3855 = vpop.f32.mrb[0].mxu0
      %v3856 = vadd.f32 0.0, %v3855
      %v3857 = vpop.f32.mrb[0].mxu0
      %3858 = vmatprep.mubr.bf16.mxu0 0
      %3859 = vmatmul.mubr.bf16.gmra.mrb[0].mxu0 %v3737
      %v3860 = vpop.f32.mrb[0].mxu0
      %v3861 = vadd.f32 0.0, %v3860
      %v3862 = vpop.f32.mrb[0].mxu0
      %v3863 = vpop.f32.mrb[0].mxu0
      %v3864 = vadd.f32 0.0, %v3863
      %v3865 = vpop.f32.mrb[0].mxu0
      %3866 = vmatprep.mubr.bf16.mxu0 0
      %3867 = vmatmul.mubr.bf16.gmra.mrb[0].mxu0 %v3740
      %v3868 = vpop.f32.mrb[0].mxu0
      %v3869 = vadd.f32 0.0, %v3868
      %v3870 = vpop.f32.mrb[0].mxu0
      %v3871 = vpop.f32.mrb[0].mxu0
      %v3872 = vadd.f32 0.0, %v3871
      %v3873 = vpop.f32.mrb[0].mxu0
      %3874 = vmatprep.mubr.bf16.mxu0 0
      %3875 = vmatmul.mubr.bf16.gmra.mrb[0].mxu0 %v3743
      %v3876 = vpop.f32.mrb[0].mxu0
      %v3877 = vadd.f32 0.0, %v3876
      %v3878 = vpop.f32.mrb[0].mxu0
      %v3879 = vpop.f32.mrb[0].mxu0
      %v3880 = vadd.f32 0.0, %v3879
      %v3881 = vpop.f32.mrb[0].mxu0
      %3882 = vmatprep.mubr.bf16.mxu0 0
      %3883 = vmatmul.mubr.bf16.gmra.mrb[0].mxu0 %v3746
      %v3884 = vpop.f32.mrb[0].mxu0
      %v3885 = vadd.f32 0.0, %v3884
      %v3886 = vpop.f32.mrb[0].mxu0
      %v3887 = vpop.f32.mrb[0].mxu0
      %v3888 = vadd.f32 0.0, %v3887
      %v3889 = vpop.f32.mrb[0].mxu0
      %3890 = vmatprep.mubr.bf16.mxu0 0
      %3891 = vmatmul.mubr.bf16.gmra.mrb[0].mxu0 %v3749
      %v3892 = vpop.f32.mrb[0].mxu0
      %v3893 = vadd.f32 0.0, %v3892
      %v3894 = vpop.f32.mrb[0].mxu0
      %v3895 = vpop.f32.mrb[0].mxu0
      %v3896 = vadd.f32 0.0, %v3895
      %v3897 = vpop.f32.mrb[0].mxu0
      %3898 = vmatprep.mubr.bf16.mxu0 0
      %3899 = vmatmul.mubr.bf16.gmra.mrb[0].mxu0 %v3752
      %v3900 = vpop.f32.mrb[0].mxu0
      %v3901 = vadd.f32 0.0, %v3900
      %v3902 = vpop.f32.mrb[0].mxu0
      %v3903 = vpop.f32.mrb[0].mxu0
      %v3904 = vadd.f32 0.0, %v3903
      %v3905 = vpop.f32.mrb[0].mxu0
      %3906 = vmatprep.mubr.bf16.mxu0 0
      %3907 = vmatmul.mubr.bf16.gmra.mrb[0].mxu0 %v3755
      %v3908 = vpop.f32.mrb[0].mxu0
      %v3909 = vadd.f32 0.0, %v3908
      %v3910 = vpop.f32.mrb[0].mxu0
      %v3911 = vpop.f32.mrb[0].mxu0
      %v3912 = vadd.f32 0.0, %v3911
      %v3913 = vpop.f32.mrb[0].mxu0
      %3914 = vmatprep.mubr.bf16.mxu0 0
      %3915 = vmatmul.mubr.bf16.gmra.mrb[0].mxu0 %v3758
      %v3916 = vpop.f32.mrb[0].mxu0
      %v3917 = vadd.f32 0.0, %v3916
      %v3918 = vpop.f32.mrb[0].mxu0
      %v3919 = vpop.f32.mrb[0].mxu0
      %v3920 = vadd.f32 0.0, %v3919
      %v3921 = vpop.f32.mrb[0].mxu0
      %3922 = vmatprep.mubr.bf16.mxu0 0
      %3923 = vmatmul.mubr.bf16.gmra.mrb[0].mxu0 %v3761
      %v3924 = vpop.f32.mrb[0].mxu0
      %v3925 = vadd.f32 0.0, %v3924
      %v3926 = vpop.f32.mrb[0].mxu0
      %v3927 = vpop.f32.mrb[0].mxu0
      %v3928 = vadd.f32 0.0, %v3927
      %v3929 = vpop.f32.mrb[0].mxu0
      %3930 = vmatprep.mubr.bf16.mxu0 0
      %3931 = vmatmul.mubr.bf16.gmra.mrb[0].mxu0 %v3764
      %v3932 = vpop.f32.mrb[0].mxu0
      %v3933 = vadd.f32 0.0, %v3932
      %v3934 = vpop.f32.mrb[0].mxu0
      %v3935 = vpop.f32.mrb[0].mxu0
      %v3936 = vadd.f32 0.0, %v3935
      %v3937 = vpop.f32.mrb[0].mxu0
      %3938 = vmatprep.mubr.bf16.mxu0 0
      %3939 = vmatmul.mubr.bf16.gmra.mrb[0].mxu0 %v3767
      %v3940 = vpop.f32.mrb[0].mxu0
      %v3941 = vadd.f32 0.0, %v3940
      %v3942 = vpop.f32.mrb[0].mxu0
      %v3943 = vpop.f32.mrb[0].mxu0
      %v3944 = vadd.f32 0.0, %v3943
      %v3945 = vpop.f32.mrb[0].mxu0
      %3946 = vmatprep.mubr.bf16.mxu0 0
      %3947 = vmatmul.mubr.bf16.gmra.mrb[0].mxu0 %v3770
      %v3948 = vpop.f32.mrb[0].mxu0
      %v3949 = vadd.f32 0.0, %v3948
      %v3950 = vpop.f32.mrb[0].mxu0
      %v3951 = vpop.f32.mrb[0].mxu0
      %v3952 = vadd.f32 0.0, %v3951
      %v3953 = vpop.f32.mrb[0].mxu0
      %3954 = vmatprep.mubr.bf16.mxu0 0
      %3955 = vmatmul.mubr.bf16.gmra.mrb[0].mxu0 %v3773
      %v3956 = vpop.f32.mrb[0].mxu0
      %v3957 = vadd.f32 0.0, %v3956
      %v3958 = vpop.f32.mrb[0].mxu0
      %v3959 = vpop.f32.mrb[0].mxu0
      %v3960 = vadd.f32 0.0, %v3959
      %v3961 = vpop.f32.mrb[0].mxu0
      %3962 = vmatprep.mubr.bf16.mxu0 0
      %3963 = vmatmul.mubr.bf16.gmra.mrb[0].mxu0 %v3776
      %v3964 = vpop.f32.mrb[0].mxu0
      %v3965 = vadd.f32 0.0, %v3964
      %v3966 = vpop.f32.mrb[0].mxu0
      %v3967 = vpop.f32.mrb[0].mxu0
      %v3968 = vadd.f32 0.0, %v3967
      %v3969 = vpop.f32.mrb[0].mxu0
      %3970 = vmatprep.mubr.bf16.mxu0 0
      %3971 = vmatmul.mubr.bf16.gmra.mrb[0].mxu0 %v3779
      %v3972 = vpop.f32.mrb[0].mxu0
      %v3973 = vadd.f32 0.0, %v3972
      %v3974 = vpop.f32.mrb[0].mxu0
      %v3975 = vpop.f32.mrb[0].mxu0
      %v3976 = vadd.f32 0.0, %v3975
      %v3977 = vpop.f32.mrb[0].mxu0
      %3978 = vmatprep.mubr.bf16.mxu0 0
      %3979 = vmatmul.mubr.bf16.gmra.mrb[0].mxu0 %v3782
      %v3980 = vpop.f32.mrb[0].mxu0
      %v3981 = vadd.f32 0.0, %v3980
      %v3982 = vpop.f32.mrb[0].mxu0
      %v3983 = vpop.f32.mrb[0].mxu0
      %v3984 = vadd.f32 0.0, %v3983
      %v3985 = vpop.f32.mrb[0].mxu0
      %3986 = vmatprep.mubr.bf16.mxu0 0
      %3987 = vmatmul.mubr.bf16.gmra.mrb[0].mxu0 %v3785
      %v3988 = vpop.f32.mrb[0].mxu0
      %v3989 = vadd.f32 0.0, %v3988
      %v3990 = vpop.f32.mrb[0].mxu0
      %v3991 = vpop.f32.mrb[0].mxu0
      %v3992 = vadd.f32 0.0, %v3991
      %v3993 = vpop.f32.mrb[0].mxu0
      %3994 = vmatprep.mubr.bf16.mxu0 0
      %3995 = vmatmul.mubr.bf16.gmra.mrb[0].mxu0 %v3788
      %v3996 = vpop.f32.mrb[0].mxu0
      %v3997 = vadd.f32 0.0, %v3996
      %v3998 = vpop.f32.mrb[0].mxu0
      %v3999 = vpop.f32.mrb[0].mxu0
      %v4000 = vadd.f32 0.0, %v3999
      %v4001 = vpop.f32.mrb[0].mxu0
      %4002 = vmatprep.mubr.bf16.mxu0 0
      %4003 = vmatmul.mubr.bf16.gmra.mrb[0].mxu0 %v3791
      %v4004 = vpop.f32.mrb[0].mxu0
      %v4005 = vadd.f32 0.0, %v4004
      %v4006 = vpop.f32.mrb[0].mxu0
      %v4007 = vpop.f32.mrb[0].mxu0
      %v4008 = vadd.f32 0.0, %v4007
      %v4009 = vpop.f32.mrb[0].mxu0
      %4010 = vmatprep.mubr.bf16.mxu0 0
      %4011 = vmatmul.mubr.bf16.gmra.mrb[0].mxu0 %v3794
      %v4012 = vpop.f32.mrb[0].mxu0
      %v4013 = vadd.f32 0.0, %v4012
      %v4014 = vpop.f32.mrb[0].mxu0
      %v4015 = vpop.f32.mrb[0].mxu0
      %v4016 = vadd.f32 0.0, %v4015
      %v4017 = vpop.f32.mrb[0].mxu0
      %4018 = vmatprep.mubr.bf16.mxu0 0
      %4019 = vmatmul.mubr.bf16.gmra.mrb[0].mxu0 %v3797
      %v4020 = vpop.f32.mrb[0].mxu0
      %v4021 = vadd.f32 0.0, %v4020
      %v4022 = vpop.f32.mrb[0].mxu0
      %v4023 = vpop.f32.mrb[0].mxu0
      %v4024 = vadd.f32 0.0, %v4023
      %v4025 = vpop.f32.mrb[0].mxu0
      %4026 = vdwg.mxu0
      %v4027 = vadd.f32 %v3605, %v3837
      %v4028 = vadd.f32 %v3606, %v3840
      %v4029 = vadd.f32 %v3607, %v3845
      %v4030 = vadd.f32 %v3608, %v3848
      %v4031 = vadd.f32 %v3609, %v3853
      %v4032 = vadd.f32 %v3610, %v3856
      %v4033 = vadd.f32 %v3611, %v3861
      %v4034 = vadd.f32 %v3612, %v3864
      %v4035 = vadd.f32 %v3613, %v3869
      %v4036 = vadd.f32 %v3614, %v3872
      %v4037 = vadd.f32 %v3615, %v3877
      %v4038 = vadd.f32 %v3616, %v3880
      %v4039 = vadd.f32 %v3617, %v3885
      %v4040 = vadd.f32 %v3618, %v3888
      %v4041 = vadd.f32 %v3619, %v3893
      %v4042 = vadd.f32 %v3620, %v3896
      %v4043 = vadd.f32 %v3621, %v3901
      %v4044 = vadd.f32 %v3622, %v3904
      %v4045 = vadd.f32 %v3623, %v3909
      %v4046 = vadd.f32 %v3624, %v3912
      %v4047 = vadd.f32 %v3625, %v3917
      %v4048 = vadd.f32 %v3626, %v3920
      %v4049 = vadd.f32 %v3627, %v3925
      %v4050 = vadd.f32 %v3628, %v3928
      %v4051 = vadd.f32 %v3629, %v3933
      %v4052 = vadd.f32 %v3630, %v3936
      %v4053 = vadd.f32 %v3631, %v3941
      %v4054 = vadd.f32 %v3632, %v3944
      %v4055 = vadd.f32 %v3633, %v3949
      %v4056 = vadd.f32 %v3634, %v3952
      %v4057 = vadd.f32 %v3635, %v3957
      %v4058 = vadd.f32 %v3636, %v3960
      %v4059 = vadd.f32 %v3637, %v3965
      %v4060 = vadd.f32 %v3638, %v3968
      %v4061 = vadd.f32 %v3639, %v3973
      %v4062 = vadd.f32 %v3640, %v3976
      %v4063 = vadd.f32 %v3641, %v3981
      %v4064 = vadd.f32 %v3642, %v3984
      %v4065 = vadd.f32 %v3643, %v3989
      %v4066 = vadd.f32 %v3644, %v3992
      %v4067 = vadd.f32 %v3645, %v3997
      %v4068 = vadd.f32 %v3646, %v4000
      %v4069 = vadd.f32 %v3647, %v4005
      %v4070 = vadd.f32 %v3648, %v4008
      %v4071 = vadd.f32 %v3649, %v4013
      %v4072 = vadd.f32 %v3650, %v4016
      %v4073 = vadd.f32 %v3651, %v4021
      %v4074 = vadd.f32 %v3652, %v4024
      %v4075 = vld [vmem:[#allocation2 + $0x37] sm:$0xff]
      %v4076 = vld [vmem:[#allocation2 + $0x3f] sm:$0xff]
      %v4077 = vld [vmem:[#allocation2 + $0x47] sm:$0xff]
      %v4078 = vld [vmem:[#allocation2 + $0x4f] sm:$0xff]
      %v4079 = vld [vmem:[#allocation2 + $0x57] sm:$0xff]
      %v4080 = vld [vmem:[#allocation2 + $0x5f] sm:$0xff]
      %v4081 = vld [vmem:[#allocation2 + $0x67] sm:$0xff]
      %v4082 = vld [vmem:[#allocation2 + $0x6f] sm:$0xff]
      %v4083 = vld [vmem:[#allocation2 + $0x77] sm:$0xff]
      %v4084 = vld [vmem:[#allocation2 + $0x7f] sm:$0xff]
      %v4085 = vld [vmem:[#allocation2 + $0x87] sm:$0xff]
      %v4086 = vld [vmem:[#allocation2 + $0x8f] sm:$0xff]
      %v4087 = vld [vmem:[#allocation2 + $0x97] sm:$0xff]
      %v4088 = vld [vmem:[#allocation2 + $0x9f] sm:$0xff]
      %v4089 = vld [vmem:[#allocation2 + $0xa7] sm:$0xff]
      %v4090 = vld [vmem:[#allocation2 + $0xaf] sm:$0xff]
      %v4091 = vld [vmem:[#allocation2 + $0xb7] sm:$0xff]
      %v4092 = vld [vmem:[#allocation2 + $0xbf] sm:$0xff]
      %v4093 = vld [vmem:[#allocation2 + $0xc7] sm:$0xff]
      %v4094 = vld [vmem:[#allocation2 + $0xcf] sm:$0xff]
      %v4095 = vld [vmem:[#allocation2 + $0xd7] sm:$0xff]
      %v4096 = vld [vmem:[#allocation2 + $0xdf] sm:$0xff]
      %v4097 = vld [vmem:[#allocation2 + $0xe7] sm:$0xff]
      %v4098 = vld [vmem:[#allocation2 + $0xef] sm:$0xff]
      %v4099 = vld [vmem:[#allocation2 + $0xf7] sm:$0xff]
      %v4100 = vld [vmem:[#allocation2 + $0xff] sm:$0xff]
      %v4101 = vld [vmem:[#allocation2 + $0x107] sm:$0xff]
      %v4102 = vld [vmem:[#allocation2 + $0x10f] sm:$0xff]
      %v4103 = vld [vmem:[#allocation2 + $0x117] sm:$0xff]
      %v4104 = vld [vmem:[#allocation2 + $0x11f] sm:$0xff]
      %v4105 = vld [vmem:[#allocation2 + $0x127] sm:$0xff]
      %v4106 = vld [vmem:[#allocation2 + $0x12f] sm:$0xff]
      %v4107 = vld [vmem:[#allocation2 + $0x137] sm:$0xff]
      %v4108 = vld [vmem:[#allocation2 + $0x13f] sm:$0xff]
      %v4109 = vld [vmem:[#allocation2 + $0x147] sm:$0xff]
      %v4110 = vld [vmem:[#allocation2 + $0x14f] sm:$0xff]
      %v4111 = vld [vmem:[#allocation2 + $0x157] sm:$0xff]
      %v4112 = vld [vmem:[#allocation2 + $0x15f] sm:$0xff]
      %v4113 = vld [vmem:[#allocation2 + $0x167] sm:$0xff]
      %v4114 = vld [vmem:[#allocation2 + $0x16f] sm:$0xff]
      %v4115 = vld [vmem:[#allocation2 + $0x177] sm:$0xff]
      %v4116 = vld [vmem:[#allocation2 + $0x17f] sm:$0xff]
      %v4117 = vld [vmem:[#allocation2 + $0x187] sm:$0xff]
      %v4118 = vld [vmem:[#allocation2 + $0x18f] sm:$0xff]
      %v4119 = vld [vmem:[#allocation2 + $0x197] sm:$0xff]
      %v4120 = vld [vmem:[#allocation2 + $0x19f] sm:$0xff]
      %v4121 = vld [vmem:[#allocation2 + $0x1a7] sm:$0xff]
      %v4122 = vld [vmem:[#allocation2 + $0x1af] sm:$0xff]
      %v4123 = vpack.c.bf16 %v4076, %v4075
      %v4124 = vpack.c.bf16 %v4078, %v4077
      %v4125 = vpack.c.bf16 %v4080, %v4079
      %v4126 = vpack.c.bf16 %v4082, %v4081
      %v4127 = vpack.c.bf16 %v4084, %v4083
      %v4128 = vpack.c.bf16 %v4086, %v4085
      %v4129 = vpack.c.bf16 %v4088, %v4087
      %v4130 = vpack.c.bf16 %v4090, %v4089
      %v4131 = vpack.c.bf16 %v4092, %v4091
      %v4132 = vpack.c.bf16 %v4094, %v4093
      %v4133 = vpack.c.bf16 %v4096, %v4095
      %v4134 = vpack.c.bf16 %v4098, %v4097
      %v4135 = vpack.c.bf16 %v4100, %v4099
      %v4136 = vpack.c.bf16 %v4102, %v4101
      %v4137 = vpack.c.bf16 %v4104, %v4103
      %v4138 = vpack.c.bf16 %v4106, %v4105
      %v4139 = vpack.c.bf16 %v4108, %v4107
      %v4140 = vpack.c.bf16 %v4110, %v4109
      %v4141 = vpack.c.bf16 %v4112, %v4111
      %v4142 = vpack.c.bf16 %v4114, %v4113
      %v4143 = vpack.c.bf16 %v4116, %v4115
      %v4144 = vpack.c.bf16 %v4118, %v4117
      %v4145 = vpack.c.bf16 %v4120, %v4119
      %v4146 = vpack.c.bf16 %v4122, %v4121
      %s4147 = scalar_lea.vmem %s6, 12
      %v4148 = vld [vmem:[%s4147] sm:$0x3]
      %v4150 = vsel %vm871, %v4123, 0
      %v4153 = vsel %vm871, %v4124, 0
      %v4156 = vsel %vm871, %v4125, 0
      %v4159 = vsel %vm871, %v4126, 0
      %v4162 = vsel %vm871, %v4127, 0
      %v4165 = vsel %vm871, %v4128, 0
      %v4168 = vsel %vm871, %v4129, 0
      %v4171 = vsel %vm871, %v4130, 0
      %v4174 = vsel %vm871, %v4131, 0
      %v4177 = vsel %vm871, %v4132, 0
      %v4180 = vsel %vm871, %v4133, 0
      %v4183 = vsel %vm871, %v4134, 0
      %v4186 = vsel %vm871, %v4135, 0
      %v4189 = vsel %vm871, %v4136, 0
      %v4192 = vsel %vm871, %v4137, 0
      %v4195 = vsel %vm871, %v4138, 0
      %v4198 = vsel %vm871, %v4139, 0
      %v4201 = vsel %vm871, %v4140, 0
      %v4204 = vsel %vm871, %v4141, 0
      %v4207 = vsel %vm871, %v4142, 0
      %v4210 = vsel %vm871, %v4143, 0
      %v4213 = vsel %vm871, %v4144, 0
      %v4216 = vsel %vm871, %v4145, 0
      %v4219 = vsel %vm871, %v4146, 0
      %v4222 = vsel %vm953, %v4148, 0
      %4224 = vmatprep.subr.bf16.mxu0 0
      %4225 = vmatpush1.bf16.msra.mxu0 %v4222
      %4226 = vmatprep.subr.bf16.mxu0 0
      %4227 = vmatpush1.bf16.msra.mxu0 0
      %4228 = vmatprep.subr.bf16.mxu0 0
      %4229 = vmatpush1.bf16.msra.mxu0 0
      %4230 = vmatprep.subr.bf16.mxu0 0
      %4231 = vmatpush1.bf16.msra.mxu0 0
      %4232 = vmatprep.subr.bf16.mxu0 0
      %4233 = vmatpush1.bf16.msra.mxu0 0
      %4234 = vmatprep.subr.bf16.mxu0 0
      %4235 = vmatpush1.bf16.msra.mxu0 0
      %4236 = vmatprep.subr.bf16.mxu0 0
      %4237 = vmatpush1.bf16.msra.mxu0 0
      %4238 = vmatprep.subr.bf16.mxu0 0
      %4239 = vmatpush1.bf16.msra.mxu0 0
      %4240 = vmatprep.subr.bf16.mxu0 0
      %4241 = vmatpush1.bf16.msra.mxu0 0
      %4242 = vmatprep.subr.bf16.mxu0 0
      %4243 = vmatpush1.bf16.msra.mxu0 0
      %4244 = vmatprep.subr.bf16.mxu0 0
      %4245 = vmatpush1.bf16.msra.mxu0 0
      %4246 = vmatprep.subr.bf16.mxu0 0
      %4247 = vmatpush1.bf16.msra.mxu0 0
      %4248 = vmatprep.subr.bf16.mxu0 0
      %4249 = vmatpush1.bf16.msra.mxu0 0
      %4250 = vmatprep.subr.bf16.mxu0 0
      %4251 = vmatpush1.bf16.msra.mxu0 0
      %4252 = vmatprep.subr.bf16.mxu0 0
      %4253 = vmatpush1.bf16.msra.mxu0 0
      %4254 = vmatprep.subr.bf16.mxu0 0
      %4255 = vmatpush1.bf16.msra.mxu0 0
      %4256 = vmatprep.mubr.bf16.mxu0 0
      %4257 = vmatmul.mubr.bf16.gmra.mrb[0].mxu0 %v4150
      %v4258 = vpop.f32.mrb[0].mxu0
      %v4259 = vadd.f32 0.0, %v4258
      %v4260 = vpop.f32.mrb[0].mxu0
      %v4261 = vpop.f32.mrb[0].mxu0
      %v4262 = vadd.f32 0.0, %v4261
      %v4263 = vpop.f32.mrb[0].mxu0
      %4264 = vmatprep.mubr.bf16.mxu0 0
      %4265 = vmatmul.mubr.bf16.gmra.mrb[0].mxu0 %v4153
      %v4266 = vpop.f32.mrb[0].mxu0
      %v4267 = vadd.f32 0.0, %v4266
      %v4268 = vpop.f32.mrb[0].mxu0
      %v4269 = vpop.f32.mrb[0].mxu0
      %v4270 = vadd.f32 0.0, %v4269
      %v4271 = vpop.f32.mrb[0].mxu0
      %4272 = vmatprep.mubr.bf16.mxu0 0
      %4273 = vmatmul.mubr.bf16.gmra.mrb[0].mxu0 %v4156
      %v4274 = vpop.f32.mrb[0].mxu0
      %v4275 = vadd.f32 0.0, %v4274
      %v4276 = vpop.f32.mrb[0].mxu0
      %v4277 = vpop.f32.mrb[0].mxu0
      %v4278 = vadd.f32 0.0, %v4277
      %v4279 = vpop.f32.mrb[0].mxu0
      %4280 = vmatprep.mubr.bf16.mxu0 0
      %4281 = vmatmul.mubr.bf16.gmra.mrb[0].mxu0 %v4159
      %v4282 = vpop.f32.mrb[0].mxu0
      %v4283 = vadd.f32 0.0, %v4282
      %v4284 = vpop.f32.mrb[0].mxu0
      %v4285 = vpop.f32.mrb[0].mxu0
      %v4286 = vadd.f32 0.0, %v4285
      %v4287 = vpop.f32.mrb[0].mxu0
      %4288 = vmatprep.mubr.bf16.mxu0 0
      %4289 = vmatmul.mubr.bf16.gmra.mrb[0].mxu0 %v4162
      %v4290 = vpop.f32.mrb[0].mxu0
      %v4291 = vadd.f32 0.0, %v4290
      %v4292 = vpop.f32.mrb[0].mxu0
      %v4293 = vpop.f32.mrb[0].mxu0
      %v4294 = vadd.f32 0.0, %v4293
      %v4295 = vpop.f32.mrb[0].mxu0
      %4296 = vmatprep.mubr.bf16.mxu0 0
      %4297 = vmatmul.mubr.bf16.gmra.mrb[0].mxu0 %v4165
      %v4298 = vpop.f32.mrb[0].mxu0
      %v4299 = vadd.f32 0.0, %v4298
      %v4300 = vpop.f32.mrb[0].mxu0
      %v4301 = vpop.f32.mrb[0].mxu0
      %v4302 = vadd.f32 0.0, %v4301
      %v4303 = vpop.f32.mrb[0].mxu0
      %4304 = vmatprep.mubr.bf16.mxu0 0
      %4305 = vmatmul.mubr.bf16.gmra.mrb[0].mxu0 %v4168
      %v4306 = vpop.f32.mrb[0].mxu0
      %v4307 = vadd.f32 0.0, %v4306
      %v4308 = vpop.f32.mrb[0].mxu0
      %v4309 = vpop.f32.mrb[0].mxu0
      %v4310 = vadd.f32 0.0, %v4309
      %v4311 = vpop.f32.mrb[0].mxu0
      %4312 = vmatprep.mubr.bf16.mxu0 0
      %4313 = vmatmul.mubr.bf16.gmra.mrb[0].mxu0 %v4171
      %v4314 = vpop.f32.mrb[0].mxu0
      %v4315 = vadd.f32 0.0, %v4314
      %v4316 = vpop.f32.mrb[0].mxu0
      %v4317 = vpop.f32.mrb[0].mxu0
      %v4318 = vadd.f32 0.0, %v4317
      %v4319 = vpop.f32.mrb[0].mxu0
      %4320 = vmatprep.mubr.bf16.mxu0 0
      %4321 = vmatmul.mubr.bf16.gmra.mrb[0].mxu0 %v4174
      %v4322 = vpop.f32.mrb[0].mxu0
      %v4323 = vadd.f32 0.0, %v4322
      %v4324 = vpop.f32.mrb[0].mxu0
      %v4325 = vpop.f32.mrb[0].mxu0
      %v4326 = vadd.f32 0.0, %v4325
      %v4327 = vpop.f32.mrb[0].mxu0
      %4328 = vmatprep.mubr.bf16.mxu0 0
      %4329 = vmatmul.mubr.bf16.gmra.mrb[0].mxu0 %v4177
      %v4330 = vpop.f32.mrb[0].mxu0
      %v4331 = vadd.f32 0.0, %v4330
      %v4332 = vpop.f32.mrb[0].mxu0
      %v4333 = vpop.f32.mrb[0].mxu0
      %v4334 = vadd.f32 0.0, %v4333
      %v4335 = vpop.f32.mrb[0].mxu0
      %4336 = vmatprep.mubr.bf16.mxu0 0
      %4337 = vmatmul.mubr.bf16.gmra.mrb[0].mxu0 %v4180
      %v4338 = vpop.f32.mrb[0].mxu0
      %v4339 = vadd.f32 0.0, %v4338
      %v4340 = vpop.f32.mrb[0].mxu0
      %v4341 = vpop.f32.mrb[0].mxu0
      %v4342 = vadd.f32 0.0, %v4341
      %v4343 = vpop.f32.mrb[0].mxu0
      %4344 = vmatprep.mubr.bf16.mxu0 0
      %4345 = vmatmul.mubr.bf16.gmra.mrb[0].mxu0 %v4183
      %v4346 = vpop.f32.mrb[0].mxu0
      %v4347 = vadd.f32 0.0, %v4346
      %v4348 = vpop.f32.mrb[0].mxu0
      %v4349 = vpop.f32.mrb[0].mxu0
      %v4350 = vadd.f32 0.0, %v4349
      %v4351 = vpop.f32.mrb[0].mxu0
      %4352 = vmatprep.mubr.bf16.mxu0 0
      %4353 = vmatmul.mubr.bf16.gmra.mrb[0].mxu0 %v4186
      %v4354 = vpop.f32.mrb[0].mxu0
      %v4355 = vadd.f32 0.0, %v4354
      %v4356 = vpop.f32.mrb[0].mxu0
      %v4357 = vpop.f32.mrb[0].mxu0
      %v4358 = vadd.f32 0.0, %v4357
      %v4359 = vpop.f32.mrb[0].mxu0
      %4360 = vmatprep.mubr.bf16.mxu0 0
      %4361 = vmatmul.mubr.bf16.gmra.mrb[0].mxu0 %v4189
      %v4362 = vpop.f32.mrb[0].mxu0
      %v4363 = vadd.f32 0.0, %v4362
      %v4364 = vpop.f32.mrb[0].mxu0
      %v4365 = vpop.f32.mrb[0].mxu0
      %v4366 = vadd.f32 0.0, %v4365
      %v4367 = vpop.f32.mrb[0].mxu0
      %4368 = vmatprep.mubr.bf16.mxu0 0
      %4369 = vmatmul.mubr.bf16.gmra.mrb[0].mxu0 %v4192
      %v4370 = vpop.f32.mrb[0].mxu0
      %v4371 = vadd.f32 0.0, %v4370
      %v4372 = vpop.f32.mrb[0].mxu0
      %v4373 = vpop.f32.mrb[0].mxu0
      %v4374 = vadd.f32 0.0, %v4373
      %v4375 = vpop.f32.mrb[0].mxu0
      %4376 = vmatprep.mubr.bf16.mxu0 0
      %4377 = vmatmul.mubr.bf16.gmra.mrb[0].mxu0 %v4195
      %v4378 = vpop.f32.mrb[0].mxu0
      %v4379 = vadd.f32 0.0, %v4378
      %v4380 = vpop.f32.mrb[0].mxu0
      %v4381 = vpop.f32.mrb[0].mxu0
      %v4382 = vadd.f32 0.0, %v4381
      %v4383 = vpop.f32.mrb[0].mxu0
      %4384 = vmatprep.mubr.bf16.mxu0 0
      %4385 = vmatmul.mubr.bf16.gmra.mrb[0].mxu0 %v4198
      %v4386 = vpop.f32.mrb[0].mxu0
      %v4387 = vadd.f32 0.0, %v4386
      %v4388 = vpop.f32.mrb[0].mxu0
      %v4389 = vpop.f32.mrb[0].mxu0
      %v4390 = vadd.f32 0.0, %v4389
      %v4391 = vpop.f32.mrb[0].mxu0
      %4392 = vmatprep.mubr.bf16.mxu0 0
      %4393 = vmatmul.mubr.bf16.gmra.mrb[0].mxu0 %v4201
      %v4394 = vpop.f32.mrb[0].mxu0
      %v4395 = vadd.f32 0.0, %v4394
      %v4396 = vpop.f32.mrb[0].mxu0
      %v4397 = vpop.f32.mrb[0].mxu0
      %v4398 = vadd.f32 0.0, %v4397
      %v4399 = vpop.f32.mrb[0].mxu0
      %4400 = vmatprep.mubr.bf16.mxu0 0
      %4401 = vmatmul.mubr.bf16.gmra.mrb[0].mxu0 %v4204
      %v4402 = vpop.f32.mrb[0].mxu0
      %v4403 = vadd.f32 0.0, %v4402
      %v4404 = vpop.f32.mrb[0].mxu0
      %v4405 = vpop.f32.mrb[0].mxu0
      %v4406 = vadd.f32 0.0, %v4405
      %v4407 = vpop.f32.mrb[0].mxu0
      %4408 = vmatprep.mubr.bf16.mxu0 0
      %4409 = vmatmul.mubr.bf16.gmra.mrb[0].mxu0 %v4207
      %v4410 = vpop.f32.mrb[0].mxu0
      %v4411 = vadd.f32 0.0, %v4410
      %v4412 = vpop.f32.mrb[0].mxu0
      %v4413 = vpop.f32.mrb[0].mxu0
      %v4414 = vadd.f32 0.0, %v4413
      %v4415 = vpop.f32.mrb[0].mxu0
      %4416 = vmatprep.mubr.bf16.mxu0 0
      %4417 = vmatmul.mubr.bf16.gmra.mrb[0].mxu0 %v4210
      %v4418 = vpop.f32.mrb[0].mxu0
      %v4419 = vadd.f32 0.0, %v4418
      %v4420 = vpop.f32.mrb[0].mxu0
      %v4421 = vpop.f32.mrb[0].mxu0
      %v4422 = vadd.f32 0.0, %v4421
      %v4423 = vpop.f32.mrb[0].mxu0
      %4424 = vmatprep.mubr.bf16.mxu0 0
      %4425 = vmatmul.mubr.bf16.gmra.mrb[0].mxu0 %v4213
      %v4426 = vpop.f32.mrb[0].mxu0
      %v4427 = vadd.f32 0.0, %v4426
      %v4428 = vpop.f32.mrb[0].mxu0
      %v4429 = vpop.f32.mrb[0].mxu0
      %v4430 = vadd.f32 0.0, %v4429
      %v4431 = vpop.f32.mrb[0].mxu0
      %4432 = vmatprep.mubr.bf16.mxu0 0
      %4433 = vmatmul.mubr.bf16.gmra.mrb[0].mxu0 %v4216
      %v4434 = vpop.f32.mrb[0].mxu0
      %v4435 = vadd.f32 0.0, %v4434
      %v4436 = vpop.f32.mrb[0].mxu0
      %v4437 = vpop.f32.mrb[0].mxu0
      %v4438 = vadd.f32 0.0, %v4437
      %v4439 = vpop.f32.mrb[0].mxu0
      %4440 = vmatprep.mubr.bf16.mxu0 0
      %4441 = vmatmul.mubr.bf16.gmra.mrb[0].mxu0 %v4219
      %v4442 = vpop.f32.mrb[0].mxu0
      %v4443 = vadd.f32 0.0, %v4442
      %v4444 = vpop.f32.mrb[0].mxu0
      %v4445 = vpop.f32.mrb[0].mxu0
      %v4446 = vadd.f32 0.0, %v4445
      %v4447 = vpop.f32.mrb[0].mxu0
      %4448 = vdwg.mxu0
      %v4449 = vadd.f32 %v4027, %v4259
      %v4450 = vadd.f32 %v4028, %v4262
      %v4451 = vadd.f32 %v4029, %v4267
      %v4452 = vadd.f32 %v4030, %v4270
      %v4453 = vadd.f32 %v4031, %v4275
      %v4454 = vadd.f32 %v4032, %v4278
      %v4455 = vadd.f32 %v4033, %v4283
      %v4456 = vadd.f32 %v4034, %v4286
      %v4457 = vadd.f32 %v4035, %v4291
      %v4458 = vadd.f32 %v4036, %v4294
      %v4459 = vadd.f32 %v4037, %v4299
      %v4460 = vadd.f32 %v4038, %v4302
      %v4461 = vadd.f32 %v4039, %v4307
      %v4462 = vadd.f32 %v4040, %v4310
      %v4463 = vadd.f32 %v4041, %v4315
      %v4464 = vadd.f32 %v4042, %v4318
      %v4465 = vadd.f32 %v4043, %v4323
      %v4466 = vadd.f32 %v4044, %v4326
      %v4467 = vadd.f32 %v4045, %v4331
      %v4468 = vadd.f32 %v4046, %v4334
      %v4469 = vadd.f32 %v4047, %v4339
      %v4470 = vadd.f32 %v4048, %v4342
      %v4471 = vadd.f32 %v4049, %v4347
      %v4472 = vadd.f32 %v4050, %v4350
      %v4473 = vadd.f32 %v4051, %v4355
      %v4474 = vadd.f32 %v4052, %v4358
      %v4475 = vadd.f32 %v4053, %v4363
      %v4476 = vadd.f32 %v4054, %v4366
      %v4477 = vadd.f32 %v4055, %v4371
      %v4478 = vadd.f32 %v4056, %v4374
      %v4479 = vadd.f32 %v4057, %v4379
      %v4480 = vadd.f32 %v4058, %v4382
      %v4481 = vadd.f32 %v4059, %v4387
      %v4482 = vadd.f32 %v4060, %v4390
      %v4483 = vadd.f32 %v4061, %v4395
      %v4484 = vadd.f32 %v4062, %v4398
      %v4485 = vadd.f32 %v4063, %v4403
      %v4486 = vadd.f32 %v4064, %v4406
      %v4487 = vadd.f32 %v4065, %v4411
      %v4488 = vadd.f32 %v4066, %v4414
      %v4489 = vadd.f32 %v4067, %v4419
      %v4490 = vadd.f32 %v4068, %v4422
      %v4491 = vadd.f32 %v4069, %v4427
      %v4492 = vadd.f32 %v4070, %v4430
      %v4493 = vadd.f32 %v4071, %v4435
      %v4494 = vadd.f32 %v4072, %v4438
      %v4495 = vadd.f32 %v4073, %v4443
      %v4496 = vadd.f32 %v4074, %v4446
      %v4497 = vld [vmem:[#allocation2 + $0x38] sm:$0xff]
      %v4498 = vld [vmem:[#allocation2 + $0x40] sm:$0xff]
      %v4499 = vld [vmem:[#allocation2 + $0x48] sm:$0xff]
      %v4500 = vld [vmem:[#allocation2 + $0x50] sm:$0xff]
      %v4501 = vld [vmem:[#allocation2 + $0x58] sm:$0xff]
      %v4502 = vld [vmem:[#allocation2 + $0x60] sm:$0xff]
      %v4503 = vld [vmem:[#allocation2 + $0x68] sm:$0xff]
      %v4504 = vld [vmem:[#allocation2 + $0x70] sm:$0xff]
      %v4505 = vld [vmem:[#allocation2 + $0x78] sm:$0xff]
      %v4506 = vld [vmem:[#allocation2 + $0x80] sm:$0xff]
      %v4507 = vld [vmem:[#allocation2 + $0x88] sm:$0xff]
      %v4508 = vld [vmem:[#allocation2 + $0x90] sm:$0xff]
      %v4509 = vld [vmem:[#allocation2 + $0x98] sm:$0xff]
      %v4510 = vld [vmem:[#allocation2 + $0xa0] sm:$0xff]
      %v4511 = vld [vmem:[#allocation2 + $0xa8] sm:$0xff]
      %v4512 = vld [vmem:[#allocation2 + $0xb0] sm:$0xff]
      %v4513 = vld [vmem:[#allocation2 + $0xb8] sm:$0xff]
      %v4514 = vld [vmem:[#allocation2 + $0xc0] sm:$0xff]
      %v4515 = vld [vmem:[#allocation2 + $0xc8] sm:$0xff]
      %v4516 = vld [vmem:[#allocation2 + $0xd0] sm:$0xff]
      %v4517 = vld [vmem:[#allocation2 + $0xd8] sm:$0xff]
      %v4518 = vld [vmem:[#allocation2 + $0xe0] sm:$0xff]
      %v4519 = vld [vmem:[#allocation2 + $0xe8] sm:$0xff]
      %v4520 = vld [vmem:[#allocation2 + $0xf0] sm:$0xff]
      %v4521 = vld [vmem:[#allocation2 + $0xf8] sm:$0xff]
      %v4522 = vld [vmem:[#allocation2 + $0x100] sm:$0xff]
      %v4523 = vld [vmem:[#allocation2 + $0x108] sm:$0xff]
      %v4524 = vld [vmem:[#allocation2 + $0x110] sm:$0xff]
      %v4525 = vld [vmem:[#allocation2 + $0x118] sm:$0xff]
      %v4526 = vld [vmem:[#allocation2 + $0x120] sm:$0xff]
      %v4527 = vld [vmem:[#allocation2 + $0x128] sm:$0xff]
      %v4528 = vld [vmem:[#allocation2 + $0x130] sm:$0xff]
      %v4529 = vld [vmem:[#allocation2 + $0x138] sm:$0xff]
      %v4530 = vld [vmem:[#allocation2 + $0x140] sm:$0xff]
      %v4531 = vld [vmem:[#allocation2 + $0x148] sm:$0xff]
      %v4532 = vld [vmem:[#allocation2 + $0x150] sm:$0xff]
      %v4533 = vld [vmem:[#allocation2 + $0x158] sm:$0xff]
      %v4534 = vld [vmem:[#allocation2 + $0x160] sm:$0xff]
      %v4535 = vld [vmem:[#allocation2 + $0x168] sm:$0xff]
      %v4536 = vld [vmem:[#allocation2 + $0x170] sm:$0xff]
      %v4537 = vld [vmem:[#allocation2 + $0x178] sm:$0xff]
      %v4538 = vld [vmem:[#allocation2 + $0x180] sm:$0xff]
      %v4539 = vld [vmem:[#allocation2 + $0x188] sm:$0xff]
      %v4540 = vld [vmem:[#allocation2 + $0x190] sm:$0xff]
      %v4541 = vld [vmem:[#allocation2 + $0x198] sm:$0xff]
      %v4542 = vld [vmem:[#allocation2 + $0x1a0] sm:$0xff]
      %v4543 = vld [vmem:[#allocation2 + $0x1a8] sm:$0xff]
      %v4544 = vld [vmem:[#allocation2 + $0x1b0] sm:$0xff]
      %v4545 = vpack.c.bf16 %v4498, %v4497
      %v4546 = vpack.c.bf16 %v4500, %v4499
      %v4547 = vpack.c.bf16 %v4502, %v4501
      %v4548 = vpack.c.bf16 %v4504, %v4503
      %v4549 = vpack.c.bf16 %v4506, %v4505
      %v4550 = vpack.c.bf16 %v4508, %v4507
      %v4551 = vpack.c.bf16 %v4510, %v4509
      %v4552 = vpack.c.bf16 %v4512, %v4511
      %v4553 = vpack.c.bf16 %v4514, %v4513
      %v4554 = vpack.c.bf16 %v4516, %v4515
      %v4555 = vpack.c.bf16 %v4518, %v4517
      %v4556 = vpack.c.bf16 %v4520, %v4519
      %v4557 = vpack.c.bf16 %v4522, %v4521
      %v4558 = vpack.c.bf16 %v4524, %v4523
      %v4559 = vpack.c.bf16 %v4526, %v4525
      %v4560 = vpack.c.bf16 %v4528, %v4527
      %v4561 = vpack.c.bf16 %v4530, %v4529
      %v4562 = vpack.c.bf16 %v4532, %v4531
      %v4563 = vpack.c.bf16 %v4534, %v4533
      %v4564 = vpack.c.bf16 %v4536, %v4535
      %v4565 = vpack.c.bf16 %v4538, %v4537
      %v4566 = vpack.c.bf16 %v4540, %v4539
      %v4567 = vpack.c.bf16 %v4542, %v4541
      %v4568 = vpack.c.bf16 %v4544, %v4543
      %s4569 = scalar_lea.vmem %s6, 14
      %v4570 = vld [vmem:[%s4569] sm:$0x3]
      %v4572 = vsel %vm871, %v4545, 0
      %v4575 = vsel %vm871, %v4546, 0
      %v4578 = vsel %vm871, %v4547, 0
      %v4581 = vsel %vm871, %v4548, 0
      %v4584 = vsel %vm871, %v4549, 0
      %v4587 = vsel %vm871, %v4550, 0
      %v4590 = vsel %vm871, %v4551, 0
      %v4593 = vsel %vm871, %v4552, 0
      %v4596 = vsel %vm871, %v4553, 0
      %v4599 = vsel %vm871, %v4554, 0
      %v4602 = vsel %vm871, %v4555, 0
      %v4605 = vsel %vm871, %v4556, 0
      %v4608 = vsel %vm871, %v4557, 0
      %v4611 = vsel %vm871, %v4558, 0
      %v4614 = vsel %vm871, %v4559, 0
      %v4617 = vsel %vm871, %v4560, 0
      %v4620 = vsel %vm871, %v4561, 0
      %v4623 = vsel %vm871, %v4562, 0
      %v4626 = vsel %vm871, %v4563, 0
      %v4629 = vsel %vm871, %v4564, 0
      %v4632 = vsel %vm871, %v4565, 0
      %v4635 = vsel %vm871, %v4566, 0
      %v4638 = vsel %vm871, %v4567, 0
      %v4641 = vsel %vm871, %v4568, 0
      %v4644 = vsel %vm953, %v4570, 0
      %4646 = vmatprep.subr.bf16.mxu0 0
      %4647 = vmatpush1.bf16.msra.mxu0 %v4644
      %4648 = vmatprep.subr.bf16.mxu0 0
      %4649 = vmatpush1.bf16.msra.mxu0 0
      %4650 = vmatprep.subr.bf16.mxu0 0
      %4651 = vmatpush1.bf16.msra.mxu0 0
      %4652 = vmatprep.subr.bf16.mxu0 0
      %4653 = vmatpush1.bf16.msra.mxu0 0
      %4654 = vmatprep.subr.bf16.mxu0 0
      %4655 = vmatpush1.bf16.msra.mxu0 0
      %4656 = vmatprep.subr.bf16.mxu0 0
      %4657 = vmatpush1.bf16.msra.mxu0 0
      %4658 = vmatprep.subr.bf16.mxu0 0
      %4659 = vmatpush1.bf16.msra.mxu0 0
      %4660 = vmatprep.subr.bf16.mxu0 0
      %4661 = vmatpush1.bf16.msra.mxu0 0
      %4662 = vmatprep.subr.bf16.mxu0 0
      %4663 = vmatpush1.bf16.msra.mxu0 0
      %4664 = vmatprep.subr.bf16.mxu0 0
      %4665 = vmatpush1.bf16.msra.mxu0 0
      %4666 = vmatprep.subr.bf16.mxu0 0
      %4667 = vmatpush1.bf16.msra.mxu0 0
      %4668 = vmatprep.subr.bf16.mxu0 0
      %4669 = vmatpush1.bf16.msra.mxu0 0
      %4670 = vmatprep.subr.bf16.mxu0 0
      %4671 = vmatpush1.bf16.msra.mxu0 0
      %4672 = vmatprep.subr.bf16.mxu0 0
      %4673 = vmatpush1.bf16.msra.mxu0 0
      %4674 = vmatprep.subr.bf16.mxu0 0
      %4675 = vmatpush1.bf16.msra.mxu0 0
      %4676 = vmatprep.subr.bf16.mxu0 0
      %4677 = vmatpush1.bf16.msra.mxu0 0
      %4678 = vmatprep.mubr.bf16.mxu0 0
      %4679 = vmatmul.mubr.bf16.gmra.mrb[0].mxu0 %v4572
      %v4680 = vpop.f32.mrb[0].mxu0
      %v4681 = vadd.f32 0.0, %v4680
      %v4682 = vpop.f32.mrb[0].mxu0
      %v4683 = vpop.f32.mrb[0].mxu0
      %v4684 = vadd.f32 0.0, %v4683
      %v4685 = vpop.f32.mrb[0].mxu0
      %4686 = vmatprep.mubr.bf16.mxu0 0
      %4687 = vmatmul.mubr.bf16.gmra.mrb[0].mxu0 %v4575
      %v4688 = vpop.f32.mrb[0].mxu0
      %v4689 = vadd.f32 0.0, %v4688
      %v4690 = vpop.f32.mrb[0].mxu0
      %v4691 = vpop.f32.mrb[0].mxu0
      %v4692 = vadd.f32 0.0, %v4691
      %v4693 = vpop.f32.mrb[0].mxu0
      %4694 = vmatprep.mubr.bf16.mxu0 0
      %4695 = vmatmul.mubr.bf16.gmra.mrb[0].mxu0 %v4578
      %v4696 = vpop.f32.mrb[0].mxu0
      %v4697 = vadd.f32 0.0, %v4696
      %v4698 = vpop.f32.mrb[0].mxu0
      %v4699 = vpop.f32.mrb[0].mxu0
      %v4700 = vadd.f32 0.0, %v4699
      %v4701 = vpop.f32.mrb[0].mxu0
      %4702 = vmatprep.mubr.bf16.mxu0 0
      %4703 = vmatmul.mubr.bf16.gmra.mrb[0].mxu0 %v4581
      %v4704 = vpop.f32.mrb[0].mxu0
      %v4705 = vadd.f32 0.0, %v4704
      %v4706 = vpop.f32.mrb[0].mxu0
      %v4707 = vpop.f32.mrb[0].mxu0
      %v4708 = vadd.f32 0.0, %v4707
      %v4709 = vpop.f32.mrb[0].mxu0
      %4710 = vmatprep.mubr.bf16.mxu0 0
      %4711 = vmatmul.mubr.bf16.gmra.mrb[0].mxu0 %v4584
      %v4712 = vpop.f32.mrb[0].mxu0
      %v4713 = vadd.f32 0.0, %v4712
      %v4714 = vpop.f32.mrb[0].mxu0
      %v4715 = vpop.f32.mrb[0].mxu0
      %v4716 = vadd.f32 0.0, %v4715
      %v4717 = vpop.f32.mrb[0].mxu0
      %4718 = vmatprep.mubr.bf16.mxu0 0
      %4719 = vmatmul.mubr.bf16.gmra.mrb[0].mxu0 %v4587
      %v4720 = vpop.f32.mrb[0].mxu0
      %v4721 = vadd.f32 0.0, %v4720
      %v4722 = vpop.f32.mrb[0].mxu0
      %v4723 = vpop.f32.mrb[0].mxu0
      %v4724 = vadd.f32 0.0, %v4723
      %v4725 = vpop.f32.mrb[0].mxu0
      %4726 = vmatprep.mubr.bf16.mxu0 0
      %4727 = vmatmul.mubr.bf16.gmra.mrb[0].mxu0 %v4590
      %v4728 = vpop.f32.mrb[0].mxu0
      %v4729 = vadd.f32 0.0, %v4728
      %v4730 = vpop.f32.mrb[0].mxu0
      %v4731 = vpop.f32.mrb[0].mxu0
      %v4732 = vadd.f32 0.0, %v4731
      %v4733 = vpop.f32.mrb[0].mxu0
      %4734 = vmatprep.mubr.bf16.mxu0 0
      %4735 = vmatmul.mubr.bf16.gmra.mrb[0].mxu0 %v4593
      %v4736 = vpop.f32.mrb[0].mxu0
      %v4737 = vadd.f32 0.0, %v4736
      %v4738 = vpop.f32.mrb[0].mxu0
      %v4739 = vpop.f32.mrb[0].mxu0
      %v4740 = vadd.f32 0.0, %v4739
      %v4741 = vpop.f32.mrb[0].mxu0
      %4742 = vmatprep.mubr.bf16.mxu0 0
      %4743 = vmatmul.mubr.bf16.gmra.mrb[0].mxu0 %v4596
      %v4744 = vpop.f32.mrb[0].mxu0
      %v4745 = vadd.f32 0.0, %v4744
      %v4746 = vpop.f32.mrb[0].mxu0
      %v4747 = vpop.f32.mrb[0].mxu0
      %v4748 = vadd.f32 0.0, %v4747
      %v4749 = vpop.f32.mrb[0].mxu0
      %4750 = vmatprep.mubr.bf16.mxu0 0
      %4751 = vmatmul.mubr.bf16.gmra.mrb[0].mxu0 %v4599
      %v4752 = vpop.f32.mrb[0].mxu0
      %v4753 = vadd.f32 0.0, %v4752
      %v4754 = vpop.f32.mrb[0].mxu0
      %v4755 = vpop.f32.mrb[0].mxu0
      %v4756 = vadd.f32 0.0, %v4755
      %v4757 = vpop.f32.mrb[0].mxu0
      %4758 = vmatprep.mubr.bf16.mxu0 0
      %4759 = vmatmul.mubr.bf16.gmra.mrb[0].mxu0 %v4602
      %v4760 = vpop.f32.mrb[0].mxu0
      %v4761 = vadd.f32 0.0, %v4760
      %v4762 = vpop.f32.mrb[0].mxu0
      %v4763 = vpop.f32.mrb[0].mxu0
      %v4764 = vadd.f32 0.0, %v4763
      %v4765 = vpop.f32.mrb[0].mxu0
      %4766 = vmatprep.mubr.bf16.mxu0 0
      %4767 = vmatmul.mubr.bf16.gmra.mrb[0].mxu0 %v4605
      %v4768 = vpop.f32.mrb[0].mxu0
      %v4769 = vadd.f32 0.0, %v4768
      %v4770 = vpop.f32.mrb[0].mxu0
      %v4771 = vpop.f32.mrb[0].mxu0
      %v4772 = vadd.f32 0.0, %v4771
      %v4773 = vpop.f32.mrb[0].mxu0
      %4774 = vmatprep.mubr.bf16.mxu0 0
      %4775 = vmatmul.mubr.bf16.gmra.mrb[0].mxu0 %v4608
      %v4776 = vpop.f32.mrb[0].mxu0
      %v4777 = vadd.f32 0.0, %v4776
      %v4778 = vpop.f32.mrb[0].mxu0
      %v4779 = vpop.f32.mrb[0].mxu0
      %v4780 = vadd.f32 0.0, %v4779
      %v4781 = vpop.f32.mrb[0].mxu0
      %4782 = vmatprep.mubr.bf16.mxu0 0
      %4783 = vmatmul.mubr.bf16.gmra.mrb[0].mxu0 %v4611
      %v4784 = vpop.f32.mrb[0].mxu0
      %v4785 = vadd.f32 0.0, %v4784
      %v4786 = vpop.f32.mrb[0].mxu0
      %v4787 = vpop.f32.mrb[0].mxu0
      %v4788 = vadd.f32 0.0, %v4787
      %v4789 = vpop.f32.mrb[0].mxu0
      %4790 = vmatprep.mubr.bf16.mxu0 0
      %4791 = vmatmul.mubr.bf16.gmra.mrb[0].mxu0 %v4614
      %v4792 = vpop.f32.mrb[0].mxu0
      %v4793 = vadd.f32 0.0, %v4792
      %v4794 = vpop.f32.mrb[0].mxu0
      %v4795 = vpop.f32.mrb[0].mxu0
      %v4796 = vadd.f32 0.0, %v4795
      %v4797 = vpop.f32.mrb[0].mxu0
      %4798 = vmatprep.mubr.bf16.mxu0 0
      %4799 = vmatmul.mubr.bf16.gmra.mrb[0].mxu0 %v4617
      %v4800 = vpop.f32.mrb[0].mxu0
      %v4801 = vadd.f32 0.0, %v4800
      %v4802 = vpop.f32.mrb[0].mxu0
      %v4803 = vpop.f32.mrb[0].mxu0
      %v4804 = vadd.f32 0.0, %v4803
      %v4805 = vpop.f32.mrb[0].mxu0
      %4806 = vmatprep.mubr.bf16.mxu0 0
      %4807 = vmatmul.mubr.bf16.gmra.mrb[0].mxu0 %v4620
      %v4808 = vpop.f32.mrb[0].mxu0
      %v4809 = vadd.f32 0.0, %v4808
      %v4810 = vpop.f32.mrb[0].mxu0
      %v4811 = vpop.f32.mrb[0].mxu0
      %v4812 = vadd.f32 0.0, %v4811
      %v4813 = vpop.f32.mrb[0].mxu0
      %4814 = vmatprep.mubr.bf16.mxu0 0
      %4815 = vmatmul.mubr.bf16.gmra.mrb[0].mxu0 %v4623
      %v4816 = vpop.f32.mrb[0].mxu0
      %v4817 = vadd.f32 0.0, %v4816
      %v4818 = vpop.f32.mrb[0].mxu0
      %v4819 = vpop.f32.mrb[0].mxu0
      %v4820 = vadd.f32 0.0, %v4819
      %v4821 = vpop.f32.mrb[0].mxu0
      %4822 = vmatprep.mubr.bf16.mxu0 0
      %4823 = vmatmul.mubr.bf16.gmra.mrb[0].mxu0 %v4626
      %v4824 = vpop.f32.mrb[0].mxu0
      %v4825 = vadd.f32 0.0, %v4824
      %v4826 = vpop.f32.mrb[0].mxu0
      %v4827 = vpop.f32.mrb[0].mxu0
      %v4828 = vadd.f32 0.0, %v4827
      %v4829 = vpop.f32.mrb[0].mxu0
      %4830 = vmatprep.mubr.bf16.mxu0 0
      %4831 = vmatmul.mubr.bf16.gmra.mrb[0].mxu0 %v4629
      %v4832 = vpop.f32.mrb[0].mxu0
      %v4833 = vadd.f32 0.0, %v4832
      %v4834 = vpop.f32.mrb[0].mxu0
      %v4835 = vpop.f32.mrb[0].mxu0
      %v4836 = vadd.f32 0.0, %v4835
      %v4837 = vpop.f32.mrb[0].mxu0
      %4838 = vmatprep.mubr.bf16.mxu0 0
      %4839 = vmatmul.mubr.bf16.gmra.mrb[0].mxu0 %v4632
      %v4840 = vpop.f32.mrb[0].mxu0
      %v4841 = vadd.f32 0.0, %v4840
      %v4842 = vpop.f32.mrb[0].mxu0
      %v4843 = vpop.f32.mrb[0].mxu0
      %v4844 = vadd.f32 0.0, %v4843
      %v4845 = vpop.f32.mrb[0].mxu0
      %4846 = vmatprep.mubr.bf16.mxu0 0
      %4847 = vmatmul.mubr.bf16.gmra.mrb[0].mxu0 %v4635
      %v4848 = vpop.f32.mrb[0].mxu0
      %v4849 = vadd.f32 0.0, %v4848
      %v4850 = vpop.f32.mrb[0].mxu0
      %v4851 = vpop.f32.mrb[0].mxu0
      %v4852 = vadd.f32 0.0, %v4851
      %v4853 = vpop.f32.mrb[0].mxu0
      %4854 = vmatprep.mubr.bf16.mxu0 0
      %4855 = vmatmul.mubr.bf16.gmra.mrb[0].mxu0 %v4638
      %v4856 = vpop.f32.mrb[0].mxu0
      %v4857 = vadd.f32 0.0, %v4856
      %v4858 = vpop.f32.mrb[0].mxu0
      %v4859 = vpop.f32.mrb[0].mxu0
      %v4860 = vadd.f32 0.0, %v4859
      %v4861 = vpop.f32.mrb[0].mxu0
      %4862 = vmatprep.mubr.bf16.mxu0 0
      %4863 = vmatmul.mubr.bf16.gmra.mrb[0].mxu0 %v4641
      %v4864 = vpop.f32.mrb[0].mxu0
      %v4865 = vadd.f32 0.0, %v4864
      %v4866 = vpop.f32.mrb[0].mxu0
      %v4867 = vpop.f32.mrb[0].mxu0
      %v4868 = vadd.f32 0.0, %v4867
      %v4869 = vpop.f32.mrb[0].mxu0
      %4870 = vdwg.mxu0
      %v4871 = vadd.f32 %v4449, %v4681
      %v4872 = vadd.f32 %v4450, %v4684
      %v4873 = vadd.f32 %v4451, %v4689
      %v4874 = vadd.f32 %v4452, %v4692
      %v4875 = vadd.f32 %v4453, %v4697
      %v4876 = vadd.f32 %v4454, %v4700
      %v4877 = vadd.f32 %v4455, %v4705
      %v4878 = vadd.f32 %v4456, %v4708
      %v4879 = vadd.f32 %v4457, %v4713
      %v4880 = vadd.f32 %v4458, %v4716
      %v4881 = vadd.f32 %v4459, %v4721
      %v4882 = vadd.f32 %v4460, %v4724
      %v4883 = vadd.f32 %v4461, %v4729
      %v4884 = vadd.f32 %v4462, %v4732
      %v4885 = vadd.f32 %v4463, %v4737
      %v4886 = vadd.f32 %v4464, %v4740
      %v4887 = vadd.f32 %v4465, %v4745
      %v4888 = vadd.f32 %v4466, %v4748
      %v4889 = vadd.f32 %v4467, %v4753
      %v4890 = vadd.f32 %v4468, %v4756
      %v4891 = vadd.f32 %v4469, %v4761
      %v4892 = vadd.f32 %v4470, %v4764
      %v4893 = vadd.f32 %v4471, %v4769
      %v4894 = vadd.f32 %v4472, %v4772
      %v4895 = vadd.f32 %v4473, %v4777
      %v4896 = vadd.f32 %v4474, %v4780
      %v4897 = vadd.f32 %v4475, %v4785
      %v4898 = vadd.f32 %v4476, %v4788
      %v4899 = vadd.f32 %v4477, %v4793
      %v4900 = vadd.f32 %v4478, %v4796
      %v4901 = vadd.f32 %v4479, %v4801
      %v4902 = vadd.f32 %v4480, %v4804
      %v4903 = vadd.f32 %v4481, %v4809
      %v4904 = vadd.f32 %v4482, %v4812
      %v4905 = vadd.f32 %v4483, %v4817
      %v4906 = vadd.f32 %v4484, %v4820
      %v4907 = vadd.f32 %v4485, %v4825
      %v4908 = vadd.f32 %v4486, %v4828
      %v4909 = vadd.f32 %v4487, %v4833
      %v4910 = vadd.f32 %v4488, %v4836
      %v4911 = vadd.f32 %v4489, %v4841
      %v4912 = vadd.f32 %v4490, %v4844
      %v4913 = vadd.f32 %v4491, %v4849
      %v4914 = vadd.f32 %v4492, %v4852
      %v4915 = vadd.f32 %v4493, %v4857
      %v4916 = vadd.f32 %v4494, %v4860
      %v4917 = vadd.f32 %v4495, %v4865
      %v4918 = vadd.f32 %v4496, %v4868
      %v4919 = vld [vmem:[#allocation2 + $0x39] sm:$0xff]
      %v4920 = vld [vmem:[#allocation2 + $0x41] sm:$0xff]
      %v4921 = vld [vmem:[#allocation2 + $0x49] sm:$0xff]
      %v4922 = vld [vmem:[#allocation2 + $0x51] sm:$0xff]
      %v4923 = vld [vmem:[#allocation2 + $0x59] sm:$0xff]
      %v4924 = vld [vmem:[#allocation2 + $0x61] sm:$0xff]
      %v4925 = vld [vmem:[#allocation2 + $0x69] sm:$0xff]
      %v4926 = vld [vmem:[#allocation2 + $0x71] sm:$0xff]
      %v4927 = vld [vmem:[#allocation2 + $0x79] sm:$0xff]
      %v4928 = vld [vmem:[#allocation2 + $0x81] sm:$0xff]
      %v4929 = vld [vmem:[#allocation2 + $0x89] sm:$0xff]
      %v4930 = vld [vmem:[#allocation2 + $0x91] sm:$0xff]
      %v4931 = vld [vmem:[#allocation2 + $0x99] sm:$0xff]
      %v4932 = vld [vmem:[#allocation2 + $0xa1] sm:$0xff]
      %v4933 = vld [vmem:[#allocation2 + $0xa9] sm:$0xff]
      %v4934 = vld [vmem:[#allocation2 + $0xb1] sm:$0xff]
      %v4935 = vld [vmem:[#allocation2 + $0xb9] sm:$0xff]
      %v4936 = vld [vmem:[#allocation2 + $0xc1] sm:$0xff]
      %v4937 = vld [vmem:[#allocation2 + $0xc9] sm:$0xff]
      %v4938 = vld [vmem:[#allocation2 + $0xd1] sm:$0xff]
      %v4939 = vld [vmem:[#allocation2 + $0xd9] sm:$0xff]
      %v4940 = vld [vmem:[#allocation2 + $0xe1] sm:$0xff]
      %v4941 = vld [vmem:[#allocation2 + $0xe9] sm:$0xff]
      %v4942 = vld [vmem:[#allocation2 + $0xf1] sm:$0xff]
      %v4943 = vld [vmem:[#allocation2 + $0xf9] sm:$0xff]
      %v4944 = vld [vmem:[#allocation2 + $0x101] sm:$0xff]
      %v4945 = vld [vmem:[#allocation2 + $0x109] sm:$0xff]
      %v4946 = vld [vmem:[#allocation2 + $0x111] sm:$0xff]
      %v4947 = vld [vmem:[#allocation2 + $0x119] sm:$0xff]
      %v4948 = vld [vmem:[#allocation2 + $0x121] sm:$0xff]
      %v4949 = vld [vmem:[#allocation2 + $0x129] sm:$0xff]
      %v4950 = vld [vmem:[#allocation2 + $0x131] sm:$0xff]
      %v4951 = vld [vmem:[#allocation2 + $0x139] sm:$0xff]
      %v4952 = vld [vmem:[#allocation2 + $0x141] sm:$0xff]
      %v4953 = vld [vmem:[#allocation2 + $0x149] sm:$0xff]
      %v4954 = vld [vmem:[#allocation2 + $0x151] sm:$0xff]
      %v4955 = vld [vmem:[#allocation2 + $0x159] sm:$0xff]
      %v4956 = vld [vmem:[#allocation2 + $0x161] sm:$0xff]
      %v4957 = vld [vmem:[#allocation2 + $0x169] sm:$0xff]
      %v4958 = vld [vmem:[#allocation2 + $0x171] sm:$0xff]
      %v4959 = vld [vmem:[#allocation2 + $0x179] sm:$0xff]
      %v4960 = vld [vmem:[#allocation2 + $0x181] sm:$0xff]
      %v4961 = vld [vmem:[#allocation2 + $0x189] sm:$0xff]
      %v4962 = vld [vmem:[#allocation2 + $0x191] sm:$0xff]
      %v4963 = vld [vmem:[#allocation2 + $0x199] sm:$0xff]
      %v4964 = vld [vmem:[#allocation2 + $0x1a1] sm:$0xff]
      %v4965 = vld [vmem:[#allocation2 + $0x1a9] sm:$0xff]
      %v4966 = vld [vmem:[#allocation2 + $0x1b1] sm:$0xff]
      %v4967 = vpack.c.bf16 %v4920, %v4919
      %v4968 = vpack.c.bf16 %v4922, %v4921
      %v4969 = vpack.c.bf16 %v4924, %v4923
      %v4970 = vpack.c.bf16 %v4926, %v4925
      %v4971 = vpack.c.bf16 %v4928, %v4927
      %v4972 = vpack.c.bf16 %v4930, %v4929
      %v4973 = vpack.c.bf16 %v4932, %v4931
      %v4974 = vpack.c.bf16 %v4934, %v4933
      %v4975 = vpack.c.bf16 %v4936, %v4935
      %v4976 = vpack.c.bf16 %v4938, %v4937
      %v4977 = vpack.c.bf16 %v4940, %v4939
      %v4978 = vpack.c.bf16 %v4942, %v4941
      %v4979 = vpack.c.bf16 %v4944, %v4943
      %v4980 = vpack.c.bf16 %v4946, %v4945
      %v4981 = vpack.c.bf16 %v4948, %v4947
      %v4982 = vpack.c.bf16 %v4950, %v4949
      %v4983 = vpack.c.bf16 %v4952, %v4951
      %v4984 = vpack.c.bf16 %v4954, %v4953
      %v4985 = vpack.c.bf16 %v4956, %v4955
      %v4986 = vpack.c.bf16 %v4958, %v4957
      %v4987 = vpack.c.bf16 %v4960, %v4959
      %v4988 = vpack.c.bf16 %v4962, %v4961
      %v4989 = vpack.c.bf16 %v4964, %v4963
      %v4990 = vpack.c.bf16 %v4966, %v4965
      %s4991 = scalar_lea.vmem %s6, 16
      %v4992 = vld [vmem:[%s4991] sm:$0x3]
      %v4994 = vsel %vm871, %v4967, 0
      %v4997 = vsel %vm871, %v4968, 0
      %v5000 = vsel %vm871, %v4969, 0
      %v5003 = vsel %vm871, %v4970, 0
      %v5006 = vsel %vm871, %v4971, 0
      %v5009 = vsel %vm871, %v4972, 0
      %v5012 = vsel %vm871, %v4973, 0
      %v5015 = vsel %vm871, %v4974, 0
      %v5018 = vsel %vm871, %v4975, 0
      %v5021 = vsel %vm871, %v4976, 0
      %v5024 = vsel %vm871, %v4977, 0
      %v5027 = vsel %vm871, %v4978, 0
      %v5030 = vsel %vm871, %v4979, 0
      %v5033 = vsel %vm871, %v4980, 0
      %v5036 = vsel %vm871, %v4981, 0
      %v5039 = vsel %vm871, %v4982, 0
      %v5042 = vsel %vm871, %v4983, 0
      %v5045 = vsel %vm871, %v4984, 0
      %v5048 = vsel %vm871, %v4985, 0
      %v5051 = vsel %vm871, %v4986, 0
      %v5054 = vsel %vm871, %v4987, 0
      %v5057 = vsel %vm871, %v4988, 0
      %v5060 = vsel %vm871, %v4989, 0
      %v5063 = vsel %vm871, %v4990, 0
      %v5066 = vsel %vm953, %v4992, 0
      %5068 = vmatprep.subr.bf16.mxu0 0
      %5069 = vmatpush1.bf16.msra.mxu0 %v5066
      %5070 = vmatprep.subr.bf16.mxu0 0
      %5071 = vmatpush1.bf16.msra.mxu0 0
      %5072 = vmatprep.subr.bf16.mxu0 0
      %5073 = vmatpush1.bf16.msra.mxu0 0
      %5074 = vmatprep.subr.bf16.mxu0 0
      %5075 = vmatpush1.bf16.msra.mxu0 0
      %5076 = vmatprep.subr.bf16.mxu0 0
      %5077 = vmatpush1.bf16.msra.mxu0 0
      %5078 = vmatprep.subr.bf16.mxu0 0
      %5079 = vmatpush1.bf16.msra.mxu0 0
      %5080 = vmatprep.subr.bf16.mxu0 0
      %5081 = vmatpush1.bf16.msra.mxu0 0
      %5082 = vmatprep.subr.bf16.mxu0 0
      %5083 = vmatpush1.bf16.msra.mxu0 0
      %5084 = vmatprep.subr.bf16.mxu0 0
      %5085 = vmatpush1.bf16.msra.mxu0 0
      %5086 = vmatprep.subr.bf16.mxu0 0
      %5087 = vmatpush1.bf16.msra.mxu0 0
      %5088 = vmatprep.subr.bf16.mxu0 0
      %5089 = vmatpush1.bf16.msra.mxu0 0
      %5090 = vmatprep.subr.bf16.mxu0 0
      %5091 = vmatpush1.bf16.msra.mxu0 0
      %5092 = vmatprep.subr.bf16.mxu0 0
      %5093 = vmatpush1.bf16.msra.mxu0 0
      %5094 = vmatprep.subr.bf16.mxu0 0
      %5095 = vmatpush1.bf16.msra.mxu0 0
      %5096 = vmatprep.subr.bf16.mxu0 0
      %5097 = vmatpush1.bf16.msra.mxu0 0
      %5098 = vmatprep.subr.bf16.mxu0 0
      %5099 = vmatpush1.bf16.msra.mxu0 0
      %5100 = vmatprep.mubr.bf16.mxu0 0
      %5101 = vmatmul.mubr.bf16.gmra.mrb[0].mxu0 %v4994
      %v5102 = vpop.f32.mrb[0].mxu0
      %v5103 = vadd.f32 0.0, %v5102
      %v5104 = vpop.f32.mrb[0].mxu0
      %v5105 = vpop.f32.mrb[0].mxu0
      %v5106 = vadd.f32 0.0, %v5105
      %v5107 = vpop.f32.mrb[0].mxu0
      %5108 = vmatprep.mubr.bf16.mxu0 0
      %5109 = vmatmul.mubr.bf16.gmra.mrb[0].mxu0 %v4997
      %v5110 = vpop.f32.mrb[0].mxu0
      %v5111 = vadd.f32 0.0, %v5110
      %v5112 = vpop.f32.mrb[0].mxu0
      %v5113 = vpop.f32.mrb[0].mxu0
      %v5114 = vadd.f32 0.0, %v5113
      %v5115 = vpop.f32.mrb[0].mxu0
      %5116 = vmatprep.mubr.bf16.mxu0 0
      %5117 = vmatmul.mubr.bf16.gmra.mrb[0].mxu0 %v5000
      %v5118 = vpop.f32.mrb[0].mxu0
      %v5119 = vadd.f32 0.0, %v5118
      %v5120 = vpop.f32.mrb[0].mxu0
      %v5121 = vpop.f32.mrb[0].mxu0
      %v5122 = vadd.f32 0.0, %v5121
      %v5123 = vpop.f32.mrb[0].mxu0
      %5124 = vmatprep.mubr.bf16.mxu0 0
      %5125 = vmatmul.mubr.bf16.gmra.mrb[0].mxu0 %v5003
      %v5126 = vpop.f32.mrb[0].mxu0
      %v5127 = vadd.f32 0.0, %v5126
      %v5128 = vpop.f32.mrb[0].mxu0
      %v5129 = vpop.f32.mrb[0].mxu0
      %v5130 = vadd.f32 0.0, %v5129
      %v5131 = vpop.f32.mrb[0].mxu0
      %5132 = vmatprep.mubr.bf16.mxu0 0
      %5133 = vmatmul.mubr.bf16.gmra.mrb[0].mxu0 %v5006
      %v5134 = vpop.f32.mrb[0].mxu0
      %v5135 = vadd.f32 0.0, %v5134
      %v5136 = vpop.f32.mrb[0].mxu0
      %v5137 = vpop.f32.mrb[0].mxu0
      %v5138 = vadd.f32 0.0, %v5137
      %v5139 = vpop.f32.mrb[0].mxu0
      %5140 = vmatprep.mubr.bf16.mxu0 0
      %5141 = vmatmul.mubr.bf16.gmra.mrb[0].mxu0 %v5009
      %v5142 = vpop.f32.mrb[0].mxu0
      %v5143 = vadd.f32 0.0, %v5142
      %v5144 = vpop.f32.mrb[0].mxu0
      %v5145 = vpop.f32.mrb[0].mxu0
      %v5146 = vadd.f32 0.0, %v5145
      %v5147 = vpop.f32.mrb[0].mxu0
      %5148 = vmatprep.mubr.bf16.mxu0 0
      %5149 = vmatmul.mubr.bf16.gmra.mrb[0].mxu0 %v5012
      %v5150 = vpop.f32.mrb[0].mxu0
      %v5151 = vadd.f32 0.0, %v5150
      %v5152 = vpop.f32.mrb[0].mxu0
      %v5153 = vpop.f32.mrb[0].mxu0
      %v5154 = vadd.f32 0.0, %v5153
      %v5155 = vpop.f32.mrb[0].mxu0
      %5156 = vmatprep.mubr.bf16.mxu0 0
      %5157 = vmatmul.mubr.bf16.gmra.mrb[0].mxu0 %v5015
      %v5158 = vpop.f32.mrb[0].mxu0
      %v5159 = vadd.f32 0.0, %v5158
      %v5160 = vpop.f32.mrb[0].mxu0
      %v5161 = vpop.f32.mrb[0].mxu0
      %v5162 = vadd.f32 0.0, %v5161
      %v5163 = vpop.f32.mrb[0].mxu0
      %5164 = vmatprep.mubr.bf16.mxu0 0
      %5165 = vmatmul.mubr.bf16.gmra.mrb[0].mxu0 %v5018
      %v5166 = vpop.f32.mrb[0].mxu0
      %v5167 = vadd.f32 0.0, %v5166
      %v5168 = vpop.f32.mrb[0].mxu0
      %v5169 = vpop.f32.mrb[0].mxu0
      %v5170 = vadd.f32 0.0, %v5169
      %v5171 = vpop.f32.mrb[0].mxu0
      %5172 = vmatprep.mubr.bf16.mxu0 0
      %5173 = vmatmul.mubr.bf16.gmra.mrb[0].mxu0 %v5021
      %v5174 = vpop.f32.mrb[0].mxu0
      %v5175 = vadd.f32 0.0, %v5174
      %v5176 = vpop.f32.mrb[0].mxu0
      %v5177 = vpop.f32.mrb[0].mxu0
      %v5178 = vadd.f32 0.0, %v5177
      %v5179 = vpop.f32.mrb[0].mxu0
      %5180 = vmatprep.mubr.bf16.mxu0 0
      %5181 = vmatmul.mubr.bf16.gmra.mrb[0].mxu0 %v5024
      %v5182 = vpop.f32.mrb[0].mxu0
      %v5183 = vadd.f32 0.0, %v5182
      %v5184 = vpop.f32.mrb[0].mxu0
      %v5185 = vpop.f32.mrb[0].mxu0
      %v5186 = vadd.f32 0.0, %v5185
      %v5187 = vpop.f32.mrb[0].mxu0
      %5188 = vmatprep.mubr.bf16.mxu0 0
      %5189 = vmatmul.mubr.bf16.gmra.mrb[0].mxu0 %v5027
      %v5190 = vpop.f32.mrb[0].mxu0
      %v5191 = vadd.f32 0.0, %v5190
      %v5192 = vpop.f32.mrb[0].mxu0
      %v5193 = vpop.f32.mrb[0].mxu0
      %v5194 = vadd.f32 0.0, %v5193
      %v5195 = vpop.f32.mrb[0].mxu0
      %5196 = vmatprep.mubr.bf16.mxu0 0
      %5197 = vmatmul.mubr.bf16.gmra.mrb[0].mxu0 %v5030
      %v5198 = vpop.f32.mrb[0].mxu0
      %v5199 = vadd.f32 0.0, %v5198
      %v5200 = vpop.f32.mrb[0].mxu0
      %v5201 = vpop.f32.mrb[0].mxu0
      %v5202 = vadd.f32 0.0, %v5201
      %v5203 = vpop.f32.mrb[0].mxu0
      %5204 = vmatprep.mubr.bf16.mxu0 0
      %5205 = vmatmul.mubr.bf16.gmra.mrb[0].mxu0 %v5033
      %v5206 = vpop.f32.mrb[0].mxu0
      %v5207 = vadd.f32 0.0, %v5206
      %v5208 = vpop.f32.mrb[0].mxu0
      %v5209 = vpop.f32.mrb[0].mxu0
      %v5210 = vadd.f32 0.0, %v5209
      %v5211 = vpop.f32.mrb[0].mxu0
      %5212 = vmatprep.mubr.bf16.mxu0 0
      %5213 = vmatmul.mubr.bf16.gmra.mrb[0].mxu0 %v5036
      %v5214 = vpop.f32.mrb[0].mxu0
      %v5215 = vadd.f32 0.0, %v5214
      %v5216 = vpop.f32.mrb[0].mxu0
      %v5217 = vpop.f32.mrb[0].mxu0
      %v5218 = vadd.f32 0.0, %v5217
      %v5219 = vpop.f32.mrb[0].mxu0
      %5220 = vmatprep.mubr.bf16.mxu0 0
      %5221 = vmatmul.mubr.bf16.gmra.mrb[0].mxu0 %v5039
      %v5222 = vpop.f32.mrb[0].mxu0
      %v5223 = vadd.f32 0.0, %v5222
      %v5224 = vpop.f32.mrb[0].mxu0
      %v5225 = vpop.f32.mrb[0].mxu0
      %v5226 = vadd.f32 0.0, %v5225
      %v5227 = vpop.f32.mrb[0].mxu0
      %5228 = vmatprep.mubr.bf16.mxu0 0
      %5229 = vmatmul.mubr.bf16.gmra.mrb[0].mxu0 %v5042
      %v5230 = vpop.f32.mrb[0].mxu0
      %v5231 = vadd.f32 0.0, %v5230
      %v5232 = vpop.f32.mrb[0].mxu0
      %v5233 = vpop.f32.mrb[0].mxu0
      %v5234 = vadd.f32 0.0, %v5233
      %v5235 = vpop.f32.mrb[0].mxu0
      %5236 = vmatprep.mubr.bf16.mxu0 0
      %5237 = vmatmul.mubr.bf16.gmra.mrb[0].mxu0 %v5045
      %v5238 = vpop.f32.mrb[0].mxu0
      %v5239 = vadd.f32 0.0, %v5238
      %v5240 = vpop.f32.mrb[0].mxu0
      %v5241 = vpop.f32.mrb[0].mxu0
      %v5242 = vadd.f32 0.0, %v5241
      %v5243 = vpop.f32.mrb[0].mxu0
      %5244 = vmatprep.mubr.bf16.mxu0 0
      %5245 = vmatmul.mubr.bf16.gmra.mrb[0].mxu0 %v5048
      %v5246 = vpop.f32.mrb[0].mxu0
      %v5247 = vadd.f32 0.0, %v5246
      %v5248 = vpop.f32.mrb[0].mxu0
      %v5249 = vpop.f32.mrb[0].mxu0
      %v5250 = vadd.f32 0.0, %v5249
      %v5251 = vpop.f32.mrb[0].mxu0
      %5252 = vmatprep.mubr.bf16.mxu0 0
      %5253 = vmatmul.mubr.bf16.gmra.mrb[0].mxu0 %v5051
      %v5254 = vpop.f32.mrb[0].mxu0
      %v5255 = vadd.f32 0.0, %v5254
      %v5256 = vpop.f32.mrb[0].mxu0
      %v5257 = vpop.f32.mrb[0].mxu0
      %v5258 = vadd.f32 0.0, %v5257
      %v5259 = vpop.f32.mrb[0].mxu0
      %5260 = vmatprep.mubr.bf16.mxu0 0
      %5261 = vmatmul.mubr.bf16.gmra.mrb[0].mxu0 %v5054
      %v5262 = vpop.f32.mrb[0].mxu0
      %v5263 = vadd.f32 0.0, %v5262
      %v5264 = vpop.f32.mrb[0].mxu0
      %v5265 = vpop.f32.mrb[0].mxu0
      %v5266 = vadd.f32 0.0, %v5265
      %v5267 = vpop.f32.mrb[0].mxu0
      %5268 = vmatprep.mubr.bf16.mxu0 0
      %5269 = vmatmul.mubr.bf16.gmra.mrb[0].mxu0 %v5057
      %v5270 = vpop.f32.mrb[0].mxu0
      %v5271 = vadd.f32 0.0, %v5270
      %v5272 = vpop.f32.mrb[0].mxu0
      %v5273 = vpop.f32.mrb[0].mxu0
      %v5274 = vadd.f32 0.0, %v5273
      %v5275 = vpop.f32.mrb[0].mxu0
      %5276 = vmatprep.mubr.bf16.mxu0 0
      %5277 = vmatmul.mubr.bf16.gmra.mrb[0].mxu0 %v5060
      %v5278 = vpop.f32.mrb[0].mxu0
      %v5279 = vadd.f32 0.0, %v5278
      %v5280 = vpop.f32.mrb[0].mxu0
      %v5281 = vpop.f32.mrb[0].mxu0
      %v5282 = vadd.f32 0.0, %v5281
      %v5283 = vpop.f32.mrb[0].mxu0
      %5284 = vmatprep.mubr.bf16.mxu0 0
      %5285 = vmatmul.mubr.bf16.gmra.mrb[0].mxu0 %v5063
      %v5286 = vpop.f32.mrb[0].mxu0
      %v5287 = vadd.f32 0.0, %v5286
      %v5288 = vpop.f32.mrb[0].mxu0
      %v5289 = vpop.f32.mrb[0].mxu0
      %v5290 = vadd.f32 0.0, %v5289
      %v5291 = vpop.f32.mrb[0].mxu0
      %5292 = vdwg.mxu0
      %v5293 = vadd.f32 %v4871, %v5103
      %v5294 = vadd.f32 %v4872, %v5106
      %v5295 = vadd.f32 %v4873, %v5111
      %v5296 = vadd.f32 %v4874, %v5114
      %v5297 = vadd.f32 %v4875, %v5119
      %v5298 = vadd.f32 %v4876, %v5122
      %v5299 = vadd.f32 %v4877, %v5127
      %v5300 = vadd.f32 %v4878, %v5130
      %v5301 = vadd.f32 %v4879, %v5135
      %v5302 = vadd.f32 %v4880, %v5138
      %v5303 = vadd.f32 %v4881, %v5143
      %v5304 = vadd.f32 %v4882, %v5146
      %v5305 = vadd.f32 %v4883, %v5151
      %v5306 = vadd.f32 %v4884, %v5154
      %v5307 = vadd.f32 %v4885, %v5159
      %v5308 = vadd.f32 %v4886, %v5162
      %v5309 = vadd.f32 %v4887, %v5167
      %v5310 = vadd.f32 %v4888, %v5170
      %v5311 = vadd.f32 %v4889, %v5175
      %v5312 = vadd.f32 %v4890, %v5178
      %v5313 = vadd.f32 %v4891, %v5183
      %v5314 = vadd.f32 %v4892, %v5186
      %v5315 = vadd.f32 %v4893, %v5191
      %v5316 = vadd.f32 %v4894, %v5194
      %v5317 = vadd.f32 %v4895, %v5199
      %v5318 = vadd.f32 %v4896, %v5202
      %v5319 = vadd.f32 %v4897, %v5207
      %v5320 = vadd.f32 %v4898, %v5210
      %v5321 = vadd.f32 %v4899, %v5215
      %v5322 = vadd.f32 %v4900, %v5218
      %v5323 = vadd.f32 %v4901, %v5223
      %v5324 = vadd.f32 %v4902, %v5226
      %v5325 = vadd.f32 %v4903, %v5231
      %v5326 = vadd.f32 %v4904, %v5234
      %v5327 = vadd.f32 %v4905, %v5239
      %v5328 = vadd.f32 %v4906, %v5242
      %v5329 = vadd.f32 %v4907, %v5247
      %v5330 = vadd.f32 %v4908, %v5250
      %v5331 = vadd.f32 %v4909, %v5255
      %v5332 = vadd.f32 %v4910, %v5258
      %v5333 = vadd.f32 %v4911, %v5263
      %v5334 = vadd.f32 %v4912, %v5266
      %v5335 = vadd.f32 %v4913, %v5271
      %v5336 = vadd.f32 %v4914, %v5274
      %v5337 = vadd.f32 %v4915, %v5279
      %v5338 = vadd.f32 %v4916, %v5282
      %v5339 = vadd.f32 %v4917, %v5287
      %v5340 = vadd.f32 %v4918, %v5290
      %v5341 = vld [vmem:[%s7] sm:$0x1]
      %v5343 = vlaneseq
      %v5344 = vshrl.u32 %v5343, 7
      %v5345 = vsub.s32 0, %v5344
      %v5346 = vrot.slane %v5341, %v5345
      %v5348 = vadd.f32 %v5293, %v5346
      %v5349 = vadd.f32 %v5294, %v5346
      %v5350 = vadd.f32 %v5295, %v5346
      %v5351 = vadd.f32 %v5296, %v5346
      %v5352 = vadd.f32 %v5297, %v5346
      %v5353 = vadd.f32 %v5298, %v5346
      %v5354 = vadd.f32 %v5299, %v5346
      %v5355 = vadd.f32 %v5300, %v5346
      %v5356 = vadd.f32 %v5301, %v5346
      %v5357 = vadd.f32 %v5302, %v5346
      %v5358 = vadd.f32 %v5303, %v5346
      %v5359 = vadd.f32 %v5304, %v5346
      %v5360 = vadd.f32 %v5305, %v5346
      %v5361 = vadd.f32 %v5306, %v5346
      %v5362 = vadd.f32 %v5307, %v5346
      %v5363 = vadd.f32 %v5308, %v5346
      %v5364 = vadd.f32 %v5309, %v5346
      %v5365 = vadd.f32 %v5310, %v5346
      %v5366 = vadd.f32 %v5311, %v5346
      %v5367 = vadd.f32 %v5312, %v5346
      %v5368 = vadd.f32 %v5313, %v5346
      %v5369 = vadd.f32 %v5314, %v5346
      %v5370 = vadd.f32 %v5315, %v5346
      %v5371 = vadd.f32 %v5316, %v5346
      %v5372 = vadd.f32 %v5317, %v5346
      %v5373 = vadd.f32 %v5318, %v5346
      %v5374 = vadd.f32 %v5319, %v5346
      %v5375 = vadd.f32 %v5320, %v5346
      %v5376 = vadd.f32 %v5321, %v5346
      %v5377 = vadd.f32 %v5322, %v5346
      %v5378 = vadd.f32 %v5323, %v5346
      %v5379 = vadd.f32 %v5324, %v5346
      %v5380 = vadd.f32 %v5325, %v5346
      %v5381 = vadd.f32 %v5326, %v5346
      %v5382 = vadd.f32 %v5327, %v5346
      %v5383 = vadd.f32 %v5328, %v5346
      %v5384 = vadd.f32 %v5329, %v5346
      %v5385 = vadd.f32 %v5330, %v5346
      %v5386 = vadd.f32 %v5331, %v5346
      %v5387 = vadd.f32 %v5332, %v5346
      %v5388 = vadd.f32 %v5333, %v5346
      %v5389 = vadd.f32 %v5334, %v5346
      %v5390 = vadd.f32 %v5335, %v5346
      %v5391 = vadd.f32 %v5336, %v5346
      %v5392 = vadd.f32 %v5337, %v5346
      %v5393 = vadd.f32 %v5338, %v5346
      %v5394 = vadd.f32 %v5339, %v5346
      %v5395 = vadd.f32 %v5340, %v5346
      %v5396 = vmax.f32 %v5348, 0.0
      %v5397 = vmax.f32 %v5349, 0.0
      %v5398 = vmax.f32 %v5350, 0.0
      %v5399 = vmax.f32 %v5351, 0.0
      %v5400 = vmax.f32 %v5352, 0.0
      %v5401 = vmax.f32 %v5353, 0.0
      %v5402 = vmax.f32 %v5354, 0.0
      %v5403 = vmax.f32 %v5355, 0.0
      %v5404 = vmax.f32 %v5356, 0.0
      %v5405 = vmax.f32 %v5357, 0.0
      %v5406 = vmax.f32 %v5358, 0.0
      %v5407 = vmax.f32 %v5359, 0.0
      %v5408 = vmax.f32 %v5360, 0.0
      %v5409 = vmax.f32 %v5361, 0.0
      %v5410 = vmax.f32 %v5362, 0.0
      %v5411 = vmax.f32 %v5363, 0.0
      %v5412 = vmax.f32 %v5364, 0.0
      %v5413 = vmax.f32 %v5365, 0.0
      %v5414 = vmax.f32 %v5366, 0.0
      %v5415 = vmax.f32 %v5367, 0.0
      %v5416 = vmax.f32 %v5368, 0.0
      %v5417 = vmax.f32 %v5369, 0.0
      %v5418 = vmax.f32 %v5370, 0.0
      %v5419 = vmax.f32 %v5371, 0.0
      %v5420 = vmax.f32 %v5372, 0.0
      %v5421 = vmax.f32 %v5373, 0.0
      %v5422 = vmax.f32 %v5374, 0.0
      %v5423 = vmax.f32 %v5375, 0.0
      %v5424 = vmax.f32 %v5376, 0.0
      %v5425 = vmax.f32 %v5377, 0.0
      %v5426 = vmax.f32 %v5378, 0.0
      %v5427 = vmax.f32 %v5379, 0.0
      %v5428 = vmax.f32 %v5380, 0.0
      %v5429 = vmax.f32 %v5381, 0.0
      %v5430 = vmax.f32 %v5382, 0.0
      %v5431 = vmax.f32 %v5383, 0.0
      %v5432 = vmax.f32 %v5384, 0.0
      %v5433 = vmax.f32 %v5385, 0.0
      %v5434 = vmax.f32 %v5386, 0.0
      %v5435 = vmax.f32 %v5387, 0.0
      %v5436 = vmax.f32 %v5388, 0.0
      %v5437 = vmax.f32 %v5389, 0.0
      %v5438 = vmax.f32 %v5390, 0.0
      %v5439 = vmax.f32 %v5391, 0.0
      %v5440 = vmax.f32 %v5392, 0.0
      %v5441 = vmax.f32 %v5393, 0.0
      %v5442 = vmax.f32 %v5394, 0.0
      %v5443 = vmax.f32 %v5395, 0.0
      %v5444 = vpack.c.bf16 %v5397, %v5396
      %v5445 = vpack.c.bf16 %v5399, %v5398
      %v5446 = vpack.c.bf16 %v5401, %v5400
      %v5447 = vpack.c.bf16 %v5403, %v5402
      %v5448 = vpack.c.bf16 %v5405, %v5404
      %v5449 = vpack.c.bf16 %v5407, %v5406
      %v5450 = vpack.c.bf16 %v5409, %v5408
      %v5451 = vpack.c.bf16 %v5411, %v5410
      %v5452 = vpack.c.bf16 %v5413, %v5412
      %v5453 = vpack.c.bf16 %v5415, %v5414
      %v5454 = vpack.c.bf16 %v5417, %v5416
      %v5455 = vpack.c.bf16 %v5419, %v5418
      %v5456 = vpack.c.bf16 %v5421, %v5420
      %v5457 = vpack.c.bf16 %v5423, %v5422
      %v5458 = vpack.c.bf16 %v5425, %v5424
      %v5459 = vpack.c.bf16 %v5427, %v5426
      %v5460 = vpack.c.bf16 %v5429, %v5428
      %v5461 = vpack.c.bf16 %v5431, %v5430
      %v5462 = vpack.c.bf16 %v5433, %v5432
      %v5463 = vpack.c.bf16 %v5435, %v5434
      %v5464 = vpack.c.bf16 %v5437, %v5436
      %v5465 = vpack.c.bf16 %v5439, %v5438
      %v5466 = vpack.c.bf16 %v5441, %v5440
      %v5467 = vpack.c.bf16 %v5443, %v5442
      %v5468 = vld [vmem:[%s8] sm:$0x3]
      %v5469 = vld [vmem:[%s9] sm:$0x1]
      %v5471 = vlaneseq
      %v5472 = vshrl.u32 %v5471, 7
      %v5473 = vsub.s32 0, %v5472
      %v5474 = vrot.slane %v5469, %v5473
      %v5477 = vsel %vm871, %v5444, 0
      %v5480 = vsel %vm871, %v5445, 0
      %v5483 = vsel %vm871, %v5446, 0
      %v5486 = vsel %vm871, %v5447, 0
      %v5489 = vsel %vm871, %v5448, 0
      %v5492 = vsel %vm871, %v5449, 0
      %v5495 = vsel %vm871, %v5450, 0
      %v5498 = vsel %vm871, %v5451, 0
      %v5501 = vsel %vm871, %v5452, 0
      %v5504 = vsel %vm871, %v5453, 0
      %v5507 = vsel %vm871, %v5454, 0
      %v5510 = vsel %vm871, %v5455, 0
      %v5513 = vsel %vm871, %v5456, 0
      %v5516 = vsel %vm871, %v5457, 0
      %v5519 = vsel %vm871, %v5458, 0
      %v5522 = vsel %vm871, %v5459, 0
      %v5525 = vsel %vm871, %v5460, 0
      %v5528 = vsel %vm871, %v5461, 0
      %v5531 = vsel %vm871, %v5462, 0
      %v5534 = vsel %vm871, %v5463, 0
      %v5537 = vsel %vm871, %v5464, 0
      %v5540 = vsel %vm871, %v5465, 0
      %v5543 = vsel %vm871, %v5466, 0
      %v5546 = vsel %vm871, %v5467, 0
      %v5549 = vsel %vm953, %v5468, 0
      %5551 = vmatprep.subr.bf16.mxu0 0
      %5552 = vmatpush1.bf16.msra.mxu0 %v5549
      %5553 = vmatprep.subr.bf16.mxu0 0
      %5554 = vmatpush1.bf16.msra.mxu0 0
      %5555 = vmatprep.subr.bf16.mxu0 0
      %5556 = vmatpush1.bf16.msra.mxu0 0
      %5557 = vmatprep.subr.bf16.mxu0 0
      %5558 = vmatpush1.bf16.msra.mxu0 0
      %5559 = vmatprep.subr.bf16.mxu0 0
      %5560 = vmatpush1.bf16.msra.mxu0 0
      %5561 = vmatprep.subr.bf16.mxu0 0
      %5562 = vmatpush1.bf16.msra.mxu0 0
      %5563 = vmatprep.subr.bf16.mxu0 0
      %5564 = vmatpush1.bf16.msra.mxu0 0
      %5565 = vmatprep.subr.bf16.mxu0 0
      %5566 = vmatpush1.bf16.msra.mxu0 0
      %5567 = vmatprep.subr.bf16.mxu0 0
      %5568 = vmatpush1.bf16.msra.mxu0 0
      %5569 = vmatprep.subr.bf16.mxu0 0
      %5570 = vmatpush1.bf16.msra.mxu0 0
      %5571 = vmatprep.subr.bf16.mxu0 0
      %5572 = vmatpush1.bf16.msra.mxu0 0
      %5573 = vmatprep.subr.bf16.mxu0 0
      %5574 = vmatpush1.bf16.msra.mxu0 0
      %5575 = vmatprep.subr.bf16.mxu0 0
      %5576 = vmatpush1.bf16.msra.mxu0 0
      %5577 = vmatprep.subr.bf16.mxu0 0
      %5578 = vmatpush1.bf16.msra.mxu0 0
      %5579 = vmatprep.subr.bf16.mxu0 0
      %5580 = vmatpush1.bf16.msra.mxu0 0
      %5581 = vmatprep.subr.bf16.mxu0 0
      %5582 = vmatpush1.bf16.msra.mxu0 0
      %5583 = vmatprep.mubr.bf16.mxu0 0
      %5584 = vmatmul.mubr.bf16.gmra.mrb[0].mxu0 %v5477
      %v5585 = vpop.f32.mrb[0].mxu0
      %v5586 = vadd.f32 %v5474, %v5585
      %v5587 = vpop.f32.mrb[0].mxu0
      %v5588 = vpop.f32.mrb[0].mxu0
      %v5589 = vadd.f32 %v5474, %v5588
      %v5590 = vpop.f32.mrb[0].mxu0
      %5591 = vmatprep.mubr.bf16.mxu0 0
      %5592 = vmatmul.mubr.bf16.gmra.mrb[0].mxu0 %v5480
      %v5593 = vpop.f32.mrb[0].mxu0
      %v5594 = vadd.f32 %v5474, %v5593
      %v5595 = vpop.f32.mrb[0].mxu0
      %v5596 = vpop.f32.mrb[0].mxu0
      %v5597 = vadd.f32 %v5474, %v5596
      %v5598 = vpop.f32.mrb[0].mxu0
      %5599 = vmatprep.mubr.bf16.mxu0 0
      %5600 = vmatmul.mubr.bf16.gmra.mrb[0].mxu0 %v5483
      %v5601 = vpop.f32.mrb[0].mxu0
      %v5602 = vadd.f32 %v5474, %v5601
      %v5603 = vpop.f32.mrb[0].mxu0
      %v5604 = vpop.f32.mrb[0].mxu0
      %v5605 = vadd.f32 %v5474, %v5604
      %v5606 = vpop.f32.mrb[0].mxu0
      %5607 = vmatprep.mubr.bf16.mxu0 0
      %5608 = vmatmul.mubr.bf16.gmra.mrb[0].mxu0 %v5486
      %v5609 = vpop.f32.mrb[0].mxu0
      %v5610 = vadd.f32 %v5474, %v5609
      %v5611 = vpop.f32.mrb[0].mxu0
      %v5612 = vpop.f32.mrb[0].mxu0
      %v5613 = vadd.f32 %v5474, %v5612
      %v5614 = vpop.f32.mrb[0].mxu0
      %5615 = vmatprep.mubr.bf16.mxu0 0
      %5616 = vmatmul.mubr.bf16.gmra.mrb[0].mxu0 %v5489
      %v5617 = vpop.f32.mrb[0].mxu0
      %v5618 = vadd.f32 %v5474, %v5617
      %v5619 = vpop.f32.mrb[0].mxu0
      %v5620 = vpop.f32.mrb[0].mxu0
      %v5621 = vadd.f32 %v5474, %v5620
      %v5622 = vpop.f32.mrb[0].mxu0
      %5623 = vmatprep.mubr.bf16.mxu0 0
      %5624 = vmatmul.mubr.bf16.gmra.mrb[0].mxu0 %v5492
      %v5625 = vpop.f32.mrb[0].mxu0
      %v5626 = vadd.f32 %v5474, %v5625
      %v5627 = vpop.f32.mrb[0].mxu0
      %v5628 = vpop.f32.mrb[0].mxu0
      %v5629 = vadd.f32 %v5474, %v5628
      %v5630 = vpop.f32.mrb[0].mxu0
      %5631 = vmatprep.mubr.bf16.mxu0 0
      %5632 = vmatmul.mubr.bf16.gmra.mrb[0].mxu0 %v5495
      %v5633 = vpop.f32.mrb[0].mxu0
      %v5634 = vadd.f32 %v5474, %v5633
      %v5635 = vpop.f32.mrb[0].mxu0
      %v5636 = vpop.f32.mrb[0].mxu0
      %v5637 = vadd.f32 %v5474, %v5636
      %v5638 = vpop.f32.mrb[0].mxu0
      %5639 = vmatprep.mubr.bf16.mxu0 0
      %5640 = vmatmul.mubr.bf16.gmra.mrb[0].mxu0 %v5498
      %v5641 = vpop.f32.mrb[0].mxu0
      %v5642 = vadd.f32 %v5474, %v5641
      %v5643 = vpop.f32.mrb[0].mxu0
      %v5644 = vpop.f32.mrb[0].mxu0
      %v5645 = vadd.f32 %v5474, %v5644
      %v5646 = vpop.f32.mrb[0].mxu0
      %5647 = vmatprep.mubr.bf16.mxu0 0
      %5648 = vmatmul.mubr.bf16.gmra.mrb[0].mxu0 %v5501
      %v5649 = vpop.f32.mrb[0].mxu0
      %v5650 = vadd.f32 %v5474, %v5649
      %v5651 = vpop.f32.mrb[0].mxu0
      %v5652 = vpop.f32.mrb[0].mxu0
      %v5653 = vadd.f32 %v5474, %v5652
      %v5654 = vpop.f32.mrb[0].mxu0
      %5655 = vmatprep.mubr.bf16.mxu0 0
      %5656 = vmatmul.mubr.bf16.gmra.mrb[0].mxu0 %v5504
      %v5657 = vpop.f32.mrb[0].mxu0
      %v5658 = vadd.f32 %v5474, %v5657
      %v5659 = vpop.f32.mrb[0].mxu0
      %v5660 = vpop.f32.mrb[0].mxu0
      %v5661 = vadd.f32 %v5474, %v5660
      %v5662 = vpop.f32.mrb[0].mxu0
      %5663 = vmatprep.mubr.bf16.mxu0 0
      %5664 = vmatmul.mubr.bf16.gmra.mrb[0].mxu0 %v5507
      %v5665 = vpop.f32.mrb[0].mxu0
      %v5666 = vadd.f32 %v5474, %v5665
      %v5667 = vpop.f32.mrb[0].mxu0
      %v5668 = vpop.f32.mrb[0].mxu0
      %v5669 = vadd.f32 %v5474, %v5668
      %v5670 = vpop.f32.mrb[0].mxu0
      %5671 = vmatprep.mubr.bf16.mxu0 0
      %5672 = vmatmul.mubr.bf16.gmra.mrb[0].mxu0 %v5510
      %v5673 = vpop.f32.mrb[0].mxu0
      %v5674 = vadd.f32 %v5474, %v5673
      %v5675 = vpop.f32.mrb[0].mxu0
      %v5676 = vpop.f32.mrb[0].mxu0
      %v5677 = vadd.f32 %v5474, %v5676
      %v5678 = vpop.f32.mrb[0].mxu0
      %5679 = vmatprep.mubr.bf16.mxu0 0
      %5680 = vmatmul.mubr.bf16.gmra.mrb[0].mxu0 %v5513
      %v5681 = vpop.f32.mrb[0].mxu0
      %v5682 = vadd.f32 %v5474, %v5681
      %v5683 = vpop.f32.mrb[0].mxu0
      %v5684 = vpop.f32.mrb[0].mxu0
      %v5685 = vadd.f32 %v5474, %v5684
      %v5686 = vpop.f32.mrb[0].mxu0
      %5687 = vmatprep.mubr.bf16.mxu0 0
      %5688 = vmatmul.mubr.bf16.gmra.mrb[0].mxu0 %v5516
      %v5689 = vpop.f32.mrb[0].mxu0
      %v5690 = vadd.f32 %v5474, %v5689
      %v5691 = vpop.f32.mrb[0].mxu0
      %v5692 = vpop.f32.mrb[0].mxu0
      %v5693 = vadd.f32 %v5474, %v5692
      %v5694 = vpop.f32.mrb[0].mxu0
      %5695 = vmatprep.mubr.bf16.mxu0 0
      %5696 = vmatmul.mubr.bf16.gmra.mrb[0].mxu0 %v5519
      %v5697 = vpop.f32.mrb[0].mxu0
      %v5698 = vadd.f32 %v5474, %v5697
      %v5699 = vpop.f32.mrb[0].mxu0
      %v5700 = vpop.f32.mrb[0].mxu0
      %v5701 = vadd.f32 %v5474, %v5700
      %v5702 = vpop.f32.mrb[0].mxu0
      %5703 = vmatprep.mubr.bf16.mxu0 0
      %5704 = vmatmul.mubr.bf16.gmra.mrb[0].mxu0 %v5522
      %v5705 = vpop.f32.mrb[0].mxu0
      %v5706 = vadd.f32 %v5474, %v5705
      %v5707 = vpop.f32.mrb[0].mxu0
      %v5708 = vpop.f32.mrb[0].mxu0
      %v5709 = vadd.f32 %v5474, %v5708
      %v5710 = vpop.f32.mrb[0].mxu0
      %5711 = vmatprep.mubr.bf16.mxu0 0
      %5712 = vmatmul.mubr.bf16.gmra.mrb[0].mxu0 %v5525
      %v5713 = vpop.f32.mrb[0].mxu0
      %v5714 = vadd.f32 %v5474, %v5713
      %v5715 = vpop.f32.mrb[0].mxu0
      %v5716 = vpop.f32.mrb[0].mxu0
      %v5717 = vadd.f32 %v5474, %v5716
      %v5718 = vpop.f32.mrb[0].mxu0
      %5719 = vmatprep.mubr.bf16.mxu0 0
      %5720 = vmatmul.mubr.bf16.gmra.mrb[0].mxu0 %v5528
      %v5721 = vpop.f32.mrb[0].mxu0
      %v5722 = vadd.f32 %v5474, %v5721
      %v5723 = vpop.f32.mrb[0].mxu0
      %v5724 = vpop.f32.mrb[0].mxu0
      %v5725 = vadd.f32 %v5474, %v5724
      %v5726 = vpop.f32.mrb[0].mxu0
      %5727 = vmatprep.mubr.bf16.mxu0 0
      %5728 = vmatmul.mubr.bf16.gmra.mrb[0].mxu0 %v5531
      %v5729 = vpop.f32.mrb[0].mxu0
      %v5730 = vadd.f32 %v5474, %v5729
      %v5731 = vpop.f32.mrb[0].mxu0
      %v5732 = vpop.f32.mrb[0].mxu0
      %v5733 = vadd.f32 %v5474, %v5732
      %v5734 = vpop.f32.mrb[0].mxu0
      %5735 = vmatprep.mubr.bf16.mxu0 0
      %5736 = vmatmul.mubr.bf16.gmra.mrb[0].mxu0 %v5534
      %v5737 = vpop.f32.mrb[0].mxu0
      %v5738 = vadd.f32 %v5474, %v5737
      %v5739 = vpop.f32.mrb[0].mxu0
      %v5740 = vpop.f32.mrb[0].mxu0
      %v5741 = vadd.f32 %v5474, %v5740
      %v5742 = vpop.f32.mrb[0].mxu0
      %5743 = vmatprep.mubr.bf16.mxu0 0
      %5744 = vmatmul.mubr.bf16.gmra.mrb[0].mxu0 %v5537
      %v5745 = vpop.f32.mrb[0].mxu0
      %v5746 = vadd.f32 %v5474, %v5745
      %v5747 = vpop.f32.mrb[0].mxu0
      %v5748 = vpop.f32.mrb[0].mxu0
      %v5749 = vadd.f32 %v5474, %v5748
      %v5750 = vpop.f32.mrb[0].mxu0
      %5751 = vmatprep.mubr.bf16.mxu0 0
      %5752 = vmatmul.mubr.bf16.gmra.mrb[0].mxu0 %v5540
      %v5753 = vpop.f32.mrb[0].mxu0
      %v5754 = vadd.f32 %v5474, %v5753
      %v5755 = vpop.f32.mrb[0].mxu0
      %v5756 = vpop.f32.mrb[0].mxu0
      %v5757 = vadd.f32 %v5474, %v5756
      %v5758 = vpop.f32.mrb[0].mxu0
      %5759 = vmatprep.mubr.bf16.mxu0 0
      %5760 = vmatmul.mubr.bf16.gmra.mrb[0].mxu0 %v5543
      %v5761 = vpop.f32.mrb[0].mxu0
      %v5762 = vadd.f32 %v5474, %v5761
      %v5763 = vpop.f32.mrb[0].mxu0
      %v5764 = vpop.f32.mrb[0].mxu0
      %v5765 = vadd.f32 %v5474, %v5764
      %v5766 = vpop.f32.mrb[0].mxu0
      %5767 = vmatprep.mubr.bf16.mxu0 0
      %5768 = vmatmul.mubr.bf16.gmra.mrb[0].mxu0 %v5546
      %v5769 = vpop.f32.mrb[0].mxu0
      %v5770 = vadd.f32 %v5474, %v5769
      %v5771 = vpop.f32.mrb[0].mxu0
      %v5772 = vpop.f32.mrb[0].mxu0
      %v5773 = vadd.f32 %v5474, %v5772
      %v5774 = vpop.f32.mrb[0].mxu0
      %5775 = vdwg.mxu0
      %v5776 = vld [vmem:[%s10] sm:$0x1]
      %v5778 = vlaneseq
      %v5779 = vshrl.u32 %v5778, 7
      %v5780 = vsub.s32 0, %v5779
      %v5781 = vrot.slane %v5776, %v5780
      %v5783 = vmul.f32 %v555, %v5781
      %v5784 = vmul.f32 %v556, %v5781
      %v5785 = vmul.f32 %v557, %v5781
      %v5786 = vmul.f32 %v558, %v5781
      %v5787 = vmul.f32 %v559, %v5781
      %v5788 = vmul.f32 %v560, %v5781
      %v5789 = vmul.f32 %v561, %v5781
      %v5790 = vmul.f32 %v562, %v5781
      %v5791 = vmul.f32 %v563, %v5781
      %v5792 = vmul.f32 %v564, %v5781
      %v5793 = vmul.f32 %v565, %v5781
      %v5794 = vmul.f32 %v566, %v5781
      %v5795 = vmul.f32 %v567, %v5781
      %v5796 = vmul.f32 %v568, %v5781
      %v5797 = vmul.f32 %v569, %v5781
      %v5798 = vmul.f32 %v570, %v5781
      %v5799 = vmul.f32 %v571, %v5781
      %v5800 = vmul.f32 %v572, %v5781
      %v5801 = vmul.f32 %v573, %v5781
      %v5802 = vmul.f32 %v574, %v5781
      %v5803 = vmul.f32 %v575, %v5781
      %v5804 = vmul.f32 %v576, %v5781
      %v5805 = vmul.f32 %v577, %v5781
      %v5806 = vmul.f32 %v578, %v5781
      %v5807 = vmul.f32 %v579, %v5781
      %v5808 = vmul.f32 %v580, %v5781
      %v5809 = vmul.f32 %v581, %v5781
      %v5810 = vmul.f32 %v582, %v5781
      %v5811 = vmul.f32 %v583, %v5781
      %v5812 = vmul.f32 %v584, %v5781
      %v5813 = vmul.f32 %v585, %v5781
      %v5814 = vmul.f32 %v586, %v5781
      %v5815 = vmul.f32 %v587, %v5781
      %v5816 = vmul.f32 %v588, %v5781
      %v5817 = vmul.f32 %v589, %v5781
      %v5818 = vmul.f32 %v590, %v5781
      %v5819 = vmul.f32 %v591, %v5781
      %v5820 = vmul.f32 %v592, %v5781
      %v5821 = vmul.f32 %v593, %v5781
      %v5822 = vmul.f32 %v594, %v5781
      %v5823 = vmul.f32 %v595, %v5781
      %v5824 = vmul.f32 %v596, %v5781
      %v5825 = vmul.f32 %v597, %v5781
      %v5826 = vmul.f32 %v598, %v5781
      %v5827 = vmul.f32 %v599, %v5781
      %v5828 = vmul.f32 %v600, %v5781
      %v5829 = vmul.f32 %v601, %v5781
      %v5830 = vmul.f32 %v602, %v5781
      %v5831 = vld [vmem:[%s11] sm:$0x1]
      %v5833 = vlaneseq
      %v5834 = vshrl.u32 %v5833, 7
      %v5835 = vsub.s32 0, %v5834
      %v5836 = vrot.slane %v5831, %v5835
      %v5838 = vadd.f32 %v5783, %v5836
      %v5839 = vadd.f32 %v5784, %v5836
      %v5840 = vadd.f32 %v5785, %v5836
      %v5841 = vadd.f32 %v5786, %v5836
      %v5842 = vadd.f32 %v5787, %v5836
      %v5843 = vadd.f32 %v5788, %v5836
      %v5844 = vadd.f32 %v5789, %v5836
      %v5845 = vadd.f32 %v5790, %v5836
      %v5846 = vadd.f32 %v5791, %v5836
      %v5847 = vadd.f32 %v5792, %v5836
      %v5848 = vadd.f32 %v5793, %v5836
      %v5849 = vadd.f32 %v5794, %v5836
      %v5850 = vadd.f32 %v5795, %v5836
      %v5851 = vadd.f32 %v5796, %v5836
      %v5852 = vadd.f32 %v5797, %v5836
      %v5853 = vadd.f32 %v5798, %v5836
      %v5854 = vadd.f32 %v5799, %v5836
      %v5855 = vadd.f32 %v5800, %v5836
      %v5856 = vadd.f32 %v5801, %v5836
      %v5857 = vadd.f32 %v5802, %v5836
      %v5858 = vadd.f32 %v5803, %v5836
      %v5859 = vadd.f32 %v5804, %v5836
      %v5860 = vadd.f32 %v5805, %v5836
      %v5861 = vadd.f32 %v5806, %v5836
      %v5862 = vadd.f32 %v5807, %v5836
      %v5863 = vadd.f32 %v5808, %v5836
      %v5864 = vadd.f32 %v5809, %v5836
      %v5865 = vadd.f32 %v5810, %v5836
      %v5866 = vadd.f32 %v5811, %v5836
      %v5867 = vadd.f32 %v5812, %v5836
      %v5868 = vadd.f32 %v5813, %v5836
      %v5869 = vadd.f32 %v5814, %v5836
      %v5870 = vadd.f32 %v5815, %v5836
      %v5871 = vadd.f32 %v5816, %v5836
      %v5872 = vadd.f32 %v5817, %v5836
      %v5873 = vadd.f32 %v5818, %v5836
      %v5874 = vadd.f32 %v5819, %v5836
      %v5875 = vadd.f32 %v5820, %v5836
      %v5876 = vadd.f32 %v5821, %v5836
      %v5877 = vadd.f32 %v5822, %v5836
      %v5878 = vadd.f32 %v5823, %v5836
      %v5879 = vadd.f32 %v5824, %v5836
      %v5880 = vadd.f32 %v5825, %v5836
      %v5881 = vadd.f32 %v5826, %v5836
      %v5882 = vadd.f32 %v5827, %v5836
      %v5883 = vadd.f32 %v5828, %v5836
      %v5884 = vadd.f32 %v5829, %v5836
      %v5885 = vadd.f32 %v5830, %v5836
      %v5886 = vmax.f32 %v5838, 0.0
      %v5887 = vmax.f32 %v5839, 0.0
      %v5888 = vmax.f32 %v5840, 0.0
      %v5889 = vmax.f32 %v5841, 0.0
      %v5890 = vmax.f32 %v5842, 0.0
      %v5891 = vmax.f32 %v5843, 0.0
      %v5892 = vmax.f32 %v5844, 0.0
      %v5893 = vmax.f32 %v5845, 0.0
      %v5894 = vmax.f32 %v5846, 0.0
      %v5895 = vmax.f32 %v5847, 0.0
      %v5896 = vmax.f32 %v5848, 0.0
      %v5897 = vmax.f32 %v5849, 0.0
      %v5898 = vmax.f32 %v5850, 0.0
      %v5899 = vmax.f32 %v5851, 0.0
      %v5900 = vmax.f32 %v5852, 0.0
      %v5901 = vmax.f32 %v5853, 0.0
      %v5902 = vmax.f32 %v5854, 0.0
      %v5903 = vmax.f32 %v5855, 0.0
      %v5904 = vmax.f32 %v5856, 0.0
      %v5905 = vmax.f32 %v5857, 0.0
      %v5906 = vmax.f32 %v5858, 0.0
      %v5907 = vmax.f32 %v5859, 0.0
      %v5908 = vmax.f32 %v5860, 0.0
      %v5909 = vmax.f32 %v5861, 0.0
      %v5910 = vmax.f32 %v5862, 0.0
      %v5911 = vmax.f32 %v5863, 0.0
      %v5912 = vmax.f32 %v5864, 0.0
      %v5913 = vmax.f32 %v5865, 0.0
      %v5914 = vmax.f32 %v5866, 0.0
      %v5915 = vmax.f32 %v5867, 0.0
      %v5916 = vmax.f32 %v5868, 0.0
      %v5917 = vmax.f32 %v5869, 0.0
      %v5918 = vmax.f32 %v5870, 0.0
      %v5919 = vmax.f32 %v5871, 0.0
      %v5920 = vmax.f32 %v5872, 0.0
      %v5921 = vmax.f32 %v5873, 0.0
      %v5922 = vmax.f32 %v5874, 0.0
      %v5923 = vmax.f32 %v5875, 0.0
      %v5924 = vmax.f32 %v5876, 0.0
      %v5925 = vmax.f32 %v5877, 0.0
      %v5926 = vmax.f32 %v5878, 0.0
      %v5927 = vmax.f32 %v5879, 0.0
      %v5928 = vmax.f32 %v5880, 0.0
      %v5929 = vmax.f32 %v5881, 0.0
      %v5930 = vmax.f32 %v5882, 0.0
      %v5931 = vmax.f32 %v5883, 0.0
      %v5932 = vmax.f32 %v5884, 0.0
      %v5933 = vmax.f32 %v5885, 0.0
      %v5934 = vpack.c.bf16 %v5887, %v5886
      %v5935 = vpack.c.bf16 %v5889, %v5888
      %v5936 = vpack.c.bf16 %v5891, %v5890
      %v5937 = vpack.c.bf16 %v5893, %v5892
      %v5938 = vpack.c.bf16 %v5895, %v5894
      %v5939 = vpack.c.bf16 %v5897, %v5896
      %v5940 = vpack.c.bf16 %v5899, %v5898
      %v5941 = vpack.c.bf16 %v5901, %v5900
      %v5942 = vpack.c.bf16 %v5903, %v5902
      %v5943 = vpack.c.bf16 %v5905, %v5904
      %v5944 = vpack.c.bf16 %v5907, %v5906
      %v5945 = vpack.c.bf16 %v5909, %v5908
      %v5946 = vpack.c.bf16 %v5911, %v5910
      %v5947 = vpack.c.bf16 %v5913, %v5912
      %v5948 = vpack.c.bf16 %v5915, %v5914
      %v5949 = vpack.c.bf16 %v5917, %v5916
      %v5950 = vpack.c.bf16 %v5919, %v5918
      %v5951 = vpack.c.bf16 %v5921, %v5920
      %v5952 = vpack.c.bf16 %v5923, %v5922
      %v5953 = vpack.c.bf16 %v5925, %v5924
      %v5954 = vpack.c.bf16 %v5927, %v5926
      %v5955 = vpack.c.bf16 %v5929, %v5928
      %v5956 = vpack.c.bf16 %v5931, %v5930
      %v5957 = vpack.c.bf16 %v5933, %v5932
      %v5958 = vld [vmem:[%s12] sm:$0x3]
      %v5960 = vsel %vm871, %v5934, 0
      %v5963 = vsel %vm871, %v5935, 0
      %v5966 = vsel %vm871, %v5936, 0
      %v5969 = vsel %vm871, %v5937, 0
      %v5972 = vsel %vm871, %v5938, 0
      %v5975 = vsel %vm871, %v5939, 0
      %v5978 = vsel %vm871, %v5940, 0
      %v5981 = vsel %vm871, %v5941, 0
      %v5984 = vsel %vm871, %v5942, 0
      %v5987 = vsel %vm871, %v5943, 0
      %v5990 = vsel %vm871, %v5944, 0
      %v5993 = vsel %vm871, %v5945, 0
      %v5996 = vsel %vm871, %v5946, 0
      %v5999 = vsel %vm871, %v5947, 0
      %v6002 = vsel %vm871, %v5948, 0
      %v6005 = vsel %vm871, %v5949, 0
      %v6008 = vsel %vm871, %v5950, 0
      %v6011 = vsel %vm871, %v5951, 0
      %v6014 = vsel %vm871, %v5952, 0
      %v6017 = vsel %vm871, %v5953, 0
      %v6020 = vsel %vm871, %v5954, 0
      %v6023 = vsel %vm871, %v5955, 0
      %v6026 = vsel %vm871, %v5956, 0
      %v6029 = vsel %vm871, %v5957, 0
      %v6032 = vsel %vm953, %v5958, 0
      %6034 = vmatprep.subr.bf16.mxu0 0
      %6035 = vmatpush1.bf16.msra.mxu0 %v6032
      %6036 = vmatprep.subr.bf16.mxu0 0
      %6037 = vmatpush1.bf16.msra.mxu0 0
      %6038 = vmatprep.subr.bf16.mxu0 0
      %6039 = vmatpush1.bf16.msra.mxu0 0
      %6040 = vmatprep.subr.bf16.mxu0 0
      %6041 = vmatpush1.bf16.msra.mxu0 0
      %6042 = vmatprep.subr.bf16.mxu0 0
      %6043 = vmatpush1.bf16.msra.mxu0 0
      %6044 = vmatprep.subr.bf16.mxu0 0
      %6045 = vmatpush1.bf16.msra.mxu0 0
      %6046 = vmatprep.subr.bf16.mxu0 0
      %6047 = vmatpush1.bf16.msra.mxu0 0
      %6048 = vmatprep.subr.bf16.mxu0 0
      %6049 = vmatpush1.bf16.msra.mxu0 0
      %6050 = vmatprep.subr.bf16.mxu0 0
      %6051 = vmatpush1.bf16.msra.mxu0 0
      %6052 = vmatprep.subr.bf16.mxu0 0
      %6053 = vmatpush1.bf16.msra.mxu0 0
      %6054 = vmatprep.subr.bf16.mxu0 0
      %6055 = vmatpush1.bf16.msra.mxu0 0
      %6056 = vmatprep.subr.bf16.mxu0 0
      %6057 = vmatpush1.bf16.msra.mxu0 0
      %6058 = vmatprep.subr.bf16.mxu0 0
      %6059 = vmatpush1.bf16.msra.mxu0 0
      %6060 = vmatprep.subr.bf16.mxu0 0
      %6061 = vmatpush1.bf16.msra.mxu0 0
      %6062 = vmatprep.subr.bf16.mxu0 0
      %6063 = vmatpush1.bf16.msra.mxu0 0
      %6064 = vmatprep.subr.bf16.mxu0 0
      %6065 = vmatpush1.bf16.msra.mxu0 0
      %6066 = vmatprep.mubr.bf16.mxu0 0
      %6067 = vmatmul.mubr.bf16.gmra.mrb[0].mxu0 %v5960
      %v6068 = vpop.f32.mrb[0].mxu0
      %v6069 = vadd.f32 0.0, %v6068
      %v6070 = vpop.f32.mrb[0].mxu0
      %v6071 = vpop.f32.mrb[0].mxu0
      %v6072 = vadd.f32 0.0, %v6071
      %v6073 = vpop.f32.mrb[0].mxu0
      %6074 = vmatprep.mubr.bf16.mxu0 0
      %6075 = vmatmul.mubr.bf16.gmra.mrb[0].mxu0 %v5963
      %v6076 = vpop.f32.mrb[0].mxu0
      %v6077 = vadd.f32 0.0, %v6076
      %v6078 = vpop.f32.mrb[0].mxu0
      %v6079 = vpop.f32.mrb[0].mxu0
      %v6080 = vadd.f32 0.0, %v6079
      %v6081 = vpop.f32.mrb[0].mxu0
      %6082 = vmatprep.mubr.bf16.mxu0 0
      %6083 = vmatmul.mubr.bf16.gmra.mrb[0].mxu0 %v5966
      %v6084 = vpop.f32.mrb[0].mxu0
      %v6085 = vadd.f32 0.0, %v6084
      %v6086 = vpop.f32.mrb[0].mxu0
      %v6087 = vpop.f32.mrb[0].mxu0
      %v6088 = vadd.f32 0.0, %v6087
      %v6089 = vpop.f32.mrb[0].mxu0
      %6090 = vmatprep.mubr.bf16.mxu0 0
      %6091 = vmatmul.mubr.bf16.gmra.mrb[0].mxu0 %v5969
      %v6092 = vpop.f32.mrb[0].mxu0
      %v6093 = vadd.f32 0.0, %v6092
      %v6094 = vpop.f32.mrb[0].mxu0
      %v6095 = vpop.f32.mrb[0].mxu0
      %v6096 = vadd.f32 0.0, %v6095
      %v6097 = vpop.f32.mrb[0].mxu0
      %6098 = vmatprep.mubr.bf16.mxu0 0
      %6099 = vmatmul.mubr.bf16.gmra.mrb[0].mxu0 %v5972
      %v6100 = vpop.f32.mrb[0].mxu0
      %v6101 = vadd.f32 0.0, %v6100
      %v6102 = vpop.f32.mrb[0].mxu0
      %v6103 = vpop.f32.mrb[0].mxu0
      %v6104 = vadd.f32 0.0, %v6103
      %v6105 = vpop.f32.mrb[0].mxu0
      %6106 = vmatprep.mubr.bf16.mxu0 0
      %6107 = vmatmul.mubr.bf16.gmra.mrb[0].mxu0 %v5975
      %v6108 = vpop.f32.mrb[0].mxu0
      %v6109 = vadd.f32 0.0, %v6108
      %v6110 = vpop.f32.mrb[0].mxu0
      %v6111 = vpop.f32.mrb[0].mxu0
      %v6112 = vadd.f32 0.0, %v6111
      %v6113 = vpop.f32.mrb[0].mxu0
      %6114 = vmatprep.mubr.bf16.mxu0 0
      %6115 = vmatmul.mubr.bf16.gmra.mrb[0].mxu0 %v5978
      %v6116 = vpop.f32.mrb[0].mxu0
      %v6117 = vadd.f32 0.0, %v6116
      %v6118 = vpop.f32.mrb[0].mxu0
      %v6119 = vpop.f32.mrb[0].mxu0
      %v6120 = vadd.f32 0.0, %v6119
      %v6121 = vpop.f32.mrb[0].mxu0
      %6122 = vmatprep.mubr.bf16.mxu0 0
      %6123 = vmatmul.mubr.bf16.gmra.mrb[0].mxu0 %v5981
      %v6124 = vpop.f32.mrb[0].mxu0
      %v6125 = vadd.f32 0.0, %v6124
      %v6126 = vpop.f32.mrb[0].mxu0
      %v6127 = vpop.f32.mrb[0].mxu0
      %v6128 = vadd.f32 0.0, %v6127
      %v6129 = vpop.f32.mrb[0].mxu0
      %6130 = vmatprep.mubr.bf16.mxu0 0
      %6131 = vmatmul.mubr.bf16.gmra.mrb[0].mxu0 %v5984
      %v6132 = vpop.f32.mrb[0].mxu0
      %v6133 = vadd.f32 0.0, %v6132
      %v6134 = vpop.f32.mrb[0].mxu0
      %v6135 = vpop.f32.mrb[0].mxu0
      %v6136 = vadd.f32 0.0, %v6135
      %v6137 = vpop.f32.mrb[0].mxu0
      %6138 = vmatprep.mubr.bf16.mxu0 0
      %6139 = vmatmul.mubr.bf16.gmra.mrb[0].mxu0 %v5987
      %v6140 = vpop.f32.mrb[0].mxu0
      %v6141 = vadd.f32 0.0, %v6140
      %v6142 = vpop.f32.mrb[0].mxu0
      %v6143 = vpop.f32.mrb[0].mxu0
      %v6144 = vadd.f32 0.0, %v6143
      %v6145 = vpop.f32.mrb[0].mxu0
      %6146 = vmatprep.mubr.bf16.mxu0 0
      %6147 = vmatmul.mubr.bf16.gmra.mrb[0].mxu0 %v5990
      %v6148 = vpop.f32.mrb[0].mxu0
      %v6149 = vadd.f32 0.0, %v6148
      %v6150 = vpop.f32.mrb[0].mxu0
      %v6151 = vpop.f32.mrb[0].mxu0
      %v6152 = vadd.f32 0.0, %v6151
      %v6153 = vpop.f32.mrb[0].mxu0
      %6154 = vmatprep.mubr.bf16.mxu0 0
      %6155 = vmatmul.mubr.bf16.gmra.mrb[0].mxu0 %v5993
      %v6156 = vpop.f32.mrb[0].mxu0
      %v6157 = vadd.f32 0.0, %v6156
      %v6158 = vpop.f32.mrb[0].mxu0
      %v6159 = vpop.f32.mrb[0].mxu0
      %v6160 = vadd.f32 0.0, %v6159
      %v6161 = vpop.f32.mrb[0].mxu0
      %6162 = vmatprep.mubr.bf16.mxu0 0
      %6163 = vmatmul.mubr.bf16.gmra.mrb[0].mxu0 %v5996
      %v6164 = vpop.f32.mrb[0].mxu0
      %v6165 = vadd.f32 0.0, %v6164
      %v6166 = vpop.f32.mrb[0].mxu0
      %v6167 = vpop.f32.mrb[0].mxu0
      %v6168 = vadd.f32 0.0, %v6167
      %v6169 = vpop.f32.mrb[0].mxu0
      %6170 = vmatprep.mubr.bf16.mxu0 0
      %6171 = vmatmul.mubr.bf16.gmra.mrb[0].mxu0 %v5999
      %v6172 = vpop.f32.mrb[0].mxu0
      %v6173 = vadd.f32 0.0, %v6172
      %v6174 = vpop.f32.mrb[0].mxu0
      %v6175 = vpop.f32.mrb[0].mxu0
      %v6176 = vadd.f32 0.0, %v6175
      %v6177 = vpop.f32.mrb[0].mxu0
      %6178 = vmatprep.mubr.bf16.mxu0 0
      %6179 = vmatmul.mubr.bf16.gmra.mrb[0].mxu0 %v6002
      %v6180 = vpop.f32.mrb[0].mxu0
      %v6181 = vadd.f32 0.0, %v6180
      %v6182 = vpop.f32.mrb[0].mxu0
      %v6183 = vpop.f32.mrb[0].mxu0
      %v6184 = vadd.f32 0.0, %v6183
      %v6185 = vpop.f32.mrb[0].mxu0
      %6186 = vmatprep.mubr.bf16.mxu0 0
      %6187 = vmatmul.mubr.bf16.gmra.mrb[0].mxu0 %v6005
      %v6188 = vpop.f32.mrb[0].mxu0
      %v6189 = vadd.f32 0.0, %v6188
      %v6190 = vpop.f32.mrb[0].mxu0
      %v6191 = vpop.f32.mrb[0].mxu0
      %v6192 = vadd.f32 0.0, %v6191
      %v6193 = vpop.f32.mrb[0].mxu0
      %6194 = vmatprep.mubr.bf16.mxu0 0
      %6195 = vmatmul.mubr.bf16.gmra.mrb[0].mxu0 %v6008
      %v6196 = vpop.f32.mrb[0].mxu0
      %v6197 = vadd.f32 0.0, %v6196
      %v6198 = vpop.f32.mrb[0].mxu0
      %v6199 = vpop.f32.mrb[0].mxu0
      %v6200 = vadd.f32 0.0, %v6199
      %v6201 = vpop.f32.mrb[0].mxu0
      %6202 = vmatprep.mubr.bf16.mxu0 0
      %6203 = vmatmul.mubr.bf16.gmra.mrb[0].mxu0 %v6011
      %v6204 = vpop.f32.mrb[0].mxu0
      %v6205 = vadd.f32 0.0, %v6204
      %v6206 = vpop.f32.mrb[0].mxu0
      %v6207 = vpop.f32.mrb[0].mxu0
      %v6208 = vadd.f32 0.0, %v6207
      %v6209 = vpop.f32.mrb[0].mxu0
      %6210 = vmatprep.mubr.bf16.mxu0 0
      %6211 = vmatmul.mubr.bf16.gmra.mrb[0].mxu0 %v6014
      %v6212 = vpop.f32.mrb[0].mxu0
      %v6213 = vadd.f32 0.0, %v6212
      %v6214 = vpop.f32.mrb[0].mxu0
      %v6215 = vpop.f32.mrb[0].mxu0
      %v6216 = vadd.f32 0.0, %v6215
      %v6217 = vpop.f32.mrb[0].mxu0
      %6218 = vmatprep.mubr.bf16.mxu0 0
      %6219 = vmatmul.mubr.bf16.gmra.mrb[0].mxu0 %v6017
      %v6220 = vpop.f32.mrb[0].mxu0
      %v6221 = vadd.f32 0.0, %v6220
      %v6222 = vpop.f32.mrb[0].mxu0
      %v6223 = vpop.f32.mrb[0].mxu0
      %v6224 = vadd.f32 0.0, %v6223
      %v6225 = vpop.f32.mrb[0].mxu0
      %6226 = vmatprep.mubr.bf16.mxu0 0
      %6227 = vmatmul.mubr.bf16.gmra.mrb[0].mxu0 %v6020
      %v6228 = vpop.f32.mrb[0].mxu0
      %v6229 = vadd.f32 0.0, %v6228
      %v6230 = vpop.f32.mrb[0].mxu0
      %v6231 = vpop.f32.mrb[0].mxu0
      %v6232 = vadd.f32 0.0, %v6231
      %v6233 = vpop.f32.mrb[0].mxu0
      %6234 = vmatprep.mubr.bf16.mxu0 0
      %6235 = vmatmul.mubr.bf16.gmra.mrb[0].mxu0 %v6023
      %v6236 = vpop.f32.mrb[0].mxu0
      %v6237 = vadd.f32 0.0, %v6236
      %v6238 = vpop.f32.mrb[0].mxu0
      %v6239 = vpop.f32.mrb[0].mxu0
      %v6240 = vadd.f32 0.0, %v6239
      %v6241 = vpop.f32.mrb[0].mxu0
      %6242 = vmatprep.mubr.bf16.mxu0 0
      %6243 = vmatmul.mubr.bf16.gmra.mrb[0].mxu0 %v6026
      %v6244 = vpop.f32.mrb[0].mxu0
      %v6245 = vadd.f32 0.0, %v6244
      %v6246 = vpop.f32.mrb[0].mxu0
      %v6247 = vpop.f32.mrb[0].mxu0
      %v6248 = vadd.f32 0.0, %v6247
      %v6249 = vpop.f32.mrb[0].mxu0
      %6250 = vmatprep.mubr.bf16.mxu0 0
      %6251 = vmatmul.mubr.bf16.gmra.mrb[0].mxu0 %v6029
      %v6252 = vpop.f32.mrb[0].mxu0
      %v6253 = vadd.f32 0.0, %v6252
      %v6254 = vpop.f32.mrb[0].mxu0
      %v6255 = vpop.f32.mrb[0].mxu0
      %v6256 = vadd.f32 0.0, %v6255
      %v6257 = vpop.f32.mrb[0].mxu0
      %6258 = vdwg.mxu0
      %v6259 = vadd.f32 %v5586, %v6069
      %v6260 = vadd.f32 %v5589, %v6072
      %v6261 = vadd.f32 %v5594, %v6077
      %v6262 = vadd.f32 %v5597, %v6080
      %v6263 = vadd.f32 %v5602, %v6085
      %v6264 = vadd.f32 %v5605, %v6088
      %v6265 = vadd.f32 %v5610, %v6093
      %v6266 = vadd.f32 %v5613, %v6096
      %v6267 = vadd.f32 %v5618, %v6101
      %v6268 = vadd.f32 %v5621, %v6104
      %v6269 = vadd.f32 %v5626, %v6109
      %v6270 = vadd.f32 %v5629, %v6112
      %v6271 = vadd.f32 %v5634, %v6117
      %v6272 = vadd.f32 %v5637, %v6120
      %v6273 = vadd.f32 %v5642, %v6125
      %v6274 = vadd.f32 %v5645, %v6128
      %v6275 = vadd.f32 %v5650, %v6133
      %v6276 = vadd.f32 %v5653, %v6136
      %v6277 = vadd.f32 %v5658, %v6141
      %v6278 = vadd.f32 %v5661, %v6144
      %v6279 = vadd.f32 %v5666, %v6149
      %v6280 = vadd.f32 %v5669, %v6152
      %v6281 = vadd.f32 %v5674, %v6157
      %v6282 = vadd.f32 %v5677, %v6160
      %v6283 = vadd.f32 %v5682, %v6165
      %v6284 = vadd.f32 %v5685, %v6168
      %v6285 = vadd.f32 %v5690, %v6173
      %v6286 = vadd.f32 %v5693, %v6176
      %v6287 = vadd.f32 %v5698, %v6181
      %v6288 = vadd.f32 %v5701, %v6184
      %v6289 = vadd.f32 %v5706, %v6189
      %v6290 = vadd.f32 %v5709, %v6192
      %v6291 = vadd.f32 %v5714, %v6197
      %v6292 = vadd.f32 %v5717, %v6200
      %v6293 = vadd.f32 %v5722, %v6205
      %v6294 = vadd.f32 %v5725, %v6208
      %v6295 = vadd.f32 %v5730, %v6213
      %v6296 = vadd.f32 %v5733, %v6216
      %v6297 = vadd.f32 %v5738, %v6221
      %v6298 = vadd.f32 %v5741, %v6224
      %v6299 = vadd.f32 %v5746, %v6229
      %v6300 = vadd.f32 %v5749, %v6232
      %v6301 = vadd.f32 %v5754, %v6237
      %v6302 = vadd.f32 %v5757, %v6240
      %v6303 = vadd.f32 %v5762, %v6245
      %v6304 = vadd.f32 %v5765, %v6248
      %v6305 = vadd.f32 %v5770, %v6253
      %v6306 = vadd.f32 %v5773, %v6256
      %v6307 = vpack.c.bf16 %v6260, %v6259
      %v6308 = vpack.c.bf16 %v6262, %v6261
      %v6309 = vpack.c.bf16 %v6264, %v6263
      %v6310 = vpack.c.bf16 %v6266, %v6265
      %v6311 = vpack.c.bf16 %v6268, %v6267
      %v6312 = vpack.c.bf16 %v6270, %v6269
      %v6313 = vpack.c.bf16 %v6272, %v6271
      %v6314 = vpack.c.bf16 %v6274, %v6273
      %v6315 = vpack.c.bf16 %v6276, %v6275
      %v6316 = vpack.c.bf16 %v6278, %v6277
      %v6317 = vpack.c.bf16 %v6280, %v6279
      %v6318 = vpack.c.bf16 %v6282, %v6281
      %v6319 = vpack.c.bf16 %v6284, %v6283
      %v6320 = vpack.c.bf16 %v6286, %v6285
      %v6321 = vpack.c.bf16 %v6288, %v6287
      %v6322 = vpack.c.bf16 %v6290, %v6289
      %v6323 = vpack.c.bf16 %v6292, %v6291
      %v6324 = vpack.c.bf16 %v6294, %v6293
      %v6325 = vpack.c.bf16 %v6296, %v6295
      %v6326 = vpack.c.bf16 %v6298, %v6297
      %v6327 = vpack.c.bf16 %v6300, %v6299
      %v6328 = vpack.c.bf16 %v6302, %v6301
      %v6329 = vpack.c.bf16 %v6304, %v6303
      %v6330 = vpack.c.bf16 %v6306, %v6305
      %v6355 = vunpack.c.l.b16 %v6307
      %v6356 = vunpack.c.h.b16 %v6307
      %v6357 = vunpack.c.l.b16 %v6308
      %v6358 = vunpack.c.h.b16 %v6308
      %v6359 = vunpack.c.l.b16 %v6309
      %v6360 = vunpack.c.h.b16 %v6309
      %v6361 = vunpack.c.l.b16 %v6310
      %v6362 = vunpack.c.h.b16 %v6310
      %v6363 = vunpack.c.l.b16 %v6311
      %v6364 = vunpack.c.h.b16 %v6311
      %v6365 = vunpack.c.l.b16 %v6312
      %v6366 = vunpack.c.h.b16 %v6312
      %v6367 = vunpack.c.l.b16 %v6313
      %v6368 = vunpack.c.h.b16 %v6313
      %v6369 = vunpack.c.l.b16 %v6314
      %v6370 = vunpack.c.h.b16 %v6314
      %v6371 = vunpack.c.l.b16 %v6315
      %v6372 = vunpack.c.h.b16 %v6315
      %v6373 = vunpack.c.l.b16 %v6316
      %v6374 = vunpack.c.h.b16 %v6316
      %v6375 = vunpack.c.l.b16 %v6317
      %v6376 = vunpack.c.h.b16 %v6317
      %v6377 = vunpack.c.l.b16 %v6318
      %v6378 = vunpack.c.h.b16 %v6318
      %v6379 = vunpack.c.l.b16 %v6319
      %v6380 = vunpack.c.h.b16 %v6319
      %v6381 = vunpack.c.l.b16 %v6320
      %v6382 = vunpack.c.h.b16 %v6320
      %v6383 = vunpack.c.l.b16 %v6321
      %v6384 = vunpack.c.h.b16 %v6321
      %v6385 = vunpack.c.l.b16 %v6322
      %v6386 = vunpack.c.h.b16 %v6322
      %v6387 = vunpack.c.l.b16 %v6323
      %v6388 = vunpack.c.h.b16 %v6323
      %v6389 = vunpack.c.l.b16 %v6324
      %v6390 = vunpack.c.h.b16 %v6324
      %v6391 = vunpack.c.l.b16 %v6325
      %v6392 = vunpack.c.h.b16 %v6325
      %v6393 = vunpack.c.l.b16 %v6326
      %v6394 = vunpack.c.h.b16 %v6326
      %v6395 = vunpack.c.l.b16 %v6327
      %v6396 = vunpack.c.h.b16 %v6327
      %v6397 = vunpack.c.l.b16 %v6328
      %v6398 = vunpack.c.h.b16 %v6328
      %v6399 = vunpack.c.l.b16 %v6329
      %v6400 = vunpack.c.h.b16 %v6329
      %v6401 = vunpack.c.l.b16 %v6330
      %v6402 = vunpack.c.h.b16 %v6330
      %v6403 = vpack.c.b16 %v6355, %v6355
      %v6404 = vpack.c.b16 %v6356, %v6356
      %v6405 = vpack.c.b16 %v6357, %v6357
      %v6406 = vpack.c.b16 %v6358, %v6358
      %v6407 = vpack.c.b16 %v6359, %v6359
      %v6408 = vpack.c.b16 %v6360, %v6360
      %v6409 = vpack.c.b16 %v6361, %v6361
      %v6410 = vpack.c.b16 %v6362, %v6362
      %v6411 = vpack.c.b16 %v6363, %v6363
      %v6412 = vpack.c.b16 %v6364, %v6364
      %v6413 = vpack.c.b16 %v6365, %v6365
      %v6414 = vpack.c.b16 %v6366, %v6366
      %v6415 = vpack.c.b16 %v6367, %v6367
      %v6416 = vpack.c.b16 %v6368, %v6368
      %v6417 = vpack.c.b16 %v6369, %v6369
      %v6418 = vpack.c.b16 %v6370, %v6370
      %v6419 = vpack.c.b16 %v6371, %v6371
      %v6420 = vpack.c.b16 %v6372, %v6372
      %v6421 = vpack.c.b16 %v6373, %v6373
      %v6422 = vpack.c.b16 %v6374, %v6374
      %v6423 = vpack.c.b16 %v6375, %v6375
      %v6424 = vpack.c.b16 %v6376, %v6376
      %v6425 = vpack.c.b16 %v6377, %v6377
      %v6426 = vpack.c.b16 %v6378, %v6378
      %v6427 = vpack.c.b16 %v6379, %v6379
      %v6428 = vpack.c.b16 %v6380, %v6380
      %v6429 = vpack.c.b16 %v6381, %v6381
      %v6430 = vpack.c.b16 %v6382, %v6382
      %v6431 = vpack.c.b16 %v6383, %v6383
      %v6432 = vpack.c.b16 %v6384, %v6384
      %v6433 = vpack.c.b16 %v6385, %v6385
      %v6434 = vpack.c.b16 %v6386, %v6386
      %v6435 = vpack.c.b16 %v6387, %v6387
      %v6436 = vpack.c.b16 %v6388, %v6388
      %v6437 = vpack.c.b16 %v6389, %v6389
      %v6438 = vpack.c.b16 %v6390, %v6390
      %v6439 = vpack.c.b16 %v6391, %v6391
      %v6440 = vpack.c.b16 %v6392, %v6392
      %v6441 = vpack.c.b16 %v6393, %v6393
      %v6442 = vpack.c.b16 %v6394, %v6394
      %v6443 = vpack.c.b16 %v6395, %v6395
      %v6444 = vpack.c.b16 %v6396, %v6396
      %v6445 = vpack.c.b16 %v6397, %v6397
      %v6446 = vpack.c.b16 %v6398, %v6398
      %v6447 = vpack.c.b16 %v6399, %v6399
      %v6448 = vpack.c.b16 %v6400, %v6400
      %v6449 = vpack.c.b16 %v6401, %v6401
      %v6450 = vpack.c.b16 %v6402, %v6402
      %vm6499 = vcmask 60416
      %6500 = vst.msk [vmem:[%s496] sm:$0xf] %vm6499, %v6403
      %6501 = vst.msk [vmem:[%s496 + $0x4] sm:$0xf] %vm6499, %v6404
      %6502 = vst.msk [vmem:[%s496 + $0x8] sm:$0xf] %vm6499, %v6405
      %6503 = vst.msk [vmem:[%s496 + $0xc] sm:$0xf] %vm6499, %v6406
      %6504 = vst.msk [vmem:[%s496 + $0x10] sm:$0xf] %vm6499, %v6407
      %6505 = vst.msk [vmem:[%s496 + $0x14] sm:$0xf] %vm6499, %v6408
      %6506 = vst.msk [vmem:[%s496 + $0x18] sm:$0xf] %vm6499, %v6409
      %6507 = vst.msk [vmem:[%s496 + $0x1c] sm:$0xf] %vm6499, %v6410
      %6508 = vst.msk [vmem:[%s496 + $0x20] sm:$0xf] %vm6499, %v6411
      %6509 = vst.msk [vmem:[%s496 + $0x24] sm:$0xf] %vm6499, %v6412
      %6510 = vst.msk [vmem:[%s496 + $0x28] sm:$0xf] %vm6499, %v6413
      %6511 = vst.msk [vmem:[%s496 + $0x2c] sm:$0xf] %vm6499, %v6414
      %6512 = vst.msk [vmem:[%s496 + $0x30] sm:$0xf] %vm6499, %v6415
      %6513 = vst.msk [vmem:[%s496 + $0x34] sm:$0xf] %vm6499, %v6416
      %6514 = vst.msk [vmem:[%s496 + $0x38] sm:$0xf] %vm6499, %v6417
      %6515 = vst.msk [vmem:[%s496 + $0x3c] sm:$0xf] %vm6499, %v6418
      %6516 = vst.msk [vmem:[%s496 + $0x40] sm:$0xf] %vm6499, %v6419
      %6517 = vst.msk [vmem:[%s496 + $0x44] sm:$0xf] %vm6499, %v6420
      %6518 = vst.msk [vmem:[%s496 + $0x48] sm:$0xf] %vm6499, %v6421
      %6519 = vst.msk [vmem:[%s496 + $0x4c] sm:$0xf] %vm6499, %v6422
      %6520 = vst.msk [vmem:[%s496 + $0x50] sm:$0xf] %vm6499, %v6423
      %6521 = vst.msk [vmem:[%s496 + $0x54] sm:$0xf] %vm6499, %v6424
      %6522 = vst.msk [vmem:[%s496 + $0x58] sm:$0xf] %vm6499, %v6425
      %6523 = vst.msk [vmem:[%s496 + $0x5c] sm:$0xf] %vm6499, %v6426
      %6524 = vst.msk [vmem:[%s496 + $0x60] sm:$0xf] %vm6499, %v6427
      %6525 = vst.msk [vmem:[%s496 + $0x64] sm:$0xf] %vm6499, %v6428
      %6526 = vst.msk [vmem:[%s496 + $0x68] sm:$0xf] %vm6499, %v6429
      %6527 = vst.msk [vmem:[%s496 + $0x6c] sm:$0xf] %vm6499, %v6430
      %6528 = vst.msk [vmem:[%s496 + $0x70] sm:$0xf] %vm6499, %v6431
      %6529 = vst.msk [vmem:[%s496 + $0x74] sm:$0xf] %vm6499, %v6432
      %6530 = vst.msk [vmem:[%s496 + $0x78] sm:$0xf] %vm6499, %v6433
      %6531 = vst.msk [vmem:[%s496 + $0x7c] sm:$0xf] %vm6499, %v6434
      %6532 = vst.msk [vmem:[%s496 + $0x80] sm:$0xf] %vm6499, %v6435
      %6533 = vst.msk [vmem:[%s496 + $0x84] sm:$0xf] %vm6499, %v6436
      %6534 = vst.msk [vmem:[%s496 + $0x88] sm:$0xf] %vm6499, %v6437
      %6535 = vst.msk [vmem:[%s496 + $0x8c] sm:$0xf] %vm6499, %v6438
      %6536 = vst.msk [vmem:[%s496 + $0x90] sm:$0xf] %vm6499, %v6439
      %6537 = vst.msk [vmem:[%s496 + $0x94] sm:$0xf] %vm6499, %v6440
      %6538 = vst.msk [vmem:[%s496 + $0x98] sm:$0xf] %vm6499, %v6441
      %6539 = vst.msk [vmem:[%s496 + $0x9c] sm:$0xf] %vm6499, %v6442
      %6540 = vst.msk [vmem:[%s496 + $0xa0] sm:$0xf] %vm6499, %v6443
      %6541 = vst.msk [vmem:[%s496 + $0xa4] sm:$0xf] %vm6499, %v6444
      %6542 = vst.msk [vmem:[%s496 + $0xa8] sm:$0xf] %vm6499, %v6445
      %6543 = vst.msk [vmem:[%s496 + $0xac] sm:$0xf] %vm6499, %v6446
      %6544 = vst.msk [vmem:[%s496 + $0xb0] sm:$0xf] %vm6499, %v6447
      %6545 = vst.msk [vmem:[%s496 + $0xb4] sm:$0xf] %vm6499, %v6448
      %6546 = vst.msk [vmem:[%s496 + $0xb8] sm:$0xf] %vm6499, %v6449
      %6547 = vst.msk [vmem:[%s496 + $0xbc] sm:$0xf] %vm6499, %v6450
      %p6548 = scmp.lt.s32.totalorder %s28, 1
      %s6549 = scalar_select %p6548, %s28, 1
      %p6550 = scmp.lt.s32.totalorder %s29, 0
      %s6551 = scalar_select %p6550, %s29, 0
      %s6552 = smul.addr %s6551, 48
      %s6553 = smul.addr %s6549, 48
      %s6554 = sadd.s32 %s6552, %s6553
      %s6555 = smul.addr %s6554, 4
      %s6556 = scalar_lea.vmem %s13, %s6555
      // Predicated region
      $region73: #{residual_forward.1} parent=71 // pred_check
        %p6557 = pneg %p341
      $region74: #{residual_forward.1} parent=71 // pred_check_branch
        %6559 = sbr.rel (%p6557) target = $region76
      $region75: #{residual_forward.1} parent=71 // pred_region
        _
      $region76: #{residual_forward.1} parent=71 // pred_fallthru
        _
    $region72: #{residual_forward.1} parent=5 // pred_fallthru
      _
    %p6560 = scmp.le.s32.totalorder 2, %s19
    // Predicated region
    $region77: #{residual_forward.1} parent=5 // pred_check
      %p6561 = pneg %p6560
    $region78: #{residual_forward.1} parent=5 // pred_check_branch
      %6563 = sbr.rel (%p6561) target = $region80
    $region79: #{residual_forward.1} parent=5 // pred_region
      %s6564 = ssub.s32 %s19, 2
      // Predicated region
      $region81: #{residual_forward.1} parent=79 // pred_check
        %p6565 = pneg %p347
      $region82: #{residual_forward.1} parent=79 // pred_check_branch
        %6567 = sbr.rel (%p6565) target = $region84
      $region83: #{residual_forward.1} parent=79 // pred_region
        %p6568 = scmp.lt.s32.totalorder %s30, 1
        %s6569 = scalar_select %p6568, %s30, 1
        %p6570 = scmp.lt.s32.totalorder %s31, 0
        %s6571 = scalar_select %p6570, %s31, 0
        %s6572 = smul.addr %s6571, 48
        %s6573 = smul.addr %s6569, 48
        %s6574 = sadd.s32 %s6572, %s6573
        %s6575 = smul.addr %s6574, 4
        %s6576 = scalar_lea.vmem %s13, %s6575
      $region84: #{residual_forward.1} parent=79 // pred_fallthru
        _
    $region80: #{residual_forward.1} parent=5 // pred_fallthru
      _
  $region6: #{residual_forward.1} parent=0 // loop_footer
    %s23 = sadd.s32 1, %s19
  $region7: #{residual_forward.1} parent=0 // loop_footer_branch
    %18 = sbr.rel target = $region3
  $region8: #{residual_forward.1} parent=0 // loop_exit
    _

</llo_original>
